<compile_context>
chip_gen: v7x
topology: tpu7x:2x2x1
jax: 0.10.0
libtpu: 0.0.40
codegen_flags: <defaults>
</compile_context>

<pallas_src>
import jax
import jax.numpy as jnp
from jax import lax
from jax.experimental import pallas as pl
from jax.experimental.pallas import tpu as pltpu


# ----------------------------------------------------------------------------
# The fused decoder kernel (single grid step; everything resident in VMEM).
# ----------------------------------------------------------------------------
def _decoder_kernel(e4_ref, e3_ref, e2_ref, e1_ref,
                    ws3_ref, bs3_ref, ws2_ref, bs2_ref, ws1_ref, bs1_ref,
                    w3_ref, b3_ref, w2_ref, b2_ref, w1_ref, b1_ref,
                    wf_ref, bf_ref, grp_ref,
                    o_ref,
                    cat3_ref, cat2_ref, cat1_ref):
    """Row orders: e4/e3 rows = (b, y, x) on the coarse grid; e2/e1 rows are
    pre-permuted to the packed (subpixel..., b, y, x) order that the in-kernel
    row scatter produces, so cat(d_k, s_k) is a plain column concat in VMEM.

    cat3: (M3,  512+256)  [e4 | s3]     cat2: (4*M3, 256+128)  [d3 | s2]
    cat1: (16*M3, 128+64) [d2 | s1]     o   : (16*M3, 4*oc)    cols (sy, sx, oc)
    """
    f32, bf16 = jnp.float32, jnp.bfloat16
    m3 = e4_ref.shape[0]
    m2 = e2_ref.shape[0]
    c4 = e4_ref.shape[1]            # 512  main-path channels into D3
    co3 = w3_ref.shape[1] // 4      # 256  channels out of D3
    co2 = w2_ref.shape[1] // 4      # 128  channels out of D2

    def shortcut(e_ref, w_ref, b_ref):                        # 1x1 conv + ReLU
        s = jnp.dot(e_ref[...], w_ref[...], preferred_element_type=f32)
        return jnp.maximum(s + b_ref[...], 0.0).astype(bf16)

    def convt(cat_ref, w_ref, b_ref):       # ConvT(k=2,s=2) as one K=Cx+Cs dot
        y = jnp.dot(cat_ref[...], w_ref[...], preferred_element_type=f32)
        return jnp.maximum(y + b_ref[...], 0.0)               # (m, 4*Cout) f32

    # ---- D3: cat(e4, s3) -> ConvT(768 -> 256), ReLU --------------------------
    cat3_ref[:, :c4] = e4_ref[...]
    cat3_ref[:, c4:] = shortcut(e3_ref, ws3_ref, bs3_ref)
    y3 = convt(cat3_ref, w3_ref, b3_ref)
    # depth-to-space == row scatter: subpixel q of coarse row r -> row q*m3 + r
    for q in range(4):
        cat2_ref[q * m3:(q + 1) * m3, :co3] = (
            y3[:, q * co3:(q + 1) * co3].astype(bf16))

    # ---- D2: cat(d3, s2) -> ConvT(384 -> 128), ReLU --------------------------
    cat2_ref[:, co3:] = shortcut(e2_ref, ws2_ref, bs2_ref)
    y2 = convt(cat2_ref, w2_ref, b2_ref)
    for q in range(4):
        cat1_ref[q * m2:(q + 1) * m2, :co2] = (
            y2[:, q * co2:(q + 1) * co2].astype(bf16))

    # ---- D1: cat(d2, s1) -> ConvT(192 -> 64), ReLU  (d1 never leaves VMEM) ---
    cat1_ref[:, co2:] = shortcut(e1_ref, ws1_ref, bs1_ref)
    y1 = convt(cat1_ref, w1_ref, b1_ref)                      # (m1, 4*64) f32

    # ---- conv_final (block-diag 1x1; commutes with the pixel shuffle) --------
    z = jnp.dot(y1.astype(bf16), wf_ref[...], preferred_element_type=f32)
    z = z + bf_ref[...]
    # per-pixel L2 normalize: per-subpixel group sums via the prepared
    # block-diagonal mask (hoisted out of the kernel), rsqrt on the EUP.
    ss = jnp.dot(z * z, grp_ref[...], preferred_element_type=f32)
    inv = lax.rsqrt(jnp.maximum(ss, 1e-24))   # == 1 / max(||z||_2, 1e-12)
    o_ref[...] = (z * inv).astype(o_ref.dtype)


# ----------------------------------------------------------------------------
# pallas_call wrapper
# ----------------------------------------------------------------------------
def _fused_decoder_call(e4r, e3r, e2p, e1p, prep):
    m3 = e4r.shape[0]
    m2, m1 = e2p.shape[0], e1p.shape[0]
    noc = prep["final"][1].shape[1]                           # 4 * out_ch

    operands = (e4r, e3r, e2p, e1p,
                *prep["short3"], *prep["short2"], *prep["short1"],
                *prep["D3"], *prep["D2"], *prep["D1"],
                *prep["final"], prep["grp"])

    cs3 = prep["short3"][0].shape[1]
    cs2 = prep["short2"][0].shape[1]
    cs1 = prep["short1"][0].shape[1]
    co3 = prep["D3"][0].shape[1] // 4
    co2 = prep["D2"][0].shape[1] // 4

    # VMEM budget sanity (bf16 scratch + double-buffered operands + output).
    cat_bytes = 2 * (m3 * (e4r.shape[1] + cs3) + m2 * (co3 + cs2) + m1 * (co2 + cs1))
    op_bytes = sum(int(a.size) * a.dtype.itemsize for a in operands)
    out_bytes = m1 * noc * 4
    # TODO(synk): if this ever trips (much larger spatial extents), tile the
    # grid over blocks of coarse (b, y, x) rows instead of using grid=(1,).
    assert cat_bytes + 2 * (op_bytes + out_bytes) < 24 * 1024 * 1024

    flops = 2 * (m3 * (e3r.shape[1] * cs3
                       + prep["D3"][0].shape[0] * prep["D3"][0].shape[1])
                 + m2 * (e2p.shape[1] * cs2
                         + prep["D2"][0].shape[0] * prep["D2"][0].shape[1])
                 + m1 * (e1p.shape[1] * cs1
                         + prep["D1"][0].shape[0] * prep["D1"][0].shape[1]
                         + prep["final"][0].shape[0] * noc + noc * noc))

    def full_spec(a):
        return pl.BlockSpec(a.shape, lambda i: (0, 0))

    return pl.pallas_call(
        _decoder_kernel,
        out_shape=jax.ShapeDtypeStruct((m1, noc), jnp.float32),
        grid_spec=pltpu.PrefetchScalarGridSpec(
            num_scalar_prefetch=0,
            grid=(1,),                       # one step: no pipeline overhead
            in_specs=[full_spec(a) for a in operands],
            out_specs=pl.BlockSpec((m1, noc), lambda i: (0, 0)),
            scratch_shapes=[
                pltpu.VMEM((m3, e4r.shape[1] + cs3), jnp.bfloat16),   # cat3
                pltpu.VMEM((m2, co3 + cs2), jnp.bfloat16),            # cat2
                pltpu.VMEM((m1, co2 + cs1), jnp.bfloat16),            # cat1
            ]),
        compiler_params=pltpu.CompilerParams(
            dimension_semantics=("arbitrary",)),
        cost_estimate=pl.CostEstimate(
            flops=int(flops), transcendentals=int(m1 * noc),
            bytes_accessed=int(op_bytes + out_bytes)),
    )(*operands)


# ----------------------------------------------------------------------------
# Parameters (deterministic, synthetic) + one-time prep hoisted out of the
# jitted hot path.
# ----------------------------------------------------------------------------
def init_params(key, out_ch=3):
    keys = jax.random.split(key, 14)
    k = iter(keys)

    def w_(shape, kk, scale=0.05):
        return scale * jax.random.normal(kk, shape, dtype=jnp.float32)

    def b_(n, kk):
        return 0.01 * jax.random.normal(kk, (n,), dtype=jnp.float32)

    def convT_w(cin, cout, kk):
        # Stored as (Cin, kH, kW, Cout) flattened to (Cin, 4*Cout) -> column
        # order (dy, dx, cout).  NOTE: a real PyTorch ConvTranspose2d
        # checkpoint is (Cin, Cout, kH, kW); permute (0, 2, 3, 1) before this.
        return w_((cin, 2, 2, cout), kk).reshape(cin, 4 * cout)

    return {
        "short1_w": w_((32, 64), next(k)),   "short1_b": b_(64, next(k)),
        "short2_w": w_((64, 128), next(k)),  "short2_b": b_(128, next(k)),
        "short3_w": w_((256, 256), next(k)), "short3_b": b_(256, next(k)),
        "D3_w": convT_w(512 + 256, 256, next(k)), "D3_b": b_(256, next(k)),
        "D2_w": convT_w(256 + 128, 128, next(k)), "D2_b": b_(128, next(k)),
        "D1_w": convT_w(128 + 64, 64, next(k)),   "D1_b": b_(64, next(k)),
        "final_w": w_((64, out_ch), next(k)),     "final_b": b_(out_ch, next(k)),
    }


def prepare_params(p):
    """bf16 casts, ConvT bias tiling over the 4 subpixels, block-diagonal
    conv_final weight, and the block-diagonal group-sum mask used by the fused
    L2 normalize (hoisted here so it is not rebuilt inside the kernel)."""
    bf16, f32 = jnp.bfloat16, jnp.float32
    oc = p["final_w"].shape[1]

    def short(w, b):
        return (w.astype(bf16), b.reshape(1, -1).astype(f32))

    def dstage(w, b):
        # ConvT weight stays UNSPLIT: one K = Cx+Cs contraction per stage.
        return (w.astype(bf16), jnp.tile(b, 4).reshape(1, -1).astype(f32))

    wf4 = jnp.kron(jnp.eye(4, dtype=f32), p["final_w"]).astype(bf16)  # (256,4oc)
    bf4 = jnp.tile(p["final_b"], 4).reshape(1, -1).astype(f32)
    g = jnp.arange(4 * oc) // oc
    grp = (g[:, None] == g[None, :]).astype(f32)                      # (4oc,4oc)

    return {
        "short1": short(p["short1_w"], p["short1_b"]),
        "short2": short(p["short2_w"], p["short2_b"]),
        "short3": short(p["short3_w"], p["short3_b"]),
        "D3": dstage(p["D3_w"], p["D3_b"]),
        "D2": dstage(p["D2_w"], p["D2_b"]),
        "D1": dstage(p["D1_w"], p["D1_b"]),
        "final": (wf4, bf4),
        "grp": grp,
    }


# ----------------------------------------------------------------------------
# Decoder forward (NCHW in / NCHW out, matching the PyTorch module)
# ----------------------------------------------------------------------------
def decoder_forward(prep, e1, e2, e3, e4):
    b, _, h3, w3 = e4.shape
    assert e3.shape[2:] == (h3, w3)
    assert e2.shape[2:] == (2 * h3, 2 * w3)
    assert e1.shape[2:] == (4 * h3, 4 * w3)
    oc = prep["final"][1].shape[1] // 4
    bf16 = jnp.bfloat16

    # NCHW -> 2D rows, folded with the bf16 cast.  e2 / e1 are additionally
    # permuted into the raw (subpixel, coarse-pixel) row order produced by the
    # in-kernel row scatter; this replaces the per-stage depth-to-space ops of
    # the unfused version with one transpose per input.
    e4r = jnp.transpose(e4, (0, 2, 3, 1)).reshape(b * h3 * w3, -1).astype(bf16)
    e3r = jnp.transpose(e3, (0, 2, 3, 1)).reshape(b * h3 * w3, -1).astype(bf16)

    c2 = e2.shape[1]
    e2p = e2.reshape(b, c2, h3, 2, w3, 2)                     # b c y3 qy x3 qx
    e2p = jnp.transpose(e2p, (3, 5, 0, 2, 4, 1))              # qy qx b y3 x3 c
    e2p = e2p.reshape(4 * b * h3 * w3, c2).astype(bf16)

    c1 = e1.shape[1]
    e1p = e1.reshape(b, c1, h3, 2, 2, w3, 2, 2)               # b c y3 qy py x3 qx px
    e1p = jnp.transpose(e1p, (4, 7, 3, 6, 0, 2, 5, 1))        # py px qy qx b y3 x3 c
    e1p = e1p.reshape(16 * b * h3 * w3, c1).astype(bf16)

    out_raw = _fused_decoder_call(e4r, e3r, e2p, e1p, prep)   # (16*b*h3*w3, 4*oc)

    # one XLA op composes the final depth-to-space with the NCHW transpose:
    # rows (py,px,qy,qx,b,y3,x3), cols (sy,sx,oc) -> (b, oc, 8*h3, 8*w3)
    out = out_raw.reshape(2, 2, 2, 2, b, h3, w3, 2, 2, oc)
    out = jnp.transpose(out, (4, 9, 5, 2, 0, 7, 6, 3, 1, 8))
    return out.reshape(b, oc, 8 * h3, 8 * w3)


# ----------------------------------------------------------------------------
# Pure-JAX f32 reference (same module semantics, NHWC internally)
# ----------------------------------------------------------------------------
def decoder_reference(p, e1, e2, e3, e4):
    t = lambda a: jnp.transpose(a, (0, 2, 3, 1)).astype(jnp.float32)
    e1, e2, e3, e4 = t(e1), t(e2), t(e3), t(e4)
    relu = lambda x: jnp.maximum(x, 0.0)
    s1 = relu(e1 @ p["short1_w"] + p["short1_b"])
    s2 = relu(e2 @ p["short2_w"] + p["short2_b"])
    s3 = relu(e3 @ p["short3_w"] + p["short3_b"])

    def convT(x, w, b):
        bsz, hh, ww, _ = x.shape
        cout = b.shape[0]
        y = relu(jnp.einsum("bhwc,cn->bhwn", x, w) + jnp.tile(b, 4))
        y = y.reshape(bsz, hh, ww, 2, 2, cout)
        return jnp.transpose(y, (0, 1, 3, 2, 4, 5)).reshape(bsz, 2 * hh, 2 * ww, cout)

    d3 = convT(jnp.concatenate([e4, s3], -1), p["D3_w"], p["D3_b"])
    d2 = convT(jnp.concatenate([d3, s2], -1), p["D2_w"], p["D2_b"])
    d1 = convT(jnp.concatenate([d2, s1], -1), p["D1_w"], p["D1_b"])
    r = d1 @ p["final_w"] + p["final_b"]
    nrm = jnp.sqrt(jnp.sum(r * r, axis=-1, keepdims=True))
    out = r / jnp.maximum(nrm, 1e-12)
    return jnp.transpose(out, (0, 3, 1, 2)), jnp.squeeze(nrm, -1)


# ----------------------------------------------------------------------------
# Demo
# ----------------------------------------------------------------------------
if __name__ == "__main__":
    key = jax.random.PRNGKey(0)
    kp, k1, k2, k3, k4 = jax.random.split(key, 5)

    params = init_params(kp, out_ch=3)
    prep = prepare_params(params)          # one-time prep, outside the hot path

    B = 2
    # hourglass encoder features (NCHW): e4/e3 coarsest, each stage upsamples x2
    e1 = jax.random.normal(k1, (B, 32, 16, 16), dtype=jnp.float32)
    e2 = jax.random.normal(k2, (B, 64, 8, 8), dtype=jnp.float32)
    e3 = jax.random.normal(k3, (B, 256, 4, 4), dtype=jnp.float32)
    e4 = jax.random.normal(k4, (B, 512, 4, 4), dtype=jnp.float32)

    out = jax.jit(decoder_forward)(prep, e1, e2, e3, e4)
    out = jax.block_until_ready(out)
    assert out.shape == (B, 3, 32, 32), out.shape

    # sanity: fused F.normalize gives unit per-pixel channel vectors
    norms = jnp.sqrt(jnp.sum(out * out, axis=1))
    assert bool(jnp.all(jnp.abs(norms - 1.0) < 2e-3)), "normalization failed"

    # correctness vs the pure-JAX f32 reference.  The kernel runs its matmuls
    # in bf16 (f32 accumulation); pixels whose pre-normalization magnitude is
    # tiny have a numerically ill-conditioned direction, so compare where the
    # reference ||z|| is not tiny.
    ref, prenorm = decoder_reference(params, e1, e2, e3, e4)
    mask = (prenorm > 0.1)[:, None, :, :]
    err = jnp.max(jnp.where(mask, jnp.abs(out - ref), 0.0))
    assert float(err) < 8e-2, float(err)

    print("KERNEL_OK")
</pallas_src>

<mosaic_0001>
module attributes {stable_mosaic.version = 11 : i64} {
  func.func @_decoder_kernel(%arg0: i32, %arg1: memref<32x512xbf16, #tpu.memory_space<vmem>>, %arg2: memref<32x256xbf16, #tpu.memory_space<vmem>>, %arg3: memref<128x64xbf16, #tpu.memory_space<vmem>>, %arg4: memref<512x32xbf16, #tpu.memory_space<vmem>>, %arg5: memref<256x256xbf16, #tpu.memory_space<vmem>>, %arg6: memref<1x256xf32, #tpu.memory_space<vmem>>, %arg7: memref<64x128xbf16, #tpu.memory_space<vmem>>, %arg8: memref<1x128xf32, #tpu.memory_space<vmem>>, %arg9: memref<32x64xbf16, #tpu.memory_space<vmem>>, %arg10: memref<1x64xf32, #tpu.memory_space<vmem>>, %arg11: memref<768x1024xbf16, #tpu.memory_space<vmem>>, %arg12: memref<1x1024xf32, #tpu.memory_space<vmem>>, %arg13: memref<384x512xbf16, #tpu.memory_space<vmem>>, %arg14: memref<1x512xf32, #tpu.memory_space<vmem>>, %arg15: memref<192x256xbf16, #tpu.memory_space<vmem>>, %arg16: memref<1x256xf32, #tpu.memory_space<vmem>>, %arg17: memref<256x12xbf16, #tpu.memory_space<vmem>>, %arg18: memref<1x12xf32, #tpu.memory_space<vmem>>, %arg19: memref<12x12xf32, #tpu.memory_space<vmem>>, %arg20: memref<512x12xf32, #tpu.memory_space<vmem>>, %arg21: memref<32x768xbf16, #tpu.memory_space<vmem>>, %arg22: memref<128x384xbf16, #tpu.memory_space<vmem>>, %arg23: memref<512x192xbf16, #tpu.memory_space<vmem>>) attributes {dimension_semantics = [#tpu.dimension_semantics<arbitrary>], iteration_bounds = array<i64: 1>, scalar_prefetch = 0 : i64, scratch_operands = 3 : i64, tpu.core_type = #tpu.core_type<tc>, window_params = [{pipeline_mode = #tpu.pipeline_mode<synchronous>, transform_indices = @transform_0, window_bounds = array<i64: 32, 512>}, {pipeline_mode = #tpu.pipeline_mode<synchronous>, transform_indices = @transform_1, window_bounds = array<i64: 32, 256>}, {pipeline_mode = #tpu.pipeline_mode<synchronous>, transform_indices = @transform_2, window_bounds = array<i64: 128, 64>}, {pipeline_mode = #tpu.pipeline_mode<synchronous>, transform_indices = @transform_3, window_bounds = array<i64: 512, 32>}, {pipeline_mode = #tpu.pipeline_mode<synchronous>, transform_indices = @transform_4, window_bounds = array<i64: 256, 256>}, {pipeline_mode = #tpu.pipeline_mode<synchronous>, transform_indices = @transform_5, window_bounds = array<i64: 1, 256>}, {pipeline_mode = #tpu.pipeline_mode<synchronous>, transform_indices = @transform_6, window_bounds = array<i64: 64, 128>}, {pipeline_mode = #tpu.pipeline_mode<synchronous>, transform_indices = @transform_7, window_bounds = array<i64: 1, 128>}, {pipeline_mode = #tpu.pipeline_mode<synchronous>, transform_indices = @transform_8, window_bounds = array<i64: 32, 64>}, {pipeline_mode = #tpu.pipeline_mode<synchronous>, transform_indices = @transform_9, window_bounds = array<i64: 1, 64>}, {pipeline_mode = #tpu.pipeline_mode<synchronous>, transform_indices = @transform_10, window_bounds = array<i64: 768, 1024>}, {pipeline_mode = #tpu.pipeline_mode<synchronous>, transform_indices = @transform_11, window_bounds = array<i64: 1, 1024>}, {pipeline_mode = #tpu.pipeline_mode<synchronous>, transform_indices = @transform_12, window_bounds = array<i64: 384, 512>}, {pipeline_mode = #tpu.pipeline_mode<synchronous>, transform_indices = @transform_13, window_bounds = array<i64: 1, 512>}, {pipeline_mode = #tpu.pipeline_mode<synchronous>, transform_indices = @transform_14, window_bounds = array<i64: 192, 256>}, {pipeline_mode = #tpu.pipeline_mode<synchronous>, transform_indices = @transform_15, window_bounds = array<i64: 1, 256>}, {pipeline_mode = #tpu.pipeline_mode<synchronous>, transform_indices = @transform_16, window_bounds = array<i64: 256, 12>}, {pipeline_mode = #tpu.pipeline_mode<synchronous>, transform_indices = @transform_17, window_bounds = array<i64: 1, 12>}, {pipeline_mode = #tpu.pipeline_mode<synchronous>, transform_indices = @transform_18, window_bounds = array<i64: 12, 12>}, {pipeline_mode = #tpu.pipeline_mode<synchronous>, transform_indices = @transform_19, window_bounds = array<i64: 512, 12>}]} {
    %c0 = arith.constant 0 : index
    %c0_0 = arith.constant 0 : index
    %0 = vector.load %arg1[%c0, %c0_0] : memref<32x512xbf16, #tpu.memory_space<vmem>>, vector<32x512xbf16>
    %c0_1 = arith.constant 0 : index
    %c0_2 = arith.constant 0 : index
    %1 = vector.load %arg21[%c0_1, %c0_2] : memref<32x768xbf16, #tpu.memory_space<vmem>>, vector<32x512xbf16>
    tpu.vector_store %arg21[%c0_1, %c0_2], %0 {strides = array<i32>} : memref<32x768xbf16, #tpu.memory_space<vmem>>, vector<32x512xbf16>,
    %c0_3 = arith.constant 0 : index
    %c0_4 = arith.constant 0 : index
    %2 = vector.load %arg2[%c0_3, %c0_4] : memref<32x256xbf16, #tpu.memory_space<vmem>>, vector<32x256xbf16>
    %c0_5 = arith.constant 0 : index
    %c0_6 = arith.constant 0 : index
    %3 = vector.load %arg5[%c0_5, %c0_6] : memref<256x256xbf16, #tpu.memory_space<vmem>>, vector<256x256xbf16>
    %cst = arith.constant dense<0.000000e+00> : vector<32x256xf32>
    %4 = tpu.matmul %2, %3, %cst {dimension_numbers = #tpu.dot_dimension_numbers<[1], [0], [0], [1], [0, 0, 1, 1], [], []>} : vector<32x256xbf16>, vector<256x256xbf16>, vector<32x256xf32> -> vector<32x256xf32>
    %c0_7 = arith.constant 0 : index
    %c0_8 = arith.constant 0 : index
    %5 = vector.load %arg6[%c0_7, %c0_8] : memref<1x256xf32, #tpu.memory_space<vmem>>, vector<1x256xf32>
    %6 = vector.broadcast %5 : vector<1x256xf32> to vector<32x256xf32>
    %7 = arith.addf %4, %6 : vector<32x256xf32>
    %cst_9 = arith.constant 0.000000e+00 : f32
    %8 = vector.broadcast %cst_9 : f32 to vector<32x256xf32>
    %9 = arith.maximumf %7, %8 : vector<32x256xf32>
    %10 = arith.truncf %9 : vector<32x256xf32> to vector<32x256xbf16>
    %c0_10 = arith.constant 0 : index
    %c512 = arith.constant 512 : index
    %11 = vector.load %arg21[%c0_10, %c512] : memref<32x768xbf16, #tpu.memory_space<vmem>>, vector<32x256xbf16>
    tpu.vector_store %arg21[%c0_10, %c512], %10 {strides = array<i32>} : memref<32x768xbf16, #tpu.memory_space<vmem>>, vector<32x256xbf16>,
    %c0_11 = arith.constant 0 : index
    %c0_12 = arith.constant 0 : index
    %12 = vector.load %arg21[%c0_11, %c0_12] : memref<32x768xbf16, #tpu.memory_space<vmem>>, vector<32x768xbf16>
    %c0_13 = arith.constant 0 : index
    %c0_14 = arith.constant 0 : index
    %13 = vector.load %arg11[%c0_13, %c0_14] : memref<768x1024xbf16, #tpu.memory_space<vmem>>, vector<768x1024xbf16>
    %cst_15 = arith.constant dense<0.000000e+00> : vector<32x1024xf32>
    %14 = tpu.matmul %12, %13, %cst_15 {dimension_numbers = #tpu.dot_dimension_numbers<[1], [0], [0], [1], [0, 0, 1, 1], [], []>} : vector<32x768xbf16>, vector<768x1024xbf16>, vector<32x1024xf32> -> vector<32x1024xf32>
    %c0_16 = arith.constant 0 : index
    %c0_17 = arith.constant 0 : index
    %15 = vector.load %arg12[%c0_16, %c0_17] : memref<1x1024xf32, #tpu.memory_space<vmem>>, vector<1x1024xf32>
    %16 = vector.broadcast %15 : vector<1x1024xf32> to vector<32x1024xf32>
    %17 = arith.addf %14, %16 : vector<32x1024xf32>
    %cst_18 = arith.constant 0.000000e+00 : f32
    %18 = vector.broadcast %cst_18 : f32 to vector<32x1024xf32>
    %19 = arith.maximumf %17, %18 : vector<32x1024xf32>
    %20 = vector.extract_strided_slice %19 {offsets = [0, 0], sizes = [32, 256], strides = [1, 1]} : vector<32x1024xf32> to vector<32x256xf32>
    %21 = arith.truncf %20 : vector<32x256xf32> to vector<32x256xbf16>
    %c0_19 = arith.constant 0 : index
    %c0_20 = arith.constant 0 : index
    %22 = vector.load %arg22[%c0_19, %c0_20] : memref<128x384xbf16, #tpu.memory_space<vmem>>, vector<32x256xbf16>
    tpu.vector_store %arg22[%c0_19, %c0_20], %21 {strides = array<i32>} : memref<128x384xbf16, #tpu.memory_space<vmem>>, vector<32x256xbf16>,
    %23 = vector.extract_strided_slice %19 {offsets = [0, 256], sizes = [32, 256], strides = [1, 1]} : vector<32x1024xf32> to vector<32x256xf32>
    %24 = arith.truncf %23 : vector<32x256xf32> to vector<32x256xbf16>
    %c32 = arith.constant 32 : index
    %c0_21 = arith.constant 0 : index
    %25 = vector.load %arg22[%c32, %c0_21] : memref<128x384xbf16, #tpu.memory_space<vmem>>, vector<32x256xbf16>
    tpu.vector_store %arg22[%c32, %c0_21], %24 {strides = array<i32>} : memref<128x384xbf16, #tpu.memory_space<vmem>>, vector<32x256xbf16>,
    %26 = vector.extract_strided_slice %19 {offsets = [0, 512], sizes = [32, 256], strides = [1, 1]} : vector<32x1024xf32> to vector<32x256xf32>
    %27 = arith.truncf %26 : vector<32x256xf32> to vector<32x256xbf16>
    %c64 = arith.constant 64 : index
    %c0_22 = arith.constant 0 : index
    %28 = vector.load %arg22[%c64, %c0_22] : memref<128x384xbf16, #tpu.memory_space<vmem>>, vector<32x256xbf16>
    tpu.vector_store %arg22[%c64, %c0_22], %27 {strides = array<i32>} : memref<128x384xbf16, #tpu.memory_space<vmem>>, vector<32x256xbf16>,
    %29 = vector.extract_strided_slice %19 {offsets = [0, 768], sizes = [32, 256], strides = [1, 1]} : vector<32x1024xf32> to vector<32x256xf32>
    %30 = arith.truncf %29 : vector<32x256xf32> to vector<32x256xbf16>
    %c96 = arith.constant 96 : index
    %c0_23 = arith.constant 0 : index
    %31 = vector.load %arg22[%c96, %c0_23] : memref<128x384xbf16, #tpu.memory_space<vmem>>, vector<32x256xbf16>
    tpu.vector_store %arg22[%c96, %c0_23], %30 {strides = array<i32>} : memref<128x384xbf16, #tpu.memory_space<vmem>>, vector<32x256xbf16>,
    %c0_24 = arith.constant 0 : index
    %c0_25 = arith.constant 0 : index
    %32 = vector.load %arg3[%c0_24, %c0_25] : memref<128x64xbf16, #tpu.memory_space<vmem>>, vector<128x64xbf16>
    %c0_26 = arith.constant 0 : index
    %c0_27 = arith.constant 0 : index
    %33 = vector.load %arg7[%c0_26, %c0_27] : memref<64x128xbf16, #tpu.memory_space<vmem>>, vector<64x128xbf16>
    %cst_28 = arith.constant dense<0.000000e+00> : vector<128x128xf32>
    %34 = tpu.matmul %32, %33, %cst_28 {dimension_numbers = #tpu.dot_dimension_numbers<[1], [0], [0], [1], [0, 0, 1, 1], [], []>} : vector<128x64xbf16>, vector<64x128xbf16>, vector<128x128xf32> -> vector<128x128xf32>
    %c0_29 = arith.constant 0 : index
    %c0_30 = arith.constant 0 : index
    %35 = vector.load %arg8[%c0_29, %c0_30] : memref<1x128xf32, #tpu.memory_space<vmem>>, vector<1x128xf32>
    %36 = vector.broadcast %35 : vector<1x128xf32> to vector<128x128xf32>
    %37 = arith.addf %34, %36 : vector<128x128xf32>
    %cst_31 = arith.constant 0.000000e+00 : f32
    %38 = vector.broadcast %cst_31 : f32 to vector<128x128xf32>
    %39 = arith.maximumf %37, %38 : vector<128x128xf32>
    %40 = arith.truncf %39 : vector<128x128xf32> to vector<128x128xbf16>
    %c0_32 = arith.constant 0 : index
    %c256 = arith.constant 256 : index
    %41 = vector.load %arg22[%c0_32, %c256] : memref<128x384xbf16, #tpu.memory_space<vmem>>, vector<128x128xbf16>
    tpu.vector_store %arg22[%c0_32, %c256], %40 {strides = array<i32>} : memref<128x384xbf16, #tpu.memory_space<vmem>>, vector<128x128xbf16>,
    %c0_33 = arith.constant 0 : index
    %c0_34 = arith.constant 0 : index
    %42 = vector.load %arg22[%c0_33, %c0_34] : memref<128x384xbf16, #tpu.memory_space<vmem>>, vector<128x384xbf16>
    %c0_35 = arith.constant 0 : index
    %c0_36 = arith.constant 0 : index
    %43 = vector.load %arg13[%c0_35, %c0_36] : memref<384x512xbf16, #tpu.memory_space<vmem>>, vector<384x512xbf16>
    %cst_37 = arith.constant dense<0.000000e+00> : vector<128x512xf32>
    %44 = tpu.matmul %42, %43, %cst_37 {dimension_numbers = #tpu.dot_dimension_numbers<[1], [0], [0], [1], [0, 0, 1, 1], [], []>} : vector<128x384xbf16>, vector<384x512xbf16>, vector<128x512xf32> -> vector<128x512xf32>
    %c0_38 = arith.constant 0 : index
    %c0_39 = arith.constant 0 : index
    %45 = vector.load %arg14[%c0_38, %c0_39] : memref<1x512xf32, #tpu.memory_space<vmem>>, vector<1x512xf32>
    %46 = vector.broadcast %45 : vector<1x512xf32> to vector<128x512xf32>
    %47 = arith.addf %44, %46 : vector<128x512xf32>
    %cst_40 = arith.constant 0.000000e+00 : f32
    %48 = vector.broadcast %cst_40 : f32 to vector<128x512xf32>
    %49 = arith.maximumf %47, %48 : vector<128x512xf32>
    %50 = vector.extract_strided_slice %49 {offsets = [0, 0], sizes = [128, 128], strides = [1, 1]} : vector<128x512xf32> to vector<128x128xf32>
    %51 = arith.truncf %50 : vector<128x128xf32> to vector<128x128xbf16>
    %c0_41 = arith.constant 0 : index
    %c0_42 = arith.constant 0 : index
    %52 = vector.load %arg23[%c0_41, %c0_42] : memref<512x192xbf16, #tpu.memory_space<vmem>>, vector<128x128xbf16>
    tpu.vector_store %arg23[%c0_41, %c0_42], %51 {strides = array<i32>} : memref<512x192xbf16, #tpu.memory_space<vmem>>, vector<128x128xbf16>,
    %53 = vector.extract_strided_slice %49 {offsets = [0, 128], sizes = [128, 128], strides = [1, 1]} : vector<128x512xf32> to vector<128x128xf32>
    %54 = arith.truncf %53 : vector<128x128xf32> to vector<128x128xbf16>
    %c128 = arith.constant 128 : index
    %c0_43 = arith.constant 0 : index
    %55 = vector.load %arg23[%c128, %c0_43] : memref<512x192xbf16, #tpu.memory_space<vmem>>, vector<128x128xbf16>
    tpu.vector_store %arg23[%c128, %c0_43], %54 {strides = array<i32>} : memref<512x192xbf16, #tpu.memory_space<vmem>>, vector<128x128xbf16>,
    %56 = vector.extract_strided_slice %49 {offsets = [0, 256], sizes = [128, 128], strides = [1, 1]} : vector<128x512xf32> to vector<128x128xf32>
    %57 = arith.truncf %56 : vector<128x128xf32> to vector<128x128xbf16>
    %c256_44 = arith.constant 256 : index
    %c0_45 = arith.constant 0 : index
    %58 = vector.load %arg23[%c256_44, %c0_45] : memref<512x192xbf16, #tpu.memory_space<vmem>>, vector<128x128xbf16>
    tpu.vector_store %arg23[%c256_44, %c0_45], %57 {strides = array<i32>} : memref<512x192xbf16, #tpu.memory_space<vmem>>, vector<128x128xbf16>,
    %59 = vector.extract_strided_slice %49 {offsets = [0, 384], sizes = [128, 128], strides = [1, 1]} : vector<128x512xf32> to vector<128x128xf32>
    %60 = arith.truncf %59 : vector<128x128xf32> to vector<128x128xbf16>
    %c384 = arith.constant 384 : index
    %c0_46 = arith.constant 0 : index
    %61 = vector.load %arg23[%c384, %c0_46] : memref<512x192xbf16, #tpu.memory_space<vmem>>, vector<128x128xbf16>
    tpu.vector_store %arg23[%c384, %c0_46], %60 {strides = array<i32>} : memref<512x192xbf16, #tpu.memory_space<vmem>>, vector<128x128xbf16>,
    %c0_47 = arith.constant 0 : index
    %c0_48 = arith.constant 0 : index
    %62 = vector.load %arg4[%c0_47, %c0_48] : memref<512x32xbf16, #tpu.memory_space<vmem>>, vector<512x32xbf16>
    %c0_49 = arith.constant 0 : index
    %c0_50 = arith.constant 0 : index
    %63 = vector.load %arg9[%c0_49, %c0_50] : memref<32x64xbf16, #tpu.memory_space<vmem>>, vector<32x64xbf16>
    %cst_51 = arith.constant dense<0.000000e+00> : vector<512x64xf32>
    %64 = tpu.matmul %62, %63, %cst_51 {dimension_numbers = #tpu.dot_dimension_numbers<[1], [0], [0], [1], [0, 0, 1, 1], [], []>} : vector<512x32xbf16>, vector<32x64xbf16>, vector<512x64xf32> -> vector<512x64xf32>
    %c0_52 = arith.constant 0 : index
    %c0_53 = arith.constant 0 : index
    %65 = vector.load %arg10[%c0_52, %c0_53] : memref<1x64xf32, #tpu.memory_space<vmem>>, vector<1x64xf32>
    %66 = vector.broadcast %65 : vector<1x64xf32> to vector<512x64xf32>
    %67 = arith.addf %64, %66 : vector<512x64xf32>
    %cst_54 = arith.constant 0.000000e+00 : f32
    %68 = vector.broadcast %cst_54 : f32 to vector<512x64xf32>
    %69 = arith.maximumf %67, %68 : vector<512x64xf32>
    %70 = arith.truncf %69 : vector<512x64xf32> to vector<512x64xbf16>
    %c0_55 = arith.constant 0 : index
    %c128_56 = arith.constant 128 : index
    %71 = vector.load %arg23[%c0_55, %c128_56] : memref<512x192xbf16, #tpu.memory_space<vmem>>, vector<512x64xbf16>
    tpu.vector_store %arg23[%c0_55, %c128_56], %70 {strides = array<i32>} : memref<512x192xbf16, #tpu.memory_space<vmem>>, vector<512x64xbf16>,
    %c0_57 = arith.constant 0 : index
    %c0_58 = arith.constant 0 : index
    %72 = vector.load %arg23[%c0_57, %c0_58] : memref<512x192xbf16, #tpu.memory_space<vmem>>, vector<512x192xbf16>
    %c0_59 = arith.constant 0 : index
    %c0_60 = arith.constant 0 : index
    %73 = vector.load %arg15[%c0_59, %c0_60] : memref<192x256xbf16, #tpu.memory_space<vmem>>, vector<192x256xbf16>
    %cst_61 = arith.constant dense<0.000000e+00> : vector<512x256xf32>
    %74 = tpu.matmul %72, %73, %cst_61 {dimension_numbers = #tpu.dot_dimension_numbers<[1], [0], [0], [1], [0, 0, 1, 1], [], []>} : vector<512x192xbf16>, vector<192x256xbf16>, vector<512x256xf32> -> vector<512x256xf32>
    %c0_62 = arith.constant 0 : index
    %c0_63 = arith.constant 0 : index
    %75 = vector.load %arg16[%c0_62, %c0_63] : memref<1x256xf32, #tpu.memory_space<vmem>>, vector<1x256xf32>
    %76 = vector.broadcast %75 : vector<1x256xf32> to vector<512x256xf32>
    %77 = arith.addf %74, %76 : vector<512x256xf32>
    %cst_64 = arith.constant 0.000000e+00 : f32
    %78 = vector.broadcast %cst_64 : f32 to vector<512x256xf32>
    %79 = arith.maximumf %77, %78 : vector<512x256xf32>
    %80 = arith.truncf %79 : vector<512x256xf32> to vector<512x256xbf16>
    %c0_65 = arith.constant 0 : index
    %c0_66 = arith.constant 0 : index
    %81 = vector.load %arg17[%c0_65, %c0_66] : memref<256x12xbf16, #tpu.memory_space<vmem>>, vector<256x12xbf16>
    %cst_67 = arith.constant dense<0.000000e+00> : vector<512x12xf32>
    %82 = tpu.matmul %80, %81, %cst_67 {dimension_numbers = #tpu.dot_dimension_numbers<[1], [0], [0], [1], [0, 0, 1, 1], [], []>} : vector<512x256xbf16>, vector<256x12xbf16>, vector<512x12xf32> -> vector<512x12xf32>
    %c0_68 = arith.constant 0 : index
    %c0_69 = arith.constant 0 : index
    %83 = vector.load %arg18[%c0_68, %c0_69] : memref<1x12xf32, #tpu.memory_space<vmem>>, vector<1x12xf32>
    %84 = vector.broadcast %83 : vector<1x12xf32> to vector<512x12xf32>
    %85 = arith.addf %82, %84 : vector<512x12xf32>
    %86 = arith.mulf %85, %85 : vector<512x12xf32>
    %c0_70 = arith.constant 0 : index
    %c0_71 = arith.constant 0 : index
    %87 = vector.load %arg19[%c0_70, %c0_71] : memref<12x12xf32, #tpu.memory_space<vmem>>, vector<12x12xf32>
    %cst_72 = arith.constant dense<0.000000e+00> : vector<512x12xf32>
    %88 = tpu.matmul %86, %87, %cst_72 {dimension_numbers = #tpu.dot_dimension_numbers<[1], [0], [0], [1], [0, 0, 1, 1], [], []>} : vector<512x12xf32>, vector<12x12xf32>, vector<512x12xf32> -> vector<512x12xf32>
    %cst_73 = arith.constant 1.000000e-24 : f32
    %89 = vector.broadcast %cst_73 : f32 to vector<512x12xf32>
    %90 = arith.maximumf %88, %89 : vector<512x12xf32>
    %91 = math.rsqrt %90 : vector<512x12xf32>
    %92 = arith.mulf %85, %91 : vector<512x12xf32>
    %c0_74 = arith.constant 0 : index
    %c0_75 = arith.constant 0 : index
    %93 = vector.load %arg20[%c0_74, %c0_75] : memref<512x12xf32, #tpu.memory_space<vmem>>, vector<512x12xf32>
    tpu.vector_store %arg20[%c0_74, %c0_75], %92 {strides = array<i32>} : memref<512x12xf32, #tpu.memory_space<vmem>>, vector<512x12xf32>,
    return
  }
  func.func @transform_0(%arg0: i32) -> (i32, i32) {
    %c0_i32 = arith.constant 0 : i32
    %c0_i32_0 = arith.constant 0 : i32
    %c0_i32_1 = arith.constant 0 : i32
    return %c0_i32, %c0_i32_0 : i32, i32
  }
  func.func @transform_1(%arg0: i32) -> (i32, i32) {
    %c0_i32 = arith.constant 0 : i32
    %c0_i32_0 = arith.constant 0 : i32
    %c0_i32_1 = arith.constant 0 : i32
    return %c0_i32, %c0_i32_0 : i32, i32
  }
  func.func @transform_2(%arg0: i32) -> (i32, i32) {
    %c0_i32 = arith.constant 0 : i32
    %c0_i32_0 = arith.constant 0 : i32
    %c0_i32_1 = arith.constant 0 : i32
    return %c0_i32, %c0_i32_0 : i32, i32
  }
  func.func @transform_3(%arg0: i32) -> (i32, i32) {
    %c0_i32 = arith.constant 0 : i32
    %c0_i32_0 = arith.constant 0 : i32
    %c0_i32_1 = arith.constant 0 : i32
    return %c0_i32, %c0_i32_0 : i32, i32
  }
  func.func @transform_4(%arg0: i32) -> (i32, i32) {
    %c0_i32 = arith.constant 0 : i32
    %c0_i32_0 = arith.constant 0 : i32
    %c0_i32_1 = arith.constant 0 : i32
    return %c0_i32, %c0_i32_0 : i32, i32
  }
  func.func @transform_5(%arg0: i32) -> (i32, i32) {
    %c0_i32 = arith.constant 0 : i32
    %c0_i32_0 = arith.constant 0 : i32
    %c0_i32_1 = arith.constant 0 : i32
    return %c0_i32, %c0_i32_0 : i32, i32
  }
  func.func @transform_6(%arg0: i32) -> (i32, i32) {
    %c0_i32 = arith.constant 0 : i32
    %c0_i32_0 = arith.constant 0 : i32
    %c0_i32_1 = arith.constant 0 : i32
    return %c0_i32, %c0_i32_0 : i32, i32
  }
  func.func @transform_7(%arg0: i32) -> (i32, i32) {
    %c0_i32 = arith.constant 0 : i32
    %c0_i32_0 = arith.constant 0 : i32
    %c0_i32_1 = arith.constant 0 : i32
    return %c0_i32, %c0_i32_0 : i32, i32
  }
  func.func @transform_8(%arg0: i32) -> (i32, i32) {
    %c0_i32 = arith.constant 0 : i32
    %c0_i32_0 = arith.constant 0 : i32
    %c0_i32_1 = arith.constant 0 : i32
    return %c0_i32, %c0_i32_0 : i32, i32
  }
  func.func @transform_9(%arg0: i32) -> (i32, i32) {
    %c0_i32 = arith.constant 0 : i32
    %c0_i32_0 = arith.constant 0 : i32
    %c0_i32_1 = arith.constant 0 : i32
    return %c0_i32, %c0_i32_0 : i32, i32
  }
  func.func @transform_10(%arg0: i32) -> (i32, i32) {
    %c0_i32 = arith.constant 0 : i32
    %c0_i32_0 = arith.constant 0 : i32
    %c0_i32_1 = arith.constant 0 : i32
    return %c0_i32, %c0_i32_0 : i32, i32
  }
  func.func @transform_11(%arg0: i32) -> (i32, i32) {
    %c0_i32 = arith.constant 0 : i32
    %c0_i32_0 = arith.constant 0 : i32
    %c0_i32_1 = arith.constant 0 : i32
    return %c0_i32, %c0_i32_0 : i32, i32
  }
  func.func @transform_12(%arg0: i32) -> (i32, i32) {
    %c0_i32 = arith.constant 0 : i32
    %c0_i32_0 = arith.constant 0 : i32
    %c0_i32_1 = arith.constant 0 : i32
    return %c0_i32, %c0_i32_0 : i32, i32
  }
  func.func @transform_13(%arg0: i32) -> (i32, i32) {
    %c0_i32 = arith.constant 0 : i32
    %c0_i32_0 = arith.constant 0 : i32
    %c0_i32_1 = arith.constant 0 : i32
    return %c0_i32, %c0_i32_0 : i32, i32
  }
  func.func @transform_14(%arg0: i32) -> (i32, i32) {
    %c0_i32 = arith.constant 0 : i32
    %c0_i32_0 = arith.constant 0 : i32
    %c0_i32_1 = arith.constant 0 : i32
    return %c0_i32, %c0_i32_0 : i32, i32
  }
  func.func @transform_15(%arg0: i32) -> (i32, i32) {
    %c0_i32 = arith.constant 0 : i32
    %c0_i32_0 = arith.constant 0 : i32
    %c0_i32_1 = arith.constant 0 : i32
    return %c0_i32, %c0_i32_0 : i32, i32
  }
  func.func @transform_16(%arg0: i32) -> (i32, i32) {
    %c0_i32 = arith.constant 0 : i32
    %c0_i32_0 = arith.constant 0 : i32
    %c0_i32_1 = arith.constant 0 : i32
    return %c0_i32, %c0_i32_0 : i32, i32
  }
  func.func @transform_17(%arg0: i32) -> (i32, i32) {
    %c0_i32 = arith.constant 0 : i32
    %c0_i32_0 = arith.constant 0 : i32
    %c0_i32_1 = arith.constant 0 : i32
    return %c0_i32, %c0_i32_0 : i32, i32
  }
  func.func @transform_18(%arg0: i32) -> (i32, i32) {
    %c0_i32 = arith.constant 0 : i32
    %c0_i32_0 = arith.constant 0 : i32
    %c0_i32_1 = arith.constant 0 : i32
    return %c0_i32, %c0_i32_0 : i32, i32
  }
  func.func @transform_19(%arg0: i32) -> (i32, i32) {
    %c0_i32 = arith.constant 0 : i32
    %c0_i32_0 = arith.constant 0 : i32
    %c0_i32_1 = arith.constant 0 : i32
    return %c0_i32, %c0_i32_0 : i32, i32
  }
}

</mosaic_0001>

<llo_original>
// kernel: decoder_forward.1
$region0: #{decoder_forward.1}
  #allocation0 [shape = 'u32[]', space=smem, size = 0x4, offset = 0x4, fixed_abs, tag = 'smem constant byte address 0x4 - core index']
  #allocation1 [shape = 'u32[144,128]{1,0:T(1,128)}', space=vmem, size = 0x12000, scoped, tag = 'internal scratch']
  #allocation2 [shape = 'bf16[32,768]{1,0:T(16,128)(2,1)}', space=vmem, size = 0xc000, scoped, tag = 'scratch operand']
  #allocation3 [shape = 'bf16[128,384]{1,0:T(16,128)(2,1)}', space=vmem, size = 0x18000, scoped, tag = 'scratch operand']
  #allocation4 [shape = 'bf16[512,192]{1,0:T(16,128)(2,1)}', space=vmem, size = 0x40000, scoped, tag = 'scratch operand']
  %s0 = inlined_call_operand.vmem [shape: bf16[32,512], index: 0, kind: input, shape index: {}]
  %s1 = inlined_call_operand.vmem [shape: bf16[32,256], index: 1, kind: input, shape index: {}]
  %s2 = inlined_call_operand.vmem [shape: bf16[128,64], index: 2, kind: input, shape index: {}]
  %s3 = inlined_call_operand.vmem [shape: bf16[512,32], index: 3, kind: input, shape index: {}]
  %s4 = inlined_call_operand.hbm [shape: bf16[256,256], index: 4, kind: input, shape index: {}]
  %s5 = inlined_call_operand.hbm [shape: f32[1,256], index: 5, kind: input, shape index: {}]
  %s6 = inlined_call_operand.hbm [shape: bf16[64,128], index: 6, kind: input, shape index: {}]
  %s7 = inlined_call_operand.hbm [shape: f32[1,128], index: 7, kind: input, shape index: {}]
  %s8 = inlined_call_operand.hbm [shape: bf16[32,64], index: 8, kind: input, shape index: {}]
  %s9 = inlined_call_operand.hbm [shape: f32[1,64], index: 9, kind: input, shape index: {}]
  %s10 = inlined_call_operand.hbm [shape: bf16[768,1024], index: 10, kind: input, shape index: {}]
  %s11 = inlined_call_operand.hbm [shape: f32[1,1024], index: 11, kind: input, shape index: {}]
  %s12 = inlined_call_operand.hbm [shape: bf16[384,512], index: 12, kind: input, shape index: {}]
  %s13 = inlined_call_operand.hbm [shape: f32[1,512], index: 13, kind: input, shape index: {}]
  %s14 = inlined_call_operand.hbm [shape: bf16[192,256], index: 14, kind: input, shape index: {}]
  %s15 = inlined_call_operand.hbm [shape: f32[1,256], index: 15, kind: input, shape index: {}]
  %s16 = inlined_call_operand.vmem [shape: bf16[256,12], index: 16, kind: input, shape index: {}]
  %s17 = inlined_call_operand.hbm [shape: f32[1,12], index: 17, kind: input, shape index: {}]
  %s18 = inlined_call_operand.hbm [shape: f32[12,12], index: 18, kind: input, shape index: {}]
  %s19 = inlined_call_operand.vmem [shape: f32[512,12], index: 19, kind: output, shape index: {}]
  %s20 = sld [smem:[#allocation0]]
  $region142: #{decoder_forward.1} parent=0
    _
  %s22 = ssub.s32 1, %s20
  %s23 = scalar_select 0, %s22, %s20
  $region1: #{decoder_forward.1} parent=0
    #allocation5 [shape = 'u8[131072]{0}', space=vmem, size = 0x20000, scoped, tag = 'input window, operand 4, single buffered']
    #allocation6 [shape = 's32[1]{0}', space=sflag, size = 0x4, scoped, tag = 'scoped memory for decoder_forward.1']
    #allocation7 [shape = 'u8[1024]{0}', space=vmem, size = 0x400, scoped, tag = 'input window, operand 5, single buffered']
    #allocation8 [shape = 's32[1]{0}', space=sflag, size = 0x4, scoped, tag = 'scoped memory for decoder_forward.1']
    #allocation9 [shape = 'u8[16384]{0}', space=vmem, size = 0x4000, scoped, tag = 'input window, operand 6, single buffered']
    #allocation10 [shape = 'u8[512]{0}', space=vmem, size = 0x400, scoped, tag = 'input window, operand 7, single buffered']
    #allocation11 [shape = 's32[1]{0}', space=sflag, size = 0x4, scoped, tag = 'scoped memory for decoder_forward.1']
    #allocation12 [shape = 'u8[8192]{0}', space=vmem, size = 0x2000, scoped, tag = 'input window, operand 8, single buffered']
    #allocation13 [shape = 'u8[512]{0}', space=vmem, size = 0x400, scoped, tag = 'input window, operand 9, single buffered']
    #allocation14 [shape = 's32[1]{0}', space=sflag, size = 0x4, scoped, tag = 'scoped memory for decoder_forward.1']
    #allocation15 [shape = 'u8[1572864]{0}', space=vmem, size = 0x180000, scoped, tag = 'input window, operand 10, single buffered']
    #allocation16 [shape = 'u8[4096]{0}', space=vmem, size = 0x1000, scoped, tag = 'input window, operand 11, single buffered']
    #allocation17 [shape = 's32[1]{0}', space=sflag, size = 0x4, scoped, tag = 'scoped memory for decoder_forward.1']
    #allocation18 [shape = 'u8[393216]{0}', space=vmem, size = 0x60000, scoped, tag = 'input window, operand 12, single buffered']
    #allocation19 [shape = 'u8[2048]{0}', space=vmem, size = 0x800, scoped, tag = 'input window, operand 13, single buffered']
    #allocation20 [shape = 's32[1]{0}', space=sflag, size = 0x4, scoped, tag = 'scoped memory for decoder_forward.1']
    #allocation21 [shape = 'u8[98304]{0}', space=vmem, size = 0x18000, scoped, tag = 'input window, operand 14, single buffered']
    #allocation22 [shape = 'u8[1024]{0}', space=vmem, size = 0x400, scoped, tag = 'input window, operand 15, single buffered']
    #allocation23 [shape = 's32[1]{0}', space=sflag, size = 0x4, scoped, tag = 'scoped memory for decoder_forward.1']
    #allocation24 [shape = 'u8[512]{0}', space=vmem, size = 0x400, scoped, tag = 'input window, operand 17, single buffered']
    #allocation25 [shape = 'u8[8192]{0}', space=vmem, size = 0x2000, scoped, tag = 'input window, operand 18, single buffered']
    #allocation26 [shape = 's32[1]{0}', space=sflag, size = 0x4, scoped, tag = 'scoped memory for decoder_forward.1']
    %24 = vsyncpa [#allocation6], 0
    %25 = vsyncpa [#allocation8], 0
    %26 = vsyncpa [#allocation11], 0
    %27 = vsyncpa [#allocation14], 0
    %28 = vsyncpa [#allocation17], 0
    %29 = vsyncpa [#allocation20], 0
    %30 = vsyncpa [#allocation23], 0
    %31 = vsyncpa [#allocation26], 0
    // Predicated region
    $region2: #{decoder_forward.1} parent=1 // pred_check
      _
    $region3: #{decoder_forward.1} parent=1 // pred_check_branch
      %33 = sbr.rel (0) target = $region5
    $region4: #{decoder_forward.1} parent=1 // pred_region
      _
    $region5: #{decoder_forward.1} parent=1 // pred_fallthru
      _
    // Predicated region
    $region6: #{decoder_forward.1} parent=1 // pred_check
      _
    $region7: #{decoder_forward.1} parent=1 // pred_check_branch
      %35 = sbr.rel (0) target = $region9
    $region8: #{decoder_forward.1} parent=1 // pred_region
      _
    $region9: #{decoder_forward.1} parent=1 // pred_fallthru
      _
    // Predicated region
    $region10: #{decoder_forward.1} parent=1 // pred_check
      _
    $region11: #{decoder_forward.1} parent=1 // pred_check_branch
      %37 = sbr.rel (0) target = $region13
    $region12: #{decoder_forward.1} parent=1 // pred_region
      _
    $region13: #{decoder_forward.1} parent=1 // pred_fallthru
      _
    // Predicated region
    $region14: #{decoder_forward.1} parent=1 // pred_check
      _
    $region15: #{decoder_forward.1} parent=1 // pred_check_branch
      %39 = sbr.rel (0) target = $region17
    $region16: #{decoder_forward.1} parent=1 // pred_region
      _
    $region17: #{decoder_forward.1} parent=1 // pred_fallthru
      _
    // Predicated region
    $region18: #{decoder_forward.1} parent=1 // pred_check
      _
    $region19: #{decoder_forward.1} parent=1 // pred_check_branch
      %41 = sbr.rel (0) target = $region21
    $region20: #{decoder_forward.1} parent=1 // pred_region
      %s43 = ssub.s32 4096, 4096
      %44 = vsyncadd [#allocation6], %s43
      %s45 = sshll.u32 [#allocation5], 4
      %s46 = int_to_ptr.vmem [resolvable:$true] %s45
      %51 = dma.hbm_to_vmem [thread:$0]  %s4, 4096, %s46, [#allocation6], 128, 128, 8
    $region21: #{decoder_forward.1} parent=1 // pred_fallthru
      _
    // Predicated region
    $region22: #{decoder_forward.1} parent=1 // pred_check
      _
    $region23: #{decoder_forward.1} parent=1 // pred_check_branch
      %53 = sbr.rel (0) target = $region25
    $region24: #{decoder_forward.1} parent=1 // pred_region
      %s55 = ssub.s32 32, 32
      %56 = vsyncadd [#allocation8], %s55
      %s58 = sshll.u32 [#allocation7], 4
      %s59 = int_to_ptr.vmem [resolvable:$true] %s58
      %61 = dma.hbm_to_vmem [thread:$0]  %s5, 32, %s59, [#allocation8]
    $region25: #{decoder_forward.1} parent=1 // pred_fallthru
      _
    // Predicated region
    $region26: #{decoder_forward.1} parent=1 // pred_check
      _
    $region27: #{decoder_forward.1} parent=1 // pred_check_branch
      %63 = sbr.rel (0) target = $region29
    $region28: #{decoder_forward.1} parent=1 // pred_region
      %s65 = ssub.s32 512, 512
      %66 = vsyncadd [#allocation8], %s65
      %s67 = sshll.u32 [#allocation9], 4
      %s68 = int_to_ptr.vmem [resolvable:$true] %s67
      %73 = dma.hbm_to_vmem [thread:$0]  %s6, 512, %s68, [#allocation8], 64, 64, 4
    $region29: #{decoder_forward.1} parent=1 // pred_fallthru
      _
    // Predicated region
    $region30: #{decoder_forward.1} parent=1 // pred_check
      _
    $region31: #{decoder_forward.1} parent=1 // pred_check_branch
      %75 = sbr.rel (0) target = $region33
    $region32: #{decoder_forward.1} parent=1 // pred_region
      %s77 = ssub.s32 16, 16
      %78 = vsyncadd [#allocation11], %s77
      %s80 = sshll.u32 [#allocation10], 4
      %s81 = int_to_ptr.vmem [resolvable:$true] %s80
      %83 = dma.hbm_to_vmem [thread:$0]  %s7, 16, %s81, [#allocation11]
    $region33: #{decoder_forward.1} parent=1 // pred_fallthru
      _
    // Predicated region
    $region34: #{decoder_forward.1} parent=1 // pred_check
      _
    $region35: #{decoder_forward.1} parent=1 // pred_check_branch
      %85 = sbr.rel (0) target = $region37
    $region36: #{decoder_forward.1} parent=1 // pred_region
      %s87 = ssub.s32 256, 256
      %88 = vsyncadd [#allocation11], %s87
      %s89 = sshll.u32 [#allocation12], 4
      %s90 = int_to_ptr.vmem [resolvable:$true] %s89
      %95 = dma.hbm_to_vmem [thread:$0]  %s8, 256, %s90, [#allocation11], 64, 64, 4
    $region37: #{decoder_forward.1} parent=1 // pred_fallthru
      _
    // Predicated region
    $region38: #{decoder_forward.1} parent=1 // pred_check
      _
    $region39: #{decoder_forward.1} parent=1 // pred_check_branch
      %97 = sbr.rel (0) target = $region41
    $region40: #{decoder_forward.1} parent=1 // pred_region
      %s99 = ssub.s32 16, 16
      %100 = vsyncadd [#allocation14], %s99
      %s102 = sshll.u32 [#allocation13], 4
      %s103 = int_to_ptr.vmem [resolvable:$true] %s102
      %105 = dma.hbm_to_vmem [thread:$0]  %s9, 16, %s103, [#allocation14]
    $region41: #{decoder_forward.1} parent=1 // pred_fallthru
      _
    // Predicated region
    $region42: #{decoder_forward.1} parent=1 // pred_check
      _
    $region43: #{decoder_forward.1} parent=1 // pred_check_branch
      %107 = sbr.rel (0) target = $region45
    $region44: #{decoder_forward.1} parent=1 // pred_region
      %s109 = ssub.s32 49152, 49152
      %110 = vsyncadd [#allocation14], %s109
      %s111 = sshll.u32 [#allocation15], 4
      %s112 = int_to_ptr.vmem [resolvable:$true] %s111
      %117 = dma.hbm_to_vmem [thread:$0]  %s10, 49152, %s112, [#allocation14], 512, 512, 32
    $region45: #{decoder_forward.1} parent=1 // pred_fallthru
      _
    // Predicated region
    $region46: #{decoder_forward.1} parent=1 // pred_check
      _
    $region47: #{decoder_forward.1} parent=1 // pred_check_branch
      %119 = sbr.rel (0) target = $region49
    $region48: #{decoder_forward.1} parent=1 // pred_region
      %s121 = ssub.s32 128, 128
      %122 = vsyncadd [#allocation17], %s121
      %s124 = sshll.u32 [#allocation16], 4
      %s125 = int_to_ptr.vmem [resolvable:$true] %s124
      %127 = dma.hbm_to_vmem [thread:$0]  %s11, 128, %s125, [#allocation17]
    $region49: #{decoder_forward.1} parent=1 // pred_fallthru
      _
    // Predicated region
    $region50: #{decoder_forward.1} parent=1 // pred_check
      _
    $region51: #{decoder_forward.1} parent=1 // pred_check_branch
      %129 = sbr.rel (0) target = $region53
    $region52: #{decoder_forward.1} parent=1 // pred_region
      %s131 = ssub.s32 12288, 12288
      %132 = vsyncadd [#allocation17], %s131
      %s133 = sshll.u32 [#allocation18], 4
      %s134 = int_to_ptr.vmem [resolvable:$true] %s133
      %139 = dma.hbm_to_vmem [thread:$0]  %s12, 12288, %s134, [#allocation17], 256, 256, 16
    $region53: #{decoder_forward.1} parent=1 // pred_fallthru
      _
    // Predicated region
    $region54: #{decoder_forward.1} parent=1 // pred_check
      _
    $region55: #{decoder_forward.1} parent=1 // pred_check_branch
      %141 = sbr.rel (0) target = $region57
    $region56: #{decoder_forward.1} parent=1 // pred_region
      %s143 = ssub.s32 64, 64
      %144 = vsyncadd [#allocation20], %s143
      %s146 = sshll.u32 [#allocation19], 4
      %s147 = int_to_ptr.vmem [resolvable:$true] %s146
      %149 = dma.hbm_to_vmem [thread:$0]  %s13, 64, %s147, [#allocation20]
    $region57: #{decoder_forward.1} parent=1 // pred_fallthru
      _
    // Predicated region
    $region58: #{decoder_forward.1} parent=1 // pred_check
      _
    $region59: #{decoder_forward.1} parent=1 // pred_check_branch
      %151 = sbr.rel (0) target = $region61
    $region60: #{decoder_forward.1} parent=1 // pred_region
      %s153 = ssub.s32 3072, 3072
      %154 = vsyncadd [#allocation20], %s153
      %s155 = sshll.u32 [#allocation21], 4
      %s156 = int_to_ptr.vmem [resolvable:$true] %s155
      %161 = dma.hbm_to_vmem [thread:$0]  %s14, 3072, %s156, [#allocation20], 128, 128, 8
    $region61: #{decoder_forward.1} parent=1 // pred_fallthru
      _
    // Predicated region
    $region62: #{decoder_forward.1} parent=1 // pred_check
      _
    $region63: #{decoder_forward.1} parent=1 // pred_check_branch
      %163 = sbr.rel (0) target = $region65
    $region64: #{decoder_forward.1} parent=1 // pred_region
      %s165 = ssub.s32 32, 32
      %166 = vsyncadd [#allocation23], %s165
      %s168 = sshll.u32 [#allocation22], 4
      %s169 = int_to_ptr.vmem [resolvable:$true] %s168
      %171 = dma.hbm_to_vmem [thread:$0]  %s15, 32, %s169, [#allocation23]
    $region65: #{decoder_forward.1} parent=1 // pred_fallthru
      _
    // Predicated region
    $region66: #{decoder_forward.1} parent=1 // pred_check
      _
    $region67: #{decoder_forward.1} parent=1 // pred_check_branch
      %173 = sbr.rel (0) target = $region69
    $region68: #{decoder_forward.1} parent=1 // pred_region
      _
    $region69: #{decoder_forward.1} parent=1 // pred_fallthru
      _
    // Predicated region
    $region70: #{decoder_forward.1} parent=1 // pred_check
      _
    $region71: #{decoder_forward.1} parent=1 // pred_check_branch
      %175 = sbr.rel (0) target = $region73
    $region72: #{decoder_forward.1} parent=1 // pred_region
      %s177 = ssub.s32 16, 16
      %178 = vsyncadd [#allocation23], %s177
      %s180 = sshll.u32 [#allocation24], 4
      %s181 = int_to_ptr.vmem [resolvable:$true] %s180
      %183 = dma.hbm_to_vmem [thread:$0]  %s17, 16, %s181, [#allocation23]
    $region73: #{decoder_forward.1} parent=1 // pred_fallthru
      _
    // Predicated region
    $region74: #{decoder_forward.1} parent=1 // pred_check
      _
    $region75: #{decoder_forward.1} parent=1 // pred_check_branch
      %185 = sbr.rel (0) target = $region77
    $region76: #{decoder_forward.1} parent=1 // pred_region
      %s187 = ssub.s32 256, 256
      %188 = vsyncadd [#allocation26], %s187
      %s189 = sshll.u32 [#allocation25], 4
      %s190 = int_to_ptr.vmem [resolvable:$true] %s189
      %195 = dma.hbm_to_vmem [thread:$0]  %s18, 256, %s190, [#allocation26], 128, 128, 8
    $region77: #{decoder_forward.1} parent=1 // pred_fallthru
      _
    // Predicated region
    $region78: #{decoder_forward.1} parent=1 // pred_check
      _
    $region79: #{decoder_forward.1} parent=1 // pred_check_branch
      %197 = sbr.rel (0) target = $region81
    $region80: #{decoder_forward.1} parent=1 // pred_region
      %198 = dma.done [#allocation6], 4096
    $region81: #{decoder_forward.1} parent=1 // pred_fallthru
      _
    // Predicated region
    $region82: #{decoder_forward.1} parent=1 // pred_check
      _
    $region83: #{decoder_forward.1} parent=1 // pred_check_branch
      %200 = sbr.rel (0) target = $region85
    $region84: #{decoder_forward.1} parent=1 // pred_region
      %201 = dma.done [#allocation8], 32
    $region85: #{decoder_forward.1} parent=1 // pred_fallthru
      _
    // Predicated region
    $region86: #{decoder_forward.1} parent=1 // pred_check
      _
    $region87: #{decoder_forward.1} parent=1 // pred_check_branch
      %203 = sbr.rel (0) target = $region89
    $region88: #{decoder_forward.1} parent=1 // pred_region
      %204 = dma.done [#allocation8], 512
    $region89: #{decoder_forward.1} parent=1 // pred_fallthru
      _
    // Predicated region
    $region90: #{decoder_forward.1} parent=1 // pred_check
      _
    $region91: #{decoder_forward.1} parent=1 // pred_check_branch
      %206 = sbr.rel (0) target = $region93
    $region92: #{decoder_forward.1} parent=1 // pred_region
      %207 = dma.done [#allocation11], 16
    $region93: #{decoder_forward.1} parent=1 // pred_fallthru
      _
    // Predicated region
    $region94: #{decoder_forward.1} parent=1 // pred_check
      _
    $region95: #{decoder_forward.1} parent=1 // pred_check_branch
      %209 = sbr.rel (0) target = $region97
    $region96: #{decoder_forward.1} parent=1 // pred_region
      %210 = dma.done [#allocation11], 256
    $region97: #{decoder_forward.1} parent=1 // pred_fallthru
      _
    // Predicated region
    $region98: #{decoder_forward.1} parent=1 // pred_check
      _
    $region99: #{decoder_forward.1} parent=1 // pred_check_branch
      %212 = sbr.rel (0) target = $region101
    $region100: #{decoder_forward.1} parent=1 // pred_region
      %213 = dma.done [#allocation14], 16
    $region101: #{decoder_forward.1} parent=1 // pred_fallthru
      _
    // Predicated region
    $region102: #{decoder_forward.1} parent=1 // pred_check
      _
    $region103: #{decoder_forward.1} parent=1 // pred_check_branch
      %215 = sbr.rel (0) target = $region105
    $region104: #{decoder_forward.1} parent=1 // pred_region
      %216 = dma.done [#allocation14], 49152
    $region105: #{decoder_forward.1} parent=1 // pred_fallthru
      _
    // Predicated region
    $region106: #{decoder_forward.1} parent=1 // pred_check
      _
    $region107: #{decoder_forward.1} parent=1 // pred_check_branch
      %218 = sbr.rel (0) target = $region109
    $region108: #{decoder_forward.1} parent=1 // pred_region
      %219 = dma.done [#allocation17], 128
    $region109: #{decoder_forward.1} parent=1 // pred_fallthru
      _
    // Predicated region
    $region110: #{decoder_forward.1} parent=1 // pred_check
      _
    $region111: #{decoder_forward.1} parent=1 // pred_check_branch
      %221 = sbr.rel (0) target = $region113
    $region112: #{decoder_forward.1} parent=1 // pred_region
      %222 = dma.done [#allocation17], 12288
    $region113: #{decoder_forward.1} parent=1 // pred_fallthru
      _
    // Predicated region
    $region114: #{decoder_forward.1} parent=1 // pred_check
      _
    $region115: #{decoder_forward.1} parent=1 // pred_check_branch
      %224 = sbr.rel (0) target = $region117
    $region116: #{decoder_forward.1} parent=1 // pred_region
      %225 = dma.done [#allocation20], 64
    $region117: #{decoder_forward.1} parent=1 // pred_fallthru
      _
    // Predicated region
    $region118: #{decoder_forward.1} parent=1 // pred_check
      _
    $region119: #{decoder_forward.1} parent=1 // pred_check_branch
      %227 = sbr.rel (0) target = $region121
    $region120: #{decoder_forward.1} parent=1 // pred_region
      %228 = dma.done [#allocation20], 3072
    $region121: #{decoder_forward.1} parent=1 // pred_fallthru
      _
    // Predicated region
    $region122: #{decoder_forward.1} parent=1 // pred_check
      _
    $region123: #{decoder_forward.1} parent=1 // pred_check_branch
      %230 = sbr.rel (0) target = $region125
    $region124: #{decoder_forward.1} parent=1 // pred_region
      %231 = dma.done [#allocation23], 32
    $region125: #{decoder_forward.1} parent=1 // pred_fallthru
      _
    // Predicated region
    $region126: #{decoder_forward.1} parent=1 // pred_check
      _
    $region127: #{decoder_forward.1} parent=1 // pred_check_branch
      %233 = sbr.rel (0) target = $region129
    $region128: #{decoder_forward.1} parent=1 // pred_region
      %234 = dma.done [#allocation23], 16
    $region129: #{decoder_forward.1} parent=1 // pred_fallthru
      _
    // Predicated region
    $region130: #{decoder_forward.1} parent=1 // pred_check
      _
    $region131: #{decoder_forward.1} parent=1 // pred_check_branch
      %236 = sbr.rel (0) target = $region133
    $region132: #{decoder_forward.1} parent=1 // pred_region
      %237 = dma.done [#allocation26], 256
    $region133: #{decoder_forward.1} parent=1 // pred_fallthru
      _
    %v239 = vld [vmem:[%s0] sm:$0xff]
    %v240 = vld [vmem:[%s0 + $0x8] sm:$0xff]
    %v241 = vld [vmem:[%s0 + $0x10] sm:$0xff]
    %v242 = vld [vmem:[%s0 + $0x18] sm:$0xff]
    %v243 = vld [vmem:[%s0 + $0x20] sm:$0xff]
    %v244 = vld [vmem:[%s0 + $0x28] sm:$0xff]
    %v245 = vld [vmem:[%s0 + $0x30] sm:$0xff]
    %v246 = vld [vmem:[%s0 + $0x38] sm:$0xff]
    %v255 = vunpack.c.l.b16 %v239
    %v256 = vunpack.c.h.b16 %v239
    %v257 = vunpack.c.l.b16 %v240
    %v258 = vunpack.c.h.b16 %v240
    %v259 = vunpack.c.l.b16 %v241
    %v260 = vunpack.c.h.b16 %v241
    %v261 = vunpack.c.l.b16 %v242
    %v262 = vunpack.c.h.b16 %v242
    %v263 = vunpack.c.l.b16 %v243
    %v264 = vunpack.c.h.b16 %v243
    %v265 = vunpack.c.l.b16 %v244
    %v266 = vunpack.c.h.b16 %v244
    %v267 = vunpack.c.l.b16 %v245
    %v268 = vunpack.c.h.b16 %v245
    %v269 = vunpack.c.l.b16 %v246
    %v270 = vunpack.c.h.b16 %v246
    %v271 = vpack.c.b16 %v259, %v255
    %v272 = vpack.c.b16 %v260, %v256
    %v273 = vpack.c.b16 %v261, %v257
    %v274 = vpack.c.b16 %v262, %v258
    %v275 = vpack.c.b16 %v267, %v263
    %v276 = vpack.c.b16 %v268, %v264
    %v277 = vpack.c.b16 %v269, %v265
    %v278 = vpack.c.b16 %v270, %v266
    %287 = vst [vmem:[#allocation2] sm:$0xff] %v271
    %288 = vst [vmem:[#allocation2 + $0x8] sm:$0xff] %v272
    %289 = vst [vmem:[#allocation2 + $0x10] sm:$0xff] %v273
    %290 = vst [vmem:[#allocation2 + $0x18] sm:$0xff] %v274
    %291 = vst [vmem:[#allocation2 + $0x30] sm:$0xff] %v275
    %292 = vst [vmem:[#allocation2 + $0x38] sm:$0xff] %v276
    %293 = vst [vmem:[#allocation2 + $0x40] sm:$0xff] %v277
    %294 = vst [vmem:[#allocation2 + $0x48] sm:$0xff] %v278
    %v295 = vld [vmem:[%s1] sm:$0xff]
    %v296 = vld [vmem:[%s1 + $0x8] sm:$0xff]
    %v297 = vld [vmem:[%s1 + $0x10] sm:$0xff]
    %v298 = vld [vmem:[%s1 + $0x18] sm:$0xff]
    %v299 = vld [vmem:[#allocation5] sm:$0xff]
    %v300 = vld [vmem:[#allocation5 + $0x8] sm:$0xff]
    %v301 = vld [vmem:[#allocation5 + $0x10] sm:$0xff]
    %v302 = vld [vmem:[#allocation5 + $0x18] sm:$0xff]
    %v303 = vld [vmem:[#allocation5 + $0x20] sm:$0xff]
    %v304 = vld [vmem:[#allocation5 + $0x28] sm:$0xff]
    %v305 = vld [vmem:[#allocation5 + $0x30] sm:$0xff]
    %v306 = vld [vmem:[#allocation5 + $0x38] sm:$0xff]
    %v307 = vld [vmem:[#allocation5 + $0x40] sm:$0xff]
    %v308 = vld [vmem:[#allocation5 + $0x48] sm:$0xff]
    %v309 = vld [vmem:[#allocation5 + $0x50] sm:$0xff]
    %v310 = vld [vmem:[#allocation5 + $0x58] sm:$0xff]
    %v311 = vld [vmem:[#allocation5 + $0x60] sm:$0xff]
    %v312 = vld [vmem:[#allocation5 + $0x68] sm:$0xff]
    %v313 = vld [vmem:[#allocation5 + $0x70] sm:$0xff]
    %v314 = vld [vmem:[#allocation5 + $0x78] sm:$0xff]
    %v315 = vld [vmem:[#allocation5 + $0x80] sm:$0xff]
    %v316 = vld [vmem:[#allocation5 + $0x88] sm:$0xff]
    %v317 = vld [vmem:[#allocation5 + $0x90] sm:$0xff]
    %v318 = vld [vmem:[#allocation5 + $0x98] sm:$0xff]
    %v319 = vld [vmem:[#allocation5 + $0xa0] sm:$0xff]
    %v320 = vld [vmem:[#allocation5 + $0xa8] sm:$0xff]
    %v321 = vld [vmem:[#allocation5 + $0xb0] sm:$0xff]
    %v322 = vld [vmem:[#allocation5 + $0xb8] sm:$0xff]
    %v323 = vld [vmem:[#allocation5 + $0xc0] sm:$0xff]
    %v324 = vld [vmem:[#allocation5 + $0xc8] sm:$0xff]
    %v325 = vld [vmem:[#allocation5 + $0xd0] sm:$0xff]
    %v326 = vld [vmem:[#allocation5 + $0xd8] sm:$0xff]
    %v327 = vld [vmem:[#allocation5 + $0xe0] sm:$0xff]
    %v328 = vld [vmem:[#allocation5 + $0xe8] sm:$0xff]
    %v329 = vld [vmem:[#allocation5 + $0xf0] sm:$0xff]
    %v330 = vld [vmem:[#allocation5 + $0xf8] sm:$0xff]
    %v331 = vld [vmem:[#allocation7] sm:$0x3]
    %v333 = vlaneseq
    %v334 = vshrl.u32 %v333, 7
    %v335 = vsub.s32 0, %v334
    %v336 = vrot.slane %v331, %v335
    %v337 = vlaneseq
    %v338 = vshrl.u32 %v337, 7
    %v339 = vsub.s32 1, %v338
    %v340 = vrot.slane %v331, %v339
    %v347 = vunpack.c.l.b16 %v295
    %v348 = vunpack.c.h.b16 %v295
    %v349 = vunpack.c.l.b16 %v296
    %v350 = vunpack.c.h.b16 %v296
    %v351 = vunpack.c.l.b16 %v297
    %v352 = vunpack.c.h.b16 %v297
    %v353 = vunpack.c.l.b16 %v298
    %v354 = vunpack.c.h.b16 %v298
    %v355 = vpack.c.b16 %v349, %v347
    %v356 = vpack.c.b16 %v350, %v348
    %v357 = vpack.c.b16 %v353, %v351
    %v358 = vpack.c.b16 %v354, %v352
    %v395 = vunpack.c.l.b16 %v299
    %v396 = vunpack.c.h.b16 %v299
    %v397 = vunpack.c.l.b16 %v300
    %v398 = vunpack.c.h.b16 %v300
    %v399 = vunpack.c.l.b16 %v301
    %v400 = vunpack.c.h.b16 %v301
    %v401 = vunpack.c.l.b16 %v302
    %v402 = vunpack.c.h.b16 %v302
    %v403 = vunpack.c.l.b16 %v303
    %v404 = vunpack.c.h.b16 %v303
    %v405 = vunpack.c.l.b16 %v304
    %v406 = vunpack.c.h.b16 %v304
    %v407 = vunpack.c.l.b16 %v305
    %v408 = vunpack.c.h.b16 %v305
    %v409 = vunpack.c.l.b16 %v306
    %v410 = vunpack.c.h.b16 %v306
    %v411 = vunpack.c.l.b16 %v307
    %v412 = vunpack.c.h.b16 %v307
    %v413 = vunpack.c.l.b16 %v308
    %v414 = vunpack.c.h.b16 %v308
    %v415 = vunpack.c.l.b16 %v309
    %v416 = vunpack.c.h.b16 %v309
    %v417 = vunpack.c.l.b16 %v310
    %v418 = vunpack.c.h.b16 %v310
    %v419 = vunpack.c.l.b16 %v311
    %v420 = vunpack.c.h.b16 %v311
    %v421 = vunpack.c.l.b16 %v312
    %v422 = vunpack.c.h.b16 %v312
    %v423 = vunpack.c.l.b16 %v313
    %v424 = vunpack.c.h.b16 %v313
    %v425 = vunpack.c.l.b16 %v314
    %v426 = vunpack.c.h.b16 %v314
    %v427 = vunpack.c.l.b16 %v315
    %v428 = vunpack.c.h.b16 %v315
    %v429 = vunpack.c.l.b16 %v316
    %v430 = vunpack.c.h.b16 %v316
    %v431 = vunpack.c.l.b16 %v317
    %v432 = vunpack.c.h.b16 %v317
    %v433 = vunpack.c.l.b16 %v318
    %v434 = vunpack.c.h.b16 %v318
    %v435 = vunpack.c.l.b16 %v319
    %v436 = vunpack.c.h.b16 %v319
    %v437 = vunpack.c.l.b16 %v320
    %v438 = vunpack.c.h.b16 %v320
    %v439 = vunpack.c.l.b16 %v321
    %v440 = vunpack.c.h.b16 %v321
    %v441 = vunpack.c.l.b16 %v322
    %v442 = vunpack.c.h.b16 %v322
    %v443 = vunpack.c.l.b16 %v323
    %v444 = vunpack.c.h.b16 %v323
    %v445 = vunpack.c.l.b16 %v324
    %v446 = vunpack.c.h.b16 %v324
    %v447 = vunpack.c.l.b16 %v325
    %v448 = vunpack.c.h.b16 %v325
    %v449 = vunpack.c.l.b16 %v326
    %v450 = vunpack.c.h.b16 %v326
    %v451 = vunpack.c.l.b16 %v327
    %v452 = vunpack.c.h.b16 %v327
    %v453 = vunpack.c.l.b16 %v328
    %v454 = vunpack.c.h.b16 %v328
    %v455 = vunpack.c.l.b16 %v329
    %v456 = vunpack.c.h.b16 %v329
    %v457 = vunpack.c.l.b16 %v330
    %v458 = vunpack.c.h.b16 %v330
    %v459 = vpack.c.b16 %v397, %v395
    %v460 = vpack.c.b16 %v398, %v396
    %v461 = vpack.c.b16 %v401, %v399
    %v462 = vpack.c.b16 %v402, %v400
    %v463 = vpack.c.b16 %v405, %v403
    %v464 = vpack.c.b16 %v406, %v404
    %v465 = vpack.c.b16 %v409, %v407
    %v466 = vpack.c.b16 %v410, %v408
    %v467 = vpack.c.b16 %v413, %v411
    %v468 = vpack.c.b16 %v414, %v412
    %v469 = vpack.c.b16 %v417, %v415
    %v470 = vpack.c.b16 %v418, %v416
    %v471 = vpack.c.b16 %v421, %v419
    %v472 = vpack.c.b16 %v422, %v420
    %v473 = vpack.c.b16 %v425, %v423
    %v474 = vpack.c.b16 %v426, %v424
    %v475 = vpack.c.b16 %v429, %v427
    %v476 = vpack.c.b16 %v430, %v428
    %v477 = vpack.c.b16 %v433, %v431
    %v478 = vpack.c.b16 %v434, %v432
    %v479 = vpack.c.b16 %v437, %v435
    %v480 = vpack.c.b16 %v438, %v436
    %v481 = vpack.c.b16 %v441, %v439
    %v482 = vpack.c.b16 %v442, %v440
    %v483 = vpack.c.b16 %v445, %v443
    %v484 = vpack.c.b16 %v446, %v444
    %v485 = vpack.c.b16 %v449, %v447
    %v486 = vpack.c.b16 %v450, %v448
    %v487 = vpack.c.b16 %v453, %v451
    %v488 = vpack.c.b16 %v454, %v452
    %v489 = vpack.c.b16 %v457, %v455
    %v490 = vpack.c.b16 %v458, %v456
    %523 = vmatprep.subr.bf16.mxu0 %v460
    %524 = vmatpush1.bf16.msra.mxu0 %v459
    %525 = vmatprep.subr.bf16.mxu0 %v462
    %526 = vmatpush1.bf16.msra.mxu0 %v461
    %527 = vmatprep.subr.bf16.mxu0 %v464
    %528 = vmatpush1.bf16.msra.mxu0 %v463
    %529 = vmatprep.subr.bf16.mxu0 %v466
    %530 = vmatpush1.bf16.msra.mxu0 %v465
    %531 = vmatprep.subr.bf16.mxu0 %v468
    %532 = vmatpush1.bf16.msra.mxu0 %v467
    %533 = vmatprep.subr.bf16.mxu0 %v470
    %534 = vmatpush1.bf16.msra.mxu0 %v469
    %535 = vmatprep.subr.bf16.mxu0 %v472
    %536 = vmatpush1.bf16.msra.mxu0 %v471
    %537 = vmatprep.subr.bf16.mxu0 %v474
    %538 = vmatpush1.bf16.msra.mxu0 %v473
    %539 = vmatprep.subr.bf16.mxu0 %v476
    %540 = vmatpush1.bf16.msra.mxu0 %v475
    %541 = vmatprep.subr.bf16.mxu0 %v478
    %542 = vmatpush1.bf16.msra.mxu0 %v477
    %543 = vmatprep.subr.bf16.mxu0 %v480
    %544 = vmatpush1.bf16.msra.mxu0 %v479
    %545 = vmatprep.subr.bf16.mxu0 %v482
    %546 = vmatpush1.bf16.msra.mxu0 %v481
    %547 = vmatprep.subr.bf16.mxu0 %v484
    %548 = vmatpush1.bf16.msra.mxu0 %v483
    %549 = vmatprep.subr.bf16.mxu0 %v486
    %550 = vmatpush1.bf16.msra.mxu0 %v485
    %551 = vmatprep.subr.bf16.mxu0 %v488
    %552 = vmatpush1.bf16.msra.mxu0 %v487
    %553 = vmatprep.subr.bf16.mxu0 %v490
    %554 = vmatpush1.bf16.msra.mxu0 %v489
    %555 = vmatprep.mubr.bf16.mxu0 %v356
    %556 = vmatmul.mubr.bf16.gmra.mrb[0].mxu0 %v355
    %v557 = vpop.f32.mrb[0].mxu0
    %v558 = vadd.f32 %v336, %v557
    %v559 = vpop.f32.mrb[0].mxu0
    %v560 = vadd.f32 %v340, %v559
    %v561 = vpop.f32.mrb[0].mxu0
    %v562 = vadd.f32 %v336, %v561
    %v563 = vpop.f32.mrb[0].mxu0
    %v564 = vadd.f32 %v340, %v563
    %565 = vmatprep.mubr.bf16.mxu0 %v358
    %566 = vmatmul.mubr.bf16.gmra.mrb[0].mxu0 %v357
    %v567 = vpop.f32.mrb[0].mxu0
    %v568 = vadd.f32 %v336, %v567
    %v569 = vpop.f32.mrb[0].mxu0
    %v570 = vadd.f32 %v340, %v569
    %v571 = vpop.f32.mrb[0].mxu0
    %v572 = vadd.f32 %v336, %v571
    %v573 = vpop.f32.mrb[0].mxu0
    %v574 = vadd.f32 %v340, %v573
    %575 = vdwg.mxu0
    %v576 = vmax.f32 %v558, 0.0
    %v577 = vmax.f32 %v560, 0.0
    %v578 = vmax.f32 %v562, 0.0
    %v579 = vmax.f32 %v564, 0.0
    %v580 = vmax.f32 %v568, 0.0
    %v581 = vmax.f32 %v570, 0.0
    %v582 = vmax.f32 %v572, 0.0
    %v583 = vmax.f32 %v574, 0.0
    %v584 = vpack.c.bf16 %v578, %v576
    %v585 = vpack.c.bf16 %v579, %v577
    %v586 = vpack.c.bf16 %v582, %v580
    %v587 = vpack.c.bf16 %v583, %v581
    %588 = vst [vmem:[#allocation2 + $0x20] sm:$0xff] %v584
    %589 = vst [vmem:[#allocation2 + $0x28] sm:$0xff] %v585
    %590 = vst [vmem:[#allocation2 + $0x50] sm:$0xff] %v586
    %591 = vst [vmem:[#allocation2 + $0x58] sm:$0xff] %v587
    %v592 = vld [vmem:[#allocation2] sm:$0xff]
    %v593 = vld [vmem:[#allocation2 + $0x8] sm:$0xff]
    %v594 = vld [vmem:[#allocation2 + $0x10] sm:$0xff]
    %v595 = vld [vmem:[#allocation2 + $0x18] sm:$0xff]
    %v596 = vld [vmem:[#allocation2 + $0x20] sm:$0xff]
    %v597 = vld [vmem:[#allocation2 + $0x28] sm:$0xff]
    %v598 = vld [vmem:[#allocation2 + $0x30] sm:$0xff]
    %v599 = vld [vmem:[#allocation2 + $0x38] sm:$0xff]
    %v600 = vld [vmem:[#allocation2 + $0x40] sm:$0xff]
    %v601 = vld [vmem:[#allocation2 + $0x48] sm:$0xff]
    %v602 = vld [vmem:[#allocation2 + $0x50] sm:$0xff]
    %v603 = vld [vmem:[#allocation2 + $0x58] sm:$0xff]
    %v604 = vld [vmem:[#allocation15] sm:$0xff]
    %v605 = vld [vmem:[#allocation15 + $0x8] sm:$0xff]
    %v606 = vld [vmem:[#allocation15 + $0x10] sm:$0xff]
    %v607 = vld [vmem:[#allocation15 + $0x18] sm:$0xff]
    %v608 = vld [vmem:[#allocation15 + $0x20] sm:$0xff]
    %v609 = vld [vmem:[#allocation15 + $0x28] sm:$0xff]
    %v610 = vld [vmem:[#allocation15 + $0x30] sm:$0xff]
    %v611 = vld [vmem:[#allocation15 + $0x38] sm:$0xff]
    %v612 = vld [vmem:[#allocation15 + $0x40] sm:$0xff]
    %v613 = vld [vmem:[#allocation15 + $0x48] sm:$0xff]
    %v614 = vld [vmem:[#allocation15 + $0x50] sm:$0xff]
    %v615 = vld [vmem:[#allocation15 + $0x58] sm:$0xff]
    %v616 = vld [vmem:[#allocation15 + $0x60] sm:$0xff]
    %v617 = vld [vmem:[#allocation15 + $0x68] sm:$0xff]
    %v618 = vld [vmem:[#allocation15 + $0x70] sm:$0xff]
    %v619 = vld [vmem:[#allocation15 + $0x78] sm:$0xff]
    %v620 = vld [vmem:[#allocation15 + $0x80] sm:$0xff]
    %v621 = vld [vmem:[#allocation15 + $0x88] sm:$0xff]
    %v622 = vld [vmem:[#allocation15 + $0x90] sm:$0xff]
    %v623 = vld [vmem:[#allocation15 + $0x98] sm:$0xff]
    %v624 = vld [vmem:[#allocation15 + $0xa0] sm:$0xff]
    %v625 = vld [vmem:[#allocation15 + $0xa8] sm:$0xff]
    %v626 = vld [vmem:[#allocation15 + $0xb0] sm:$0xff]
    %v627 = vld [vmem:[#allocation15 + $0xb8] sm:$0xff]
    %v628 = vld [vmem:[#allocation15 + $0xc0] sm:$0xff]
    %v629 = vld [vmem:[#allocation15 + $0xc8] sm:$0xff]
    %v630 = vld [vmem:[#allocation15 + $0xd0] sm:$0xff]
    %v631 = vld [vmem:[#allocation15 + $0xd8] sm:$0xff]
    %v632 = vld [vmem:[#allocation15 + $0xe0] sm:$0xff]
    %v633 = vld [vmem:[#allocation15 + $0xe8] sm:$0xff]
    %v634 = vld [vmem:[#allocation15 + $0xf0] sm:$0xff]
    %v635 = vld [vmem:[#allocation15 + $0xf8] sm:$0xff]
    %v636 = vld [vmem:[#allocation15 + $0x100] sm:$0xff]
    %v637 = vld [vmem:[#allocation15 + $0x108] sm:$0xff]
    %v638 = vld [vmem:[#allocation15 + $0x110] sm:$0xff]
    %v639 = vld [vmem:[#allocation15 + $0x118] sm:$0xff]
    %v640 = vld [vmem:[#allocation15 + $0x120] sm:$0xff]
    %v641 = vld [vmem:[#allocation15 + $0x128] sm:$0xff]
    %v642 = vld [vmem:[#allocation15 + $0x130] sm:$0xff]
    %v643 = vld [vmem:[#allocation15 + $0x138] sm:$0xff]
    %v644 = vld [vmem:[#allocation15 + $0x140] sm:$0xff]
    %v645 = vld [vmem:[#allocation15 + $0x148] sm:$0xff]
    %v646 = vld [vmem:[#allocation15 + $0x150] sm:$0xff]
    %v647 = vld [vmem:[#allocation15 + $0x158] sm:$0xff]
    %v648 = vld [vmem:[#allocation15 + $0x160] sm:$0xff]
    %v649 = vld [vmem:[#allocation15 + $0x168] sm:$0xff]
    %v650 = vld [vmem:[#allocation15 + $0x170] sm:$0xff]
    %v651 = vld [vmem:[#allocation15 + $0x178] sm:$0xff]
    %v652 = vld [vmem:[#allocation15 + $0x180] sm:$0xff]
    %v653 = vld [vmem:[#allocation15 + $0x188] sm:$0xff]
    %v654 = vld [vmem:[#allocation15 + $0x190] sm:$0xff]
    %v655 = vld [vmem:[#allocation15 + $0x198] sm:$0xff]
    %v656 = vld [vmem:[#allocation15 + $0x1a0] sm:$0xff]
    %v657 = vld [vmem:[#allocation15 + $0x1a8] sm:$0xff]
    %v658 = vld [vmem:[#allocation15 + $0x1b0] sm:$0xff]
    %v659 = vld [vmem:[#allocation15 + $0x1b8] sm:$0xff]
    %v660 = vld [vmem:[#allocation15 + $0x1c0] sm:$0xff]
    %v661 = vld [vmem:[#allocation15 + $0x1c8] sm:$0xff]
    %v662 = vld [vmem:[#allocation15 + $0x1d0] sm:$0xff]
    %v663 = vld [vmem:[#allocation15 + $0x1d8] sm:$0xff]
    %v664 = vld [vmem:[#allocation15 + $0x1e0] sm:$0xff]
    %v665 = vld [vmem:[#allocation15 + $0x1e8] sm:$0xff]
    %v666 = vld [vmem:[#allocation15 + $0x1f0] sm:$0xff]
    %v667 = vld [vmem:[#allocation15 + $0x1f8] sm:$0xff]
    %v668 = vld [vmem:[#allocation15 + $0x200] sm:$0xff]
    %v669 = vld [vmem:[#allocation15 + $0x208] sm:$0xff]
    %v670 = vld [vmem:[#allocation15 + $0x210] sm:$0xff]
    %v671 = vld [vmem:[#allocation15 + $0x218] sm:$0xff]
    %v672 = vld [vmem:[#allocation15 + $0x220] sm:$0xff]
    %v673 = vld [vmem:[#allocation15 + $0x228] sm:$0xff]
    %v674 = vld [vmem:[#allocation15 + $0x230] sm:$0xff]
    %v675 = vld [vmem:[#allocation15 + $0x238] sm:$0xff]
    %v676 = vld [vmem:[#allocation15 + $0x240] sm:$0xff]
    %v677 = vld [vmem:[#allocation15 + $0x248] sm:$0xff]
    %v678 = vld [vmem:[#allocation15 + $0x250] sm:$0xff]
    %v679 = vld [vmem:[#allocation15 + $0x258] sm:$0xff]
    %v680 = vld [vmem:[#allocation15 + $0x260] sm:$0xff]
    %v681 = vld [vmem:[#allocation15 + $0x268] sm:$0xff]
    %v682 = vld [vmem:[#allocation15 + $0x270] sm:$0xff]
    %v683 = vld [vmem:[#allocation15 + $0x278] sm:$0xff]
    %v684 = vld [vmem:[#allocation15 + $0x280] sm:$0xff]
    %v685 = vld [vmem:[#allocation15 + $0x288] sm:$0xff]
    %v686 = vld [vmem:[#allocation15 + $0x290] sm:$0xff]
    %v687 = vld [vmem:[#allocation15 + $0x298] sm:$0xff]
    %v688 = vld [vmem:[#allocation15 + $0x2a0] sm:$0xff]
    %v689 = vld [vmem:[#allocation15 + $0x2a8] sm:$0xff]
    %v690 = vld [vmem:[#allocation15 + $0x2b0] sm:$0xff]
    %v691 = vld [vmem:[#allocation15 + $0x2b8] sm:$0xff]
    %v692 = vld [vmem:[#allocation15 + $0x2c0] sm:$0xff]
    %v693 = vld [vmem:[#allocation15 + $0x2c8] sm:$0xff]
    %v694 = vld [vmem:[#allocation15 + $0x2d0] sm:$0xff]
    %v695 = vld [vmem:[#allocation15 + $0x2d8] sm:$0xff]
    %v696 = vld [vmem:[#allocation15 + $0x2e0] sm:$0xff]
    %v697 = vld [vmem:[#allocation15 + $0x2e8] sm:$0xff]
    %v698 = vld [vmem:[#allocation15 + $0x2f0] sm:$0xff]
    %v699 = vld [vmem:[#allocation15 + $0x2f8] sm:$0xff]
    %v700 = vld [vmem:[#allocation15 + $0x300] sm:$0xff]
    %v701 = vld [vmem:[#allocation15 + $0x308] sm:$0xff]
    %v702 = vld [vmem:[#allocation15 + $0x310] sm:$0xff]
    %v703 = vld [vmem:[#allocation15 + $0x318] sm:$0xff]
    %v704 = vld [vmem:[#allocation15 + $0x320] sm:$0xff]
    %v705 = vld [vmem:[#allocation15 + $0x328] sm:$0xff]
    %v706 = vld [vmem:[#allocation15 + $0x330] sm:$0xff]
    %v707 = vld [vmem:[#allocation15 + $0x338] sm:$0xff]
    %v708 = vld [vmem:[#allocation15 + $0x340] sm:$0xff]
    %v709 = vld [vmem:[#allocation15 + $0x348] sm:$0xff]
    %v710 = vld [vmem:[#allocation15 + $0x350] sm:$0xff]
    %v711 = vld [vmem:[#allocation15 + $0x358] sm:$0xff]
    %v712 = vld [vmem:[#allocation15 + $0x360] sm:$0xff]
    %v713 = vld [vmem:[#allocation15 + $0x368] sm:$0xff]
    %v714 = vld [vmem:[#allocation15 + $0x370] sm:$0xff]
    %v715 = vld [vmem:[#allocation15 + $0x378] sm:$0xff]
    %v716 = vld [vmem:[#allocation15 + $0x380] sm:$0xff]
    %v717 = vld [vmem:[#allocation15 + $0x388] sm:$0xff]
    %v718 = vld [vmem:[#allocation15 + $0x390] sm:$0xff]
    %v719 = vld [vmem:[#allocation15 + $0x398] sm:$0xff]
    %v720 = vld [vmem:[#allocation15 + $0x3a0] sm:$0xff]
    %v721 = vld [vmem:[#allocation15 + $0x3a8] sm:$0xff]
    %v722 = vld [vmem:[#allocation15 + $0x3b0] sm:$0xff]
    %v723 = vld [vmem:[#allocation15 + $0x3b8] sm:$0xff]
    %v724 = vld [vmem:[#allocation15 + $0x3c0] sm:$0xff]
    %v725 = vld [vmem:[#allocation15 + $0x3c8] sm:$0xff]
    %v726 = vld [vmem:[#allocation15 + $0x3d0] sm:$0xff]
    %v727 = vld [vmem:[#allocation15 + $0x3d8] sm:$0xff]
    %v728 = vld [vmem:[#allocation15 + $0x3e0] sm:$0xff]
    %v729 = vld [vmem:[#allocation15 + $0x3e8] sm:$0xff]
    %v730 = vld [vmem:[#allocation15 + $0x3f0] sm:$0xff]
    %v731 = vld [vmem:[#allocation15 + $0x3f8] sm:$0xff]
    %v732 = vld [vmem:[#allocation15 + $0x400] sm:$0xff]
    %v733 = vld [vmem:[#allocation15 + $0x408] sm:$0xff]
    %v734 = vld [vmem:[#allocation15 + $0x410] sm:$0xff]
    %v735 = vld [vmem:[#allocation15 + $0x418] sm:$0xff]
    %v736 = vld [vmem:[#allocation15 + $0x420] sm:$0xff]
    %v737 = vld [vmem:[#allocation15 + $0x428] sm:$0xff]
    %v738 = vld [vmem:[#allocation15 + $0x430] sm:$0xff]
    %v739 = vld [vmem:[#allocation15 + $0x438] sm:$0xff]
    %v740 = vld [vmem:[#allocation15 + $0x440] sm:$0xff]
    %v741 = vld [vmem:[#allocation15 + $0x448] sm:$0xff]
    %v742 = vld [vmem:[#allocation15 + $0x450] sm:$0xff]
    %v743 = vld [vmem:[#allocation15 + $0x458] sm:$0xff]
    %v744 = vld [vmem:[#allocation15 + $0x460] sm:$0xff]
    %v745 = vld [vmem:[#allocation15 + $0x468] sm:$0xff]
    %v746 = vld [vmem:[#allocation15 + $0x470] sm:$0xff]
    %v747 = vld [vmem:[#allocation15 + $0x478] sm:$0xff]
    %v748 = vld [vmem:[#allocation15 + $0x480] sm:$0xff]
    %v749 = vld [vmem:[#allocation15 + $0x488] sm:$0xff]
    %v750 = vld [vmem:[#allocation15 + $0x490] sm:$0xff]
    %v751 = vld [vmem:[#allocation15 + $0x498] sm:$0xff]
    %v752 = vld [vmem:[#allocation15 + $0x4a0] sm:$0xff]
    %v753 = vld [vmem:[#allocation15 + $0x4a8] sm:$0xff]
    %v754 = vld [vmem:[#allocation15 + $0x4b0] sm:$0xff]
    %v755 = vld [vmem:[#allocation15 + $0x4b8] sm:$0xff]
    %v756 = vld [vmem:[#allocation15 + $0x4c0] sm:$0xff]
    %v757 = vld [vmem:[#allocation15 + $0x4c8] sm:$0xff]
    %v758 = vld [vmem:[#allocation15 + $0x4d0] sm:$0xff]
    %v759 = vld [vmem:[#allocation15 + $0x4d8] sm:$0xff]
    %v760 = vld [vmem:[#allocation15 + $0x4e0] sm:$0xff]
    %v761 = vld [vmem:[#allocation15 + $0x4e8] sm:$0xff]
    %v762 = vld [vmem:[#allocation15 + $0x4f0] sm:$0xff]
    %v763 = vld [vmem:[#allocation15 + $0x4f8] sm:$0xff]
    %v764 = vld [vmem:[#allocation15 + $0x500] sm:$0xff]
    %v765 = vld [vmem:[#allocation15 + $0x508] sm:$0xff]
    %v766 = vld [vmem:[#allocation15 + $0x510] sm:$0xff]
    %v767 = vld [vmem:[#allocation15 + $0x518] sm:$0xff]
    %v768 = vld [vmem:[#allocation15 + $0x520] sm:$0xff]
    %v769 = vld [vmem:[#allocation15 + $0x528] sm:$0xff]
    %v770 = vld [vmem:[#allocation15 + $0x530] sm:$0xff]
    %v771 = vld [vmem:[#allocation15 + $0x538] sm:$0xff]
    %v772 = vld [vmem:[#allocation15 + $0x540] sm:$0xff]
    %v773 = vld [vmem:[#allocation15 + $0x548] sm:$0xff]
    %v774 = vld [vmem:[#allocation15 + $0x550] sm:$0xff]
    %v775 = vld [vmem:[#allocation15 + $0x558] sm:$0xff]
    %v776 = vld [vmem:[#allocation15 + $0x560] sm:$0xff]
    %v777 = vld [vmem:[#allocation15 + $0x568] sm:$0xff]
    %v778 = vld [vmem:[#allocation15 + $0x570] sm:$0xff]
    %v779 = vld [vmem:[#allocation15 + $0x578] sm:$0xff]
    %v780 = vld [vmem:[#allocation15 + $0x580] sm:$0xff]
    %v781 = vld [vmem:[#allocation15 + $0x588] sm:$0xff]
    %v782 = vld [vmem:[#allocation15 + $0x590] sm:$0xff]
    %v783 = vld [vmem:[#allocation15 + $0x598] sm:$0xff]
    %v784 = vld [vmem:[#allocation15 + $0x5a0] sm:$0xff]
    %v785 = vld [vmem:[#allocation15 + $0x5a8] sm:$0xff]
    %v786 = vld [vmem:[#allocation15 + $0x5b0] sm:$0xff]
    %v787 = vld [vmem:[#allocation15 + $0x5b8] sm:$0xff]
    %v788 = vld [vmem:[#allocation15 + $0x5c0] sm:$0xff]
    %v789 = vld [vmem:[#allocation15 + $0x5c8] sm:$0xff]
    %v790 = vld [vmem:[#allocation15 + $0x5d0] sm:$0xff]
    %v791 = vld [vmem:[#allocation15 + $0x5d8] sm:$0xff]
    %v792 = vld [vmem:[#allocation15 + $0x5e0] sm:$0xff]
    %v793 = vld [vmem:[#allocation15 + $0x5e8] sm:$0xff]
    %v794 = vld [vmem:[#allocation15 + $0x5f0] sm:$0xff]
    %v795 = vld [vmem:[#allocation15 + $0x5f8] sm:$0xff]
    %v796 = vld [vmem:[#allocation15 + $0x600] sm:$0xff]
    %v797 = vld [vmem:[#allocation15 + $0x608] sm:$0xff]
    %v798 = vld [vmem:[#allocation15 + $0x610] sm:$0xff]
    %v799 = vld [vmem:[#allocation15 + $0x618] sm:$0xff]
    %v800 = vld [vmem:[#allocation15 + $0x620] sm:$0xff]
    %v801 = vld [vmem:[#allocation15 + $0x628] sm:$0xff]
    %v802 = vld [vmem:[#allocation15 + $0x630] sm:$0xff]
    %v803 = vld [vmem:[#allocation15 + $0x638] sm:$0xff]
    %v804 = vld [vmem:[#allocation15 + $0x640] sm:$0xff]
    %v805 = vld [vmem:[#allocation15 + $0x648] sm:$0xff]
    %v806 = vld [vmem:[#allocation15 + $0x650] sm:$0xff]
    %v807 = vld [vmem:[#allocation15 + $0x658] sm:$0xff]
    %v808 = vld [vmem:[#allocation15 + $0x660] sm:$0xff]
    %v809 = vld [vmem:[#allocation15 + $0x668] sm:$0xff]
    %v810 = vld [vmem:[#allocation15 + $0x670] sm:$0xff]
    %v811 = vld [vmem:[#allocation15 + $0x678] sm:$0xff]
    %v812 = vld [vmem:[#allocation15 + $0x680] sm:$0xff]
    %v813 = vld [vmem:[#allocation15 + $0x688] sm:$0xff]
    %v814 = vld [vmem:[#allocation15 + $0x690] sm:$0xff]
    %v815 = vld [vmem:[#allocation15 + $0x698] sm:$0xff]
    %v816 = vld [vmem:[#allocation15 + $0x6a0] sm:$0xff]
    %v817 = vld [vmem:[#allocation15 + $0x6a8] sm:$0xff]
    %v818 = vld [vmem:[#allocation15 + $0x6b0] sm:$0xff]
    %v819 = vld [vmem:[#allocation15 + $0x6b8] sm:$0xff]
    %v820 = vld [vmem:[#allocation15 + $0x6c0] sm:$0xff]
    %v821 = vld [vmem:[#allocation15 + $0x6c8] sm:$0xff]
    %v822 = vld [vmem:[#allocation15 + $0x6d0] sm:$0xff]
    %v823 = vld [vmem:[#allocation15 + $0x6d8] sm:$0xff]
    %v824 = vld [vmem:[#allocation15 + $0x6e0] sm:$0xff]
    %v825 = vld [vmem:[#allocation15 + $0x6e8] sm:$0xff]
    %v826 = vld [vmem:[#allocation15 + $0x6f0] sm:$0xff]
    %v827 = vld [vmem:[#allocation15 + $0x6f8] sm:$0xff]
    %v828 = vld [vmem:[#allocation15 + $0x700] sm:$0xff]
    %v829 = vld [vmem:[#allocation15 + $0x708] sm:$0xff]
    %v830 = vld [vmem:[#allocation15 + $0x710] sm:$0xff]
    %v831 = vld [vmem:[#allocation15 + $0x718] sm:$0xff]
    %v832 = vld [vmem:[#allocation15 + $0x720] sm:$0xff]
    %v833 = vld [vmem:[#allocation15 + $0x728] sm:$0xff]
    %v834 = vld [vmem:[#allocation15 + $0x730] sm:$0xff]
    %v835 = vld [vmem:[#allocation15 + $0x738] sm:$0xff]
    %v836 = vld [vmem:[#allocation15 + $0x740] sm:$0xff]
    %v837 = vld [vmem:[#allocation15 + $0x748] sm:$0xff]
    %v838 = vld [vmem:[#allocation15 + $0x750] sm:$0xff]
    %v839 = vld [vmem:[#allocation15 + $0x758] sm:$0xff]
    %v840 = vld [vmem:[#allocation15 + $0x760] sm:$0xff]
    %v841 = vld [vmem:[#allocation15 + $0x768] sm:$0xff]
    %v842 = vld [vmem:[#allocation15 + $0x770] sm:$0xff]
    %v843 = vld [vmem:[#allocation15 + $0x778] sm:$0xff]
    %v844 = vld [vmem:[#allocation15 + $0x780] sm:$0xff]
    %v845 = vld [vmem:[#allocation15 + $0x788] sm:$0xff]
    %v846 = vld [vmem:[#allocation15 + $0x790] sm:$0xff]
    %v847 = vld [vmem:[#allocation15 + $0x798] sm:$0xff]
    %v848 = vld [vmem:[#allocation15 + $0x7a0] sm:$0xff]
    %v849 = vld [vmem:[#allocation15 + $0x7a8] sm:$0xff]
    %v850 = vld [vmem:[#allocation15 + $0x7b0] sm:$0xff]
    %v851 = vld [vmem:[#allocation15 + $0x7b8] sm:$0xff]
    %v852 = vld [vmem:[#allocation15 + $0x7c0] sm:$0xff]
    %v853 = vld [vmem:[#allocation15 + $0x7c8] sm:$0xff]
    %v854 = vld [vmem:[#allocation15 + $0x7d0] sm:$0xff]
    %v855 = vld [vmem:[#allocation15 + $0x7d8] sm:$0xff]
    %v856 = vld [vmem:[#allocation15 + $0x7e0] sm:$0xff]
    %v857 = vld [vmem:[#allocation15 + $0x7e8] sm:$0xff]
    %v858 = vld [vmem:[#allocation15 + $0x7f0] sm:$0xff]
    %v859 = vld [vmem:[#allocation15 + $0x7f8] sm:$0xff]
    %v860 = vld [vmem:[#allocation15 + $0x800] sm:$0xff]
    %v861 = vld [vmem:[#allocation15 + $0x808] sm:$0xff]
    %v862 = vld [vmem:[#allocation15 + $0x810] sm:$0xff]
    %v863 = vld [vmem:[#allocation15 + $0x818] sm:$0xff]
    %v864 = vld [vmem:[#allocation15 + $0x820] sm:$0xff]
    %v865 = vld [vmem:[#allocation15 + $0x828] sm:$0xff]
    %v866 = vld [vmem:[#allocation15 + $0x830] sm:$0xff]
    %v867 = vld [vmem:[#allocation15 + $0x838] sm:$0xff]
    %v868 = vld [vmem:[#allocation15 + $0x840] sm:$0xff]
    %v869 = vld [vmem:[#allocation15 + $0x848] sm:$0xff]
    %v870 = vld [vmem:[#allocation15 + $0x850] sm:$0xff]
    %v871 = vld [vmem:[#allocation15 + $0x858] sm:$0xff]
    %v872 = vld [vmem:[#allocation15 + $0x860] sm:$0xff]
    %v873 = vld [vmem:[#allocation15 + $0x868] sm:$0xff]
    %v874 = vld [vmem:[#allocation15 + $0x870] sm:$0xff]
    %v875 = vld [vmem:[#allocation15 + $0x878] sm:$0xff]
    %v876 = vld [vmem:[#allocation15 + $0x880] sm:$0xff]
    %v877 = vld [vmem:[#allocation15 + $0x888] sm:$0xff]
    %v878 = vld [vmem:[#allocation15 + $0x890] sm:$0xff]
    %v879 = vld [vmem:[#allocation15 + $0x898] sm:$0xff]
    %v880 = vld [vmem:[#allocation15 + $0x8a0] sm:$0xff]
    %v881 = vld [vmem:[#allocation15 + $0x8a8] sm:$0xff]
    %v882 = vld [vmem:[#allocation15 + $0x8b0] sm:$0xff]
    %v883 = vld [vmem:[#allocation15 + $0x8b8] sm:$0xff]
    %v884 = vld [vmem:[#allocation15 + $0x8c0] sm:$0xff]
    %v885 = vld [vmem:[#allocation15 + $0x8c8] sm:$0xff]
    %v886 = vld [vmem:[#allocation15 + $0x8d0] sm:$0xff]
    %v887 = vld [vmem:[#allocation15 + $0x8d8] sm:$0xff]
    %v888 = vld [vmem:[#allocation15 + $0x8e0] sm:$0xff]
    %v889 = vld [vmem:[#allocation15 + $0x8e8] sm:$0xff]
    %v890 = vld [vmem:[#allocation15 + $0x8f0] sm:$0xff]
    %v891 = vld [vmem:[#allocation15 + $0x8f8] sm:$0xff]
    %v892 = vld [vmem:[#allocation15 + $0x900] sm:$0xff]
    %v893 = vld [vmem:[#allocation15 + $0x908] sm:$0xff]
    %v894 = vld [vmem:[#allocation15 + $0x910] sm:$0xff]
    %v895 = vld [vmem:[#allocation15 + $0x918] sm:$0xff]
    %v896 = vld [vmem:[#allocation15 + $0x920] sm:$0xff]
    %v897 = vld [vmem:[#allocation15 + $0x928] sm:$0xff]
    %v898 = vld [vmem:[#allocation15 + $0x930] sm:$0xff]
    %v899 = vld [vmem:[#allocation15 + $0x938] sm:$0xff]
    %v900 = vld [vmem:[#allocation15 + $0x940] sm:$0xff]
    %v901 = vld [vmem:[#allocation15 + $0x948] sm:$0xff]
    %v902 = vld [vmem:[#allocation15 + $0x950] sm:$0xff]
    %v903 = vld [vmem:[#allocation15 + $0x958] sm:$0xff]
    %v904 = vld [vmem:[#allocation15 + $0x960] sm:$0xff]
    %v905 = vld [vmem:[#allocation15 + $0x968] sm:$0xff]
    %v906 = vld [vmem:[#allocation15 + $0x970] sm:$0xff]
    %v907 = vld [vmem:[#allocation15 + $0x978] sm:$0xff]
    %v908 = vld [vmem:[#allocation15 + $0x980] sm:$0xff]
    %v909 = vld [vmem:[#allocation15 + $0x988] sm:$0xff]
    %v910 = vld [vmem:[#allocation15 + $0x990] sm:$0xff]
    %v911 = vld [vmem:[#allocation15 + $0x998] sm:$0xff]
    %v912 = vld [vmem:[#allocation15 + $0x9a0] sm:$0xff]
    %v913 = vld [vmem:[#allocation15 + $0x9a8] sm:$0xff]
    %v914 = vld [vmem:[#allocation15 + $0x9b0] sm:$0xff]
    %v915 = vld [vmem:[#allocation15 + $0x9b8] sm:$0xff]
    %v916 = vld [vmem:[#allocation15 + $0x9c0] sm:$0xff]
    %v917 = vld [vmem:[#allocation15 + $0x9c8] sm:$0xff]
    %v918 = vld [vmem:[#allocation15 + $0x9d0] sm:$0xff]
    %v919 = vld [vmem:[#allocation15 + $0x9d8] sm:$0xff]
    %v920 = vld [vmem:[#allocation15 + $0x9e0] sm:$0xff]
    %v921 = vld [vmem:[#allocation15 + $0x9e8] sm:$0xff]
    %v922 = vld [vmem:[#allocation15 + $0x9f0] sm:$0xff]
    %v923 = vld [vmem:[#allocation15 + $0x9f8] sm:$0xff]
    %v924 = vld [vmem:[#allocation15 + $0xa00] sm:$0xff]
    %v925 = vld [vmem:[#allocation15 + $0xa08] sm:$0xff]
    %v926 = vld [vmem:[#allocation15 + $0xa10] sm:$0xff]
    %v927 = vld [vmem:[#allocation15 + $0xa18] sm:$0xff]
    %v928 = vld [vmem:[#allocation15 + $0xa20] sm:$0xff]
    %v929 = vld [vmem:[#allocation15 + $0xa28] sm:$0xff]
    %v930 = vld [vmem:[#allocation15 + $0xa30] sm:$0xff]
    %v931 = vld [vmem:[#allocation15 + $0xa38] sm:$0xff]
    %v932 = vld [vmem:[#allocation15 + $0xa40] sm:$0xff]
    %v933 = vld [vmem:[#allocation15 + $0xa48] sm:$0xff]
    %v934 = vld [vmem:[#allocation15 + $0xa50] sm:$0xff]
    %v935 = vld [vmem:[#allocation15 + $0xa58] sm:$0xff]
    %v936 = vld [vmem:[#allocation15 + $0xa60] sm:$0xff]
    %v937 = vld [vmem:[#allocation15 + $0xa68] sm:$0xff]
    %v938 = vld [vmem:[#allocation15 + $0xa70] sm:$0xff]
    %v939 = vld [vmem:[#allocation15 + $0xa78] sm:$0xff]
    %v940 = vld [vmem:[#allocation15 + $0xa80] sm:$0xff]
    %v941 = vld [vmem:[#allocation15 + $0xa88] sm:$0xff]
    %v942 = vld [vmem:[#allocation15 + $0xa90] sm:$0xff]
    %v943 = vld [vmem:[#allocation15 + $0xa98] sm:$0xff]
    %v944 = vld [vmem:[#allocation15 + $0xaa0] sm:$0xff]
    %v945 = vld [vmem:[#allocation15 + $0xaa8] sm:$0xff]
    %v946 = vld [vmem:[#allocation15 + $0xab0] sm:$0xff]
    %v947 = vld [vmem:[#allocation15 + $0xab8] sm:$0xff]
    %v948 = vld [vmem:[#allocation15 + $0xac0] sm:$0xff]
    %v949 = vld [vmem:[#allocation15 + $0xac8] sm:$0xff]
    %v950 = vld [vmem:[#allocation15 + $0xad0] sm:$0xff]
    %v951 = vld [vmem:[#allocation15 + $0xad8] sm:$0xff]
    %v952 = vld [vmem:[#allocation15 + $0xae0] sm:$0xff]
    %v953 = vld [vmem:[#allocation15 + $0xae8] sm:$0xff]
    %v954 = vld [vmem:[#allocation15 + $0xaf0] sm:$0xff]
    %v955 = vld [vmem:[#allocation15 + $0xaf8] sm:$0xff]
    %v956 = vld [vmem:[#allocation15 + $0xb00] sm:$0xff]
    %v957 = vld [vmem:[#allocation15 + $0xb08] sm:$0xff]
    %v958 = vld [vmem:[#allocation15 + $0xb10] sm:$0xff]
    %v959 = vld [vmem:[#allocation15 + $0xb18] sm:$0xff]
    %v960 = vld [vmem:[#allocation15 + $0xb20] sm:$0xff]
    %v961 = vld [vmem:[#allocation15 + $0xb28] sm:$0xff]
    %v962 = vld [vmem:[#allocation15 + $0xb30] sm:$0xff]
    %v963 = vld [vmem:[#allocation15 + $0xb38] sm:$0xff]
    %v964 = vld [vmem:[#allocation15 + $0xb40] sm:$0xff]
    %v965 = vld [vmem:[#allocation15 + $0xb48] sm:$0xff]
    %v966 = vld [vmem:[#allocation15 + $0xb50] sm:$0xff]
    %v967 = vld [vmem:[#allocation15 + $0xb58] sm:$0xff]
    %v968 = vld [vmem:[#allocation15 + $0xb60] sm:$0xff]
    %v969 = vld [vmem:[#allocation15 + $0xb68] sm:$0xff]
    %v970 = vld [vmem:[#allocation15 + $0xb70] sm:$0xff]
    %v971 = vld [vmem:[#allocation15 + $0xb78] sm:$0xff]
    %v972 = vld [vmem:[#allocation15 + $0xb80] sm:$0xff]
    %v973 = vld [vmem:[#allocation15 + $0xb88] sm:$0xff]
    %v974 = vld [vmem:[#allocation15 + $0xb90] sm:$0xff]
    %v975 = vld [vmem:[#allocation15 + $0xb98] sm:$0xff]
    %v976 = vld [vmem:[#allocation15 + $0xba0] sm:$0xff]
    %v977 = vld [vmem:[#allocation15 + $0xba8] sm:$0xff]
    %v978 = vld [vmem:[#allocation15 + $0xbb0] sm:$0xff]
    %v979 = vld [vmem:[#allocation15 + $0xbb8] sm:$0xff]
    %v980 = vld [vmem:[#allocation15 + $0xbc0] sm:$0xff]
    %v981 = vld [vmem:[#allocation15 + $0xbc8] sm:$0xff]
    %v982 = vld [vmem:[#allocation15 + $0xbd0] sm:$0xff]
    %v983 = vld [vmem:[#allocation15 + $0xbd8] sm:$0xff]
    %v984 = vld [vmem:[#allocation15 + $0xbe0] sm:$0xff]
    %v985 = vld [vmem:[#allocation15 + $0xbe8] sm:$0xff]
    %v986 = vld [vmem:[#allocation15 + $0xbf0] sm:$0xff]
    %v987 = vld [vmem:[#allocation15 + $0xbf8] sm:$0xff]
    %v988 = vld [vmem:[#allocation16] sm:$0xff]
    %v990 = vlaneseq
    %v991 = vshrl.u32 %v990, 7
    %v992 = vsub.s32 0, %v991
    %v993 = vrot.slane %v988, %v992
    %v994 = vlaneseq
    %v995 = vshrl.u32 %v994, 7
    %v996 = vsub.s32 1, %v995
    %v997 = vrot.slane %v988, %v996
    %v998 = vlaneseq
    %v999 = vshrl.u32 %v998, 7
    %v1000 = vsub.s32 2, %v999
    %v1001 = vrot.slane %v988, %v1000
    %v1002 = vlaneseq
    %v1003 = vshrl.u32 %v1002, 7
    %v1004 = vsub.s32 3, %v1003
    %v1005 = vrot.slane %v988, %v1004
    %v1006 = vlaneseq
    %v1007 = vshrl.u32 %v1006, 7
    %v1008 = vsub.s32 4, %v1007
    %v1009 = vrot.slane %v988, %v1008
    %v1010 = vlaneseq
    %v1011 = vshrl.u32 %v1010, 7
    %v1012 = vsub.s32 5, %v1011
    %v1013 = vrot.slane %v988, %v1012
    %v1014 = vlaneseq
    %v1015 = vshrl.u32 %v1014, 7
    %v1016 = vsub.s32 6, %v1015
    %v1017 = vrot.slane %v988, %v1016
    %v1018 = vlaneseq
    %v1019 = vshrl.u32 %v1018, 7
    %v1020 = vsub.s32 7, %v1019
    %v1021 = vrot.slane %v988, %v1020
    %v1414 = vunpack.c.l.b16 %v604
    %v1415 = vunpack.c.h.b16 %v604
    %v1416 = vunpack.c.l.b16 %v605
    %v1417 = vunpack.c.h.b16 %v605
    %v1418 = vunpack.c.l.b16 %v606
    %v1419 = vunpack.c.h.b16 %v606
    %v1420 = vunpack.c.l.b16 %v607
    %v1421 = vunpack.c.h.b16 %v607
    %v1422 = vunpack.c.l.b16 %v608
    %v1423 = vunpack.c.h.b16 %v608
    %v1424 = vunpack.c.l.b16 %v609
    %v1425 = vunpack.c.h.b16 %v609
    %v1426 = vunpack.c.l.b16 %v610
    %v1427 = vunpack.c.h.b16 %v610
    %v1428 = vunpack.c.l.b16 %v611
    %v1429 = vunpack.c.h.b16 %v611
    %v1430 = vunpack.c.l.b16 %v612
    %v1431 = vunpack.c.h.b16 %v612
    %v1432 = vunpack.c.l.b16 %v613
    %v1433 = vunpack.c.h.b16 %v613
    %v1434 = vunpack.c.l.b16 %v614
    %v1435 = vunpack.c.h.b16 %v614
    %v1436 = vunpack.c.l.b16 %v615
    %v1437 = vunpack.c.h.b16 %v615
    %v1438 = vunpack.c.l.b16 %v616
    %v1439 = vunpack.c.h.b16 %v616
    %v1440 = vunpack.c.l.b16 %v617
    %v1441 = vunpack.c.h.b16 %v617
    %v1442 = vunpack.c.l.b16 %v618
    %v1443 = vunpack.c.h.b16 %v618
    %v1444 = vunpack.c.l.b16 %v619
    %v1445 = vunpack.c.h.b16 %v619
    %v1446 = vunpack.c.l.b16 %v620
    %v1447 = vunpack.c.h.b16 %v620
    %v1448 = vunpack.c.l.b16 %v621
    %v1449 = vunpack.c.h.b16 %v621
    %v1450 = vunpack.c.l.b16 %v622
    %v1451 = vunpack.c.h.b16 %v622
    %v1452 = vunpack.c.l.b16 %v623
    %v1453 = vunpack.c.h.b16 %v623
    %v1454 = vunpack.c.l.b16 %v624
    %v1455 = vunpack.c.h.b16 %v624
    %v1456 = vunpack.c.l.b16 %v625
    %v1457 = vunpack.c.h.b16 %v625
    %v1458 = vunpack.c.l.b16 %v626
    %v1459 = vunpack.c.h.b16 %v626
    %v1460 = vunpack.c.l.b16 %v627
    %v1461 = vunpack.c.h.b16 %v627
    %v1462 = vunpack.c.l.b16 %v628
    %v1463 = vunpack.c.h.b16 %v628
    %v1464 = vunpack.c.l.b16 %v629
    %v1465 = vunpack.c.h.b16 %v629
    %v1466 = vunpack.c.l.b16 %v630
    %v1467 = vunpack.c.h.b16 %v630
    %v1468 = vunpack.c.l.b16 %v631
    %v1469 = vunpack.c.h.b16 %v631
    %v1470 = vunpack.c.l.b16 %v632
    %v1471 = vunpack.c.h.b16 %v632
    %v1472 = vunpack.c.l.b16 %v633
    %v1473 = vunpack.c.h.b16 %v633
    %v1474 = vunpack.c.l.b16 %v634
    %v1475 = vunpack.c.h.b16 %v634
    %v1476 = vunpack.c.l.b16 %v635
    %v1477 = vunpack.c.h.b16 %v635
    %v1478 = vunpack.c.l.b16 %v636
    %v1479 = vunpack.c.h.b16 %v636
    %v1480 = vunpack.c.l.b16 %v637
    %v1481 = vunpack.c.h.b16 %v637
    %v1482 = vunpack.c.l.b16 %v638
    %v1483 = vunpack.c.h.b16 %v638
    %v1484 = vunpack.c.l.b16 %v639
    %v1485 = vunpack.c.h.b16 %v639
    %v1486 = vunpack.c.l.b16 %v640
    %v1487 = vunpack.c.h.b16 %v640
    %v1488 = vunpack.c.l.b16 %v641
    %v1489 = vunpack.c.h.b16 %v641
    %v1490 = vunpack.c.l.b16 %v642
    %v1491 = vunpack.c.h.b16 %v642
    %v1492 = vunpack.c.l.b16 %v643
    %v1493 = vunpack.c.h.b16 %v643
    %v1494 = vunpack.c.l.b16 %v644
    %v1495 = vunpack.c.h.b16 %v644
    %v1496 = vunpack.c.l.b16 %v645
    %v1497 = vunpack.c.h.b16 %v645
    %v1498 = vunpack.c.l.b16 %v646
    %v1499 = vunpack.c.h.b16 %v646
    %v1500 = vunpack.c.l.b16 %v647
    %v1501 = vunpack.c.h.b16 %v647
    %v1502 = vunpack.c.l.b16 %v648
    %v1503 = vunpack.c.h.b16 %v648
    %v1504 = vunpack.c.l.b16 %v649
    %v1505 = vunpack.c.h.b16 %v649
    %v1506 = vunpack.c.l.b16 %v650
    %v1507 = vunpack.c.h.b16 %v650
    %v1508 = vunpack.c.l.b16 %v651
    %v1509 = vunpack.c.h.b16 %v651
    %v1510 = vunpack.c.l.b16 %v652
    %v1511 = vunpack.c.h.b16 %v652
    %v1512 = vunpack.c.l.b16 %v653
    %v1513 = vunpack.c.h.b16 %v653
    %v1514 = vunpack.c.l.b16 %v654
    %v1515 = vunpack.c.h.b16 %v654
    %v1516 = vunpack.c.l.b16 %v655
    %v1517 = vunpack.c.h.b16 %v655
    %v1518 = vunpack.c.l.b16 %v656
    %v1519 = vunpack.c.h.b16 %v656
    %v1520 = vunpack.c.l.b16 %v657
    %v1521 = vunpack.c.h.b16 %v657
    %v1522 = vunpack.c.l.b16 %v658
    %v1523 = vunpack.c.h.b16 %v658
    %v1524 = vunpack.c.l.b16 %v659
    %v1525 = vunpack.c.h.b16 %v659
    %v1526 = vunpack.c.l.b16 %v660
    %v1527 = vunpack.c.h.b16 %v660
    %v1528 = vunpack.c.l.b16 %v661
    %v1529 = vunpack.c.h.b16 %v661
    %v1530 = vunpack.c.l.b16 %v662
    %v1531 = vunpack.c.h.b16 %v662
    %v1532 = vunpack.c.l.b16 %v663
    %v1533 = vunpack.c.h.b16 %v663
    %v1534 = vunpack.c.l.b16 %v664
    %v1535 = vunpack.c.h.b16 %v664
    %v1536 = vunpack.c.l.b16 %v665
    %v1537 = vunpack.c.h.b16 %v665
    %v1538 = vunpack.c.l.b16 %v666
    %v1539 = vunpack.c.h.b16 %v666
    %v1540 = vunpack.c.l.b16 %v667
    %v1541 = vunpack.c.h.b16 %v667
    %v1542 = vunpack.c.l.b16 %v668
    %v1543 = vunpack.c.h.b16 %v668
    %v1544 = vunpack.c.l.b16 %v669
    %v1545 = vunpack.c.h.b16 %v669
    %v1546 = vunpack.c.l.b16 %v670
    %v1547 = vunpack.c.h.b16 %v670
    %v1548 = vunpack.c.l.b16 %v671
    %v1549 = vunpack.c.h.b16 %v671
    %v1550 = vunpack.c.l.b16 %v672
    %v1551 = vunpack.c.h.b16 %v672
    %v1552 = vunpack.c.l.b16 %v673
    %v1553 = vunpack.c.h.b16 %v673
    %v1554 = vunpack.c.l.b16 %v674
    %v1555 = vunpack.c.h.b16 %v674
    %v1556 = vunpack.c.l.b16 %v675
    %v1557 = vunpack.c.h.b16 %v675
    %v1558 = vunpack.c.l.b16 %v676
    %v1559 = vunpack.c.h.b16 %v676
    %v1560 = vunpack.c.l.b16 %v677
    %v1561 = vunpack.c.h.b16 %v677
    %v1562 = vunpack.c.l.b16 %v678
    %v1563 = vunpack.c.h.b16 %v678
    %v1564 = vunpack.c.l.b16 %v679
    %v1565 = vunpack.c.h.b16 %v679
    %v1566 = vunpack.c.l.b16 %v680
    %v1567 = vunpack.c.h.b16 %v680
    %v1568 = vunpack.c.l.b16 %v681
    %v1569 = vunpack.c.h.b16 %v681
    %v1570 = vunpack.c.l.b16 %v682
    %v1571 = vunpack.c.h.b16 %v682
    %v1572 = vunpack.c.l.b16 %v683
    %v1573 = vunpack.c.h.b16 %v683
    %v1574 = vunpack.c.l.b16 %v684
    %v1575 = vunpack.c.h.b16 %v684
    %v1576 = vunpack.c.l.b16 %v685
    %v1577 = vunpack.c.h.b16 %v685
    %v1578 = vunpack.c.l.b16 %v686
    %v1579 = vunpack.c.h.b16 %v686
    %v1580 = vunpack.c.l.b16 %v687
    %v1581 = vunpack.c.h.b16 %v687
    %v1582 = vunpack.c.l.b16 %v688
    %v1583 = vunpack.c.h.b16 %v688
    %v1584 = vunpack.c.l.b16 %v689
    %v1585 = vunpack.c.h.b16 %v689
    %v1586 = vunpack.c.l.b16 %v690
    %v1587 = vunpack.c.h.b16 %v690
    %v1588 = vunpack.c.l.b16 %v691
    %v1589 = vunpack.c.h.b16 %v691
    %v1590 = vunpack.c.l.b16 %v692
    %v1591 = vunpack.c.h.b16 %v692
    %v1592 = vunpack.c.l.b16 %v693
    %v1593 = vunpack.c.h.b16 %v693
    %v1594 = vunpack.c.l.b16 %v694
    %v1595 = vunpack.c.h.b16 %v694
    %v1596 = vunpack.c.l.b16 %v695
    %v1597 = vunpack.c.h.b16 %v695
    %v1598 = vunpack.c.l.b16 %v696
    %v1599 = vunpack.c.h.b16 %v696
    %v1600 = vunpack.c.l.b16 %v697
    %v1601 = vunpack.c.h.b16 %v697
    %v1602 = vunpack.c.l.b16 %v698
    %v1603 = vunpack.c.h.b16 %v698
    %v1604 = vunpack.c.l.b16 %v699
    %v1605 = vunpack.c.h.b16 %v699
    %v1606 = vunpack.c.l.b16 %v700
    %v1607 = vunpack.c.h.b16 %v700
    %v1608 = vunpack.c.l.b16 %v701
    %v1609 = vunpack.c.h.b16 %v701
    %v1610 = vunpack.c.l.b16 %v702
    %v1611 = vunpack.c.h.b16 %v702
    %v1612 = vunpack.c.l.b16 %v703
    %v1613 = vunpack.c.h.b16 %v703
    %v1614 = vunpack.c.l.b16 %v704
    %v1615 = vunpack.c.h.b16 %v704
    %v1616 = vunpack.c.l.b16 %v705
    %v1617 = vunpack.c.h.b16 %v705
    %v1618 = vunpack.c.l.b16 %v706
    %v1619 = vunpack.c.h.b16 %v706
    %v1620 = vunpack.c.l.b16 %v707
    %v1621 = vunpack.c.h.b16 %v707
    %v1622 = vunpack.c.l.b16 %v708
    %v1623 = vunpack.c.h.b16 %v708
    %v1624 = vunpack.c.l.b16 %v709
    %v1625 = vunpack.c.h.b16 %v709
    %v1626 = vunpack.c.l.b16 %v710
    %v1627 = vunpack.c.h.b16 %v710
    %v1628 = vunpack.c.l.b16 %v711
    %v1629 = vunpack.c.h.b16 %v711
    %v1630 = vunpack.c.l.b16 %v712
    %v1631 = vunpack.c.h.b16 %v712
    %v1632 = vunpack.c.l.b16 %v713
    %v1633 = vunpack.c.h.b16 %v713
    %v1634 = vunpack.c.l.b16 %v714
    %v1635 = vunpack.c.h.b16 %v714
    %v1636 = vunpack.c.l.b16 %v715
    %v1637 = vunpack.c.h.b16 %v715
    %v1638 = vunpack.c.l.b16 %v716
    %v1639 = vunpack.c.h.b16 %v716
    %v1640 = vunpack.c.l.b16 %v717
    %v1641 = vunpack.c.h.b16 %v717
    %v1642 = vunpack.c.l.b16 %v718
    %v1643 = vunpack.c.h.b16 %v718
    %v1644 = vunpack.c.l.b16 %v719
    %v1645 = vunpack.c.h.b16 %v719
    %v1646 = vunpack.c.l.b16 %v720
    %v1647 = vunpack.c.h.b16 %v720
    %v1648 = vunpack.c.l.b16 %v721
    %v1649 = vunpack.c.h.b16 %v721
    %v1650 = vunpack.c.l.b16 %v722
    %v1651 = vunpack.c.h.b16 %v722
    %v1652 = vunpack.c.l.b16 %v723
    %v1653 = vunpack.c.h.b16 %v723
    %v1654 = vunpack.c.l.b16 %v724
    %v1655 = vunpack.c.h.b16 %v724
    %v1656 = vunpack.c.l.b16 %v725
    %v1657 = vunpack.c.h.b16 %v725
    %v1658 = vunpack.c.l.b16 %v726
    %v1659 = vunpack.c.h.b16 %v726
    %v1660 = vunpack.c.l.b16 %v727
    %v1661 = vunpack.c.h.b16 %v727
    %v1662 = vunpack.c.l.b16 %v728
    %v1663 = vunpack.c.h.b16 %v728
    %v1664 = vunpack.c.l.b16 %v729
    %v1665 = vunpack.c.h.b16 %v729
    %v1666 = vunpack.c.l.b16 %v730
    %v1667 = vunpack.c.h.b16 %v730
    %v1668 = vunpack.c.l.b16 %v731
    %v1669 = vunpack.c.h.b16 %v731
    %v1670 = vunpack.c.l.b16 %v732
    %v1671 = vunpack.c.h.b16 %v732
    %v1672 = vunpack.c.l.b16 %v733
    %v1673 = vunpack.c.h.b16 %v733
    %v1674 = vunpack.c.l.b16 %v734
    %v1675 = vunpack.c.h.b16 %v734
    %v1676 = vunpack.c.l.b16 %v735
    %v1677 = vunpack.c.h.b16 %v735
    %v1678 = vunpack.c.l.b16 %v736
    %v1679 = vunpack.c.h.b16 %v736
    %v1680 = vunpack.c.l.b16 %v737
    %v1681 = vunpack.c.h.b16 %v737
    %v1682 = vunpack.c.l.b16 %v738
    %v1683 = vunpack.c.h.b16 %v738
    %v1684 = vunpack.c.l.b16 %v739
    %v1685 = vunpack.c.h.b16 %v739
    %v1686 = vunpack.c.l.b16 %v740
    %v1687 = vunpack.c.h.b16 %v740
    %v1688 = vunpack.c.l.b16 %v741
    %v1689 = vunpack.c.h.b16 %v741
    %v1690 = vunpack.c.l.b16 %v742
    %v1691 = vunpack.c.h.b16 %v742
    %v1692 = vunpack.c.l.b16 %v743
    %v1693 = vunpack.c.h.b16 %v743
    %v1694 = vunpack.c.l.b16 %v744
    %v1695 = vunpack.c.h.b16 %v744
    %v1696 = vunpack.c.l.b16 %v745
    %v1697 = vunpack.c.h.b16 %v745
    %v1698 = vunpack.c.l.b16 %v746
    %v1699 = vunpack.c.h.b16 %v746
    %v1700 = vunpack.c.l.b16 %v747
    %v1701 = vunpack.c.h.b16 %v747
    %v1702 = vunpack.c.l.b16 %v748
    %v1703 = vunpack.c.h.b16 %v748
    %v1704 = vunpack.c.l.b16 %v749
    %v1705 = vunpack.c.h.b16 %v749
    %v1706 = vunpack.c.l.b16 %v750
    %v1707 = vunpack.c.h.b16 %v750
    %v1708 = vunpack.c.l.b16 %v751
    %v1709 = vunpack.c.h.b16 %v751
    %v1710 = vunpack.c.l.b16 %v752
    %v1711 = vunpack.c.h.b16 %v752
    %v1712 = vunpack.c.l.b16 %v753
    %v1713 = vunpack.c.h.b16 %v753
    %v1714 = vunpack.c.l.b16 %v754
    %v1715 = vunpack.c.h.b16 %v754
    %v1716 = vunpack.c.l.b16 %v755
    %v1717 = vunpack.c.h.b16 %v755
    %v1718 = vunpack.c.l.b16 %v756
    %v1719 = vunpack.c.h.b16 %v756
    %v1720 = vunpack.c.l.b16 %v757
    %v1721 = vunpack.c.h.b16 %v757
    %v1722 = vunpack.c.l.b16 %v758
    %v1723 = vunpack.c.h.b16 %v758
    %v1724 = vunpack.c.l.b16 %v759
    %v1725 = vunpack.c.h.b16 %v759
    %v1726 = vunpack.c.l.b16 %v760
    %v1727 = vunpack.c.h.b16 %v760
    %v1728 = vunpack.c.l.b16 %v761
    %v1729 = vunpack.c.h.b16 %v761
    %v1730 = vunpack.c.l.b16 %v762
    %v1731 = vunpack.c.h.b16 %v762
    %v1732 = vunpack.c.l.b16 %v763
    %v1733 = vunpack.c.h.b16 %v763
    %v1734 = vunpack.c.l.b16 %v764
    %v1735 = vunpack.c.h.b16 %v764
    %v1736 = vunpack.c.l.b16 %v765
    %v1737 = vunpack.c.h.b16 %v765
    %v1738 = vunpack.c.l.b16 %v766
    %v1739 = vunpack.c.h.b16 %v766
    %v1740 = vunpack.c.l.b16 %v767
    %v1741 = vunpack.c.h.b16 %v767
    %v1742 = vunpack.c.l.b16 %v768
    %v1743 = vunpack.c.h.b16 %v768
    %v1744 = vunpack.c.l.b16 %v769
    %v1745 = vunpack.c.h.b16 %v769
    %v1746 = vunpack.c.l.b16 %v770
    %v1747 = vunpack.c.h.b16 %v770
    %v1748 = vunpack.c.l.b16 %v771
    %v1749 = vunpack.c.h.b16 %v771
    %v1750 = vunpack.c.l.b16 %v772
    %v1751 = vunpack.c.h.b16 %v772
    %v1752 = vunpack.c.l.b16 %v773
    %v1753 = vunpack.c.h.b16 %v773
    %v1754 = vunpack.c.l.b16 %v774
    %v1755 = vunpack.c.h.b16 %v774
    %v1756 = vunpack.c.l.b16 %v775
    %v1757 = vunpack.c.h.b16 %v775
    %v1758 = vunpack.c.l.b16 %v776
    %v1759 = vunpack.c.h.b16 %v776
    %v1760 = vunpack.c.l.b16 %v777
    %v1761 = vunpack.c.h.b16 %v777
    %v1762 = vunpack.c.l.b16 %v778
    %v1763 = vunpack.c.h.b16 %v778
    %v1764 = vunpack.c.l.b16 %v779
    %v1765 = vunpack.c.h.b16 %v779
    %v1766 = vunpack.c.l.b16 %v780
    %v1767 = vunpack.c.h.b16 %v780
    %v1768 = vunpack.c.l.b16 %v781
    %v1769 = vunpack.c.h.b16 %v781
    %v1770 = vunpack.c.l.b16 %v782
    %v1771 = vunpack.c.h.b16 %v782
    %v1772 = vunpack.c.l.b16 %v783
    %v1773 = vunpack.c.h.b16 %v783
    %v1774 = vunpack.c.l.b16 %v784
    %v1775 = vunpack.c.h.b16 %v784
    %v1776 = vunpack.c.l.b16 %v785
    %v1777 = vunpack.c.h.b16 %v785
    %v1778 = vunpack.c.l.b16 %v786
    %v1779 = vunpack.c.h.b16 %v786
    %v1780 = vunpack.c.l.b16 %v787
    %v1781 = vunpack.c.h.b16 %v787
    %v1782 = vunpack.c.l.b16 %v788
    %v1783 = vunpack.c.h.b16 %v788
    %v1784 = vunpack.c.l.b16 %v789
    %v1785 = vunpack.c.h.b16 %v789
    %v1786 = vunpack.c.l.b16 %v790
    %v1787 = vunpack.c.h.b16 %v790
    %v1788 = vunpack.c.l.b16 %v791
    %v1789 = vunpack.c.h.b16 %v791
    %v1790 = vunpack.c.l.b16 %v792
    %v1791 = vunpack.c.h.b16 %v792
    %v1792 = vunpack.c.l.b16 %v793
    %v1793 = vunpack.c.h.b16 %v793
    %v1794 = vunpack.c.l.b16 %v794
    %v1795 = vunpack.c.h.b16 %v794
    %v1796 = vunpack.c.l.b16 %v795
    %v1797 = vunpack.c.h.b16 %v795
    %v1798 = vunpack.c.l.b16 %v796
    %v1799 = vunpack.c.h.b16 %v796
    %v1800 = vunpack.c.l.b16 %v797
    %v1801 = vunpack.c.h.b16 %v797
    %v1802 = vunpack.c.l.b16 %v798
    %v1803 = vunpack.c.h.b16 %v798
    %v1804 = vunpack.c.l.b16 %v799
    %v1805 = vunpack.c.h.b16 %v799
    %v1806 = vunpack.c.l.b16 %v800
    %v1807 = vunpack.c.h.b16 %v800
    %v1808 = vunpack.c.l.b16 %v801
    %v1809 = vunpack.c.h.b16 %v801
    %v1810 = vunpack.c.l.b16 %v802
    %v1811 = vunpack.c.h.b16 %v802
    %v1812 = vunpack.c.l.b16 %v803
    %v1813 = vunpack.c.h.b16 %v803
    %v1814 = vunpack.c.l.b16 %v804
    %v1815 = vunpack.c.h.b16 %v804
    %v1816 = vunpack.c.l.b16 %v805
    %v1817 = vunpack.c.h.b16 %v805
    %v1818 = vunpack.c.l.b16 %v806
    %v1819 = vunpack.c.h.b16 %v806
    %v1820 = vunpack.c.l.b16 %v807
    %v1821 = vunpack.c.h.b16 %v807
    %v1822 = vunpack.c.l.b16 %v808
    %v1823 = vunpack.c.h.b16 %v808
    %v1824 = vunpack.c.l.b16 %v809
    %v1825 = vunpack.c.h.b16 %v809
    %v1826 = vunpack.c.l.b16 %v810
    %v1827 = vunpack.c.h.b16 %v810
    %v1828 = vunpack.c.l.b16 %v811
    %v1829 = vunpack.c.h.b16 %v811
    %v1830 = vunpack.c.l.b16 %v812
    %v1831 = vunpack.c.h.b16 %v812
    %v1832 = vunpack.c.l.b16 %v813
    %v1833 = vunpack.c.h.b16 %v813
    %v1834 = vunpack.c.l.b16 %v814
    %v1835 = vunpack.c.h.b16 %v814
    %v1836 = vunpack.c.l.b16 %v815
    %v1837 = vunpack.c.h.b16 %v815
    %v1838 = vunpack.c.l.b16 %v816
    %v1839 = vunpack.c.h.b16 %v816
    %v1840 = vunpack.c.l.b16 %v817
    %v1841 = vunpack.c.h.b16 %v817
    %v1842 = vunpack.c.l.b16 %v818
    %v1843 = vunpack.c.h.b16 %v818
    %v1844 = vunpack.c.l.b16 %v819
    %v1845 = vunpack.c.h.b16 %v819
    %v1846 = vunpack.c.l.b16 %v820
    %v1847 = vunpack.c.h.b16 %v820
    %v1848 = vunpack.c.l.b16 %v821
    %v1849 = vunpack.c.h.b16 %v821
    %v1850 = vunpack.c.l.b16 %v822
    %v1851 = vunpack.c.h.b16 %v822
    %v1852 = vunpack.c.l.b16 %v823
    %v1853 = vunpack.c.h.b16 %v823
    %v1854 = vunpack.c.l.b16 %v824
    %v1855 = vunpack.c.h.b16 %v824
    %v1856 = vunpack.c.l.b16 %v825
    %v1857 = vunpack.c.h.b16 %v825
    %v1858 = vunpack.c.l.b16 %v826
    %v1859 = vunpack.c.h.b16 %v826
    %v1860 = vunpack.c.l.b16 %v827
    %v1861 = vunpack.c.h.b16 %v827
    %v1862 = vunpack.c.l.b16 %v828
    %v1863 = vunpack.c.h.b16 %v828
    %v1864 = vunpack.c.l.b16 %v829
    %v1865 = vunpack.c.h.b16 %v829
    %v1866 = vunpack.c.l.b16 %v830
    %v1867 = vunpack.c.h.b16 %v830
    %v1868 = vunpack.c.l.b16 %v831
    %v1869 = vunpack.c.h.b16 %v831
    %v1870 = vunpack.c.l.b16 %v832
    %v1871 = vunpack.c.h.b16 %v832
    %v1872 = vunpack.c.l.b16 %v833
    %v1873 = vunpack.c.h.b16 %v833
    %v1874 = vunpack.c.l.b16 %v834
    %v1875 = vunpack.c.h.b16 %v834
    %v1876 = vunpack.c.l.b16 %v835
    %v1877 = vunpack.c.h.b16 %v835
    %v1878 = vunpack.c.l.b16 %v836
    %v1879 = vunpack.c.h.b16 %v836
    %v1880 = vunpack.c.l.b16 %v837
    %v1881 = vunpack.c.h.b16 %v837
    %v1882 = vunpack.c.l.b16 %v838
    %v1883 = vunpack.c.h.b16 %v838
    %v1884 = vunpack.c.l.b16 %v839
    %v1885 = vunpack.c.h.b16 %v839
    %v1886 = vunpack.c.l.b16 %v840
    %v1887 = vunpack.c.h.b16 %v840
    %v1888 = vunpack.c.l.b16 %v841
    %v1889 = vunpack.c.h.b16 %v841
    %v1890 = vunpack.c.l.b16 %v842
    %v1891 = vunpack.c.h.b16 %v842
    %v1892 = vunpack.c.l.b16 %v843
    %v1893 = vunpack.c.h.b16 %v843
    %v1894 = vunpack.c.l.b16 %v844
    %v1895 = vunpack.c.h.b16 %v844
    %v1896 = vunpack.c.l.b16 %v845
    %v1897 = vunpack.c.h.b16 %v845
    %v1898 = vunpack.c.l.b16 %v846
    %v1899 = vunpack.c.h.b16 %v846
    %v1900 = vunpack.c.l.b16 %v847
    %v1901 = vunpack.c.h.b16 %v847
    %v1902 = vunpack.c.l.b16 %v848
    %v1903 = vunpack.c.h.b16 %v848
    %v1904 = vunpack.c.l.b16 %v849
    %v1905 = vunpack.c.h.b16 %v849
    %v1906 = vunpack.c.l.b16 %v850
    %v1907 = vunpack.c.h.b16 %v850
    %v1908 = vunpack.c.l.b16 %v851
    %v1909 = vunpack.c.h.b16 %v851
    %v1910 = vunpack.c.l.b16 %v852
    %v1911 = vunpack.c.h.b16 %v852
    %v1912 = vunpack.c.l.b16 %v853
    %v1913 = vunpack.c.h.b16 %v853
    %v1914 = vunpack.c.l.b16 %v854
    %v1915 = vunpack.c.h.b16 %v854
    %v1916 = vunpack.c.l.b16 %v855
    %v1917 = vunpack.c.h.b16 %v855
    %v1918 = vunpack.c.l.b16 %v856
    %v1919 = vunpack.c.h.b16 %v856
    %v1920 = vunpack.c.l.b16 %v857
    %v1921 = vunpack.c.h.b16 %v857
    %v1922 = vunpack.c.l.b16 %v858
    %v1923 = vunpack.c.h.b16 %v858
    %v1924 = vunpack.c.l.b16 %v859
    %v1925 = vunpack.c.h.b16 %v859
    %v1926 = vunpack.c.l.b16 %v860
    %v1927 = vunpack.c.h.b16 %v860
    %v1928 = vunpack.c.l.b16 %v861
    %v1929 = vunpack.c.h.b16 %v861
    %v1930 = vunpack.c.l.b16 %v862
    %v1931 = vunpack.c.h.b16 %v862
    %v1932 = vunpack.c.l.b16 %v863
    %v1933 = vunpack.c.h.b16 %v863
    %v1934 = vunpack.c.l.b16 %v864
    %v1935 = vunpack.c.h.b16 %v864
    %v1936 = vunpack.c.l.b16 %v865
    %v1937 = vunpack.c.h.b16 %v865
    %v1938 = vunpack.c.l.b16 %v866
    %v1939 = vunpack.c.h.b16 %v866
    %v1940 = vunpack.c.l.b16 %v867
    %v1941 = vunpack.c.h.b16 %v867
    %v1942 = vunpack.c.l.b16 %v868
    %v1943 = vunpack.c.h.b16 %v868
    %v1944 = vunpack.c.l.b16 %v869
    %v1945 = vunpack.c.h.b16 %v869
    %v1946 = vunpack.c.l.b16 %v870
    %v1947 = vunpack.c.h.b16 %v870
    %v1948 = vunpack.c.l.b16 %v871
    %v1949 = vunpack.c.h.b16 %v871
    %v1950 = vunpack.c.l.b16 %v872
    %v1951 = vunpack.c.h.b16 %v872
    %v1952 = vunpack.c.l.b16 %v873
    %v1953 = vunpack.c.h.b16 %v873
    %v1954 = vunpack.c.l.b16 %v874
    %v1955 = vunpack.c.h.b16 %v874
    %v1956 = vunpack.c.l.b16 %v875
    %v1957 = vunpack.c.h.b16 %v875
    %v1958 = vunpack.c.l.b16 %v876
    %v1959 = vunpack.c.h.b16 %v876
    %v1960 = vunpack.c.l.b16 %v877
    %v1961 = vunpack.c.h.b16 %v877
    %v1962 = vunpack.c.l.b16 %v878
    %v1963 = vunpack.c.h.b16 %v878
    %v1964 = vunpack.c.l.b16 %v879
    %v1965 = vunpack.c.h.b16 %v879
    %v1966 = vunpack.c.l.b16 %v880
    %v1967 = vunpack.c.h.b16 %v880
    %v1968 = vunpack.c.l.b16 %v881
    %v1969 = vunpack.c.h.b16 %v881
    %v1970 = vunpack.c.l.b16 %v882
    %v1971 = vunpack.c.h.b16 %v882
    %v1972 = vunpack.c.l.b16 %v883
    %v1973 = vunpack.c.h.b16 %v883
    %v1974 = vunpack.c.l.b16 %v884
    %v1975 = vunpack.c.h.b16 %v884
    %v1976 = vunpack.c.l.b16 %v885
    %v1977 = vunpack.c.h.b16 %v885
    %v1978 = vunpack.c.l.b16 %v886
    %v1979 = vunpack.c.h.b16 %v886
    %v1980 = vunpack.c.l.b16 %v887
    %v1981 = vunpack.c.h.b16 %v887
    %v1982 = vunpack.c.l.b16 %v888
    %v1983 = vunpack.c.h.b16 %v888
    %v1984 = vunpack.c.l.b16 %v889
    %v1985 = vunpack.c.h.b16 %v889
    %v1986 = vunpack.c.l.b16 %v890
    %v1987 = vunpack.c.h.b16 %v890
    %v1988 = vunpack.c.l.b16 %v891
    %v1989 = vunpack.c.h.b16 %v891
    %v1990 = vunpack.c.l.b16 %v892
    %v1991 = vunpack.c.h.b16 %v892
    %v1992 = vunpack.c.l.b16 %v893
    %v1993 = vunpack.c.h.b16 %v893
    %v1994 = vunpack.c.l.b16 %v894
    %v1995 = vunpack.c.h.b16 %v894
    %v1996 = vunpack.c.l.b16 %v895
    %v1997 = vunpack.c.h.b16 %v895
    %v1998 = vunpack.c.l.b16 %v896
    %v1999 = vunpack.c.h.b16 %v896
    %v2000 = vunpack.c.l.b16 %v897
    %v2001 = vunpack.c.h.b16 %v897
    %v2002 = vunpack.c.l.b16 %v898
    %v2003 = vunpack.c.h.b16 %v898
    %v2004 = vunpack.c.l.b16 %v899
    %v2005 = vunpack.c.h.b16 %v899
    %v2006 = vunpack.c.l.b16 %v900
    %v2007 = vunpack.c.h.b16 %v900
    %v2008 = vunpack.c.l.b16 %v901
    %v2009 = vunpack.c.h.b16 %v901
    %v2010 = vunpack.c.l.b16 %v902
    %v2011 = vunpack.c.h.b16 %v902
    %v2012 = vunpack.c.l.b16 %v903
    %v2013 = vunpack.c.h.b16 %v903
    %v2014 = vunpack.c.l.b16 %v904
    %v2015 = vunpack.c.h.b16 %v904
    %v2016 = vunpack.c.l.b16 %v905
    %v2017 = vunpack.c.h.b16 %v905
    %v2018 = vunpack.c.l.b16 %v906
    %v2019 = vunpack.c.h.b16 %v906
    %v2020 = vunpack.c.l.b16 %v907
    %v2021 = vunpack.c.h.b16 %v907
    %v2022 = vunpack.c.l.b16 %v908
    %v2023 = vunpack.c.h.b16 %v908
    %v2024 = vunpack.c.l.b16 %v909
    %v2025 = vunpack.c.h.b16 %v909
    %v2026 = vunpack.c.l.b16 %v910
    %v2027 = vunpack.c.h.b16 %v910
    %v2028 = vunpack.c.l.b16 %v911
    %v2029 = vunpack.c.h.b16 %v911
    %v2030 = vunpack.c.l.b16 %v912
    %v2031 = vunpack.c.h.b16 %v912
    %v2032 = vunpack.c.l.b16 %v913
    %v2033 = vunpack.c.h.b16 %v913
    %v2034 = vunpack.c.l.b16 %v914
    %v2035 = vunpack.c.h.b16 %v914
    %v2036 = vunpack.c.l.b16 %v915
    %v2037 = vunpack.c.h.b16 %v915
    %v2038 = vunpack.c.l.b16 %v916
    %v2039 = vunpack.c.h.b16 %v916
    %v2040 = vunpack.c.l.b16 %v917
    %v2041 = vunpack.c.h.b16 %v917
    %v2042 = vunpack.c.l.b16 %v918
    %v2043 = vunpack.c.h.b16 %v918
    %v2044 = vunpack.c.l.b16 %v919
    %v2045 = vunpack.c.h.b16 %v919
    %v2046 = vunpack.c.l.b16 %v920
    %v2047 = vunpack.c.h.b16 %v920
    %v2048 = vunpack.c.l.b16 %v921
    %v2049 = vunpack.c.h.b16 %v921
    %v2050 = vunpack.c.l.b16 %v922
    %v2051 = vunpack.c.h.b16 %v922
    %v2052 = vunpack.c.l.b16 %v923
    %v2053 = vunpack.c.h.b16 %v923
    %v2054 = vunpack.c.l.b16 %v924
    %v2055 = vunpack.c.h.b16 %v924
    %v2056 = vunpack.c.l.b16 %v925
    %v2057 = vunpack.c.h.b16 %v925
    %v2058 = vunpack.c.l.b16 %v926
    %v2059 = vunpack.c.h.b16 %v926
    %v2060 = vunpack.c.l.b16 %v927
    %v2061 = vunpack.c.h.b16 %v927
    %v2062 = vunpack.c.l.b16 %v928
    %v2063 = vunpack.c.h.b16 %v928
    %v2064 = vunpack.c.l.b16 %v929
    %v2065 = vunpack.c.h.b16 %v929
    %v2066 = vunpack.c.l.b16 %v930
    %v2067 = vunpack.c.h.b16 %v930
    %v2068 = vunpack.c.l.b16 %v931
    %v2069 = vunpack.c.h.b16 %v931
    %v2070 = vunpack.c.l.b16 %v932
    %v2071 = vunpack.c.h.b16 %v932
    %v2072 = vunpack.c.l.b16 %v933
    %v2073 = vunpack.c.h.b16 %v933
    %v2074 = vunpack.c.l.b16 %v934
    %v2075 = vunpack.c.h.b16 %v934
    %v2076 = vunpack.c.l.b16 %v935
    %v2077 = vunpack.c.h.b16 %v935
    %v2078 = vunpack.c.l.b16 %v936
    %v2079 = vunpack.c.h.b16 %v936
    %v2080 = vunpack.c.l.b16 %v937
    %v2081 = vunpack.c.h.b16 %v937
    %v2082 = vunpack.c.l.b16 %v938
    %v2083 = vunpack.c.h.b16 %v938
    %v2084 = vunpack.c.l.b16 %v939
    %v2085 = vunpack.c.h.b16 %v939
    %v2086 = vunpack.c.l.b16 %v940
    %v2087 = vunpack.c.h.b16 %v940
    %v2088 = vunpack.c.l.b16 %v941
    %v2089 = vunpack.c.h.b16 %v941
    %v2090 = vunpack.c.l.b16 %v942
    %v2091 = vunpack.c.h.b16 %v942
    %v2092 = vunpack.c.l.b16 %v943
    %v2093 = vunpack.c.h.b16 %v943
    %v2094 = vunpack.c.l.b16 %v944
    %v2095 = vunpack.c.h.b16 %v944
    %v2096 = vunpack.c.l.b16 %v945
    %v2097 = vunpack.c.h.b16 %v945
    %v2098 = vunpack.c.l.b16 %v946
    %v2099 = vunpack.c.h.b16 %v946
    %v2100 = vunpack.c.l.b16 %v947
    %v2101 = vunpack.c.h.b16 %v947
    %v2102 = vunpack.c.l.b16 %v948
    %v2103 = vunpack.c.h.b16 %v948
    %v2104 = vunpack.c.l.b16 %v949
    %v2105 = vunpack.c.h.b16 %v949
    %v2106 = vunpack.c.l.b16 %v950
    %v2107 = vunpack.c.h.b16 %v950
    %v2108 = vunpack.c.l.b16 %v951
    %v2109 = vunpack.c.h.b16 %v951
    %v2110 = vunpack.c.l.b16 %v952
    %v2111 = vunpack.c.h.b16 %v952
    %v2112 = vunpack.c.l.b16 %v953
    %v2113 = vunpack.c.h.b16 %v953
    %v2114 = vunpack.c.l.b16 %v954
    %v2115 = vunpack.c.h.b16 %v954
    %v2116 = vunpack.c.l.b16 %v955
    %v2117 = vunpack.c.h.b16 %v955
    %v2118 = vunpack.c.l.b16 %v956
    %v2119 = vunpack.c.h.b16 %v956
    %v2120 = vunpack.c.l.b16 %v957
    %v2121 = vunpack.c.h.b16 %v957
    %v2122 = vunpack.c.l.b16 %v958
    %v2123 = vunpack.c.h.b16 %v958
    %v2124 = vunpack.c.l.b16 %v959
    %v2125 = vunpack.c.h.b16 %v959
    %v2126 = vunpack.c.l.b16 %v960
    %v2127 = vunpack.c.h.b16 %v960
    %v2128 = vunpack.c.l.b16 %v961
    %v2129 = vunpack.c.h.b16 %v961
    %v2130 = vunpack.c.l.b16 %v962
    %v2131 = vunpack.c.h.b16 %v962
    %v2132 = vunpack.c.l.b16 %v963
    %v2133 = vunpack.c.h.b16 %v963
    %v2134 = vunpack.c.l.b16 %v964
    %v2135 = vunpack.c.h.b16 %v964
    %v2136 = vunpack.c.l.b16 %v965
    %v2137 = vunpack.c.h.b16 %v965
    %v2138 = vunpack.c.l.b16 %v966
    %v2139 = vunpack.c.h.b16 %v966
    %v2140 = vunpack.c.l.b16 %v967
    %v2141 = vunpack.c.h.b16 %v967
    %v2142 = vunpack.c.l.b16 %v968
    %v2143 = vunpack.c.h.b16 %v968
    %v2144 = vunpack.c.l.b16 %v969
    %v2145 = vunpack.c.h.b16 %v969
    %v2146 = vunpack.c.l.b16 %v970
    %v2147 = vunpack.c.h.b16 %v970
    %v2148 = vunpack.c.l.b16 %v971
    %v2149 = vunpack.c.h.b16 %v971
    %v2150 = vunpack.c.l.b16 %v972
    %v2151 = vunpack.c.h.b16 %v972
    %v2152 = vunpack.c.l.b16 %v973
    %v2153 = vunpack.c.h.b16 %v973
    %v2154 = vunpack.c.l.b16 %v974
    %v2155 = vunpack.c.h.b16 %v974
    %v2156 = vunpack.c.l.b16 %v975
    %v2157 = vunpack.c.h.b16 %v975
    %v2158 = vunpack.c.l.b16 %v976
    %v2159 = vunpack.c.h.b16 %v976
    %v2160 = vunpack.c.l.b16 %v977
    %v2161 = vunpack.c.h.b16 %v977
    %v2162 = vunpack.c.l.b16 %v978
    %v2163 = vunpack.c.h.b16 %v978
    %v2164 = vunpack.c.l.b16 %v979
    %v2165 = vunpack.c.h.b16 %v979
    %v2166 = vunpack.c.l.b16 %v980
    %v2167 = vunpack.c.h.b16 %v980
    %v2168 = vunpack.c.l.b16 %v981
    %v2169 = vunpack.c.h.b16 %v981
    %v2170 = vunpack.c.l.b16 %v982
    %v2171 = vunpack.c.h.b16 %v982
    %v2172 = vunpack.c.l.b16 %v983
    %v2173 = vunpack.c.h.b16 %v983
    %v2174 = vunpack.c.l.b16 %v984
    %v2175 = vunpack.c.h.b16 %v984
    %v2176 = vunpack.c.l.b16 %v985
    %v2177 = vunpack.c.h.b16 %v985
    %v2178 = vunpack.c.l.b16 %v986
    %v2179 = vunpack.c.h.b16 %v986
    %v2180 = vunpack.c.l.b16 %v987
    %v2181 = vunpack.c.h.b16 %v987
    %v2182 = vpack.c.b16 %v1422, %v1414
    %v2183 = vpack.c.b16 %v1423, %v1415
    %v2184 = vpack.c.b16 %v1424, %v1416
    %v2185 = vpack.c.b16 %v1425, %v1417
    %v2186 = vpack.c.b16 %v1426, %v1418
    %v2187 = vpack.c.b16 %v1427, %v1419
    %v2188 = vpack.c.b16 %v1428, %v1420
    %v2189 = vpack.c.b16 %v1429, %v1421
    %v2190 = vpack.c.b16 %v1438, %v1430
    %v2191 = vpack.c.b16 %v1439, %v1431
    %v2192 = vpack.c.b16 %v1440, %v1432
    %v2193 = vpack.c.b16 %v1441, %v1433
    %v2194 = vpack.c.b16 %v1442, %v1434
    %v2195 = vpack.c.b16 %v1443, %v1435
    %v2196 = vpack.c.b16 %v1444, %v1436
    %v2197 = vpack.c.b16 %v1445, %v1437
    %v2198 = vpack.c.b16 %v1454, %v1446
    %v2199 = vpack.c.b16 %v1455, %v1447
    %v2200 = vpack.c.b16 %v1456, %v1448
    %v2201 = vpack.c.b16 %v1457, %v1449
    %v2202 = vpack.c.b16 %v1458, %v1450
    %v2203 = vpack.c.b16 %v1459, %v1451
    %v2204 = vpack.c.b16 %v1460, %v1452
    %v2205 = vpack.c.b16 %v1461, %v1453
    %v2206 = vpack.c.b16 %v1470, %v1462
    %v2207 = vpack.c.b16 %v1471, %v1463
    %v2208 = vpack.c.b16 %v1472, %v1464
    %v2209 = vpack.c.b16 %v1473, %v1465
    %v2210 = vpack.c.b16 %v1474, %v1466
    %v2211 = vpack.c.b16 %v1475, %v1467
    %v2212 = vpack.c.b16 %v1476, %v1468
    %v2213 = vpack.c.b16 %v1477, %v1469
    %v2214 = vpack.c.b16 %v1486, %v1478
    %v2215 = vpack.c.b16 %v1487, %v1479
    %v2216 = vpack.c.b16 %v1488, %v1480
    %v2217 = vpack.c.b16 %v1489, %v1481
    %v2218 = vpack.c.b16 %v1490, %v1482
    %v2219 = vpack.c.b16 %v1491, %v1483
    %v2220 = vpack.c.b16 %v1492, %v1484
    %v2221 = vpack.c.b16 %v1493, %v1485
    %v2222 = vpack.c.b16 %v1502, %v1494
    %v2223 = vpack.c.b16 %v1503, %v1495
    %v2224 = vpack.c.b16 %v1504, %v1496
    %v2225 = vpack.c.b16 %v1505, %v1497
    %v2226 = vpack.c.b16 %v1506, %v1498
    %v2227 = vpack.c.b16 %v1507, %v1499
    %v2228 = vpack.c.b16 %v1508, %v1500
    %v2229 = vpack.c.b16 %v1509, %v1501
    %v2230 = vpack.c.b16 %v1518, %v1510
    %v2231 = vpack.c.b16 %v1519, %v1511
    %v2232 = vpack.c.b16 %v1520, %v1512
    %v2233 = vpack.c.b16 %v1521, %v1513
    %v2234 = vpack.c.b16 %v1522, %v1514
    %v2235 = vpack.c.b16 %v1523, %v1515
    %v2236 = vpack.c.b16 %v1524, %v1516
    %v2237 = vpack.c.b16 %v1525, %v1517
    %v2238 = vpack.c.b16 %v1534, %v1526
    %v2239 = vpack.c.b16 %v1535, %v1527
    %v2240 = vpack.c.b16 %v1536, %v1528
    %v2241 = vpack.c.b16 %v1537, %v1529
    %v2242 = vpack.c.b16 %v1538, %v1530
    %v2243 = vpack.c.b16 %v1539, %v1531
    %v2244 = vpack.c.b16 %v1540, %v1532
    %v2245 = vpack.c.b16 %v1541, %v1533
    %v2246 = vpack.c.b16 %v1550, %v1542
    %v2247 = vpack.c.b16 %v1551, %v1543
    %v2248 = vpack.c.b16 %v1552, %v1544
    %v2249 = vpack.c.b16 %v1553, %v1545
    %v2250 = vpack.c.b16 %v1554, %v1546
    %v2251 = vpack.c.b16 %v1555, %v1547
    %v2252 = vpack.c.b16 %v1556, %v1548
    %v2253 = vpack.c.b16 %v1557, %v1549
    %v2254 = vpack.c.b16 %v1566, %v1558
    %v2255 = vpack.c.b16 %v1567, %v1559
    %v2256 = vpack.c.b16 %v1568, %v1560
    %v2257 = vpack.c.b16 %v1569, %v1561
    %v2258 = vpack.c.b16 %v1570, %v1562
    %v2259 = vpack.c.b16 %v1571, %v1563
    %v2260 = vpack.c.b16 %v1572, %v1564
    %v2261 = vpack.c.b16 %v1573, %v1565
    %v2262 = vpack.c.b16 %v1582, %v1574
    %v2263 = vpack.c.b16 %v1583, %v1575
    %v2264 = vpack.c.b16 %v1584, %v1576
    %v2265 = vpack.c.b16 %v1585, %v1577
    %v2266 = vpack.c.b16 %v1586, %v1578
    %v2267 = vpack.c.b16 %v1587, %v1579
    %v2268 = vpack.c.b16 %v1588, %v1580
    %v2269 = vpack.c.b16 %v1589, %v1581
    %v2270 = vpack.c.b16 %v1598, %v1590
    %v2271 = vpack.c.b16 %v1599, %v1591
    %v2272 = vpack.c.b16 %v1600, %v1592
    %v2273 = vpack.c.b16 %v1601, %v1593
    %v2274 = vpack.c.b16 %v1602, %v1594
    %v2275 = vpack.c.b16 %v1603, %v1595
    %v2276 = vpack.c.b16 %v1604, %v1596
    %v2277 = vpack.c.b16 %v1605, %v1597
    %v2278 = vpack.c.b16 %v1614, %v1606
    %v2279 = vpack.c.b16 %v1615, %v1607
    %v2280 = vpack.c.b16 %v1616, %v1608
    %v2281 = vpack.c.b16 %v1617, %v1609
    %v2282 = vpack.c.b16 %v1618, %v1610
    %v2283 = vpack.c.b16 %v1619, %v1611
    %v2284 = vpack.c.b16 %v1620, %v1612
    %v2285 = vpack.c.b16 %v1621, %v1613
    %v2286 = vpack.c.b16 %v1630, %v1622
    %v2287 = vpack.c.b16 %v1631, %v1623
    %v2288 = vpack.c.b16 %v1632, %v1624
    %v2289 = vpack.c.b16 %v1633, %v1625
    %v2290 = vpack.c.b16 %v1634, %v1626
    %v2291 = vpack.c.b16 %v1635, %v1627
    %v2292 = vpack.c.b16 %v1636, %v1628
    %v2293 = vpack.c.b16 %v1637, %v1629
    %v2294 = vpack.c.b16 %v1646, %v1638
    %v2295 = vpack.c.b16 %v1647, %v1639
    %v2296 = vpack.c.b16 %v1648, %v1640
    %v2297 = vpack.c.b16 %v1649, %v1641
    %v2298 = vpack.c.b16 %v1650, %v1642
    %v2299 = vpack.c.b16 %v1651, %v1643
    %v2300 = vpack.c.b16 %v1652, %v1644
    %v2301 = vpack.c.b16 %v1653, %v1645
    %v2302 = vpack.c.b16 %v1662, %v1654
    %v2303 = vpack.c.b16 %v1663, %v1655
    %v2304 = vpack.c.b16 %v1664, %v1656
    %v2305 = vpack.c.b16 %v1665, %v1657
    %v2306 = vpack.c.b16 %v1666, %v1658
    %v2307 = vpack.c.b16 %v1667, %v1659
    %v2308 = vpack.c.b16 %v1668, %v1660
    %v2309 = vpack.c.b16 %v1669, %v1661
    %v2310 = vpack.c.b16 %v1678, %v1670
    %v2311 = vpack.c.b16 %v1679, %v1671
    %v2312 = vpack.c.b16 %v1680, %v1672
    %v2313 = vpack.c.b16 %v1681, %v1673
    %v2314 = vpack.c.b16 %v1682, %v1674
    %v2315 = vpack.c.b16 %v1683, %v1675
    %v2316 = vpack.c.b16 %v1684, %v1676
    %v2317 = vpack.c.b16 %v1685, %v1677
    %v2318 = vpack.c.b16 %v1694, %v1686
    %v2319 = vpack.c.b16 %v1695, %v1687
    %v2320 = vpack.c.b16 %v1696, %v1688
    %v2321 = vpack.c.b16 %v1697, %v1689
    %v2322 = vpack.c.b16 %v1698, %v1690
    %v2323 = vpack.c.b16 %v1699, %v1691
    %v2324 = vpack.c.b16 %v1700, %v1692
    %v2325 = vpack.c.b16 %v1701, %v1693
    %v2326 = vpack.c.b16 %v1710, %v1702
    %v2327 = vpack.c.b16 %v1711, %v1703
    %v2328 = vpack.c.b16 %v1712, %v1704
    %v2329 = vpack.c.b16 %v1713, %v1705
    %v2330 = vpack.c.b16 %v1714, %v1706
    %v2331 = vpack.c.b16 %v1715, %v1707
    %v2332 = vpack.c.b16 %v1716, %v1708
    %v2333 = vpack.c.b16 %v1717, %v1709
    %v2334 = vpack.c.b16 %v1726, %v1718
    %v2335 = vpack.c.b16 %v1727, %v1719
    %v2336 = vpack.c.b16 %v1728, %v1720
    %v2337 = vpack.c.b16 %v1729, %v1721
    %v2338 = vpack.c.b16 %v1730, %v1722
    %v2339 = vpack.c.b16 %v1731, %v1723
    %v2340 = vpack.c.b16 %v1732, %v1724
    %v2341 = vpack.c.b16 %v1733, %v1725
    %v2342 = vpack.c.b16 %v1742, %v1734
    %v2343 = vpack.c.b16 %v1743, %v1735
    %v2344 = vpack.c.b16 %v1744, %v1736
    %v2345 = vpack.c.b16 %v1745, %v1737
    %v2346 = vpack.c.b16 %v1746, %v1738
    %v2347 = vpack.c.b16 %v1747, %v1739
    %v2348 = vpack.c.b16 %v1748, %v1740
    %v2349 = vpack.c.b16 %v1749, %v1741
    %v2350 = vpack.c.b16 %v1758, %v1750
    %v2351 = vpack.c.b16 %v1759, %v1751
    %v2352 = vpack.c.b16 %v1760, %v1752
    %v2353 = vpack.c.b16 %v1761, %v1753
    %v2354 = vpack.c.b16 %v1762, %v1754
    %v2355 = vpack.c.b16 %v1763, %v1755
    %v2356 = vpack.c.b16 %v1764, %v1756
    %v2357 = vpack.c.b16 %v1765, %v1757
    %v2358 = vpack.c.b16 %v1774, %v1766
    %v2359 = vpack.c.b16 %v1775, %v1767
    %v2360 = vpack.c.b16 %v1776, %v1768
    %v2361 = vpack.c.b16 %v1777, %v1769
    %v2362 = vpack.c.b16 %v1778, %v1770
    %v2363 = vpack.c.b16 %v1779, %v1771
    %v2364 = vpack.c.b16 %v1780, %v1772
    %v2365 = vpack.c.b16 %v1781, %v1773
    %v2366 = vpack.c.b16 %v1790, %v1782
    %v2367 = vpack.c.b16 %v1791, %v1783
    %v2368 = vpack.c.b16 %v1792, %v1784
    %v2369 = vpack.c.b16 %v1793, %v1785
    %v2370 = vpack.c.b16 %v1794, %v1786
    %v2371 = vpack.c.b16 %v1795, %v1787
    %v2372 = vpack.c.b16 %v1796, %v1788
    %v2373 = vpack.c.b16 %v1797, %v1789
    %v2374 = vpack.c.b16 %v1806, %v1798
    %v2375 = vpack.c.b16 %v1807, %v1799
    %v2376 = vpack.c.b16 %v1808, %v1800
    %v2377 = vpack.c.b16 %v1809, %v1801
    %v2378 = vpack.c.b16 %v1810, %v1802
    %v2379 = vpack.c.b16 %v1811, %v1803
    %v2380 = vpack.c.b16 %v1812, %v1804
    %v2381 = vpack.c.b16 %v1813, %v1805
    %v2382 = vpack.c.b16 %v1822, %v1814
    %v2383 = vpack.c.b16 %v1823, %v1815
    %v2384 = vpack.c.b16 %v1824, %v1816
    %v2385 = vpack.c.b16 %v1825, %v1817
    %v2386 = vpack.c.b16 %v1826, %v1818
    %v2387 = vpack.c.b16 %v1827, %v1819
    %v2388 = vpack.c.b16 %v1828, %v1820
    %v2389 = vpack.c.b16 %v1829, %v1821
    %v2390 = vpack.c.b16 %v1838, %v1830
    %v2391 = vpack.c.b16 %v1839, %v1831
    %v2392 = vpack.c.b16 %v1840, %v1832
    %v2393 = vpack.c.b16 %v1841, %v1833
    %v2394 = vpack.c.b16 %v1842, %v1834
    %v2395 = vpack.c.b16 %v1843, %v1835
    %v2396 = vpack.c.b16 %v1844, %v1836
    %v2397 = vpack.c.b16 %v1845, %v1837
    %v2398 = vpack.c.b16 %v1854, %v1846
    %v2399 = vpack.c.b16 %v1855, %v1847
    %v2400 = vpack.c.b16 %v1856, %v1848
    %v2401 = vpack.c.b16 %v1857, %v1849
    %v2402 = vpack.c.b16 %v1858, %v1850
    %v2403 = vpack.c.b16 %v1859, %v1851
    %v2404 = vpack.c.b16 %v1860, %v1852
    %v2405 = vpack.c.b16 %v1861, %v1853
    %v2406 = vpack.c.b16 %v1870, %v1862
    %v2407 = vpack.c.b16 %v1871, %v1863
    %v2408 = vpack.c.b16 %v1872, %v1864
    %v2409 = vpack.c.b16 %v1873, %v1865
    %v2410 = vpack.c.b16 %v1874, %v1866
    %v2411 = vpack.c.b16 %v1875, %v1867
    %v2412 = vpack.c.b16 %v1876, %v1868
    %v2413 = vpack.c.b16 %v1877, %v1869
    %v2414 = vpack.c.b16 %v1886, %v1878
    %v2415 = vpack.c.b16 %v1887, %v1879
    %v2416 = vpack.c.b16 %v1888, %v1880
    %v2417 = vpack.c.b16 %v1889, %v1881
    %v2418 = vpack.c.b16 %v1890, %v1882
    %v2419 = vpack.c.b16 %v1891, %v1883
    %v2420 = vpack.c.b16 %v1892, %v1884
    %v2421 = vpack.c.b16 %v1893, %v1885
    %v2422 = vpack.c.b16 %v1902, %v1894
    %v2423 = vpack.c.b16 %v1903, %v1895
    %v2424 = vpack.c.b16 %v1904, %v1896
    %v2425 = vpack.c.b16 %v1905, %v1897
    %v2426 = vpack.c.b16 %v1906, %v1898
    %v2427 = vpack.c.b16 %v1907, %v1899
    %v2428 = vpack.c.b16 %v1908, %v1900
    %v2429 = vpack.c.b16 %v1909, %v1901
    %v2430 = vpack.c.b16 %v1918, %v1910
    %v2431 = vpack.c.b16 %v1919, %v1911
    %v2432 = vpack.c.b16 %v1920, %v1912
    %v2433 = vpack.c.b16 %v1921, %v1913
    %v2434 = vpack.c.b16 %v1922, %v1914
    %v2435 = vpack.c.b16 %v1923, %v1915
    %v2436 = vpack.c.b16 %v1924, %v1916
    %v2437 = vpack.c.b16 %v1925, %v1917
    %v2438 = vpack.c.b16 %v1934, %v1926
    %v2439 = vpack.c.b16 %v1935, %v1927
    %v2440 = vpack.c.b16 %v1936, %v1928
    %v2441 = vpack.c.b16 %v1937, %v1929
    %v2442 = vpack.c.b16 %v1938, %v1930
    %v2443 = vpack.c.b16 %v1939, %v1931
    %v2444 = vpack.c.b16 %v1940, %v1932
    %v2445 = vpack.c.b16 %v1941, %v1933
    %v2446 = vpack.c.b16 %v1950, %v1942
    %v2447 = vpack.c.b16 %v1951, %v1943
    %v2448 = vpack.c.b16 %v1952, %v1944
    %v2449 = vpack.c.b16 %v1953, %v1945
    %v2450 = vpack.c.b16 %v1954, %v1946
    %v2451 = vpack.c.b16 %v1955, %v1947
    %v2452 = vpack.c.b16 %v1956, %v1948
    %v2453 = vpack.c.b16 %v1957, %v1949
    %v2454 = vpack.c.b16 %v1966, %v1958
    %v2455 = vpack.c.b16 %v1967, %v1959
    %v2456 = vpack.c.b16 %v1968, %v1960
    %v2457 = vpack.c.b16 %v1969, %v1961
    %v2458 = vpack.c.b16 %v1970, %v1962
    %v2459 = vpack.c.b16 %v1971, %v1963
    %v2460 = vpack.c.b16 %v1972, %v1964
    %v2461 = vpack.c.b16 %v1973, %v1965
    %v2462 = vpack.c.b16 %v1982, %v1974
    %v2463 = vpack.c.b16 %v1983, %v1975
    %v2464 = vpack.c.b16 %v1984, %v1976
    %v2465 = vpack.c.b16 %v1985, %v1977
    %v2466 = vpack.c.b16 %v1986, %v1978
    %v2467 = vpack.c.b16 %v1987, %v1979
    %v2468 = vpack.c.b16 %v1988, %v1980
    %v2469 = vpack.c.b16 %v1989, %v1981
    %v2470 = vpack.c.b16 %v1998, %v1990
    %v2471 = vpack.c.b16 %v1999, %v1991
    %v2472 = vpack.c.b16 %v2000, %v1992
    %v2473 = vpack.c.b16 %v2001, %v1993
    %v2474 = vpack.c.b16 %v2002, %v1994
    %v2475 = vpack.c.b16 %v2003, %v1995
    %v2476 = vpack.c.b16 %v2004, %v1996
    %v2477 = vpack.c.b16 %v2005, %v1997
    %v2478 = vpack.c.b16 %v2014, %v2006
    %v2479 = vpack.c.b16 %v2015, %v2007
    %v2480 = vpack.c.b16 %v2016, %v2008
    %v2481 = vpack.c.b16 %v2017, %v2009
    %v2482 = vpack.c.b16 %v2018, %v2010
    %v2483 = vpack.c.b16 %v2019, %v2011
    %v2484 = vpack.c.b16 %v2020, %v2012
    %v2485 = vpack.c.b16 %v2021, %v2013
    %v2486 = vpack.c.b16 %v2030, %v2022
    %v2487 = vpack.c.b16 %v2031, %v2023
    %v2488 = vpack.c.b16 %v2032, %v2024
    %v2489 = vpack.c.b16 %v2033, %v2025
    %v2490 = vpack.c.b16 %v2034, %v2026
    %v2491 = vpack.c.b16 %v2035, %v2027
    %v2492 = vpack.c.b16 %v2036, %v2028
    %v2493 = vpack.c.b16 %v2037, %v2029
    %v2494 = vpack.c.b16 %v2046, %v2038
    %v2495 = vpack.c.b16 %v2047, %v2039
    %v2496 = vpack.c.b16 %v2048, %v2040
    %v2497 = vpack.c.b16 %v2049, %v2041
    %v2498 = vpack.c.b16 %v2050, %v2042
    %v2499 = vpack.c.b16 %v2051, %v2043
    %v2500 = vpack.c.b16 %v2052, %v2044
    %v2501 = vpack.c.b16 %v2053, %v2045
    %v2502 = vpack.c.b16 %v2062, %v2054
    %v2503 = vpack.c.b16 %v2063, %v2055
    %v2504 = vpack.c.b16 %v2064, %v2056
    %v2505 = vpack.c.b16 %v2065, %v2057
    %v2506 = vpack.c.b16 %v2066, %v2058
    %v2507 = vpack.c.b16 %v2067, %v2059
    %v2508 = vpack.c.b16 %v2068, %v2060
    %v2509 = vpack.c.b16 %v2069, %v2061
    %v2510 = vpack.c.b16 %v2078, %v2070
    %v2511 = vpack.c.b16 %v2079, %v2071
    %v2512 = vpack.c.b16 %v2080, %v2072
    %v2513 = vpack.c.b16 %v2081, %v2073
    %v2514 = vpack.c.b16 %v2082, %v2074
    %v2515 = vpack.c.b16 %v2083, %v2075
    %v2516 = vpack.c.b16 %v2084, %v2076
    %v2517 = vpack.c.b16 %v2085, %v2077
    %v2518 = vpack.c.b16 %v2094, %v2086
    %v2519 = vpack.c.b16 %v2095, %v2087
    %v2520 = vpack.c.b16 %v2096, %v2088
    %v2521 = vpack.c.b16 %v2097, %v2089
    %v2522 = vpack.c.b16 %v2098, %v2090
    %v2523 = vpack.c.b16 %v2099, %v2091
    %v2524 = vpack.c.b16 %v2100, %v2092
    %v2525 = vpack.c.b16 %v2101, %v2093
    %v2526 = vpack.c.b16 %v2110, %v2102
    %v2527 = vpack.c.b16 %v2111, %v2103
    %v2528 = vpack.c.b16 %v2112, %v2104
    %v2529 = vpack.c.b16 %v2113, %v2105
    %v2530 = vpack.c.b16 %v2114, %v2106
    %v2531 = vpack.c.b16 %v2115, %v2107
    %v2532 = vpack.c.b16 %v2116, %v2108
    %v2533 = vpack.c.b16 %v2117, %v2109
    %v2534 = vpack.c.b16 %v2126, %v2118
    %v2535 = vpack.c.b16 %v2127, %v2119
    %v2536 = vpack.c.b16 %v2128, %v2120
    %v2537 = vpack.c.b16 %v2129, %v2121
    %v2538 = vpack.c.b16 %v2130, %v2122
    %v2539 = vpack.c.b16 %v2131, %v2123
    %v2540 = vpack.c.b16 %v2132, %v2124
    %v2541 = vpack.c.b16 %v2133, %v2125
    %v2542 = vpack.c.b16 %v2142, %v2134
    %v2543 = vpack.c.b16 %v2143, %v2135
    %v2544 = vpack.c.b16 %v2144, %v2136
    %v2545 = vpack.c.b16 %v2145, %v2137
    %v2546 = vpack.c.b16 %v2146, %v2138
    %v2547 = vpack.c.b16 %v2147, %v2139
    %v2548 = vpack.c.b16 %v2148, %v2140
    %v2549 = vpack.c.b16 %v2149, %v2141
    %v2550 = vpack.c.b16 %v2158, %v2150
    %v2551 = vpack.c.b16 %v2159, %v2151
    %v2552 = vpack.c.b16 %v2160, %v2152
    %v2553 = vpack.c.b16 %v2161, %v2153
    %v2554 = vpack.c.b16 %v2162, %v2154
    %v2555 = vpack.c.b16 %v2163, %v2155
    %v2556 = vpack.c.b16 %v2164, %v2156
    %v2557 = vpack.c.b16 %v2165, %v2157
    %v2558 = vpack.c.b16 %v2174, %v2166
    %v2559 = vpack.c.b16 %v2175, %v2167
    %v2560 = vpack.c.b16 %v2176, %v2168
    %v2561 = vpack.c.b16 %v2177, %v2169
    %v2562 = vpack.c.b16 %v2178, %v2170
    %v2563 = vpack.c.b16 %v2179, %v2171
    %v2564 = vpack.c.b16 %v2180, %v2172
    %v2565 = vpack.c.b16 %v2181, %v2173
    %2950 = vmatprep.subr.bf16.mxu0 %v2183
    %2951 = vmatpush1.bf16.msra.mxu0 %v2182
    %2952 = vmatprep.subr.bf16.mxu0 %v2191
    %2953 = vmatpush1.bf16.msra.mxu0 %v2190
    %2954 = vmatprep.subr.bf16.mxu0 %v2199
    %2955 = vmatpush1.bf16.msra.mxu0 %v2198
    %2956 = vmatprep.subr.bf16.mxu0 %v2207
    %2957 = vmatpush1.bf16.msra.mxu0 %v2206
    %2958 = vmatprep.subr.bf16.mxu0 %v2215
    %2959 = vmatpush1.bf16.msra.mxu0 %v2214
    %2960 = vmatprep.subr.bf16.mxu0 %v2223
    %2961 = vmatpush1.bf16.msra.mxu0 %v2222
    %2962 = vmatprep.subr.bf16.mxu0 %v2231
    %2963 = vmatpush1.bf16.msra.mxu0 %v2230
    %2964 = vmatprep.subr.bf16.mxu0 %v2239
    %2965 = vmatpush1.bf16.msra.mxu0 %v2238
    %2966 = vmatprep.subr.bf16.mxu0 %v2247
    %2967 = vmatpush1.bf16.msra.mxu0 %v2246
    %2968 = vmatprep.subr.bf16.mxu0 %v2255
    %2969 = vmatpush1.bf16.msra.mxu0 %v2254
    %2970 = vmatprep.subr.bf16.mxu0 %v2263
    %2971 = vmatpush1.bf16.msra.mxu0 %v2262
    %2972 = vmatprep.subr.bf16.mxu0 %v2271
    %2973 = vmatpush1.bf16.msra.mxu0 %v2270
    %2974 = vmatprep.subr.bf16.mxu0 %v2279
    %2975 = vmatpush1.bf16.msra.mxu0 %v2278
    %2976 = vmatprep.subr.bf16.mxu0 %v2287
    %2977 = vmatpush1.bf16.msra.mxu0 %v2286
    %2978 = vmatprep.subr.bf16.mxu0 %v2295
    %2979 = vmatpush1.bf16.msra.mxu0 %v2294
    %2980 = vmatprep.subr.bf16.mxu0 %v2303
    %2981 = vmatpush1.bf16.msra.mxu0 %v2302
    %2982 = vmatprep.mubr.bf16.mxu0 %v593
    %2983 = vmatmul.mubr.bf16.gmra.mrb[0].mxu0 %v592
    %v2984 = vpop.f32.mrb[0].mxu0
    %v2985 = vadd.f32 %v993, %v2984
    %v2986 = vpop.f32.mrb[0].mxu0
    %v2987 = vadd.f32 %v997, %v2986
    %v2988 = vpop.f32.mrb[0].mxu0
    %v2989 = vadd.f32 %v993, %v2988
    %v2990 = vpop.f32.mrb[0].mxu0
    %v2991 = vadd.f32 %v997, %v2990
    %2992 = vmatprep.mubr.bf16.mxu0 %v599
    %2993 = vmatmul.mubr.bf16.gmra.mrb[0].mxu0 %v598
    %v2994 = vpop.f32.mrb[0].mxu0
    %v2995 = vadd.f32 %v993, %v2994
    %v2996 = vpop.f32.mrb[0].mxu0
    %v2997 = vadd.f32 %v997, %v2996
    %v2998 = vpop.f32.mrb[0].mxu0
    %v2999 = vadd.f32 %v993, %v2998
    %v3000 = vpop.f32.mrb[0].mxu0
    %v3001 = vadd.f32 %v997, %v3000
    %3002 = vdwg.mxu0
    %3003 = vmatprep.subr.bf16.mxu0 %v2311
    %3004 = vmatpush1.bf16.msra.mxu0 %v2310
    %3005 = vmatprep.subr.bf16.mxu0 %v2319
    %3006 = vmatpush1.bf16.msra.mxu0 %v2318
    %3007 = vmatprep.subr.bf16.mxu0 %v2327
    %3008 = vmatpush1.bf16.msra.mxu0 %v2326
    %3009 = vmatprep.subr.bf16.mxu0 %v2335
    %3010 = vmatpush1.bf16.msra.mxu0 %v2334
    %3011 = vmatprep.subr.bf16.mxu0 %v2343
    %3012 = vmatpush1.bf16.msra.mxu0 %v2342
    %3013 = vmatprep.subr.bf16.mxu0 %v2351
    %3014 = vmatpush1.bf16.msra.mxu0 %v2350
    %3015 = vmatprep.subr.bf16.mxu0 %v2359
    %3016 = vmatpush1.bf16.msra.mxu0 %v2358
    %3017 = vmatprep.subr.bf16.mxu0 %v2367
    %3018 = vmatpush1.bf16.msra.mxu0 %v2366
    %3019 = vmatprep.subr.bf16.mxu0 %v2375
    %3020 = vmatpush1.bf16.msra.mxu0 %v2374
    %3021 = vmatprep.subr.bf16.mxu0 %v2383
    %3022 = vmatpush1.bf16.msra.mxu0 %v2382
    %3023 = vmatprep.subr.bf16.mxu0 %v2391
    %3024 = vmatpush1.bf16.msra.mxu0 %v2390
    %3025 = vmatprep.subr.bf16.mxu0 %v2399
    %3026 = vmatpush1.bf16.msra.mxu0 %v2398
    %3027 = vmatprep.subr.bf16.mxu0 %v2407
    %3028 = vmatpush1.bf16.msra.mxu0 %v2406
    %3029 = vmatprep.subr.bf16.mxu0 %v2415
    %3030 = vmatpush1.bf16.msra.mxu0 %v2414
    %3031 = vmatprep.subr.bf16.mxu0 %v2423
    %3032 = vmatpush1.bf16.msra.mxu0 %v2422
    %3033 = vmatprep.subr.bf16.mxu0 %v2431
    %3034 = vmatpush1.bf16.msra.mxu0 %v2430
    %3035 = vmatprep.mubr.bf16.mxu0 %v595
    %3036 = vmatmul.mubr.bf16.gmra.mrb[0].mxu0 %v594
    %v3037 = vpop.f32.mrb[0].mxu0
    %v3038 = vadd.f32 %v2985, %v3037
    %v3039 = vpop.f32.mrb[0].mxu0
    %v3040 = vadd.f32 %v2987, %v3039
    %v3041 = vpop.f32.mrb[0].mxu0
    %v3042 = vadd.f32 %v2989, %v3041
    %v3043 = vpop.f32.mrb[0].mxu0
    %v3044 = vadd.f32 %v2991, %v3043
    %3045 = vmatprep.mubr.bf16.mxu0 %v601
    %3046 = vmatmul.mubr.bf16.gmra.mrb[0].mxu0 %v600
    %v3047 = vpop.f32.mrb[0].mxu0
    %v3048 = vadd.f32 %v2995, %v3047
    %v3049 = vpop.f32.mrb[0].mxu0
    %v3050 = vadd.f32 %v2997, %v3049
    %v3051 = vpop.f32.mrb[0].mxu0
    %v3052 = vadd.f32 %v2999, %v3051
    %v3053 = vpop.f32.mrb[0].mxu0
    %v3054 = vadd.f32 %v3001, %v3053
    %3055 = vdwg.mxu0
    %3056 = vmatprep.subr.bf16.mxu0 %v2439
    %3057 = vmatpush1.bf16.msra.mxu0 %v2438
    %3058 = vmatprep.subr.bf16.mxu0 %v2447
    %3059 = vmatpush1.bf16.msra.mxu0 %v2446
    %3060 = vmatprep.subr.bf16.mxu0 %v2455
    %3061 = vmatpush1.bf16.msra.mxu0 %v2454
    %3062 = vmatprep.subr.bf16.mxu0 %v2463
    %3063 = vmatpush1.bf16.msra.mxu0 %v2462
    %3064 = vmatprep.subr.bf16.mxu0 %v2471
    %3065 = vmatpush1.bf16.msra.mxu0 %v2470
    %3066 = vmatprep.subr.bf16.mxu0 %v2479
    %3067 = vmatpush1.bf16.msra.mxu0 %v2478
    %3068 = vmatprep.subr.bf16.mxu0 %v2487
    %3069 = vmatpush1.bf16.msra.mxu0 %v2486
    %3070 = vmatprep.subr.bf16.mxu0 %v2495
    %3071 = vmatpush1.bf16.msra.mxu0 %v2494
    %3072 = vmatprep.subr.bf16.mxu0 %v2503
    %3073 = vmatpush1.bf16.msra.mxu0 %v2502
    %3074 = vmatprep.subr.bf16.mxu0 %v2511
    %3075 = vmatpush1.bf16.msra.mxu0 %v2510
    %3076 = vmatprep.subr.bf16.mxu0 %v2519
    %3077 = vmatpush1.bf16.msra.mxu0 %v2518
    %3078 = vmatprep.subr.bf16.mxu0 %v2527
    %3079 = vmatpush1.bf16.msra.mxu0 %v2526
    %3080 = vmatprep.subr.bf16.mxu0 %v2535
    %3081 = vmatpush1.bf16.msra.mxu0 %v2534
    %3082 = vmatprep.subr.bf16.mxu0 %v2543
    %3083 = vmatpush1.bf16.msra.mxu0 %v2542
    %3084 = vmatprep.subr.bf16.mxu0 %v2551
    %3085 = vmatpush1.bf16.msra.mxu0 %v2550
    %3086 = vmatprep.subr.bf16.mxu0 %v2559
    %3087 = vmatpush1.bf16.msra.mxu0 %v2558
    %3088 = vmatprep.mubr.bf16.mxu0 %v597
    %3089 = vmatmul.mubr.bf16.gmra.mrb[0].mxu0 %v596
    %v3090 = vpop.f32.mrb[0].mxu0
    %v3091 = vadd.f32 %v3038, %v3090
    %v3092 = vpop.f32.mrb[0].mxu0
    %v3093 = vadd.f32 %v3040, %v3092
    %v3094 = vpop.f32.mrb[0].mxu0
    %v3095 = vadd.f32 %v3042, %v3094
    %v3096 = vpop.f32.mrb[0].mxu0
    %v3097 = vadd.f32 %v3044, %v3096
    %3098 = vmatprep.mubr.bf16.mxu0 %v603
    %3099 = vmatmul.mubr.bf16.gmra.mrb[0].mxu0 %v602
    %v3100 = vpop.f32.mrb[0].mxu0
    %v3101 = vadd.f32 %v3048, %v3100
    %v3102 = vpop.f32.mrb[0].mxu0
    %v3103 = vadd.f32 %v3050, %v3102
    %v3104 = vpop.f32.mrb[0].mxu0
    %v3105 = vadd.f32 %v3052, %v3104
    %v3106 = vpop.f32.mrb[0].mxu0
    %v3107 = vadd.f32 %v3054, %v3106
    %3108 = vdwg.mxu0
    %3109 = vmatprep.subr.bf16.mxu0 %v2185
    %3110 = vmatpush1.bf16.msra.mxu0 %v2184
    %3111 = vmatprep.subr.bf16.mxu0 %v2193
    %3112 = vmatpush1.bf16.msra.mxu0 %v2192
    %3113 = vmatprep.subr.bf16.mxu0 %v2201
    %3114 = vmatpush1.bf16.msra.mxu0 %v2200
    %3115 = vmatprep.subr.bf16.mxu0 %v2209
    %3116 = vmatpush1.bf16.msra.mxu0 %v2208
    %3117 = vmatprep.subr.bf16.mxu0 %v2217
    %3118 = vmatpush1.bf16.msra.mxu0 %v2216
    %3119 = vmatprep.subr.bf16.mxu0 %v2225
    %3120 = vmatpush1.bf16.msra.mxu0 %v2224
    %3121 = vmatprep.subr.bf16.mxu0 %v2233
    %3122 = vmatpush1.bf16.msra.mxu0 %v2232
    %3123 = vmatprep.subr.bf16.mxu0 %v2241
    %3124 = vmatpush1.bf16.msra.mxu0 %v2240
    %3125 = vmatprep.subr.bf16.mxu0 %v2249
    %3126 = vmatpush1.bf16.msra.mxu0 %v2248
    %3127 = vmatprep.subr.bf16.mxu0 %v2257
    %3128 = vmatpush1.bf16.msra.mxu0 %v2256
    %3129 = vmatprep.subr.bf16.mxu0 %v2265
    %3130 = vmatpush1.bf16.msra.mxu0 %v2264
    %3131 = vmatprep.subr.bf16.mxu0 %v2273
    %3132 = vmatpush1.bf16.msra.mxu0 %v2272
    %3133 = vmatprep.subr.bf16.mxu0 %v2281
    %3134 = vmatpush1.bf16.msra.mxu0 %v2280
    %3135 = vmatprep.subr.bf16.mxu0 %v2289
    %3136 = vmatpush1.bf16.msra.mxu0 %v2288
    %3137 = vmatprep.subr.bf16.mxu0 %v2297
    %3138 = vmatpush1.bf16.msra.mxu0 %v2296
    %3139 = vmatprep.subr.bf16.mxu0 %v2305
    %3140 = vmatpush1.bf16.msra.mxu0 %v2304
    %3141 = vmatprep.mubr.bf16.mxu0 %v593
    %3142 = vmatmul.mubr.bf16.gmra.mrb[0].mxu0 %v592
    %v3143 = vpop.f32.mrb[0].mxu0
    %v3144 = vadd.f32 %v1001, %v3143
    %v3145 = vpop.f32.mrb[0].mxu0
    %v3146 = vadd.f32 %v1005, %v3145
    %v3147 = vpop.f32.mrb[0].mxu0
    %v3148 = vadd.f32 %v1001, %v3147
    %v3149 = vpop.f32.mrb[0].mxu0
    %v3150 = vadd.f32 %v1005, %v3149
    %3151 = vmatprep.mubr.bf16.mxu0 %v599
    %3152 = vmatmul.mubr.bf16.gmra.mrb[0].mxu0 %v598
    %v3153 = vpop.f32.mrb[0].mxu0
    %v3154 = vadd.f32 %v1001, %v3153
    %v3155 = vpop.f32.mrb[0].mxu0
    %v3156 = vadd.f32 %v1005, %v3155
    %v3157 = vpop.f32.mrb[0].mxu0
    %v3158 = vadd.f32 %v1001, %v3157
    %v3159 = vpop.f32.mrb[0].mxu0
    %v3160 = vadd.f32 %v1005, %v3159
    %3161 = vdwg.mxu0
    %3162 = vmatprep.subr.bf16.mxu0 %v2313
    %3163 = vmatpush1.bf16.msra.mxu0 %v2312
    %3164 = vmatprep.subr.bf16.mxu0 %v2321
    %3165 = vmatpush1.bf16.msra.mxu0 %v2320
    %3166 = vmatprep.subr.bf16.mxu0 %v2329
    %3167 = vmatpush1.bf16.msra.mxu0 %v2328
    %3168 = vmatprep.subr.bf16.mxu0 %v2337
    %3169 = vmatpush1.bf16.msra.mxu0 %v2336
    %3170 = vmatprep.subr.bf16.mxu0 %v2345
    %3171 = vmatpush1.bf16.msra.mxu0 %v2344
    %3172 = vmatprep.subr.bf16.mxu0 %v2353
    %3173 = vmatpush1.bf16.msra.mxu0 %v2352
    %3174 = vmatprep.subr.bf16.mxu0 %v2361
    %3175 = vmatpush1.bf16.msra.mxu0 %v2360
    %3176 = vmatprep.subr.bf16.mxu0 %v2369
    %3177 = vmatpush1.bf16.msra.mxu0 %v2368
    %3178 = vmatprep.subr.bf16.mxu0 %v2377
    %3179 = vmatpush1.bf16.msra.mxu0 %v2376
    %3180 = vmatprep.subr.bf16.mxu0 %v2385
    %3181 = vmatpush1.bf16.msra.mxu0 %v2384
    %3182 = vmatprep.subr.bf16.mxu0 %v2393
    %3183 = vmatpush1.bf16.msra.mxu0 %v2392
    %3184 = vmatprep.subr.bf16.mxu0 %v2401
    %3185 = vmatpush1.bf16.msra.mxu0 %v2400
    %3186 = vmatprep.subr.bf16.mxu0 %v2409
    %3187 = vmatpush1.bf16.msra.mxu0 %v2408
    %3188 = vmatprep.subr.bf16.mxu0 %v2417
    %3189 = vmatpush1.bf16.msra.mxu0 %v2416
    %3190 = vmatprep.subr.bf16.mxu0 %v2425
    %3191 = vmatpush1.bf16.msra.mxu0 %v2424
    %3192 = vmatprep.subr.bf16.mxu0 %v2433
    %3193 = vmatpush1.bf16.msra.mxu0 %v2432
    %3194 = vmatprep.mubr.bf16.mxu0 %v595
    %3195 = vmatmul.mubr.bf16.gmra.mrb[0].mxu0 %v594
    %v3196 = vpop.f32.mrb[0].mxu0
    %v3197 = vadd.f32 %v3144, %v3196
    %v3198 = vpop.f32.mrb[0].mxu0
    %v3199 = vadd.f32 %v3146, %v3198
    %v3200 = vpop.f32.mrb[0].mxu0
    %v3201 = vadd.f32 %v3148, %v3200
    %v3202 = vpop.f32.mrb[0].mxu0
    %v3203 = vadd.f32 %v3150, %v3202
    %3204 = vmatprep.mubr.bf16.mxu0 %v601
    %3205 = vmatmul.mubr.bf16.gmra.mrb[0].mxu0 %v600
    %v3206 = vpop.f32.mrb[0].mxu0
    %v3207 = vadd.f32 %v3154, %v3206
    %v3208 = vpop.f32.mrb[0].mxu0
    %v3209 = vadd.f32 %v3156, %v3208
    %v3210 = vpop.f32.mrb[0].mxu0
    %v3211 = vadd.f32 %v3158, %v3210
    %v3212 = vpop.f32.mrb[0].mxu0
    %v3213 = vadd.f32 %v3160, %v3212
    %3214 = vdwg.mxu0
    %3215 = vmatprep.subr.bf16.mxu0 %v2441
    %3216 = vmatpush1.bf16.msra.mxu0 %v2440
    %3217 = vmatprep.subr.bf16.mxu0 %v2449
    %3218 = vmatpush1.bf16.msra.mxu0 %v2448
    %3219 = vmatprep.subr.bf16.mxu0 %v2457
    %3220 = vmatpush1.bf16.msra.mxu0 %v2456
    %3221 = vmatprep.subr.bf16.mxu0 %v2465
    %3222 = vmatpush1.bf16.msra.mxu0 %v2464
    %3223 = vmatprep.subr.bf16.mxu0 %v2473
    %3224 = vmatpush1.bf16.msra.mxu0 %v2472
    %3225 = vmatprep.subr.bf16.mxu0 %v2481
    %3226 = vmatpush1.bf16.msra.mxu0 %v2480
    %3227 = vmatprep.subr.bf16.mxu0 %v2489
    %3228 = vmatpush1.bf16.msra.mxu0 %v2488
    %3229 = vmatprep.subr.bf16.mxu0 %v2497
    %3230 = vmatpush1.bf16.msra.mxu0 %v2496
    %3231 = vmatprep.subr.bf16.mxu0 %v2505
    %3232 = vmatpush1.bf16.msra.mxu0 %v2504
    %3233 = vmatprep.subr.bf16.mxu0 %v2513
    %3234 = vmatpush1.bf16.msra.mxu0 %v2512
    %3235 = vmatprep.subr.bf16.mxu0 %v2521
    %3236 = vmatpush1.bf16.msra.mxu0 %v2520
    %3237 = vmatprep.subr.bf16.mxu0 %v2529
    %3238 = vmatpush1.bf16.msra.mxu0 %v2528
    %3239 = vmatprep.subr.bf16.mxu0 %v2537
    %3240 = vmatpush1.bf16.msra.mxu0 %v2536
    %3241 = vmatprep.subr.bf16.mxu0 %v2545
    %3242 = vmatpush1.bf16.msra.mxu0 %v2544
    %3243 = vmatprep.subr.bf16.mxu0 %v2553
    %3244 = vmatpush1.bf16.msra.mxu0 %v2552
    %3245 = vmatprep.subr.bf16.mxu0 %v2561
    %3246 = vmatpush1.bf16.msra.mxu0 %v2560
    %3247 = vmatprep.mubr.bf16.mxu0 %v597
    %3248 = vmatmul.mubr.bf16.gmra.mrb[0].mxu0 %v596
    %v3249 = vpop.f32.mrb[0].mxu0
    %v3250 = vadd.f32 %v3197, %v3249
    %v3251 = vpop.f32.mrb[0].mxu0
    %v3252 = vadd.f32 %v3199, %v3251
    %v3253 = vpop.f32.mrb[0].mxu0
    %v3254 = vadd.f32 %v3201, %v3253
    %v3255 = vpop.f32.mrb[0].mxu0
    %v3256 = vadd.f32 %v3203, %v3255
    %3257 = vmatprep.mubr.bf16.mxu0 %v603
    %3258 = vmatmul.mubr.bf16.gmra.mrb[0].mxu0 %v602
    %v3259 = vpop.f32.mrb[0].mxu0
    %v3260 = vadd.f32 %v3207, %v3259
    %v3261 = vpop.f32.mrb[0].mxu0
    %v3262 = vadd.f32 %v3209, %v3261
    %v3263 = vpop.f32.mrb[0].mxu0
    %v3264 = vadd.f32 %v3211, %v3263
    %v3265 = vpop.f32.mrb[0].mxu0
    %v3266 = vadd.f32 %v3213, %v3265
    %3267 = vdwg.mxu0
    %3268 = vmatprep.subr.bf16.mxu0 %v2187
    %3269 = vmatpush1.bf16.msra.mxu0 %v2186
    %3270 = vmatprep.subr.bf16.mxu0 %v2195
    %3271 = vmatpush1.bf16.msra.mxu0 %v2194
    %3272 = vmatprep.subr.bf16.mxu0 %v2203
    %3273 = vmatpush1.bf16.msra.mxu0 %v2202
    %3274 = vmatprep.subr.bf16.mxu0 %v2211
    %3275 = vmatpush1.bf16.msra.mxu0 %v2210
    %3276 = vmatprep.subr.bf16.mxu0 %v2219
    %3277 = vmatpush1.bf16.msra.mxu0 %v2218
    %3278 = vmatprep.subr.bf16.mxu0 %v2227
    %3279 = vmatpush1.bf16.msra.mxu0 %v2226
    %3280 = vmatprep.subr.bf16.mxu0 %v2235
    %3281 = vmatpush1.bf16.msra.mxu0 %v2234
    %3282 = vmatprep.subr.bf16.mxu0 %v2243
    %3283 = vmatpush1.bf16.msra.mxu0 %v2242
    %3284 = vmatprep.subr.bf16.mxu0 %v2251
    %3285 = vmatpush1.bf16.msra.mxu0 %v2250
    %3286 = vmatprep.subr.bf16.mxu0 %v2259
    %3287 = vmatpush1.bf16.msra.mxu0 %v2258
    %3288 = vmatprep.subr.bf16.mxu0 %v2267
    %3289 = vmatpush1.bf16.msra.mxu0 %v2266
    %3290 = vmatprep.subr.bf16.mxu0 %v2275
    %3291 = vmatpush1.bf16.msra.mxu0 %v2274
    %3292 = vmatprep.subr.bf16.mxu0 %v2283
    %3293 = vmatpush1.bf16.msra.mxu0 %v2282
    %3294 = vmatprep.subr.bf16.mxu0 %v2291
    %3295 = vmatpush1.bf16.msra.mxu0 %v2290
    %3296 = vmatprep.subr.bf16.mxu0 %v2299
    %3297 = vmatpush1.bf16.msra.mxu0 %v2298
    %3298 = vmatprep.subr.bf16.mxu0 %v2307
    %3299 = vmatpush1.bf16.msra.mxu0 %v2306
    %3300 = vmatprep.mubr.bf16.mxu0 %v593
    %3301 = vmatmul.mubr.bf16.gmra.mrb[0].mxu0 %v592
    %v3302 = vpop.f32.mrb[0].mxu0
    %v3303 = vadd.f32 %v1009, %v3302
    %v3304 = vpop.f32.mrb[0].mxu0
    %v3305 = vadd.f32 %v1013, %v3304
    %v3306 = vpop.f32.mrb[0].mxu0
    %v3307 = vadd.f32 %v1009, %v3306
    %v3308 = vpop.f32.mrb[0].mxu0
    %v3309 = vadd.f32 %v1013, %v3308
    %3310 = vmatprep.mubr.bf16.mxu0 %v599
    %3311 = vmatmul.mubr.bf16.gmra.mrb[0].mxu0 %v598
    %v3312 = vpop.f32.mrb[0].mxu0
    %v3313 = vadd.f32 %v1009, %v3312
    %v3314 = vpop.f32.mrb[0].mxu0
    %v3315 = vadd.f32 %v1013, %v3314
    %v3316 = vpop.f32.mrb[0].mxu0
    %v3317 = vadd.f32 %v1009, %v3316
    %v3318 = vpop.f32.mrb[0].mxu0
    %v3319 = vadd.f32 %v1013, %v3318
    %3320 = vdwg.mxu0
    %3321 = vmatprep.subr.bf16.mxu0 %v2315
    %3322 = vmatpush1.bf16.msra.mxu0 %v2314
    %3323 = vmatprep.subr.bf16.mxu0 %v2323
    %3324 = vmatpush1.bf16.msra.mxu0 %v2322
    %3325 = vmatprep.subr.bf16.mxu0 %v2331
    %3326 = vmatpush1.bf16.msra.mxu0 %v2330
    %3327 = vmatprep.subr.bf16.mxu0 %v2339
    %3328 = vmatpush1.bf16.msra.mxu0 %v2338
    %3329 = vmatprep.subr.bf16.mxu0 %v2347
    %3330 = vmatpush1.bf16.msra.mxu0 %v2346
    %3331 = vmatprep.subr.bf16.mxu0 %v2355
    %3332 = vmatpush1.bf16.msra.mxu0 %v2354
    %3333 = vmatprep.subr.bf16.mxu0 %v2363
    %3334 = vmatpush1.bf16.msra.mxu0 %v2362
    %3335 = vmatprep.subr.bf16.mxu0 %v2371
    %3336 = vmatpush1.bf16.msra.mxu0 %v2370
    %3337 = vmatprep.subr.bf16.mxu0 %v2379
    %3338 = vmatpush1.bf16.msra.mxu0 %v2378
    %3339 = vmatprep.subr.bf16.mxu0 %v2387
    %3340 = vmatpush1.bf16.msra.mxu0 %v2386
    %3341 = vmatprep.subr.bf16.mxu0 %v2395
    %3342 = vmatpush1.bf16.msra.mxu0 %v2394
    %3343 = vmatprep.subr.bf16.mxu0 %v2403
    %3344 = vmatpush1.bf16.msra.mxu0 %v2402
    %3345 = vmatprep.subr.bf16.mxu0 %v2411
    %3346 = vmatpush1.bf16.msra.mxu0 %v2410
    %3347 = vmatprep.subr.bf16.mxu0 %v2419
    %3348 = vmatpush1.bf16.msra.mxu0 %v2418
    %3349 = vmatprep.subr.bf16.mxu0 %v2427
    %3350 = vmatpush1.bf16.msra.mxu0 %v2426
    %3351 = vmatprep.subr.bf16.mxu0 %v2435
    %3352 = vmatpush1.bf16.msra.mxu0 %v2434
    %3353 = vmatprep.mubr.bf16.mxu0 %v595
    %3354 = vmatmul.mubr.bf16.gmra.mrb[0].mxu0 %v594
    %v3355 = vpop.f32.mrb[0].mxu0
    %v3356 = vadd.f32 %v3303, %v3355
    %v3357 = vpop.f32.mrb[0].mxu0
    %v3358 = vadd.f32 %v3305, %v3357
    %v3359 = vpop.f32.mrb[0].mxu0
    %v3360 = vadd.f32 %v3307, %v3359
    %v3361 = vpop.f32.mrb[0].mxu0
    %v3362 = vadd.f32 %v3309, %v3361
    %3363 = vmatprep.mubr.bf16.mxu0 %v601
    %3364 = vmatmul.mubr.bf16.gmra.mrb[0].mxu0 %v600
    %v3365 = vpop.f32.mrb[0].mxu0
    %v3366 = vadd.f32 %v3313, %v3365
    %v3367 = vpop.f32.mrb[0].mxu0
    %v3368 = vadd.f32 %v3315, %v3367
    %v3369 = vpop.f32.mrb[0].mxu0
    %v3370 = vadd.f32 %v3317, %v3369
    %v3371 = vpop.f32.mrb[0].mxu0
    %v3372 = vadd.f32 %v3319, %v3371
    %3373 = vdwg.mxu0
    %3374 = vmatprep.subr.bf16.mxu0 %v2443
    %3375 = vmatpush1.bf16.msra.mxu0 %v2442
    %3376 = vmatprep.subr.bf16.mxu0 %v2451
    %3377 = vmatpush1.bf16.msra.mxu0 %v2450
    %3378 = vmatprep.subr.bf16.mxu0 %v2459
    %3379 = vmatpush1.bf16.msra.mxu0 %v2458
    %3380 = vmatprep.subr.bf16.mxu0 %v2467
    %3381 = vmatpush1.bf16.msra.mxu0 %v2466
    %3382 = vmatprep.subr.bf16.mxu0 %v2475
    %3383 = vmatpush1.bf16.msra.mxu0 %v2474
    %3384 = vmatprep.subr.bf16.mxu0 %v2483
    %3385 = vmatpush1.bf16.msra.mxu0 %v2482
    %3386 = vmatprep.subr.bf16.mxu0 %v2491
    %3387 = vmatpush1.bf16.msra.mxu0 %v2490
    %3388 = vmatprep.subr.bf16.mxu0 %v2499
    %3389 = vmatpush1.bf16.msra.mxu0 %v2498
    %3390 = vmatprep.subr.bf16.mxu0 %v2507
    %3391 = vmatpush1.bf16.msra.mxu0 %v2506
    %3392 = vmatprep.subr.bf16.mxu0 %v2515
    %3393 = vmatpush1.bf16.msra.mxu0 %v2514
    %3394 = vmatprep.subr.bf16.mxu0 %v2523
    %3395 = vmatpush1.bf16.msra.mxu0 %v2522
    %3396 = vmatprep.subr.bf16.mxu0 %v2531
    %3397 = vmatpush1.bf16.msra.mxu0 %v2530
    %3398 = vmatprep.subr.bf16.mxu0 %v2539
    %3399 = vmatpush1.bf16.msra.mxu0 %v2538
    %3400 = vmatprep.subr.bf16.mxu0 %v2547
    %3401 = vmatpush1.bf16.msra.mxu0 %v2546
    %3402 = vmatprep.subr.bf16.mxu0 %v2555
    %3403 = vmatpush1.bf16.msra.mxu0 %v2554
    %3404 = vmatprep.subr.bf16.mxu0 %v2563
    %3405 = vmatpush1.bf16.msra.mxu0 %v2562
    %3406 = vmatprep.mubr.bf16.mxu0 %v597
    %3407 = vmatmul.mubr.bf16.gmra.mrb[0].mxu0 %v596
    %v3408 = vpop.f32.mrb[0].mxu0
    %v3409 = vadd.f32 %v3356, %v3408
    %v3410 = vpop.f32.mrb[0].mxu0
    %v3411 = vadd.f32 %v3358, %v3410
    %v3412 = vpop.f32.mrb[0].mxu0
    %v3413 = vadd.f32 %v3360, %v3412
    %v3414 = vpop.f32.mrb[0].mxu0
    %v3415 = vadd.f32 %v3362, %v3414
    %3416 = vmatprep.mubr.bf16.mxu0 %v603
    %3417 = vmatmul.mubr.bf16.gmra.mrb[0].mxu0 %v602
    %v3418 = vpop.f32.mrb[0].mxu0
    %v3419 = vadd.f32 %v3366, %v3418
    %v3420 = vpop.f32.mrb[0].mxu0
    %v3421 = vadd.f32 %v3368, %v3420
    %v3422 = vpop.f32.mrb[0].mxu0
    %v3423 = vadd.f32 %v3370, %v3422
    %v3424 = vpop.f32.mrb[0].mxu0
    %v3425 = vadd.f32 %v3372, %v3424
    %3426 = vdwg.mxu0
    %3427 = vmatprep.subr.bf16.mxu0 %v2189
    %3428 = vmatpush1.bf16.msra.mxu0 %v2188
    %3429 = vmatprep.subr.bf16.mxu0 %v2197
    %3430 = vmatpush1.bf16.msra.mxu0 %v2196
    %3431 = vmatprep.subr.bf16.mxu0 %v2205
    %3432 = vmatpush1.bf16.msra.mxu0 %v2204
    %3433 = vmatprep.subr.bf16.mxu0 %v2213
    %3434 = vmatpush1.bf16.msra.mxu0 %v2212
    %3435 = vmatprep.subr.bf16.mxu0 %v2221
    %3436 = vmatpush1.bf16.msra.mxu0 %v2220
    %3437 = vmatprep.subr.bf16.mxu0 %v2229
    %3438 = vmatpush1.bf16.msra.mxu0 %v2228
    %3439 = vmatprep.subr.bf16.mxu0 %v2237
    %3440 = vmatpush1.bf16.msra.mxu0 %v2236
    %3441 = vmatprep.subr.bf16.mxu0 %v2245
    %3442 = vmatpush1.bf16.msra.mxu0 %v2244
    %3443 = vmatprep.subr.bf16.mxu0 %v2253
    %3444 = vmatpush1.bf16.msra.mxu0 %v2252
    %3445 = vmatprep.subr.bf16.mxu0 %v2261
    %3446 = vmatpush1.bf16.msra.mxu0 %v2260
    %3447 = vmatprep.subr.bf16.mxu0 %v2269
    %3448 = vmatpush1.bf16.msra.mxu0 %v2268
    %3449 = vmatprep.subr.bf16.mxu0 %v2277
    %3450 = vmatpush1.bf16.msra.mxu0 %v2276
    %3451 = vmatprep.subr.bf16.mxu0 %v2285
    %3452 = vmatpush1.bf16.msra.mxu0 %v2284
    %3453 = vmatprep.subr.bf16.mxu0 %v2293
    %3454 = vmatpush1.bf16.msra.mxu0 %v2292
    %3455 = vmatprep.subr.bf16.mxu0 %v2301
    %3456 = vmatpush1.bf16.msra.mxu0 %v2300
    %3457 = vmatprep.subr.bf16.mxu0 %v2309
    %3458 = vmatpush1.bf16.msra.mxu0 %v2308
    %3459 = vmatprep.mubr.bf16.mxu0 %v593
    %3460 = vmatmul.mubr.bf16.gmra.mrb[0].mxu0 %v592
    %v3461 = vpop.f32.mrb[0].mxu0
    %v3462 = vadd.f32 %v1017, %v3461
    %v3463 = vpop.f32.mrb[0].mxu0
    %v3464 = vadd.f32 %v1021, %v3463
    %v3465 = vpop.f32.mrb[0].mxu0
    %v3466 = vadd.f32 %v1017, %v3465
    %v3467 = vpop.f32.mrb[0].mxu0
    %v3468 = vadd.f32 %v1021, %v3467
    %3469 = vmatprep.mubr.bf16.mxu0 %v599
    %3470 = vmatmul.mubr.bf16.gmra.mrb[0].mxu0 %v598
    %v3471 = vpop.f32.mrb[0].mxu0
    %v3472 = vadd.f32 %v1017, %v3471
    %v3473 = vpop.f32.mrb[0].mxu0
    %v3474 = vadd.f32 %v1021, %v3473
    %v3475 = vpop.f32.mrb[0].mxu0
    %v3476 = vadd.f32 %v1017, %v3475
    %v3477 = vpop.f32.mrb[0].mxu0
    %v3478 = vadd.f32 %v1021, %v3477
    %3479 = vdwg.mxu0
    %3480 = vmatprep.subr.bf16.mxu0 %v2317
    %3481 = vmatpush1.bf16.msra.mxu0 %v2316
    %3482 = vmatprep.subr.bf16.mxu0 %v2325
    %3483 = vmatpush1.bf16.msra.mxu0 %v2324
    %3484 = vmatprep.subr.bf16.mxu0 %v2333
    %3485 = vmatpush1.bf16.msra.mxu0 %v2332
    %3486 = vmatprep.subr.bf16.mxu0 %v2341
    %3487 = vmatpush1.bf16.msra.mxu0 %v2340
    %3488 = vmatprep.subr.bf16.mxu0 %v2349
    %3489 = vmatpush1.bf16.msra.mxu0 %v2348
    %3490 = vmatprep.subr.bf16.mxu0 %v2357
    %3491 = vmatpush1.bf16.msra.mxu0 %v2356
    %3492 = vmatprep.subr.bf16.mxu0 %v2365
    %3493 = vmatpush1.bf16.msra.mxu0 %v2364
    %3494 = vmatprep.subr.bf16.mxu0 %v2373
    %3495 = vmatpush1.bf16.msra.mxu0 %v2372
    %3496 = vmatprep.subr.bf16.mxu0 %v2381
    %3497 = vmatpush1.bf16.msra.mxu0 %v2380
    %3498 = vmatprep.subr.bf16.mxu0 %v2389
    %3499 = vmatpush1.bf16.msra.mxu0 %v2388
    %3500 = vmatprep.subr.bf16.mxu0 %v2397
    %3501 = vmatpush1.bf16.msra.mxu0 %v2396
    %3502 = vmatprep.subr.bf16.mxu0 %v2405
    %3503 = vmatpush1.bf16.msra.mxu0 %v2404
    %3504 = vmatprep.subr.bf16.mxu0 %v2413
    %3505 = vmatpush1.bf16.msra.mxu0 %v2412
    %3506 = vmatprep.subr.bf16.mxu0 %v2421
    %3507 = vmatpush1.bf16.msra.mxu0 %v2420
    %3508 = vmatprep.subr.bf16.mxu0 %v2429
    %3509 = vmatpush1.bf16.msra.mxu0 %v2428
    %3510 = vmatprep.subr.bf16.mxu0 %v2437
    %3511 = vmatpush1.bf16.msra.mxu0 %v2436
    %3512 = vmatprep.mubr.bf16.mxu0 %v595
    %3513 = vmatmul.mubr.bf16.gmra.mrb[0].mxu0 %v594
    %v3514 = vpop.f32.mrb[0].mxu0
    %v3515 = vadd.f32 %v3462, %v3514
    %v3516 = vpop.f32.mrb[0].mxu0
    %v3517 = vadd.f32 %v3464, %v3516
    %v3518 = vpop.f32.mrb[0].mxu0
    %v3519 = vadd.f32 %v3466, %v3518
    %v3520 = vpop.f32.mrb[0].mxu0
    %v3521 = vadd.f32 %v3468, %v3520
    %3522 = vmatprep.mubr.bf16.mxu0 %v601
    %3523 = vmatmul.mubr.bf16.gmra.mrb[0].mxu0 %v600
    %v3524 = vpop.f32.mrb[0].mxu0
    %v3525 = vadd.f32 %v3472, %v3524
    %v3526 = vpop.f32.mrb[0].mxu0
    %v3527 = vadd.f32 %v3474, %v3526
    %v3528 = vpop.f32.mrb[0].mxu0
    %v3529 = vadd.f32 %v3476, %v3528
    %v3530 = vpop.f32.mrb[0].mxu0
    %v3531 = vadd.f32 %v3478, %v3530
    %3532 = vdwg.mxu0
    %3533 = vmatprep.subr.bf16.mxu0 %v2445
    %3534 = vmatpush1.bf16.msra.mxu0 %v2444
    %3535 = vmatprep.subr.bf16.mxu0 %v2453
    %3536 = vmatpush1.bf16.msra.mxu0 %v2452
    %3537 = vmatprep.subr.bf16.mxu0 %v2461
    %3538 = vmatpush1.bf16.msra.mxu0 %v2460
    %3539 = vmatprep.subr.bf16.mxu0 %v2469
    %3540 = vmatpush1.bf16.msra.mxu0 %v2468
    %3541 = vmatprep.subr.bf16.mxu0 %v2477
    %3542 = vmatpush1.bf16.msra.mxu0 %v2476
    %3543 = vmatprep.subr.bf16.mxu0 %v2485
    %3544 = vmatpush1.bf16.msra.mxu0 %v2484
    %3545 = vmatprep.subr.bf16.mxu0 %v2493
    %3546 = vmatpush1.bf16.msra.mxu0 %v2492
    %3547 = vmatprep.subr.bf16.mxu0 %v2501
    %3548 = vmatpush1.bf16.msra.mxu0 %v2500
    %3549 = vmatprep.subr.bf16.mxu0 %v2509
    %3550 = vmatpush1.bf16.msra.mxu0 %v2508
    %3551 = vmatprep.subr.bf16.mxu0 %v2517
    %3552 = vmatpush1.bf16.msra.mxu0 %v2516
    %3553 = vmatprep.subr.bf16.mxu0 %v2525
    %3554 = vmatpush1.bf16.msra.mxu0 %v2524
    %3555 = vmatprep.subr.bf16.mxu0 %v2533
    %3556 = vmatpush1.bf16.msra.mxu0 %v2532
    %3557 = vmatprep.subr.bf16.mxu0 %v2541
    %3558 = vmatpush1.bf16.msra.mxu0 %v2540
    %3559 = vmatprep.subr.bf16.mxu0 %v2549
    %3560 = vmatpush1.bf16.msra.mxu0 %v2548
    %3561 = vmatprep.subr.bf16.mxu0 %v2557
    %3562 = vmatpush1.bf16.msra.mxu0 %v2556
    %3563 = vmatprep.subr.bf16.mxu0 %v2565
    %3564 = vmatpush1.bf16.msra.mxu0 %v2564
    %3565 = vmatprep.mubr.bf16.mxu0 %v597
    %3566 = vmatmul.mubr.bf16.gmra.mrb[0].mxu0 %v596
    %v3567 = vpop.f32.mrb[0].mxu0
    %v3568 = vadd.f32 %v3515, %v3567
    %v3569 = vpop.f32.mrb[0].mxu0
    %v3570 = vadd.f32 %v3517, %v3569
    %v3571 = vpop.f32.mrb[0].mxu0
    %v3572 = vadd.f32 %v3519, %v3571
    %v3573 = vpop.f32.mrb[0].mxu0
    %v3574 = vadd.f32 %v3521, %v3573
    %3575 = vmatprep.mubr.bf16.mxu0 %v603
    %3576 = vmatmul.mubr.bf16.gmra.mrb[0].mxu0 %v602
    %v3577 = vpop.f32.mrb[0].mxu0
    %v3578 = vadd.f32 %v3525, %v3577
    %v3579 = vpop.f32.mrb[0].mxu0
    %v3580 = vadd.f32 %v3527, %v3579
    %v3581 = vpop.f32.mrb[0].mxu0
    %v3582 = vadd.f32 %v3529, %v3581
    %v3583 = vpop.f32.mrb[0].mxu0
    %v3584 = vadd.f32 %v3531, %v3583
    %3585 = vdwg.mxu0
    %v3586 = vmax.f32 %v3091, 0.0
    %v3587 = vmax.f32 %v3093, 0.0
    %v3588 = vmax.f32 %v3250, 0.0
    %v3589 = vmax.f32 %v3252, 0.0
    %v3590 = vmax.f32 %v3409, 0.0
    %v3591 = vmax.f32 %v3411, 0.0
    %v3592 = vmax.f32 %v3568, 0.0
    %v3593 = vmax.f32 %v3570, 0.0
    %v3594 = vmax.f32 %v3095, 0.0
    %v3595 = vmax.f32 %v3097, 0.0
    %v3596 = vmax.f32 %v3254, 0.0
    %v3597 = vmax.f32 %v3256, 0.0
    %v3598 = vmax.f32 %v3413, 0.0
    %v3599 = vmax.f32 %v3415, 0.0
    %v3600 = vmax.f32 %v3572, 0.0
    %v3601 = vmax.f32 %v3574, 0.0
    %v3602 = vmax.f32 %v3101, 0.0
    %v3603 = vmax.f32 %v3103, 0.0
    %v3604 = vmax.f32 %v3260, 0.0
    %v3605 = vmax.f32 %v3262, 0.0
    %v3606 = vmax.f32 %v3419, 0.0
    %v3607 = vmax.f32 %v3421, 0.0
    %v3608 = vmax.f32 %v3578, 0.0
    %v3609 = vmax.f32 %v3580, 0.0
    %v3610 = vmax.f32 %v3105, 0.0
    %v3611 = vmax.f32 %v3107, 0.0
    %v3612 = vmax.f32 %v3264, 0.0
    %v3613 = vmax.f32 %v3266, 0.0
    %v3614 = vmax.f32 %v3423, 0.0
    %v3615 = vmax.f32 %v3425, 0.0
    %v3616 = vmax.f32 %v3582, 0.0
    %v3617 = vmax.f32 %v3584, 0.0
    %v3618 = vpack.c.bf16 %v3594, %v3586
    %v3619 = vpack.c.bf16 %v3595, %v3587
    %v3620 = vpack.c.bf16 %v3610, %v3602
    %v3621 = vpack.c.bf16 %v3611, %v3603
    %3622 = vst [vmem:[#allocation3] sm:$0xff] %v3618
    %3623 = vst [vmem:[#allocation3 + $0x8] sm:$0xff] %v3619
    %3624 = vst [vmem:[#allocation3 + $0x18] sm:$0xff] %v3620
    %3625 = vst [vmem:[#allocation3 + $0x20] sm:$0xff] %v3621
    %v3626 = vpack.c.bf16 %v3596, %v3588
    %v3627 = vpack.c.bf16 %v3597, %v3589
    %v3628 = vpack.c.bf16 %v3612, %v3604
    %v3629 = vpack.c.bf16 %v3613, %v3605
    %3630 = vst [vmem:[#allocation3 + $0x30] sm:$0xff] %v3626
    %3631 = vst [vmem:[#allocation3 + $0x38] sm:$0xff] %v3627
    %3632 = vst [vmem:[#allocation3 + $0x48] sm:$0xff] %v3628
    %3633 = vst [vmem:[#allocation3 + $0x50] sm:$0xff] %v3629
    %v3634 = vpack.c.bf16 %v3598, %v3590
    %v3635 = vpack.c.bf16 %v3599, %v3591
    %v3636 = vpack.c.bf16 %v3614, %v3606
    %v3637 = vpack.c.bf16 %v3615, %v3607
    %3638 = vst [vmem:[#allocation3 + $0x60] sm:$0xff] %v3634
    %3639 = vst [vmem:[#allocation3 + $0x68] sm:$0xff] %v3635
    %3640 = vst [vmem:[#allocation3 + $0x78] sm:$0xff] %v3636
    %3641 = vst [vmem:[#allocation3 + $0x80] sm:$0xff] %v3637
    %v3642 = vpack.c.bf16 %v3600, %v3592
    %v3643 = vpack.c.bf16 %v3601, %v3593
    %v3644 = vpack.c.bf16 %v3616, %v3608
    %v3645 = vpack.c.bf16 %v3617, %v3609
    %3646 = vst [vmem:[#allocation3 + $0x90] sm:$0xff] %v3642
    %3647 = vst [vmem:[#allocation3 + $0x98] sm:$0xff] %v3643
    %3648 = vst [vmem:[#allocation3 + $0xa8] sm:$0xff] %v3644
    %3649 = vst [vmem:[#allocation3 + $0xb0] sm:$0xff] %v3645
    %v3650 = vld [vmem:[%s2] sm:$0xf]
    %v3651 = vld [vmem:[%s2 + $0x4] sm:$0xf]
    %v3652 = vld [vmem:[%s2 + $0x8] sm:$0xf]
    %v3653 = vld [vmem:[%s2 + $0xc] sm:$0xf]
    %v3654 = vld [vmem:[%s2 + $0x10] sm:$0xf]
    %v3655 = vld [vmem:[%s2 + $0x14] sm:$0xf]
    %v3656 = vld [vmem:[%s2 + $0x18] sm:$0xf]
    %v3657 = vld [vmem:[%s2 + $0x1c] sm:$0xf]
    %v3658 = vld [vmem:[%s2 + $0x20] sm:$0xf]
    %v3659 = vld [vmem:[%s2 + $0x24] sm:$0xf]
    %v3660 = vld [vmem:[%s2 + $0x28] sm:$0xf]
    %v3661 = vld [vmem:[%s2 + $0x2c] sm:$0xf]
    %v3662 = vld [vmem:[%s2 + $0x30] sm:$0xf]
    %v3663 = vld [vmem:[%s2 + $0x34] sm:$0xf]
    %v3664 = vld [vmem:[%s2 + $0x38] sm:$0xf]
    %v3665 = vld [vmem:[%s2 + $0x3c] sm:$0xf]
    %v3666 = vld [vmem:[#allocation9] sm:$0xf]
    %v3667 = vld [vmem:[#allocation9 + $0x4] sm:$0xf]
    %v3668 = vld [vmem:[#allocation9 + $0x8] sm:$0xf]
    %v3669 = vld [vmem:[#allocation9 + $0xc] sm:$0xf]
    %v3670 = vld [vmem:[#allocation9 + $0x10] sm:$0xf]
    %v3671 = vld [vmem:[#allocation9 + $0x14] sm:$0xf]
    %v3672 = vld [vmem:[#allocation9 + $0x18] sm:$0xf]
    %v3673 = vld [vmem:[#allocation9 + $0x1c] sm:$0xf]
    %v3674 = vld [vmem:[#allocation10] sm:$0x1]
    %v3676 = vlaneseq
    %v3677 = vshrl.u32 %v3676, 7
    %v3678 = vsub.s32 0, %v3677
    %v3679 = vrot.slane %v3674, %v3678
    %v3697 = vunpack.c.l.b16 %v3650
    %v3698 = vunpack.c.l.b16 %v3651
    %v3699 = vunpack.c.l.b16 %v3652
    %v3700 = vunpack.c.l.b16 %v3653
    %v3701 = vunpack.c.l.b16 %v3654
    %v3702 = vunpack.c.l.b16 %v3655
    %v3703 = vunpack.c.l.b16 %v3656
    %v3704 = vunpack.c.l.b16 %v3657
    %v3705 = vunpack.c.l.b16 %v3658
    %v3706 = vunpack.c.l.b16 %v3659
    %v3707 = vunpack.c.l.b16 %v3660
    %v3708 = vunpack.c.l.b16 %v3661
    %v3709 = vunpack.c.l.b16 %v3662
    %v3710 = vunpack.c.l.b16 %v3663
    %v3711 = vunpack.c.l.b16 %v3664
    %v3712 = vunpack.c.l.b16 %v3665
    %v3713 = vpack.c.b16 %v3698, %v3697
    %v3714 = vpack.c.b16 %v3700, %v3699
    %v3715 = vpack.c.b16 %v3702, %v3701
    %v3716 = vpack.c.b16 %v3704, %v3703
    %v3717 = vpack.c.b16 %v3706, %v3705
    %v3718 = vpack.c.b16 %v3708, %v3707
    %v3719 = vpack.c.b16 %v3710, %v3709
    %v3720 = vpack.c.b16 %v3712, %v3711
    %v3729 = vunpack.c.l.b16 %v3666
    %v3730 = vunpack.c.l.b16 %v3667
    %v3731 = vunpack.c.l.b16 %v3668
    %v3732 = vunpack.c.l.b16 %v3669
    %v3733 = vunpack.c.l.b16 %v3670
    %v3734 = vunpack.c.l.b16 %v3671
    %v3735 = vunpack.c.l.b16 %v3672
    %v3736 = vunpack.c.l.b16 %v3673
    %v3737 = vpack.c.b16 %v3730, %v3729
    %v3738 = vpack.c.b16 %v3732, %v3731
    %v3739 = vpack.c.b16 %v3734, %v3733
    %v3740 = vpack.c.b16 %v3736, %v3735
    %vm3745 = vcmask 523264
    %v3747 = vsel %vm3745, %v3713, 0
    %v3750 = vsel %vm3745, %v3714, 0
    %v3753 = vsel %vm3745, %v3715, 0
    %v3756 = vsel %vm3745, %v3716, 0
    %v3759 = vsel %vm3745, %v3717, 0
    %v3762 = vsel %vm3745, %v3718, 0
    %v3765 = vsel %vm3745, %v3719, 0
    %v3768 = vsel %vm3745, %v3720, 0
    %3770 = vmatprep.subr.bf16.mxu0 0
    %3771 = vmatpush1.bf16.msra.mxu0 %v3737
    %3772 = vmatprep.subr.bf16.mxu0 0
    %3773 = vmatpush1.bf16.msra.mxu0 %v3738
    %3774 = vmatprep.subr.bf16.mxu0 0
    %3775 = vmatpush1.bf16.msra.mxu0 %v3739
    %3776 = vmatprep.subr.bf16.mxu0 0
    %3777 = vmatpush1.bf16.msra.mxu0 %v3740
    %3778 = vmatprep.subr.bf16.mxu0 0
    %3779 = vmatpush1.bf16.msra.mxu0 0
    %3780 = vmatprep.subr.bf16.mxu0 0
    %3781 = vmatpush1.bf16.msra.mxu0 0
    %3782 = vmatprep.subr.bf16.mxu0 0
    %3783 = vmatpush1.bf16.msra.mxu0 0
    %3784 = vmatprep.subr.bf16.mxu0 0
    %3785 = vmatpush1.bf16.msra.mxu0 0
    %3786 = vmatprep.subr.bf16.mxu0 0
    %3787 = vmatpush1.bf16.msra.mxu0 0
    %3788 = vmatprep.subr.bf16.mxu0 0
    %3789 = vmatpush1.bf16.msra.mxu0 0
    %3790 = vmatprep.subr.bf16.mxu0 0
    %3791 = vmatpush1.bf16.msra.mxu0 0
    %3792 = vmatprep.subr.bf16.mxu0 0
    %3793 = vmatpush1.bf16.msra.mxu0 0
    %3794 = vmatprep.subr.bf16.mxu0 0
    %3795 = vmatpush1.bf16.msra.mxu0 0
    %3796 = vmatprep.subr.bf16.mxu0 0
    %3797 = vmatpush1.bf16.msra.mxu0 0
    %3798 = vmatprep.subr.bf16.mxu0 0
    %3799 = vmatpush1.bf16.msra.mxu0 0
    %3800 = vmatprep.subr.bf16.mxu0 0
    %3801 = vmatpush1.bf16.msra.mxu0 0
    %3802 = vmatprep.mubr.bf16.mxu0 0
    %3803 = vmatmul.mubr.bf16.gmra.mrb[0].mxu0 %v3747
    %v3804 = vpop.f32.mrb[0].mxu0
    %v3805 = vadd.f32 %v3679, %v3804
    %v3806 = vpop.f32.mrb[0].mxu0
    %v3807 = vpop.f32.mrb[0].mxu0
    %v3808 = vadd.f32 %v3679, %v3807
    %v3809 = vpop.f32.mrb[0].mxu0
    %3810 = vmatprep.mubr.bf16.mxu0 0
    %3811 = vmatmul.mubr.bf16.gmra.mrb[0].mxu0 %v3750
    %v3812 = vpop.f32.mrb[0].mxu0
    %v3813 = vadd.f32 %v3679, %v3812
    %v3814 = vpop.f32.mrb[0].mxu0
    %v3815 = vpop.f32.mrb[0].mxu0
    %v3816 = vadd.f32 %v3679, %v3815
    %v3817 = vpop.f32.mrb[0].mxu0
    %3818 = vmatprep.mubr.bf16.mxu0 0
    %3819 = vmatmul.mubr.bf16.gmra.mrb[0].mxu0 %v3753
    %v3820 = vpop.f32.mrb[0].mxu0
    %v3821 = vadd.f32 %v3679, %v3820
    %v3822 = vpop.f32.mrb[0].mxu0
    %v3823 = vpop.f32.mrb[0].mxu0
    %v3824 = vadd.f32 %v3679, %v3823
    %v3825 = vpop.f32.mrb[0].mxu0
    %3826 = vmatprep.mubr.bf16.mxu0 0
    %3827 = vmatmul.mubr.bf16.gmra.mrb[0].mxu0 %v3756
    %v3828 = vpop.f32.mrb[0].mxu0
    %v3829 = vadd.f32 %v3679, %v3828
    %v3830 = vpop.f32.mrb[0].mxu0
    %v3831 = vpop.f32.mrb[0].mxu0
    %v3832 = vadd.f32 %v3679, %v3831
    %v3833 = vpop.f32.mrb[0].mxu0
    %3834 = vmatprep.mubr.bf16.mxu0 0
    %3835 = vmatmul.mubr.bf16.gmra.mrb[0].mxu0 %v3759
    %v3836 = vpop.f32.mrb[0].mxu0
    %v3837 = vadd.f32 %v3679, %v3836
    %v3838 = vpop.f32.mrb[0].mxu0
    %v3839 = vpop.f32.mrb[0].mxu0
    %v3840 = vadd.f32 %v3679, %v3839
    %v3841 = vpop.f32.mrb[0].mxu0
    %3842 = vmatprep.mubr.bf16.mxu0 0
    %3843 = vmatmul.mubr.bf16.gmra.mrb[0].mxu0 %v3762
    %v3844 = vpop.f32.mrb[0].mxu0
    %v3845 = vadd.f32 %v3679, %v3844
    %v3846 = vpop.f32.mrb[0].mxu0
    %v3847 = vpop.f32.mrb[0].mxu0
    %v3848 = vadd.f32 %v3679, %v3847
    %v3849 = vpop.f32.mrb[0].mxu0
    %3850 = vmatprep.mubr.bf16.mxu0 0
    %3851 = vmatmul.mubr.bf16.gmra.mrb[0].mxu0 %v3765
    %v3852 = vpop.f32.mrb[0].mxu0
    %v3853 = vadd.f32 %v3679, %v3852
    %v3854 = vpop.f32.mrb[0].mxu0
    %v3855 = vpop.f32.mrb[0].mxu0
    %v3856 = vadd.f32 %v3679, %v3855
    %v3857 = vpop.f32.mrb[0].mxu0
    %3858 = vmatprep.mubr.bf16.mxu0 0
    %3859 = vmatmul.mubr.bf16.gmra.mrb[0].mxu0 %v3768
    %v3860 = vpop.f32.mrb[0].mxu0
    %v3861 = vadd.f32 %v3679, %v3860
    %v3862 = vpop.f32.mrb[0].mxu0
    %v3863 = vpop.f32.mrb[0].mxu0
    %v3864 = vadd.f32 %v3679, %v3863
    %v3865 = vpop.f32.mrb[0].mxu0
    %3866 = vdwg.mxu0
    %v3867 = vmax.f32 %v3805, 0.0
    %v3868 = vmax.f32 %v3808, 0.0
    %v3869 = vmax.f32 %v3813, 0.0
    %v3870 = vmax.f32 %v3816, 0.0
    %v3871 = vmax.f32 %v3821, 0.0
    %v3872 = vmax.f32 %v3824, 0.0
    %v3873 = vmax.f32 %v3829, 0.0
    %v3874 = vmax.f32 %v3832, 0.0
    %v3875 = vmax.f32 %v3837, 0.0
    %v3876 = vmax.f32 %v3840, 0.0
    %v3877 = vmax.f32 %v3845, 0.0
    %v3878 = vmax.f32 %v3848, 0.0
    %v3879 = vmax.f32 %v3853, 0.0
    %v3880 = vmax.f32 %v3856, 0.0
    %v3881 = vmax.f32 %v3861, 0.0
    %v3882 = vmax.f32 %v3864, 0.0
    %v3883 = vpack.c.bf16 %v3868, %v3867
    %v3884 = vpack.c.bf16 %v3870, %v3869
    %v3885 = vpack.c.bf16 %v3872, %v3871
    %v3886 = vpack.c.bf16 %v3874, %v3873
    %v3887 = vpack.c.bf16 %v3876, %v3875
    %v3888 = vpack.c.bf16 %v3878, %v3877
    %v3889 = vpack.c.bf16 %v3880, %v3879
    %v3890 = vpack.c.bf16 %v3882, %v3881
    %3891 = vst [vmem:[#allocation3 + $0x10] sm:$0xff] %v3883
    %3892 = vst [vmem:[#allocation3 + $0x28] sm:$0xff] %v3884
    %3893 = vst [vmem:[#allocation3 + $0x40] sm:$0xff] %v3885
    %3894 = vst [vmem:[#allocation3 + $0x58] sm:$0xff] %v3886
    %3895 = vst [vmem:[#allocation3 + $0x70] sm:$0xff] %v3887
    %3896 = vst [vmem:[#allocation3 + $0x88] sm:$0xff] %v3888
    %3897 = vst [vmem:[#allocation3 + $0xa0] sm:$0xff] %v3889
    %3898 = vst [vmem:[#allocation3 + $0xb8] sm:$0xff] %v3890
    %v3899 = vld [vmem:[#allocation3] sm:$0xff]
    %v3900 = vld [vmem:[#allocation3 + $0x8] sm:$0xff]
    %v3901 = vld [vmem:[#allocation3 + $0x10] sm:$0xff]
    %v3902 = vld [vmem:[#allocation3 + $0x18] sm:$0xff]
    %v3903 = vld [vmem:[#allocation3 + $0x20] sm:$0xff]
    %v3904 = vld [vmem:[#allocation3 + $0x28] sm:$0xff]
    %v3905 = vld [vmem:[#allocation3 + $0x30] sm:$0xff]
    %v3906 = vld [vmem:[#allocation3 + $0x38] sm:$0xff]
    %v3907 = vld [vmem:[#allocation3 + $0x40] sm:$0xff]
    %v3908 = vld [vmem:[#allocation3 + $0x48] sm:$0xff]
    %v3909 = vld [vmem:[#allocation3 + $0x50] sm:$0xff]
    %v3910 = vld [vmem:[#allocation3 + $0x58] sm:$0xff]
    %v3911 = vld [vmem:[#allocation3 + $0x60] sm:$0xff]
    %v3912 = vld [vmem:[#allocation3 + $0x68] sm:$0xff]
    %v3913 = vld [vmem:[#allocation3 + $0x70] sm:$0xff]
    %v3914 = vld [vmem:[#allocation3 + $0x78] sm:$0xff]
    %v3915 = vld [vmem:[#allocation3 + $0x80] sm:$0xff]
    %v3916 = vld [vmem:[#allocation3 + $0x88] sm:$0xff]
    %v3917 = vld [vmem:[#allocation3 + $0x90] sm:$0xff]
    %v3918 = vld [vmem:[#allocation3 + $0x98] sm:$0xff]
    %v3919 = vld [vmem:[#allocation3 + $0xa0] sm:$0xff]
    %v3920 = vld [vmem:[#allocation3 + $0xa8] sm:$0xff]
    %v3921 = vld [vmem:[#allocation3 + $0xb0] sm:$0xff]
    %v3922 = vld [vmem:[#allocation3 + $0xb8] sm:$0xff]
    %v3923 = vld [vmem:[#allocation18] sm:$0xff]
    %v3924 = vld [vmem:[#allocation18 + $0x8] sm:$0xff]
    %v3925 = vld [vmem:[#allocation18 + $0x10] sm:$0xff]
    %v3926 = vld [vmem:[#allocation18 + $0x18] sm:$0xff]
    %v3927 = vld [vmem:[#allocation18 + $0x20] sm:$0xff]
    %v3928 = vld [vmem:[#allocation18 + $0x28] sm:$0xff]
    %v3929 = vld [vmem:[#allocation18 + $0x30] sm:$0xff]
    %v3930 = vld [vmem:[#allocation18 + $0x38] sm:$0xff]
    %v3931 = vld [vmem:[#allocation18 + $0x40] sm:$0xff]
    %v3932 = vld [vmem:[#allocation18 + $0x48] sm:$0xff]
    %v3933 = vld [vmem:[#allocation18 + $0x50] sm:$0xff]
    %v3934 = vld [vmem:[#allocation18 + $0x58] sm:$0xff]
    %v3935 = vld [vmem:[#allocation18 + $0x60] sm:$0xff]
    %v3936 = vld [vmem:[#allocation18 + $0x68] sm:$0xff]
    %v3937 = vld [vmem:[#allocation18 + $0x70] sm:$0xff]
    %v3938 = vld [vmem:[#allocation18 + $0x78] sm:$0xff]
    %v3939 = vld [vmem:[#allocation18 + $0x80] sm:$0xff]
    %v3940 = vld [vmem:[#allocation18 + $0x88] sm:$0xff]
    %v3941 = vld [vmem:[#allocation18 + $0x90] sm:$0xff]
    %v3942 = vld [vmem:[#allocation18 + $0x98] sm:$0xff]
    %v3943 = vld [vmem:[#allocation18 + $0xa0] sm:$0xff]
    %v3944 = vld [vmem:[#allocation18 + $0xa8] sm:$0xff]
    %v3945 = vld [vmem:[#allocation18 + $0xb0] sm:$0xff]
    %v3946 = vld [vmem:[#allocation18 + $0xb8] sm:$0xff]
    %v3947 = vld [vmem:[#allocation18 + $0xc0] sm:$0xff]
    %v3948 = vld [vmem:[#allocation18 + $0xc8] sm:$0xff]
    %v3949 = vld [vmem:[#allocation18 + $0xd0] sm:$0xff]
    %v3950 = vld [vmem:[#allocation18 + $0xd8] sm:$0xff]
    %v3951 = vld [vmem:[#allocation18 + $0xe0] sm:$0xff]
    %v3952 = vld [vmem:[#allocation18 + $0xe8] sm:$0xff]
    %v3953 = vld [vmem:[#allocation18 + $0xf0] sm:$0xff]
    %v3954 = vld [vmem:[#allocation18 + $0xf8] sm:$0xff]
    %v3955 = vld [vmem:[#allocation18 + $0x100] sm:$0xff]
    %v3956 = vld [vmem:[#allocation18 + $0x108] sm:$0xff]
    %v3957 = vld [vmem:[#allocation18 + $0x110] sm:$0xff]
    %v3958 = vld [vmem:[#allocation18 + $0x118] sm:$0xff]
    %v3959 = vld [vmem:[#allocation18 + $0x120] sm:$0xff]
    %v3960 = vld [vmem:[#allocation18 + $0x128] sm:$0xff]
    %v3961 = vld [vmem:[#allocation18 + $0x130] sm:$0xff]
    %v3962 = vld [vmem:[#allocation18 + $0x138] sm:$0xff]
    %v3963 = vld [vmem:[#allocation18 + $0x140] sm:$0xff]
    %v3964 = vld [vmem:[#allocation18 + $0x148] sm:$0xff]
    %v3965 = vld [vmem:[#allocation18 + $0x150] sm:$0xff]
    %v3966 = vld [vmem:[#allocation18 + $0x158] sm:$0xff]
    %v3967 = vld [vmem:[#allocation18 + $0x160] sm:$0xff]
    %v3968 = vld [vmem:[#allocation18 + $0x168] sm:$0xff]
    %v3969 = vld [vmem:[#allocation18 + $0x170] sm:$0xff]
    %v3970 = vld [vmem:[#allocation18 + $0x178] sm:$0xff]
    %v3971 = vld [vmem:[#allocation18 + $0x180] sm:$0xff]
    %v3972 = vld [vmem:[#allocation18 + $0x188] sm:$0xff]
    %v3973 = vld [vmem:[#allocation18 + $0x190] sm:$0xff]
    %v3974 = vld [vmem:[#allocation18 + $0x198] sm:$0xff]
    %v3975 = vld [vmem:[#allocation18 + $0x1a0] sm:$0xff]
    %v3976 = vld [vmem:[#allocation18 + $0x1a8] sm:$0xff]
    %v3977 = vld [vmem:[#allocation18 + $0x1b0] sm:$0xff]
    %v3978 = vld [vmem:[#allocation18 + $0x1b8] sm:$0xff]
    %v3979 = vld [vmem:[#allocation18 + $0x1c0] sm:$0xff]
    %v3980 = vld [vmem:[#allocation18 + $0x1c8] sm:$0xff]
    %v3981 = vld [vmem:[#allocation18 + $0x1d0] sm:$0xff]
    %v3982 = vld [vmem:[#allocation18 + $0x1d8] sm:$0xff]
    %v3983 = vld [vmem:[#allocation18 + $0x1e0] sm:$0xff]
    %v3984 = vld [vmem:[#allocation18 + $0x1e8] sm:$0xff]
    %v3985 = vld [vmem:[#allocation18 + $0x1f0] sm:$0xff]
    %v3986 = vld [vmem:[#allocation18 + $0x1f8] sm:$0xff]
    %v3987 = vld [vmem:[#allocation18 + $0x200] sm:$0xff]
    %v3988 = vld [vmem:[#allocation18 + $0x208] sm:$0xff]
    %v3989 = vld [vmem:[#allocation18 + $0x210] sm:$0xff]
    %v3990 = vld [vmem:[#allocation18 + $0x218] sm:$0xff]
    %v3991 = vld [vmem:[#allocation18 + $0x220] sm:$0xff]
    %v3992 = vld [vmem:[#allocation18 + $0x228] sm:$0xff]
    %v3993 = vld [vmem:[#allocation18 + $0x230] sm:$0xff]
    %v3994 = vld [vmem:[#allocation18 + $0x238] sm:$0xff]
    %v3995 = vld [vmem:[#allocation18 + $0x240] sm:$0xff]
    %v3996 = vld [vmem:[#allocation18 + $0x248] sm:$0xff]
    %v3997 = vld [vmem:[#allocation18 + $0x250] sm:$0xff]
    %v3998 = vld [vmem:[#allocation18 + $0x258] sm:$0xff]
    %v3999 = vld [vmem:[#allocation18 + $0x260] sm:$0xff]
    %v4000 = vld [vmem:[#allocation18 + $0x268] sm:$0xff]
    %v4001 = vld [vmem:[#allocation18 + $0x270] sm:$0xff]
    %v4002 = vld [vmem:[#allocation18 + $0x278] sm:$0xff]
    %v4003 = vld [vmem:[#allocation18 + $0x280] sm:$0xff]
    %v4004 = vld [vmem:[#allocation18 + $0x288] sm:$0xff]
    %v4005 = vld [vmem:[#allocation18 + $0x290] sm:$0xff]
    %v4006 = vld [vmem:[#allocation18 + $0x298] sm:$0xff]
    %v4007 = vld [vmem:[#allocation18 + $0x2a0] sm:$0xff]
    %v4008 = vld [vmem:[#allocation18 + $0x2a8] sm:$0xff]
    %v4009 = vld [vmem:[#allocation18 + $0x2b0] sm:$0xff]
    %v4010 = vld [vmem:[#allocation18 + $0x2b8] sm:$0xff]
    %v4011 = vld [vmem:[#allocation18 + $0x2c0] sm:$0xff]
    %v4012 = vld [vmem:[#allocation18 + $0x2c8] sm:$0xff]
    %v4013 = vld [vmem:[#allocation18 + $0x2d0] sm:$0xff]
    %v4014 = vld [vmem:[#allocation18 + $0x2d8] sm:$0xff]
    %v4015 = vld [vmem:[#allocation18 + $0x2e0] sm:$0xff]
    %v4016 = vld [vmem:[#allocation18 + $0x2e8] sm:$0xff]
    %v4017 = vld [vmem:[#allocation18 + $0x2f0] sm:$0xff]
    %v4018 = vld [vmem:[#allocation18 + $0x2f8] sm:$0xff]
    %v4019 = vld [vmem:[#allocation19] sm:$0xf]
    %v4021 = vlaneseq
    %v4022 = vshrl.u32 %v4021, 7
    %v4023 = vsub.s32 0, %v4022
    %v4024 = vrot.slane %v4019, %v4023
    %v4025 = vlaneseq
    %v4026 = vshrl.u32 %v4025, 7
    %v4027 = vsub.s32 1, %v4026
    %v4028 = vrot.slane %v4019, %v4027
    %v4029 = vlaneseq
    %v4030 = vshrl.u32 %v4029, 7
    %v4031 = vsub.s32 2, %v4030
    %v4032 = vrot.slane %v4019, %v4031
    %v4033 = vlaneseq
    %v4034 = vshrl.u32 %v4033, 7
    %v4035 = vsub.s32 3, %v4034
    %v4036 = vrot.slane %v4019, %v4035
    %v4137 = vunpack.c.l.b16 %v3923
    %v4138 = vunpack.c.h.b16 %v3923
    %v4139 = vunpack.c.l.b16 %v3924
    %v4140 = vunpack.c.h.b16 %v3924
    %v4141 = vunpack.c.l.b16 %v3925
    %v4142 = vunpack.c.h.b16 %v3925
    %v4143 = vunpack.c.l.b16 %v3926
    %v4144 = vunpack.c.h.b16 %v3926
    %v4145 = vunpack.c.l.b16 %v3927
    %v4146 = vunpack.c.h.b16 %v3927
    %v4147 = vunpack.c.l.b16 %v3928
    %v4148 = vunpack.c.h.b16 %v3928
    %v4149 = vunpack.c.l.b16 %v3929
    %v4150 = vunpack.c.h.b16 %v3929
    %v4151 = vunpack.c.l.b16 %v3930
    %v4152 = vunpack.c.h.b16 %v3930
    %v4153 = vunpack.c.l.b16 %v3931
    %v4154 = vunpack.c.h.b16 %v3931
    %v4155 = vunpack.c.l.b16 %v3932
    %v4156 = vunpack.c.h.b16 %v3932
    %v4157 = vunpack.c.l.b16 %v3933
    %v4158 = vunpack.c.h.b16 %v3933
    %v4159 = vunpack.c.l.b16 %v3934
    %v4160 = vunpack.c.h.b16 %v3934
    %v4161 = vunpack.c.l.b16 %v3935
    %v4162 = vunpack.c.h.b16 %v3935
    %v4163 = vunpack.c.l.b16 %v3936
    %v4164 = vunpack.c.h.b16 %v3936
    %v4165 = vunpack.c.l.b16 %v3937
    %v4166 = vunpack.c.h.b16 %v3937
    %v4167 = vunpack.c.l.b16 %v3938
    %v4168 = vunpack.c.h.b16 %v3938
    %v4169 = vunpack.c.l.b16 %v3939
    %v4170 = vunpack.c.h.b16 %v3939
    %v4171 = vunpack.c.l.b16 %v3940
    %v4172 = vunpack.c.h.b16 %v3940
    %v4173 = vunpack.c.l.b16 %v3941
    %v4174 = vunpack.c.h.b16 %v3941
    %v4175 = vunpack.c.l.b16 %v3942
    %v4176 = vunpack.c.h.b16 %v3942
    %v4177 = vunpack.c.l.b16 %v3943
    %v4178 = vunpack.c.h.b16 %v3943
    %v4179 = vunpack.c.l.b16 %v3944
    %v4180 = vunpack.c.h.b16 %v3944
    %v4181 = vunpack.c.l.b16 %v3945
    %v4182 = vunpack.c.h.b16 %v3945
    %v4183 = vunpack.c.l.b16 %v3946
    %v4184 = vunpack.c.h.b16 %v3946
    %v4185 = vunpack.c.l.b16 %v3947
    %v4186 = vunpack.c.h.b16 %v3947
    %v4187 = vunpack.c.l.b16 %v3948
    %v4188 = vunpack.c.h.b16 %v3948
    %v4189 = vunpack.c.l.b16 %v3949
    %v4190 = vunpack.c.h.b16 %v3949
    %v4191 = vunpack.c.l.b16 %v3950
    %v4192 = vunpack.c.h.b16 %v3950
    %v4193 = vunpack.c.l.b16 %v3951
    %v4194 = vunpack.c.h.b16 %v3951
    %v4195 = vunpack.c.l.b16 %v3952
    %v4196 = vunpack.c.h.b16 %v3952
    %v4197 = vunpack.c.l.b16 %v3953
    %v4198 = vunpack.c.h.b16 %v3953
    %v4199 = vunpack.c.l.b16 %v3954
    %v4200 = vunpack.c.h.b16 %v3954
    %v4201 = vunpack.c.l.b16 %v3955
    %v4202 = vunpack.c.h.b16 %v3955
    %v4203 = vunpack.c.l.b16 %v3956
    %v4204 = vunpack.c.h.b16 %v3956
    %v4205 = vunpack.c.l.b16 %v3957
    %v4206 = vunpack.c.h.b16 %v3957
    %v4207 = vunpack.c.l.b16 %v3958
    %v4208 = vunpack.c.h.b16 %v3958
    %v4209 = vunpack.c.l.b16 %v3959
    %v4210 = vunpack.c.h.b16 %v3959
    %v4211 = vunpack.c.l.b16 %v3960
    %v4212 = vunpack.c.h.b16 %v3960
    %v4213 = vunpack.c.l.b16 %v3961
    %v4214 = vunpack.c.h.b16 %v3961
    %v4215 = vunpack.c.l.b16 %v3962
    %v4216 = vunpack.c.h.b16 %v3962
    %v4217 = vunpack.c.l.b16 %v3963
    %v4218 = vunpack.c.h.b16 %v3963
    %v4219 = vunpack.c.l.b16 %v3964
    %v4220 = vunpack.c.h.b16 %v3964
    %v4221 = vunpack.c.l.b16 %v3965
    %v4222 = vunpack.c.h.b16 %v3965
    %v4223 = vunpack.c.l.b16 %v3966
    %v4224 = vunpack.c.h.b16 %v3966
    %v4225 = vunpack.c.l.b16 %v3967
    %v4226 = vunpack.c.h.b16 %v3967
    %v4227 = vunpack.c.l.b16 %v3968
    %v4228 = vunpack.c.h.b16 %v3968
    %v4229 = vunpack.c.l.b16 %v3969
    %v4230 = vunpack.c.h.b16 %v3969
    %v4231 = vunpack.c.l.b16 %v3970
    %v4232 = vunpack.c.h.b16 %v3970
    %v4233 = vunpack.c.l.b16 %v3971
    %v4234 = vunpack.c.h.b16 %v3971
    %v4235 = vunpack.c.l.b16 %v3972
    %v4236 = vunpack.c.h.b16 %v3972
    %v4237 = vunpack.c.l.b16 %v3973
    %v4238 = vunpack.c.h.b16 %v3973
    %v4239 = vunpack.c.l.b16 %v3974
    %v4240 = vunpack.c.h.b16 %v3974
    %v4241 = vunpack.c.l.b16 %v3975
    %v4242 = vunpack.c.h.b16 %v3975
    %v4243 = vunpack.c.l.b16 %v3976
    %v4244 = vunpack.c.h.b16 %v3976
    %v4245 = vunpack.c.l.b16 %v3977
    %v4246 = vunpack.c.h.b16 %v3977
    %v4247 = vunpack.c.l.b16 %v3978
    %v4248 = vunpack.c.h.b16 %v3978
    %v4249 = vunpack.c.l.b16 %v3979
    %v4250 = vunpack.c.h.b16 %v3979
    %v4251 = vunpack.c.l.b16 %v3980
    %v4252 = vunpack.c.h.b16 %v3980
    %v4253 = vunpack.c.l.b16 %v3981
    %v4254 = vunpack.c.h.b16 %v3981
    %v4255 = vunpack.c.l.b16 %v3982
    %v4256 = vunpack.c.h.b16 %v3982
    %v4257 = vunpack.c.l.b16 %v3983
    %v4258 = vunpack.c.h.b16 %v3983
    %v4259 = vunpack.c.l.b16 %v3984
    %v4260 = vunpack.c.h.b16 %v3984
    %v4261 = vunpack.c.l.b16 %v3985
    %v4262 = vunpack.c.h.b16 %v3985
    %v4263 = vunpack.c.l.b16 %v3986
    %v4264 = vunpack.c.h.b16 %v3986
    %v4265 = vunpack.c.l.b16 %v3987
    %v4266 = vunpack.c.h.b16 %v3987
    %v4267 = vunpack.c.l.b16 %v3988
    %v4268 = vunpack.c.h.b16 %v3988
    %v4269 = vunpack.c.l.b16 %v3989
    %v4270 = vunpack.c.h.b16 %v3989
    %v4271 = vunpack.c.l.b16 %v3990
    %v4272 = vunpack.c.h.b16 %v3990
    %v4273 = vunpack.c.l.b16 %v3991
    %v4274 = vunpack.c.h.b16 %v3991
    %v4275 = vunpack.c.l.b16 %v3992
    %v4276 = vunpack.c.h.b16 %v3992
    %v4277 = vunpack.c.l.b16 %v3993
    %v4278 = vunpack.c.h.b16 %v3993
    %v4279 = vunpack.c.l.b16 %v3994
    %v4280 = vunpack.c.h.b16 %v3994
    %v4281 = vunpack.c.l.b16 %v3995
    %v4282 = vunpack.c.h.b16 %v3995
    %v4283 = vunpack.c.l.b16 %v3996
    %v4284 = vunpack.c.h.b16 %v3996
    %v4285 = vunpack.c.l.b16 %v3997
    %v4286 = vunpack.c.h.b16 %v3997
    %v4287 = vunpack.c.l.b16 %v3998
    %v4288 = vunpack.c.h.b16 %v3998
    %v4289 = vunpack.c.l.b16 %v3999
    %v4290 = vunpack.c.h.b16 %v3999
    %v4291 = vunpack.c.l.b16 %v4000
    %v4292 = vunpack.c.h.b16 %v4000
    %v4293 = vunpack.c.l.b16 %v4001
    %v4294 = vunpack.c.h.b16 %v4001
    %v4295 = vunpack.c.l.b16 %v4002
    %v4296 = vunpack.c.h.b16 %v4002
    %v4297 = vunpack.c.l.b16 %v4003
    %v4298 = vunpack.c.h.b16 %v4003
    %v4299 = vunpack.c.l.b16 %v4004
    %v4300 = vunpack.c.h.b16 %v4004
    %v4301 = vunpack.c.l.b16 %v4005
    %v4302 = vunpack.c.h.b16 %v4005
    %v4303 = vunpack.c.l.b16 %v4006
    %v4304 = vunpack.c.h.b16 %v4006
    %v4305 = vunpack.c.l.b16 %v4007
    %v4306 = vunpack.c.h.b16 %v4007
    %v4307 = vunpack.c.l.b16 %v4008
    %v4308 = vunpack.c.h.b16 %v4008
    %v4309 = vunpack.c.l.b16 %v4009
    %v4310 = vunpack.c.h.b16 %v4009
    %v4311 = vunpack.c.l.b16 %v4010
    %v4312 = vunpack.c.h.b16 %v4010
    %v4313 = vunpack.c.l.b16 %v4011
    %v4314 = vunpack.c.h.b16 %v4011
    %v4315 = vunpack.c.l.b16 %v4012
    %v4316 = vunpack.c.h.b16 %v4012
    %v4317 = vunpack.c.l.b16 %v4013
    %v4318 = vunpack.c.h.b16 %v4013
    %v4319 = vunpack.c.l.b16 %v4014
    %v4320 = vunpack.c.h.b16 %v4014
    %v4321 = vunpack.c.l.b16 %v4015
    %v4322 = vunpack.c.h.b16 %v4015
    %v4323 = vunpack.c.l.b16 %v4016
    %v4324 = vunpack.c.h.b16 %v4016
    %v4325 = vunpack.c.l.b16 %v4017
    %v4326 = vunpack.c.h.b16 %v4017
    %v4327 = vunpack.c.l.b16 %v4018
    %v4328 = vunpack.c.h.b16 %v4018
    %v4329 = vpack.c.b16 %v4141, %v4137
    %v4330 = vpack.c.b16 %v4142, %v4138
    %v4331 = vpack.c.b16 %v4143, %v4139
    %v4332 = vpack.c.b16 %v4144, %v4140
    %v4333 = vpack.c.b16 %v4149, %v4145
    %v4334 = vpack.c.b16 %v4150, %v4146
    %v4335 = vpack.c.b16 %v4151, %v4147
    %v4336 = vpack.c.b16 %v4152, %v4148
    %v4337 = vpack.c.b16 %v4157, %v4153
    %v4338 = vpack.c.b16 %v4158, %v4154
    %v4339 = vpack.c.b16 %v4159, %v4155
    %v4340 = vpack.c.b16 %v4160, %v4156
    %v4341 = vpack.c.b16 %v4165, %v4161
    %v4342 = vpack.c.b16 %v4166, %v4162
    %v4343 = vpack.c.b16 %v4167, %v4163
    %v4344 = vpack.c.b16 %v4168, %v4164
    %v4345 = vpack.c.b16 %v4173, %v4169
    %v4346 = vpack.c.b16 %v4174, %v4170
    %v4347 = vpack.c.b16 %v4175, %v4171
    %v4348 = vpack.c.b16 %v4176, %v4172
    %v4349 = vpack.c.b16 %v4181, %v4177
    %v4350 = vpack.c.b16 %v4182, %v4178
    %v4351 = vpack.c.b16 %v4183, %v4179
    %v4352 = vpack.c.b16 %v4184, %v4180
    %v4353 = vpack.c.b16 %v4189, %v4185
    %v4354 = vpack.c.b16 %v4190, %v4186
    %v4355 = vpack.c.b16 %v4191, %v4187
    %v4356 = vpack.c.b16 %v4192, %v4188
    %v4357 = vpack.c.b16 %v4197, %v4193
    %v4358 = vpack.c.b16 %v4198, %v4194
    %v4359 = vpack.c.b16 %v4199, %v4195
    %v4360 = vpack.c.b16 %v4200, %v4196
    %v4361 = vpack.c.b16 %v4205, %v4201
    %v4362 = vpack.c.b16 %v4206, %v4202
    %v4363 = vpack.c.b16 %v4207, %v4203
    %v4364 = vpack.c.b16 %v4208, %v4204
    %v4365 = vpack.c.b16 %v4213, %v4209
    %v4366 = vpack.c.b16 %v4214, %v4210
    %v4367 = vpack.c.b16 %v4215, %v4211
    %v4368 = vpack.c.b16 %v4216, %v4212
    %v4369 = vpack.c.b16 %v4221, %v4217
    %v4370 = vpack.c.b16 %v4222, %v4218
    %v4371 = vpack.c.b16 %v4223, %v4219
    %v4372 = vpack.c.b16 %v4224, %v4220
    %v4373 = vpack.c.b16 %v4229, %v4225
    %v4374 = vpack.c.b16 %v4230, %v4226
    %v4375 = vpack.c.b16 %v4231, %v4227
    %v4376 = vpack.c.b16 %v4232, %v4228
    %v4377 = vpack.c.b16 %v4237, %v4233
    %v4378 = vpack.c.b16 %v4238, %v4234
    %v4379 = vpack.c.b16 %v4239, %v4235
    %v4380 = vpack.c.b16 %v4240, %v4236
    %v4381 = vpack.c.b16 %v4245, %v4241
    %v4382 = vpack.c.b16 %v4246, %v4242
    %v4383 = vpack.c.b16 %v4247, %v4243
    %v4384 = vpack.c.b16 %v4248, %v4244
    %v4385 = vpack.c.b16 %v4253, %v4249
    %v4386 = vpack.c.b16 %v4254, %v4250
    %v4387 = vpack.c.b16 %v4255, %v4251
    %v4388 = vpack.c.b16 %v4256, %v4252
    %v4389 = vpack.c.b16 %v4261, %v4257
    %v4390 = vpack.c.b16 %v4262, %v4258
    %v4391 = vpack.c.b16 %v4263, %v4259
    %v4392 = vpack.c.b16 %v4264, %v4260
    %v4393 = vpack.c.b16 %v4269, %v4265
    %v4394 = vpack.c.b16 %v4270, %v4266
    %v4395 = vpack.c.b16 %v4271, %v4267
    %v4396 = vpack.c.b16 %v4272, %v4268
    %v4397 = vpack.c.b16 %v4277, %v4273
    %v4398 = vpack.c.b16 %v4278, %v4274
    %v4399 = vpack.c.b16 %v4279, %v4275
    %v4400 = vpack.c.b16 %v4280, %v4276
    %v4401 = vpack.c.b16 %v4285, %v4281
    %v4402 = vpack.c.b16 %v4286, %v4282
    %v4403 = vpack.c.b16 %v4287, %v4283
    %v4404 = vpack.c.b16 %v4288, %v4284
    %v4405 = vpack.c.b16 %v4293, %v4289
    %v4406 = vpack.c.b16 %v4294, %v4290
    %v4407 = vpack.c.b16 %v4295, %v4291
    %v4408 = vpack.c.b16 %v4296, %v4292
    %v4409 = vpack.c.b16 %v4301, %v4297
    %v4410 = vpack.c.b16 %v4302, %v4298
    %v4411 = vpack.c.b16 %v4303, %v4299
    %v4412 = vpack.c.b16 %v4304, %v4300
    %v4413 = vpack.c.b16 %v4309, %v4305
    %v4414 = vpack.c.b16 %v4310, %v4306
    %v4415 = vpack.c.b16 %v4311, %v4307
    %v4416 = vpack.c.b16 %v4312, %v4308
    %v4417 = vpack.c.b16 %v4317, %v4313
    %v4418 = vpack.c.b16 %v4318, %v4314
    %v4419 = vpack.c.b16 %v4319, %v4315
    %v4420 = vpack.c.b16 %v4320, %v4316
    %v4421 = vpack.c.b16 %v4325, %v4321
    %v4422 = vpack.c.b16 %v4326, %v4322
    %v4423 = vpack.c.b16 %v4327, %v4323
    %v4424 = vpack.c.b16 %v4328, %v4324
    %4521 = vmatprep.subr.bf16.mxu0 %v4330
    %4522 = vmatpush1.bf16.msra.mxu0 %v4329
    %4523 = vmatprep.subr.bf16.mxu0 %v4334
    %4524 = vmatpush1.bf16.msra.mxu0 %v4333
    %4525 = vmatprep.subr.bf16.mxu0 %v4338
    %4526 = vmatpush1.bf16.msra.mxu0 %v4337
    %4527 = vmatprep.subr.bf16.mxu0 %v4342
    %4528 = vmatpush1.bf16.msra.mxu0 %v4341
    %4529 = vmatprep.subr.bf16.mxu0 %v4346
    %4530 = vmatpush1.bf16.msra.mxu0 %v4345
    %4531 = vmatprep.subr.bf16.mxu0 %v4350
    %4532 = vmatpush1.bf16.msra.mxu0 %v4349
    %4533 = vmatprep.subr.bf16.mxu0 %v4354
    %4534 = vmatpush1.bf16.msra.mxu0 %v4353
    %4535 = vmatprep.subr.bf16.mxu0 %v4358
    %4536 = vmatpush1.bf16.msra.mxu0 %v4357
    %4537 = vmatprep.subr.bf16.mxu0 %v4362
    %4538 = vmatpush1.bf16.msra.mxu0 %v4361
    %4539 = vmatprep.subr.bf16.mxu0 %v4366
    %4540 = vmatpush1.bf16.msra.mxu0 %v4365
    %4541 = vmatprep.subr.bf16.mxu0 %v4370
    %4542 = vmatpush1.bf16.msra.mxu0 %v4369
    %4543 = vmatprep.subr.bf16.mxu0 %v4374
    %4544 = vmatpush1.bf16.msra.mxu0 %v4373
    %4545 = vmatprep.subr.bf16.mxu0 %v4378
    %4546 = vmatpush1.bf16.msra.mxu0 %v4377
    %4547 = vmatprep.subr.bf16.mxu0 %v4382
    %4548 = vmatpush1.bf16.msra.mxu0 %v4381
    %4549 = vmatprep.subr.bf16.mxu0 %v4386
    %4550 = vmatpush1.bf16.msra.mxu0 %v4385
    %4551 = vmatprep.subr.bf16.mxu0 %v4390
    %4552 = vmatpush1.bf16.msra.mxu0 %v4389
    %4553 = vmatprep.mubr.bf16.mxu0 %v3900
    %4554 = vmatmul.mubr.bf16.gmra.mrb[0].mxu0 %v3899
    %v4555 = vpop.f32.mrb[0].mxu0
    %v4556 = vadd.f32 %v4024, %v4555
    %v4557 = vpop.f32.mrb[0].mxu0
    %v4558 = vadd.f32 %v4028, %v4557
    %v4559 = vpop.f32.mrb[0].mxu0
    %v4560 = vadd.f32 %v4024, %v4559
    %v4561 = vpop.f32.mrb[0].mxu0
    %v4562 = vadd.f32 %v4028, %v4561
    %4563 = vmatprep.mubr.bf16.mxu0 %v3903
    %4564 = vmatmul.mubr.bf16.gmra.mrb[0].mxu0 %v3902
    %v4565 = vpop.f32.mrb[0].mxu0
    %v4566 = vadd.f32 %v4024, %v4565
    %v4567 = vpop.f32.mrb[0].mxu0
    %v4568 = vadd.f32 %v4028, %v4567
    %v4569 = vpop.f32.mrb[0].mxu0
    %v4570 = vadd.f32 %v4024, %v4569
    %v4571 = vpop.f32.mrb[0].mxu0
    %v4572 = vadd.f32 %v4028, %v4571
    %4573 = vmatprep.mubr.bf16.mxu0 %v3906
    %4574 = vmatmul.mubr.bf16.gmra.mrb[0].mxu0 %v3905
    %v4575 = vpop.f32.mrb[0].mxu0
    %v4576 = vadd.f32 %v4024, %v4575
    %v4577 = vpop.f32.mrb[0].mxu0
    %v4578 = vadd.f32 %v4028, %v4577
    %v4579 = vpop.f32.mrb[0].mxu0
    %v4580 = vadd.f32 %v4024, %v4579
    %v4581 = vpop.f32.mrb[0].mxu0
    %v4582 = vadd.f32 %v4028, %v4581
    %4583 = vmatprep.mubr.bf16.mxu0 %v3909
    %4584 = vmatmul.mubr.bf16.gmra.mrb[0].mxu0 %v3908
    %v4585 = vpop.f32.mrb[0].mxu0
    %v4586 = vadd.f32 %v4024, %v4585
    %v4587 = vpop.f32.mrb[0].mxu0
    %v4588 = vadd.f32 %v4028, %v4587
    %v4589 = vpop.f32.mrb[0].mxu0
    %v4590 = vadd.f32 %v4024, %v4589
    %v4591 = vpop.f32.mrb[0].mxu0
    %v4592 = vadd.f32 %v4028, %v4591
    %4593 = vmatprep.mubr.bf16.mxu0 %v3912
    %4594 = vmatmul.mubr.bf16.gmra.mrb[0].mxu0 %v3911
    %v4595 = vpop.f32.mrb[0].mxu0
    %v4596 = vadd.f32 %v4024, %v4595
    %v4597 = vpop.f32.mrb[0].mxu0
    %v4598 = vadd.f32 %v4028, %v4597
    %v4599 = vpop.f32.mrb[0].mxu0
    %v4600 = vadd.f32 %v4024, %v4599
    %v4601 = vpop.f32.mrb[0].mxu0
    %v4602 = vadd.f32 %v4028, %v4601
    %4603 = vmatprep.mubr.bf16.mxu0 %v3915
    %4604 = vmatmul.mubr.bf16.gmra.mrb[0].mxu0 %v3914
    %v4605 = vpop.f32.mrb[0].mxu0
    %v4606 = vadd.f32 %v4024, %v4605
    %v4607 = vpop.f32.mrb[0].mxu0
    %v4608 = vadd.f32 %v4028, %v4607
    %v4609 = vpop.f32.mrb[0].mxu0
    %v4610 = vadd.f32 %v4024, %v4609
    %v4611 = vpop.f32.mrb[0].mxu0
    %v4612 = vadd.f32 %v4028, %v4611
    %4613 = vmatprep.mubr.bf16.mxu0 %v3918
    %4614 = vmatmul.mubr.bf16.gmra.mrb[0].mxu0 %v3917
    %v4615 = vpop.f32.mrb[0].mxu0
    %v4616 = vadd.f32 %v4024, %v4615
    %v4617 = vpop.f32.mrb[0].mxu0
    %v4618 = vadd.f32 %v4028, %v4617
    %v4619 = vpop.f32.mrb[0].mxu0
    %v4620 = vadd.f32 %v4024, %v4619
    %v4621 = vpop.f32.mrb[0].mxu0
    %v4622 = vadd.f32 %v4028, %v4621
    %4623 = vmatprep.mubr.bf16.mxu0 %v3921
    %4624 = vmatmul.mubr.bf16.gmra.mrb[0].mxu0 %v3920
    %v4625 = vpop.f32.mrb[0].mxu0
    %v4626 = vadd.f32 %v4024, %v4625
    %v4627 = vpop.f32.mrb[0].mxu0
    %v4628 = vadd.f32 %v4028, %v4627
    %v4629 = vpop.f32.mrb[0].mxu0
    %v4630 = vadd.f32 %v4024, %v4629
    %v4631 = vpop.f32.mrb[0].mxu0
    %v4632 = vadd.f32 %v4028, %v4631
    %4633 = vdwg.mxu0
    %4634 = vmatprep.subr.bf16.mxu0 %v4394
    %4635 = vmatpush1.bf16.msra.mxu0 %v4393
    %4636 = vmatprep.subr.bf16.mxu0 %v4398
    %4637 = vmatpush1.bf16.msra.mxu0 %v4397
    %4638 = vmatprep.subr.bf16.mxu0 %v4402
    %4639 = vmatpush1.bf16.msra.mxu0 %v4401
    %4640 = vmatprep.subr.bf16.mxu0 %v4406
    %4641 = vmatpush1.bf16.msra.mxu0 %v4405
    %4642 = vmatprep.subr.bf16.mxu0 %v4410
    %4643 = vmatpush1.bf16.msra.mxu0 %v4409
    %4644 = vmatprep.subr.bf16.mxu0 %v4414
    %4645 = vmatpush1.bf16.msra.mxu0 %v4413
    %4646 = vmatprep.subr.bf16.mxu0 %v4418
    %4647 = vmatpush1.bf16.msra.mxu0 %v4417
    %4648 = vmatprep.subr.bf16.mxu0 %v4422
    %4649 = vmatpush1.bf16.msra.mxu0 %v4421
    %4650 = vmatprep.subr.bf16.mxu0 0
    %4651 = vmatpush1.bf16.msra.mxu0 0
    %4652 = vmatprep.subr.bf16.mxu0 0
    %4653 = vmatpush1.bf16.msra.mxu0 0
    %4654 = vmatprep.subr.bf16.mxu0 0
    %4655 = vmatpush1.bf16.msra.mxu0 0
    %4656 = vmatprep.subr.bf16.mxu0 0
    %4657 = vmatpush1.bf16.msra.mxu0 0
    %4658 = vmatprep.subr.bf16.mxu0 0
    %4659 = vmatpush1.bf16.msra.mxu0 0
    %4660 = vmatprep.subr.bf16.mxu0 0
    %4661 = vmatpush1.bf16.msra.mxu0 0
    %4662 = vmatprep.subr.bf16.mxu0 0
    %4663 = vmatpush1.bf16.msra.mxu0 0
    %4664 = vmatprep.subr.bf16.mxu0 0
    %4665 = vmatpush1.bf16.msra.mxu0 0
    %4666 = vmatprep.mubr.bf16.mxu0 0
    %4667 = vmatmul.mubr.bf16.gmra.mrb[0].mxu0 %v3901
    %v4668 = vpop.f32.mrb[0].mxu0
    %v4669 = vadd.f32 %v4556, %v4668
    %v4670 = vpop.f32.mrb[0].mxu0
    %v4671 = vadd.f32 %v4558, %v4670
    %v4672 = vpop.f32.mrb[0].mxu0
    %v4673 = vadd.f32 %v4560, %v4672
    %v4674 = vpop.f32.mrb[0].mxu0
    %v4675 = vadd.f32 %v4562, %v4674
    %4676 = vmatprep.mubr.bf16.mxu0 0
    %4677 = vmatmul.mubr.bf16.gmra.mrb[0].mxu0 %v3904
    %v4678 = vpop.f32.mrb[0].mxu0
    %v4679 = vadd.f32 %v4566, %v4678
    %v4680 = vpop.f32.mrb[0].mxu0
    %v4681 = vadd.f32 %v4568, %v4680
    %v4682 = vpop.f32.mrb[0].mxu0
    %v4683 = vadd.f32 %v4570, %v4682
    %v4684 = vpop.f32.mrb[0].mxu0
    %v4685 = vadd.f32 %v4572, %v4684
    %4686 = vmatprep.mubr.bf16.mxu0 0
    %4687 = vmatmul.mubr.bf16.gmra.mrb[0].mxu0 %v3907
    %v4688 = vpop.f32.mrb[0].mxu0
    %v4689 = vadd.f32 %v4576, %v4688
    %v4690 = vpop.f32.mrb[0].mxu0
    %v4691 = vadd.f32 %v4578, %v4690
    %v4692 = vpop.f32.mrb[0].mxu0
    %v4693 = vadd.f32 %v4580, %v4692
    %v4694 = vpop.f32.mrb[0].mxu0
    %v4695 = vadd.f32 %v4582, %v4694
    %4696 = vmatprep.mubr.bf16.mxu0 0
    %4697 = vmatmul.mubr.bf16.gmra.mrb[0].mxu0 %v3910
    %v4698 = vpop.f32.mrb[0].mxu0
    %v4699 = vadd.f32 %v4586, %v4698
    %v4700 = vpop.f32.mrb[0].mxu0
    %v4701 = vadd.f32 %v4588, %v4700
    %v4702 = vpop.f32.mrb[0].mxu0
    %v4703 = vadd.f32 %v4590, %v4702
    %v4704 = vpop.f32.mrb[0].mxu0
    %v4705 = vadd.f32 %v4592, %v4704
    %4706 = vmatprep.mubr.bf16.mxu0 0
    %4707 = vmatmul.mubr.bf16.gmra.mrb[0].mxu0 %v3913
    %v4708 = vpop.f32.mrb[0].mxu0
    %v4709 = vadd.f32 %v4596, %v4708
    %v4710 = vpop.f32.mrb[0].mxu0
    %v4711 = vadd.f32 %v4598, %v4710
    %v4712 = vpop.f32.mrb[0].mxu0
    %v4713 = vadd.f32 %v4600, %v4712
    %v4714 = vpop.f32.mrb[0].mxu0
    %v4715 = vadd.f32 %v4602, %v4714
    %4716 = vmatprep.mubr.bf16.mxu0 0
    %4717 = vmatmul.mubr.bf16.gmra.mrb[0].mxu0 %v3916
    %v4718 = vpop.f32.mrb[0].mxu0
    %v4719 = vadd.f32 %v4606, %v4718
    %v4720 = vpop.f32.mrb[0].mxu0
    %v4721 = vadd.f32 %v4608, %v4720
    %v4722 = vpop.f32.mrb[0].mxu0
    %v4723 = vadd.f32 %v4610, %v4722
    %v4724 = vpop.f32.mrb[0].mxu0
    %v4725 = vadd.f32 %v4612, %v4724
    %4726 = vmatprep.mubr.bf16.mxu0 0
    %4727 = vmatmul.mubr.bf16.gmra.mrb[0].mxu0 %v3919
    %v4728 = vpop.f32.mrb[0].mxu0
    %v4729 = vadd.f32 %v4616, %v4728
    %v4730 = vpop.f32.mrb[0].mxu0
    %v4731 = vadd.f32 %v4618, %v4730
    %v4732 = vpop.f32.mrb[0].mxu0
    %v4733 = vadd.f32 %v4620, %v4732
    %v4734 = vpop.f32.mrb[0].mxu0
    %v4735 = vadd.f32 %v4622, %v4734
    %4736 = vmatprep.mubr.bf16.mxu0 0
    %4737 = vmatmul.mubr.bf16.gmra.mrb[0].mxu0 %v3922
    %v4738 = vpop.f32.mrb[0].mxu0
    %v4739 = vadd.f32 %v4626, %v4738
    %v4740 = vpop.f32.mrb[0].mxu0
    %v4741 = vadd.f32 %v4628, %v4740
    %v4742 = vpop.f32.mrb[0].mxu0
    %v4743 = vadd.f32 %v4630, %v4742
    %v4744 = vpop.f32.mrb[0].mxu0
    %v4745 = vadd.f32 %v4632, %v4744
    %4746 = vdwg.mxu0
    %4747 = vmatprep.subr.bf16.mxu0 %v4332
    %4748 = vmatpush1.bf16.msra.mxu0 %v4331
    %4749 = vmatprep.subr.bf16.mxu0 %v4336
    %4750 = vmatpush1.bf16.msra.mxu0 %v4335
    %4751 = vmatprep.subr.bf16.mxu0 %v4340
    %4752 = vmatpush1.bf16.msra.mxu0 %v4339
    %4753 = vmatprep.subr.bf16.mxu0 %v4344
    %4754 = vmatpush1.bf16.msra.mxu0 %v4343
    %4755 = vmatprep.subr.bf16.mxu0 %v4348
    %4756 = vmatpush1.bf16.msra.mxu0 %v4347
    %4757 = vmatprep.subr.bf16.mxu0 %v4352
    %4758 = vmatpush1.bf16.msra.mxu0 %v4351
    %4759 = vmatprep.subr.bf16.mxu0 %v4356
    %4760 = vmatpush1.bf16.msra.mxu0 %v4355
    %4761 = vmatprep.subr.bf16.mxu0 %v4360
    %4762 = vmatpush1.bf16.msra.mxu0 %v4359
    %4763 = vmatprep.subr.bf16.mxu0 %v4364
    %4764 = vmatpush1.bf16.msra.mxu0 %v4363
    %4765 = vmatprep.subr.bf16.mxu0 %v4368
    %4766 = vmatpush1.bf16.msra.mxu0 %v4367
    %4767 = vmatprep.subr.bf16.mxu0 %v4372
    %4768 = vmatpush1.bf16.msra.mxu0 %v4371
    %4769 = vmatprep.subr.bf16.mxu0 %v4376
    %4770 = vmatpush1.bf16.msra.mxu0 %v4375
    %4771 = vmatprep.subr.bf16.mxu0 %v4380
    %4772 = vmatpush1.bf16.msra.mxu0 %v4379
    %4773 = vmatprep.subr.bf16.mxu0 %v4384
    %4774 = vmatpush1.bf16.msra.mxu0 %v4383
    %4775 = vmatprep.subr.bf16.mxu0 %v4388
    %4776 = vmatpush1.bf16.msra.mxu0 %v4387
    %4777 = vmatprep.subr.bf16.mxu0 %v4392
    %4778 = vmatpush1.bf16.msra.mxu0 %v4391
    %4779 = vmatprep.mubr.bf16.mxu0 %v3900
    %4780 = vmatmul.mubr.bf16.gmra.mrb[0].mxu0 %v3899
    %v4781 = vpop.f32.mrb[0].mxu0
    %v4782 = vadd.f32 %v4032, %v4781
    %v4783 = vpop.f32.mrb[0].mxu0
    %v4784 = vadd.f32 %v4036, %v4783
    %v4785 = vpop.f32.mrb[0].mxu0
    %v4786 = vadd.f32 %v4032, %v4785
    %v4787 = vpop.f32.mrb[0].mxu0
    %v4788 = vadd.f32 %v4036, %v4787
    %4789 = vmatprep.mubr.bf16.mxu0 %v3903
    %4790 = vmatmul.mubr.bf16.gmra.mrb[0].mxu0 %v3902
    %v4791 = vpop.f32.mrb[0].mxu0
    %v4792 = vadd.f32 %v4032, %v4791
    %v4793 = vpop.f32.mrb[0].mxu0
    %v4794 = vadd.f32 %v4036, %v4793
    %v4795 = vpop.f32.mrb[0].mxu0
    %v4796 = vadd.f32 %v4032, %v4795
    %v4797 = vpop.f32.mrb[0].mxu0
    %v4798 = vadd.f32 %v4036, %v4797
    %4799 = vmatprep.mubr.bf16.mxu0 %v3906
    %4800 = vmatmul.mubr.bf16.gmra.mrb[0].mxu0 %v3905
    %v4801 = vpop.f32.mrb[0].mxu0
    %v4802 = vadd.f32 %v4032, %v4801
    %v4803 = vpop.f32.mrb[0].mxu0
    %v4804 = vadd.f32 %v4036, %v4803
    %v4805 = vpop.f32.mrb[0].mxu0
    %v4806 = vadd.f32 %v4032, %v4805
    %v4807 = vpop.f32.mrb[0].mxu0
    %v4808 = vadd.f32 %v4036, %v4807
    %4809 = vmatprep.mubr.bf16.mxu0 %v3909
    %4810 = vmatmul.mubr.bf16.gmra.mrb[0].mxu0 %v3908
    %v4811 = vpop.f32.mrb[0].mxu0
    %v4812 = vadd.f32 %v4032, %v4811
    %v4813 = vpop.f32.mrb[0].mxu0
    %v4814 = vadd.f32 %v4036, %v4813
    %v4815 = vpop.f32.mrb[0].mxu0
    %v4816 = vadd.f32 %v4032, %v4815
    %v4817 = vpop.f32.mrb[0].mxu0
    %v4818 = vadd.f32 %v4036, %v4817
    %4819 = vmatprep.mubr.bf16.mxu0 %v3912
    %4820 = vmatmul.mubr.bf16.gmra.mrb[0].mxu0 %v3911
    %v4821 = vpop.f32.mrb[0].mxu0
    %v4822 = vadd.f32 %v4032, %v4821
    %v4823 = vpop.f32.mrb[0].mxu0
    %v4824 = vadd.f32 %v4036, %v4823
    %v4825 = vpop.f32.mrb[0].mxu0
    %v4826 = vadd.f32 %v4032, %v4825
    %v4827 = vpop.f32.mrb[0].mxu0
    %v4828 = vadd.f32 %v4036, %v4827
    %4829 = vmatprep.mubr.bf16.mxu0 %v3915
    %4830 = vmatmul.mubr.bf16.gmra.mrb[0].mxu0 %v3914
    %v4831 = vpop.f32.mrb[0].mxu0
    %v4832 = vadd.f32 %v4032, %v4831
    %v4833 = vpop.f32.mrb[0].mxu0
    %v4834 = vadd.f32 %v4036, %v4833
    %v4835 = vpop.f32.mrb[0].mxu0
    %v4836 = vadd.f32 %v4032, %v4835
    %v4837 = vpop.f32.mrb[0].mxu0
    %v4838 = vadd.f32 %v4036, %v4837
    %4839 = vmatprep.mubr.bf16.mxu0 %v3918
    %4840 = vmatmul.mubr.bf16.gmra.mrb[0].mxu0 %v3917
    %v4841 = vpop.f32.mrb[0].mxu0
    %v4842 = vadd.f32 %v4032, %v4841
    %v4843 = vpop.f32.mrb[0].mxu0
    %v4844 = vadd.f32 %v4036, %v4843
    %v4845 = vpop.f32.mrb[0].mxu0
    %v4846 = vadd.f32 %v4032, %v4845
    %v4847 = vpop.f32.mrb[0].mxu0
    %v4848 = vadd.f32 %v4036, %v4847
    %4849 = vmatprep.mubr.bf16.mxu0 %v3921
    %4850 = vmatmul.mubr.bf16.gmra.mrb[0].mxu0 %v3920
    %v4851 = vpop.f32.mrb[0].mxu0
    %v4852 = vadd.f32 %v4032, %v4851
    %v4853 = vpop.f32.mrb[0].mxu0
    %v4854 = vadd.f32 %v4036, %v4853
    %v4855 = vpop.f32.mrb[0].mxu0
    %v4856 = vadd.f32 %v4032, %v4855
    %v4857 = vpop.f32.mrb[0].mxu0
    %v4858 = vadd.f32 %v4036, %v4857
    %4859 = vdwg.mxu0
    %4860 = vmatprep.subr.bf16.mxu0 %v4396
    %4861 = vmatpush1.bf16.msra.mxu0 %v4395
    %4862 = vmatprep.subr.bf16.mxu0 %v4400
    %4863 = vmatpush1.bf16.msra.mxu0 %v4399
    %4864 = vmatprep.subr.bf16.mxu0 %v4404
    %4865 = vmatpush1.bf16.msra.mxu0 %v4403
    %4866 = vmatprep.subr.bf16.mxu0 %v4408
    %4867 = vmatpush1.bf16.msra.mxu0 %v4407
    %4868 = vmatprep.subr.bf16.mxu0 %v4412
    %4869 = vmatpush1.bf16.msra.mxu0 %v4411
    %4870 = vmatprep.subr.bf16.mxu0 %v4416
    %4871 = vmatpush1.bf16.msra.mxu0 %v4415
    %4872 = vmatprep.subr.bf16.mxu0 %v4420
    %4873 = vmatpush1.bf16.msra.mxu0 %v4419
    %4874 = vmatprep.subr.bf16.mxu0 %v4424
    %4875 = vmatpush1.bf16.msra.mxu0 %v4423
    %4876 = vmatprep.subr.bf16.mxu0 0
    %4877 = vmatpush1.bf16.msra.mxu0 0
    %4878 = vmatprep.subr.bf16.mxu0 0
    %4879 = vmatpush1.bf16.msra.mxu0 0
    %4880 = vmatprep.subr.bf16.mxu0 0
    %4881 = vmatpush1.bf16.msra.mxu0 0
    %4882 = vmatprep.subr.bf16.mxu0 0
    %4883 = vmatpush1.bf16.msra.mxu0 0
    %4884 = vmatprep.subr.bf16.mxu0 0
    %4885 = vmatpush1.bf16.msra.mxu0 0
    %4886 = vmatprep.subr.bf16.mxu0 0
    %4887 = vmatpush1.bf16.msra.mxu0 0
    %4888 = vmatprep.subr.bf16.mxu0 0
    %4889 = vmatpush1.bf16.msra.mxu0 0
    %4890 = vmatprep.subr.bf16.mxu0 0
    %4891 = vmatpush1.bf16.msra.mxu0 0
    %4892 = vmatprep.mubr.bf16.mxu0 0
    %4893 = vmatmul.mubr.bf16.gmra.mrb[0].mxu0 %v3901
    %v4894 = vpop.f32.mrb[0].mxu0
    %v4895 = vadd.f32 %v4782, %v4894
    %v4896 = vpop.f32.mrb[0].mxu0
    %v4897 = vadd.f32 %v4784, %v4896
    %v4898 = vpop.f32.mrb[0].mxu0
    %v4899 = vadd.f32 %v4786, %v4898
    %v4900 = vpop.f32.mrb[0].mxu0
    %v4901 = vadd.f32 %v4788, %v4900
    %4902 = vmatprep.mubr.bf16.mxu0 0
    %4903 = vmatmul.mubr.bf16.gmra.mrb[0].mxu0 %v3904
    %v4904 = vpop.f32.mrb[0].mxu0
    %v4905 = vadd.f32 %v4792, %v4904
    %v4906 = vpop.f32.mrb[0].mxu0
    %v4907 = vadd.f32 %v4794, %v4906
    %v4908 = vpop.f32.mrb[0].mxu0
    %v4909 = vadd.f32 %v4796, %v4908
    %v4910 = vpop.f32.mrb[0].mxu0
    %v4911 = vadd.f32 %v4798, %v4910
    %4912 = vmatprep.mubr.bf16.mxu0 0
    %4913 = vmatmul.mubr.bf16.gmra.mrb[0].mxu0 %v3907
    %v4914 = vpop.f32.mrb[0].mxu0
    %v4915 = vadd.f32 %v4802, %v4914
    %v4916 = vpop.f32.mrb[0].mxu0
    %v4917 = vadd.f32 %v4804, %v4916
    %v4918 = vpop.f32.mrb[0].mxu0
    %v4919 = vadd.f32 %v4806, %v4918
    %v4920 = vpop.f32.mrb[0].mxu0
    %v4921 = vadd.f32 %v4808, %v4920
    %4922 = vmatprep.mubr.bf16.mxu0 0
    %4923 = vmatmul.mubr.bf16.gmra.mrb[0].mxu0 %v3910
    %v4924 = vpop.f32.mrb[0].mxu0
    %v4925 = vadd.f32 %v4812, %v4924
    %v4926 = vpop.f32.mrb[0].mxu0
    %v4927 = vadd.f32 %v4814, %v4926
    %v4928 = vpop.f32.mrb[0].mxu0
    %v4929 = vadd.f32 %v4816, %v4928
    %v4930 = vpop.f32.mrb[0].mxu0
    %v4931 = vadd.f32 %v4818, %v4930
    %4932 = vmatprep.mubr.bf16.mxu0 0
    %4933 = vmatmul.mubr.bf16.gmra.mrb[0].mxu0 %v3913
    %v4934 = vpop.f32.mrb[0].mxu0
    %v4935 = vadd.f32 %v4822, %v4934
    %v4936 = vpop.f32.mrb[0].mxu0
    %v4937 = vadd.f32 %v4824, %v4936
    %v4938 = vpop.f32.mrb[0].mxu0
    %v4939 = vadd.f32 %v4826, %v4938
    %v4940 = vpop.f32.mrb[0].mxu0
    %v4941 = vadd.f32 %v4828, %v4940
    %4942 = vmatprep.mubr.bf16.mxu0 0
    %4943 = vmatmul.mubr.bf16.gmra.mrb[0].mxu0 %v3916
    %v4944 = vpop.f32.mrb[0].mxu0
    %v4945 = vadd.f32 %v4832, %v4944
    %v4946 = vpop.f32.mrb[0].mxu0
    %v4947 = vadd.f32 %v4834, %v4946
    %v4948 = vpop.f32.mrb[0].mxu0
    %v4949 = vadd.f32 %v4836, %v4948
    %v4950 = vpop.f32.mrb[0].mxu0
    %v4951 = vadd.f32 %v4838, %v4950
    %4952 = vmatprep.mubr.bf16.mxu0 0
    %4953 = vmatmul.mubr.bf16.gmra.mrb[0].mxu0 %v3919
    %v4954 = vpop.f32.mrb[0].mxu0
    %v4955 = vadd.f32 %v4842, %v4954
    %v4956 = vpop.f32.mrb[0].mxu0
    %v4957 = vadd.f32 %v4844, %v4956
    %v4958 = vpop.f32.mrb[0].mxu0
    %v4959 = vadd.f32 %v4846, %v4958
    %v4960 = vpop.f32.mrb[0].mxu0
    %v4961 = vadd.f32 %v4848, %v4960
    %4962 = vmatprep.mubr.bf16.mxu0 0
    %4963 = vmatmul.mubr.bf16.gmra.mrb[0].mxu0 %v3922
    %v4964 = vpop.f32.mrb[0].mxu0
    %v4965 = vadd.f32 %v4852, %v4964
    %v4966 = vpop.f32.mrb[0].mxu0
    %v4967 = vadd.f32 %v4854, %v4966
    %v4968 = vpop.f32.mrb[0].mxu0
    %v4969 = vadd.f32 %v4856, %v4968
    %v4970 = vpop.f32.mrb[0].mxu0
    %v4971 = vadd.f32 %v4858, %v4970
    %4972 = vdwg.mxu0
    %v4973 = vmax.f32 %v4669, 0.0
    %v4974 = vmax.f32 %v4671, 0.0
    %v4975 = vmax.f32 %v4895, 0.0
    %v4976 = vmax.f32 %v4897, 0.0
    %v4977 = vmax.f32 %v4673, 0.0
    %v4978 = vmax.f32 %v4675, 0.0
    %v4979 = vmax.f32 %v4899, 0.0
    %v4980 = vmax.f32 %v4901, 0.0
    %v4981 = vmax.f32 %v4679, 0.0
    %v4982 = vmax.f32 %v4681, 0.0
    %v4983 = vmax.f32 %v4905, 0.0
    %v4984 = vmax.f32 %v4907, 0.0
    %v4985 = vmax.f32 %v4683, 0.0
    %v4986 = vmax.f32 %v4685, 0.0
    %v4987 = vmax.f32 %v4909, 0.0
    %v4988 = vmax.f32 %v4911, 0.0
    %v4989 = vmax.f32 %v4689, 0.0
    %v4990 = vmax.f32 %v4691, 0.0
    %v4991 = vmax.f32 %v4915, 0.0
    %v4992 = vmax.f32 %v4917, 0.0
    %v4993 = vmax.f32 %v4693, 0.0
    %v4994 = vmax.f32 %v4695, 0.0
    %v4995 = vmax.f32 %v4919, 0.0
    %v4996 = vmax.f32 %v4921, 0.0
    %v4997 = vmax.f32 %v4699, 0.0
    %v4998 = vmax.f32 %v4701, 0.0
    %v4999 = vmax.f32 %v4925, 0.0
    %v5000 = vmax.f32 %v4927, 0.0
    %v5001 = vmax.f32 %v4703, 0.0
    %v5002 = vmax.f32 %v4705, 0.0
    %v5003 = vmax.f32 %v4929, 0.0
    %v5004 = vmax.f32 %v4931, 0.0
    %v5005 = vmax.f32 %v4709, 0.0
    %v5006 = vmax.f32 %v4711, 0.0
    %v5007 = vmax.f32 %v4935, 0.0
    %v5008 = vmax.f32 %v4937, 0.0
    %v5009 = vmax.f32 %v4713, 0.0
    %v5010 = vmax.f32 %v4715, 0.0
    %v5011 = vmax.f32 %v4939, 0.0
    %v5012 = vmax.f32 %v4941, 0.0
    %v5013 = vmax.f32 %v4719, 0.0
    %v5014 = vmax.f32 %v4721, 0.0
    %v5015 = vmax.f32 %v4945, 0.0
    %v5016 = vmax.f32 %v4947, 0.0
    %v5017 = vmax.f32 %v4723, 0.0
    %v5018 = vmax.f32 %v4725, 0.0
    %v5019 = vmax.f32 %v4949, 0.0
    %v5020 = vmax.f32 %v4951, 0.0
    %v5021 = vmax.f32 %v4729, 0.0
    %v5022 = vmax.f32 %v4731, 0.0
    %v5023 = vmax.f32 %v4955, 0.0
    %v5024 = vmax.f32 %v4957, 0.0
    %v5025 = vmax.f32 %v4733, 0.0
    %v5026 = vmax.f32 %v4735, 0.0
    %v5027 = vmax.f32 %v4959, 0.0
    %v5028 = vmax.f32 %v4961, 0.0
    %v5029 = vmax.f32 %v4739, 0.0
    %v5030 = vmax.f32 %v4741, 0.0
    %v5031 = vmax.f32 %v4965, 0.0
    %v5032 = vmax.f32 %v4967, 0.0
    %v5033 = vmax.f32 %v4743, 0.0
    %v5034 = vmax.f32 %v4745, 0.0
    %v5035 = vmax.f32 %v4969, 0.0
    %v5036 = vmax.f32 %v4971, 0.0
    %v5037 = vpack.c.bf16 %v4977, %v4973
    %v5038 = vpack.c.bf16 %v4985, %v4981
    %v5039 = vpack.c.bf16 %v4993, %v4989
    %v5040 = vpack.c.bf16 %v5001, %v4997
    %v5041 = vpack.c.bf16 %v5009, %v5005
    %v5042 = vpack.c.bf16 %v5017, %v5013
    %v5043 = vpack.c.bf16 %v5025, %v5021
    %v5044 = vpack.c.bf16 %v5033, %v5029
    %5045 = vst [vmem:[#allocation4] sm:$0xff] %v5037
    %5046 = vst [vmem:[#allocation4 + $0x10] sm:$0xff] %v5038
    %5047 = vst [vmem:[#allocation4 + $0x20] sm:$0xff] %v5039
    %5048 = vst [vmem:[#allocation4 + $0x30] sm:$0xff] %v5040
    %5049 = vst [vmem:[#allocation4 + $0x40] sm:$0xff] %v5041
    %5050 = vst [vmem:[#allocation4 + $0x50] sm:$0xff] %v5042
    %5051 = vst [vmem:[#allocation4 + $0x60] sm:$0xff] %v5043
    %5052 = vst [vmem:[#allocation4 + $0x70] sm:$0xff] %v5044
    %v5053 = vpack.c.bf16 %v4978, %v4974
    %v5054 = vpack.c.bf16 %v4986, %v4982
    %v5055 = vpack.c.bf16 %v4994, %v4990
    %v5056 = vpack.c.bf16 %v5002, %v4998
    %v5057 = vpack.c.bf16 %v5010, %v5006
    %v5058 = vpack.c.bf16 %v5018, %v5014
    %v5059 = vpack.c.bf16 %v5026, %v5022
    %v5060 = vpack.c.bf16 %v5034, %v5030
    %5061 = vst [vmem:[#allocation4 + $0x80] sm:$0xff] %v5053
    %5062 = vst [vmem:[#allocation4 + $0x90] sm:$0xff] %v5054
    %5063 = vst [vmem:[#allocation4 + $0xa0] sm:$0xff] %v5055
    %5064 = vst [vmem:[#allocation4 + $0xb0] sm:$0xff] %v5056
    %5065 = vst [vmem:[#allocation4 + $0xc0] sm:$0xff] %v5057
    %5066 = vst [vmem:[#allocation4 + $0xd0] sm:$0xff] %v5058
    %5067 = vst [vmem:[#allocation4 + $0xe0] sm:$0xff] %v5059
    %5068 = vst [vmem:[#allocation4 + $0xf0] sm:$0xff] %v5060
    %v5069 = vpack.c.bf16 %v4979, %v4975
    %v5070 = vpack.c.bf16 %v4987, %v4983
    %v5071 = vpack.c.bf16 %v4995, %v4991
    %v5072 = vpack.c.bf16 %v5003, %v4999
    %v5073 = vpack.c.bf16 %v5011, %v5007
    %v5074 = vpack.c.bf16 %v5019, %v5015
    %v5075 = vpack.c.bf16 %v5027, %v5023
    %v5076 = vpack.c.bf16 %v5035, %v5031
    %5077 = vst [vmem:[#allocation4 + $0x100] sm:$0xff] %v5069
    %5078 = vst [vmem:[#allocation4 + $0x110] sm:$0xff] %v5070
    %5079 = vst [vmem:[#allocation4 + $0x120] sm:$0xff] %v5071
    %5080 = vst [vmem:[#allocation4 + $0x130] sm:$0xff] %v5072
    %5081 = vst [vmem:[#allocation4 + $0x140] sm:$0xff] %v5073
    %5082 = vst [vmem:[#allocation4 + $0x150] sm:$0xff] %v5074
    %5083 = vst [vmem:[#allocation4 + $0x160] sm:$0xff] %v5075
    %5084 = vst [vmem:[#allocation4 + $0x170] sm:$0xff] %v5076
    %v5085 = vpack.c.bf16 %v4980, %v4976
    %v5086 = vpack.c.bf16 %v4988, %v4984
    %v5087 = vpack.c.bf16 %v4996, %v4992
    %v5088 = vpack.c.bf16 %v5004, %v5000
    %v5089 = vpack.c.bf16 %v5012, %v5008
    %v5090 = vpack.c.bf16 %v5020, %v5016
    %v5091 = vpack.c.bf16 %v5028, %v5024
    %v5092 = vpack.c.bf16 %v5036, %v5032
    %5093 = vst [vmem:[#allocation4 + $0x180] sm:$0xff] %v5085
    %5094 = vst [vmem:[#allocation4 + $0x190] sm:$0xff] %v5086
    %5095 = vst [vmem:[#allocation4 + $0x1a0] sm:$0xff] %v5087
    %5096 = vst [vmem:[#allocation4 + $0x1b0] sm:$0xff] %v5088
    %5097 = vst [vmem:[#allocation4 + $0x1c0] sm:$0xff] %v5089
    %5098 = vst [vmem:[#allocation4 + $0x1d0] sm:$0xff] %v5090
    %5099 = vst [vmem:[#allocation4 + $0x1e0] sm:$0xff] %v5091
    %5100 = vst [vmem:[#allocation4 + $0x1f0] sm:$0xff] %v5092
    %v5101 = vld [vmem:[%s3] sm:$0xf]
    %v5102 = vld [vmem:[%s3 + $0x4] sm:$0xf]
    %v5103 = vld [vmem:[%s3 + $0x8] sm:$0xf]
    %v5104 = vld [vmem:[%s3 + $0xc] sm:$0xf]
    %v5105 = vld [vmem:[%s3 + $0x10] sm:$0xf]
    %v5106 = vld [vmem:[%s3 + $0x14] sm:$0xf]
    %v5107 = vld [vmem:[%s3 + $0x18] sm:$0xf]
    %v5108 = vld [vmem:[%s3 + $0x1c] sm:$0xf]
    %v5109 = vld [vmem:[%s3 + $0x20] sm:$0xf]
    %v5110 = vld [vmem:[%s3 + $0x24] sm:$0xf]
    %v5111 = vld [vmem:[%s3 + $0x28] sm:$0xf]
    %v5112 = vld [vmem:[%s3 + $0x2c] sm:$0xf]
    %v5113 = vld [vmem:[%s3 + $0x30] sm:$0xf]
    %v5114 = vld [vmem:[%s3 + $0x34] sm:$0xf]
    %v5115 = vld [vmem:[%s3 + $0x38] sm:$0xf]
    %v5116 = vld [vmem:[%s3 + $0x3c] sm:$0xf]
    %v5117 = vld [vmem:[%s3 + $0x40] sm:$0xf]
    %v5118 = vld [vmem:[%s3 + $0x44] sm:$0xf]
    %v5119 = vld [vmem:[%s3 + $0x48] sm:$0xf]
    %v5120 = vld [vmem:[%s3 + $0x4c] sm:$0xf]
    %v5121 = vld [vmem:[%s3 + $0x50] sm:$0xf]
    %v5122 = vld [vmem:[%s3 + $0x54] sm:$0xf]
    %v5123 = vld [vmem:[%s3 + $0x58] sm:$0xf]
    %v5124 = vld [vmem:[%s3 + $0x5c] sm:$0xf]
    %v5125 = vld [vmem:[%s3 + $0x60] sm:$0xf]
    %v5126 = vld [vmem:[%s3 + $0x64] sm:$0xf]
    %v5127 = vld [vmem:[%s3 + $0x68] sm:$0xf]
    %v5128 = vld [vmem:[%s3 + $0x6c] sm:$0xf]
    %v5129 = vld [vmem:[%s3 + $0x70] sm:$0xf]
    %v5130 = vld [vmem:[%s3 + $0x74] sm:$0xf]
    %v5131 = vld [vmem:[%s3 + $0x78] sm:$0xf]
    %v5132 = vld [vmem:[%s3 + $0x7c] sm:$0xf]
    %v5133 = vld [vmem:[%s3 + $0x80] sm:$0xf]
    %v5134 = vld [vmem:[%s3 + $0x84] sm:$0xf]
    %v5135 = vld [vmem:[%s3 + $0x88] sm:$0xf]
    %v5136 = vld [vmem:[%s3 + $0x8c] sm:$0xf]
    %v5137 = vld [vmem:[%s3 + $0x90] sm:$0xf]
    %v5138 = vld [vmem:[%s3 + $0x94] sm:$0xf]
    %v5139 = vld [vmem:[%s3 + $0x98] sm:$0xf]
    %v5140 = vld [vmem:[%s3 + $0x9c] sm:$0xf]
    %v5141 = vld [vmem:[%s3 + $0xa0] sm:$0xf]
    %v5142 = vld [vmem:[%s3 + $0xa4] sm:$0xf]
    %v5143 = vld [vmem:[%s3 + $0xa8] sm:$0xf]
    %v5144 = vld [vmem:[%s3 + $0xac] sm:$0xf]
    %v5145 = vld [vmem:[%s3 + $0xb0] sm:$0xf]
    %v5146 = vld [vmem:[%s3 + $0xb4] sm:$0xf]
    %v5147 = vld [vmem:[%s3 + $0xb8] sm:$0xf]
    %v5148 = vld [vmem:[%s3 + $0xbc] sm:$0xf]
    %v5149 = vld [vmem:[%s3 + $0xc0] sm:$0xf]
    %v5150 = vld [vmem:[%s3 + $0xc4] sm:$0xf]
    %v5151 = vld [vmem:[%s3 + $0xc8] sm:$0xf]
    %v5152 = vld [vmem:[%s3 + $0xcc] sm:$0xf]
    %v5153 = vld [vmem:[%s3 + $0xd0] sm:$0xf]
    %v5154 = vld [vmem:[%s3 + $0xd4] sm:$0xf]
    %v5155 = vld [vmem:[%s3 + $0xd8] sm:$0xf]
    %v5156 = vld [vmem:[%s3 + $0xdc] sm:$0xf]
    %v5157 = vld [vmem:[%s3 + $0xe0] sm:$0xf]
    %v5158 = vld [vmem:[%s3 + $0xe4] sm:$0xf]
    %v5159 = vld [vmem:[%s3 + $0xe8] sm:$0xf]
    %v5160 = vld [vmem:[%s3 + $0xec] sm:$0xf]
    %v5161 = vld [vmem:[%s3 + $0xf0] sm:$0xf]
    %v5162 = vld [vmem:[%s3 + $0xf4] sm:$0xf]
    %v5163 = vld [vmem:[%s3 + $0xf8] sm:$0xf]
    %v5164 = vld [vmem:[%s3 + $0xfc] sm:$0xf]
    %v5165 = vld [vmem:[#allocation12] sm:$0xf]
    %v5166 = vld [vmem:[#allocation12 + $0x4] sm:$0xf]
    %v5167 = vld [vmem:[#allocation12 + $0x8] sm:$0xf]
    %v5168 = vld [vmem:[#allocation12 + $0xc] sm:$0xf]
    %v5169 = vld [vmem:[#allocation13] sm:$0x1]
    %v5171 = vlaneseq
    %v5172 = vshrl.u32 %v5171, 7
    %v5173 = vsub.s32 0, %v5172
    %v5174 = vrot.slane %v5169, %v5173
    %v5240 = vunpack.c.l.b16 %v5101
    %v5241 = vunpack.c.l.b16 %v5102
    %v5242 = vunpack.c.l.b16 %v5103
    %v5243 = vunpack.c.l.b16 %v5104
    %v5244 = vunpack.c.l.b16 %v5105
    %v5245 = vunpack.c.l.b16 %v5106
    %v5246 = vunpack.c.l.b16 %v5107
    %v5247 = vunpack.c.l.b16 %v5108
    %v5248 = vunpack.c.l.b16 %v5109
    %v5249 = vunpack.c.l.b16 %v5110
    %v5250 = vunpack.c.l.b16 %v5111
    %v5251 = vunpack.c.l.b16 %v5112
    %v5252 = vunpack.c.l.b16 %v5113
    %v5253 = vunpack.c.l.b16 %v5114
    %v5254 = vunpack.c.l.b16 %v5115
    %v5255 = vunpack.c.l.b16 %v5116
    %v5256 = vunpack.c.l.b16 %v5117
    %v5257 = vunpack.c.l.b16 %v5118
    %v5258 = vunpack.c.l.b16 %v5119
    %v5259 = vunpack.c.l.b16 %v5120
    %v5260 = vunpack.c.l.b16 %v5121
    %v5261 = vunpack.c.l.b16 %v5122
    %v5262 = vunpack.c.l.b16 %v5123
    %v5263 = vunpack.c.l.b16 %v5124
    %v5264 = vunpack.c.l.b16 %v5125
    %v5265 = vunpack.c.l.b16 %v5126
    %v5266 = vunpack.c.l.b16 %v5127
    %v5267 = vunpack.c.l.b16 %v5128
    %v5268 = vunpack.c.l.b16 %v5129
    %v5269 = vunpack.c.l.b16 %v5130
    %v5270 = vunpack.c.l.b16 %v5131
    %v5271 = vunpack.c.l.b16 %v5132
    %v5272 = vunpack.c.l.b16 %v5133
    %v5273 = vunpack.c.l.b16 %v5134
    %v5274 = vunpack.c.l.b16 %v5135
    %v5275 = vunpack.c.l.b16 %v5136
    %v5276 = vunpack.c.l.b16 %v5137
    %v5277 = vunpack.c.l.b16 %v5138
    %v5278 = vunpack.c.l.b16 %v5139
    %v5279 = vunpack.c.l.b16 %v5140
    %v5280 = vunpack.c.l.b16 %v5141
    %v5281 = vunpack.c.l.b16 %v5142
    %v5282 = vunpack.c.l.b16 %v5143
    %v5283 = vunpack.c.l.b16 %v5144
    %v5284 = vunpack.c.l.b16 %v5145
    %v5285 = vunpack.c.l.b16 %v5146
    %v5286 = vunpack.c.l.b16 %v5147
    %v5287 = vunpack.c.l.b16 %v5148
    %v5288 = vunpack.c.l.b16 %v5149
    %v5289 = vunpack.c.l.b16 %v5150
    %v5290 = vunpack.c.l.b16 %v5151
    %v5291 = vunpack.c.l.b16 %v5152
    %v5292 = vunpack.c.l.b16 %v5153
    %v5293 = vunpack.c.l.b16 %v5154
    %v5294 = vunpack.c.l.b16 %v5155
    %v5295 = vunpack.c.l.b16 %v5156
    %v5296 = vunpack.c.l.b16 %v5157
    %v5297 = vunpack.c.l.b16 %v5158
    %v5298 = vunpack.c.l.b16 %v5159
    %v5299 = vunpack.c.l.b16 %v5160
    %v5300 = vunpack.c.l.b16 %v5161
    %v5301 = vunpack.c.l.b16 %v5162
    %v5302 = vunpack.c.l.b16 %v5163
    %v5303 = vunpack.c.l.b16 %v5164
    %v5304 = vpack.c.b16 %v5241, %v5240
    %v5305 = vpack.c.b16 %v5243, %v5242
    %v5306 = vpack.c.b16 %v5245, %v5244
    %v5307 = vpack.c.b16 %v5247, %v5246
    %v5308 = vpack.c.b16 %v5249, %v5248
    %v5309 = vpack.c.b16 %v5251, %v5250
    %v5310 = vpack.c.b16 %v5253, %v5252
    %v5311 = vpack.c.b16 %v5255, %v5254
    %v5312 = vpack.c.b16 %v5257, %v5256
    %v5313 = vpack.c.b16 %v5259, %v5258
    %v5314 = vpack.c.b16 %v5261, %v5260
    %v5315 = vpack.c.b16 %v5263, %v5262
    %v5316 = vpack.c.b16 %v5265, %v5264
    %v5317 = vpack.c.b16 %v5267, %v5266
    %v5318 = vpack.c.b16 %v5269, %v5268
    %v5319 = vpack.c.b16 %v5271, %v5270
    %v5320 = vpack.c.b16 %v5273, %v5272
    %v5321 = vpack.c.b16 %v5275, %v5274
    %v5322 = vpack.c.b16 %v5277, %v5276
    %v5323 = vpack.c.b16 %v5279, %v5278
    %v5324 = vpack.c.b16 %v5281, %v5280
    %v5325 = vpack.c.b16 %v5283, %v5282
    %v5326 = vpack.c.b16 %v5285, %v5284
    %v5327 = vpack.c.b16 %v5287, %v5286
    %v5328 = vpack.c.b16 %v5289, %v5288
    %v5329 = vpack.c.b16 %v5291, %v5290
    %v5330 = vpack.c.b16 %v5293, %v5292
    %v5331 = vpack.c.b16 %v5295, %v5294
    %v5332 = vpack.c.b16 %v5297, %v5296
    %v5333 = vpack.c.b16 %v5299, %v5298
    %v5334 = vpack.c.b16 %v5301, %v5300
    %v5335 = vpack.c.b16 %v5303, %v5302
    %v5340 = vunpack.c.l.b16 %v5165
    %v5341 = vunpack.c.l.b16 %v5166
    %v5342 = vunpack.c.l.b16 %v5167
    %v5343 = vunpack.c.l.b16 %v5168
    %v5344 = vpack.c.b16 %v5341, %v5340
    %v5345 = vpack.c.b16 %v5343, %v5342
    %vm5348 = vcmask 261120
    %v5350 = vsel %vm5348, %v5304, 0
    %v5353 = vsel %vm5348, %v5305, 0
    %v5356 = vsel %vm5348, %v5306, 0
    %v5359 = vsel %vm5348, %v5307, 0
    %v5362 = vsel %vm5348, %v5308, 0
    %v5365 = vsel %vm5348, %v5309, 0
    %v5368 = vsel %vm5348, %v5310, 0
    %v5371 = vsel %vm5348, %v5311, 0
    %v5374 = vsel %vm5348, %v5312, 0
    %v5377 = vsel %vm5348, %v5313, 0
    %v5380 = vsel %vm5348, %v5314, 0
    %v5383 = vsel %vm5348, %v5315, 0
    %v5386 = vsel %vm5348, %v5316, 0
    %v5389 = vsel %vm5348, %v5317, 0
    %v5392 = vsel %vm5348, %v5318, 0
    %v5395 = vsel %vm5348, %v5319, 0
    %v5398 = vsel %vm5348, %v5320, 0
    %v5401 = vsel %vm5348, %v5321, 0
    %v5404 = vsel %vm5348, %v5322, 0
    %v5407 = vsel %vm5348, %v5323, 0
    %v5410 = vsel %vm5348, %v5324, 0
    %v5413 = vsel %vm5348, %v5325, 0
    %v5416 = vsel %vm5348, %v5326, 0
    %v5419 = vsel %vm5348, %v5327, 0
    %v5422 = vsel %vm5348, %v5328, 0
    %v5425 = vsel %vm5348, %v5329, 0
    %v5428 = vsel %vm5348, %v5330, 0
    %v5431 = vsel %vm5348, %v5331, 0
    %v5434 = vsel %vm5348, %v5332, 0
    %v5437 = vsel %vm5348, %v5333, 0
    %v5440 = vsel %vm5348, %v5334, 0
    %v5443 = vsel %vm5348, %v5335, 0
    %5445 = vmatprep.subr.bf16.mxu0 0
    %5446 = vmatpush1.bf16.msra.mxu0 %v5344
    %5447 = vmatprep.subr.bf16.mxu0 0
    %5448 = vmatpush1.bf16.msra.mxu0 %v5345
    %5449 = vmatprep.subr.bf16.mxu0 0
    %5450 = vmatpush1.bf16.msra.mxu0 0
    %5451 = vmatprep.subr.bf16.mxu0 0
    %5452 = vmatpush1.bf16.msra.mxu0 0
    %5453 = vmatprep.subr.bf16.mxu0 0
    %5454 = vmatpush1.bf16.msra.mxu0 0
    %5455 = vmatprep.subr.bf16.mxu0 0
    %5456 = vmatpush1.bf16.msra.mxu0 0
    %5457 = vmatprep.subr.bf16.mxu0 0
    %5458 = vmatpush1.bf16.msra.mxu0 0
    %5459 = vmatprep.subr.bf16.mxu0 0
    %5460 = vmatpush1.bf16.msra.mxu0 0
    %5461 = vmatprep.subr.bf16.mxu0 0
    %5462 = vmatpush1.bf16.msra.mxu0 0
    %5463 = vmatprep.subr.bf16.mxu0 0
    %5464 = vmatpush1.bf16.msra.mxu0 0
    %5465 = vmatprep.subr.bf16.mxu0 0
    %5466 = vmatpush1.bf16.msra.mxu0 0
    %5467 = vmatprep.subr.bf16.mxu0 0
    %5468 = vmatpush1.bf16.msra.mxu0 0
    %5469 = vmatprep.subr.bf16.mxu0 0
    %5470 = vmatpush1.bf16.msra.mxu0 0
    %5471 = vmatprep.subr.bf16.mxu0 0
    %5472 = vmatpush1.bf16.msra.mxu0 0
    %5473 = vmatprep.subr.bf16.mxu0 0
    %5474 = vmatpush1.bf16.msra.mxu0 0
    %5475 = vmatprep.subr.bf16.mxu0 0
    %5476 = vmatpush1.bf16.msra.mxu0 0
    %5477 = vmatprep.mubr.bf16.mxu0 0
    %5478 = vmatmul.mubr.bf16.gmra.mrb[0].mxu0 %v5350
    %v5479 = vpop.f32.mrb[0].mxu0
    %v5480 = vadd.f32 %v5174, %v5479
    %v5481 = vpop.f32.mrb[0].mxu0
    %v5482 = vpop.f32.mrb[0].mxu0
    %v5483 = vadd.f32 %v5174, %v5482
    %v5484 = vpop.f32.mrb[0].mxu0
    %5485 = vmatprep.mubr.bf16.mxu0 0
    %5486 = vmatmul.mubr.bf16.gmra.mrb[0].mxu0 %v5353
    %v5487 = vpop.f32.mrb[0].mxu0
    %v5488 = vadd.f32 %v5174, %v5487
    %v5489 = vpop.f32.mrb[0].mxu0
    %v5490 = vpop.f32.mrb[0].mxu0
    %v5491 = vadd.f32 %v5174, %v5490
    %v5492 = vpop.f32.mrb[0].mxu0
    %5493 = vmatprep.mubr.bf16.mxu0 0
    %5494 = vmatmul.mubr.bf16.gmra.mrb[0].mxu0 %v5356
    %v5495 = vpop.f32.mrb[0].mxu0
    %v5496 = vadd.f32 %v5174, %v5495
    %v5497 = vpop.f32.mrb[0].mxu0
    %v5498 = vpop.f32.mrb[0].mxu0
    %v5499 = vadd.f32 %v5174, %v5498
    %v5500 = vpop.f32.mrb[0].mxu0
    %5501 = vmatprep.mubr.bf16.mxu0 0
    %5502 = vmatmul.mubr.bf16.gmra.mrb[0].mxu0 %v5359
    %v5503 = vpop.f32.mrb[0].mxu0
    %v5504 = vadd.f32 %v5174, %v5503
    %v5505 = vpop.f32.mrb[0].mxu0
    %v5506 = vpop.f32.mrb[0].mxu0
    %v5507 = vadd.f32 %v5174, %v5506
    %v5508 = vpop.f32.mrb[0].mxu0
    %5509 = vmatprep.mubr.bf16.mxu0 0
    %5510 = vmatmul.mubr.bf16.gmra.mrb[0].mxu0 %v5362
    %v5511 = vpop.f32.mrb[0].mxu0
    %v5512 = vadd.f32 %v5174, %v5511
    %v5513 = vpop.f32.mrb[0].mxu0
    %v5514 = vpop.f32.mrb[0].mxu0
    %v5515 = vadd.f32 %v5174, %v5514
    %v5516 = vpop.f32.mrb[0].mxu0
    %5517 = vmatprep.mubr.bf16.mxu0 0
    %5518 = vmatmul.mubr.bf16.gmra.mrb[0].mxu0 %v5365
    %v5519 = vpop.f32.mrb[0].mxu0
    %v5520 = vadd.f32 %v5174, %v5519
    %v5521 = vpop.f32.mrb[0].mxu0
    %v5522 = vpop.f32.mrb[0].mxu0
    %v5523 = vadd.f32 %v5174, %v5522
    %v5524 = vpop.f32.mrb[0].mxu0
    %5525 = vmatprep.mubr.bf16.mxu0 0
    %5526 = vmatmul.mubr.bf16.gmra.mrb[0].mxu0 %v5368
    %v5527 = vpop.f32.mrb[0].mxu0
    %v5528 = vadd.f32 %v5174, %v5527
    %v5529 = vpop.f32.mrb[0].mxu0
    %v5530 = vpop.f32.mrb[0].mxu0
    %v5531 = vadd.f32 %v5174, %v5530
    %v5532 = vpop.f32.mrb[0].mxu0
    %5533 = vmatprep.mubr.bf16.mxu0 0
    %5534 = vmatmul.mubr.bf16.gmra.mrb[0].mxu0 %v5371
    %v5535 = vpop.f32.mrb[0].mxu0
    %v5536 = vadd.f32 %v5174, %v5535
    %v5537 = vpop.f32.mrb[0].mxu0
    %v5538 = vpop.f32.mrb[0].mxu0
    %v5539 = vadd.f32 %v5174, %v5538
    %v5540 = vpop.f32.mrb[0].mxu0
    %5541 = vmatprep.mubr.bf16.mxu0 0
    %5542 = vmatmul.mubr.bf16.gmra.mrb[0].mxu0 %v5374
    %v5543 = vpop.f32.mrb[0].mxu0
    %v5544 = vadd.f32 %v5174, %v5543
    %v5545 = vpop.f32.mrb[0].mxu0
    %v5546 = vpop.f32.mrb[0].mxu0
    %v5547 = vadd.f32 %v5174, %v5546
    %v5548 = vpop.f32.mrb[0].mxu0
    %5549 = vmatprep.mubr.bf16.mxu0 0
    %5550 = vmatmul.mubr.bf16.gmra.mrb[0].mxu0 %v5377
    %v5551 = vpop.f32.mrb[0].mxu0
    %v5552 = vadd.f32 %v5174, %v5551
    %v5553 = vpop.f32.mrb[0].mxu0
    %v5554 = vpop.f32.mrb[0].mxu0
    %v5555 = vadd.f32 %v5174, %v5554
    %v5556 = vpop.f32.mrb[0].mxu0
    %5557 = vmatprep.mubr.bf16.mxu0 0
    %5558 = vmatmul.mubr.bf16.gmra.mrb[0].mxu0 %v5380
    %v5559 = vpop.f32.mrb[0].mxu0
    %v5560 = vadd.f32 %v5174, %v5559
    %v5561 = vpop.f32.mrb[0].mxu0
    %v5562 = vpop.f32.mrb[0].mxu0
    %v5563 = vadd.f32 %v5174, %v5562
    %v5564 = vpop.f32.mrb[0].mxu0
    %5565 = vmatprep.mubr.bf16.mxu0 0
    %5566 = vmatmul.mubr.bf16.gmra.mrb[0].mxu0 %v5383
    %v5567 = vpop.f32.mrb[0].mxu0
    %v5568 = vadd.f32 %v5174, %v5567
    %v5569 = vpop.f32.mrb[0].mxu0
    %v5570 = vpop.f32.mrb[0].mxu0
    %v5571 = vadd.f32 %v5174, %v5570
    %v5572 = vpop.f32.mrb[0].mxu0
    %5573 = vmatprep.mubr.bf16.mxu0 0
    %5574 = vmatmul.mubr.bf16.gmra.mrb[0].mxu0 %v5386
    %v5575 = vpop.f32.mrb[0].mxu0
    %v5576 = vadd.f32 %v5174, %v5575
    %v5577 = vpop.f32.mrb[0].mxu0
    %v5578 = vpop.f32.mrb[0].mxu0
    %v5579 = vadd.f32 %v5174, %v5578
    %v5580 = vpop.f32.mrb[0].mxu0
    %5581 = vmatprep.mubr.bf16.mxu0 0
    %5582 = vmatmul.mubr.bf16.gmra.mrb[0].mxu0 %v5389
    %v5583 = vpop.f32.mrb[0].mxu0
    %v5584 = vadd.f32 %v5174, %v5583
    %v5585 = vpop.f32.mrb[0].mxu0
    %v5586 = vpop.f32.mrb[0].mxu0
    %v5587 = vadd.f32 %v5174, %v5586
    %v5588 = vpop.f32.mrb[0].mxu0
    %5589 = vmatprep.mubr.bf16.mxu0 0
    %5590 = vmatmul.mubr.bf16.gmra.mrb[0].mxu0 %v5392
    %v5591 = vpop.f32.mrb[0].mxu0
    %v5592 = vadd.f32 %v5174, %v5591
    %v5593 = vpop.f32.mrb[0].mxu0
    %v5594 = vpop.f32.mrb[0].mxu0
    %v5595 = vadd.f32 %v5174, %v5594
    %v5596 = vpop.f32.mrb[0].mxu0
    %5597 = vmatprep.mubr.bf16.mxu0 0
    %5598 = vmatmul.mubr.bf16.gmra.mrb[0].mxu0 %v5395
    %v5599 = vpop.f32.mrb[0].mxu0
    %v5600 = vadd.f32 %v5174, %v5599
    %v5601 = vpop.f32.mrb[0].mxu0
    %v5602 = vpop.f32.mrb[0].mxu0
    %v5603 = vadd.f32 %v5174, %v5602
    %v5604 = vpop.f32.mrb[0].mxu0
    %5605 = vmatprep.mubr.bf16.mxu0 0
    %5606 = vmatmul.mubr.bf16.gmra.mrb[0].mxu0 %v5398
    %v5607 = vpop.f32.mrb[0].mxu0
    %v5608 = vadd.f32 %v5174, %v5607
    %v5609 = vpop.f32.mrb[0].mxu0
    %v5610 = vpop.f32.mrb[0].mxu0
    %v5611 = vadd.f32 %v5174, %v5610
    %v5612 = vpop.f32.mrb[0].mxu0
    %5613 = vmatprep.mubr.bf16.mxu0 0
    %5614 = vmatmul.mubr.bf16.gmra.mrb[0].mxu0 %v5401
    %v5615 = vpop.f32.mrb[0].mxu0
    %v5616 = vadd.f32 %v5174, %v5615
    %v5617 = vpop.f32.mrb[0].mxu0
    %v5618 = vpop.f32.mrb[0].mxu0
    %v5619 = vadd.f32 %v5174, %v5618
    %v5620 = vpop.f32.mrb[0].mxu0
    %5621 = vmatprep.mubr.bf16.mxu0 0
    %5622 = vmatmul.mubr.bf16.gmra.mrb[0].mxu0 %v5404
    %v5623 = vpop.f32.mrb[0].mxu0
    %v5624 = vadd.f32 %v5174, %v5623
    %v5625 = vpop.f32.mrb[0].mxu0
    %v5626 = vpop.f32.mrb[0].mxu0
    %v5627 = vadd.f32 %v5174, %v5626
    %v5628 = vpop.f32.mrb[0].mxu0
    %5629 = vmatprep.mubr.bf16.mxu0 0
    %5630 = vmatmul.mubr.bf16.gmra.mrb[0].mxu0 %v5407
    %v5631 = vpop.f32.mrb[0].mxu0
    %v5632 = vadd.f32 %v5174, %v5631
    %v5633 = vpop.f32.mrb[0].mxu0
    %v5634 = vpop.f32.mrb[0].mxu0
    %v5635 = vadd.f32 %v5174, %v5634
    %v5636 = vpop.f32.mrb[0].mxu0
    %5637 = vmatprep.mubr.bf16.mxu0 0
    %5638 = vmatmul.mubr.bf16.gmra.mrb[0].mxu0 %v5410
    %v5639 = vpop.f32.mrb[0].mxu0
    %v5640 = vadd.f32 %v5174, %v5639
    %v5641 = vpop.f32.mrb[0].mxu0
    %v5642 = vpop.f32.mrb[0].mxu0
    %v5643 = vadd.f32 %v5174, %v5642
    %v5644 = vpop.f32.mrb[0].mxu0
    %5645 = vmatprep.mubr.bf16.mxu0 0
    %5646 = vmatmul.mubr.bf16.gmra.mrb[0].mxu0 %v5413
    %v5647 = vpop.f32.mrb[0].mxu0
    %v5648 = vadd.f32 %v5174, %v5647
    %v5649 = vpop.f32.mrb[0].mxu0
    %v5650 = vpop.f32.mrb[0].mxu0
    %v5651 = vadd.f32 %v5174, %v5650
    %v5652 = vpop.f32.mrb[0].mxu0
    %5653 = vmatprep.mubr.bf16.mxu0 0
    %5654 = vmatmul.mubr.bf16.gmra.mrb[0].mxu0 %v5416
    %v5655 = vpop.f32.mrb[0].mxu0
    %v5656 = vadd.f32 %v5174, %v5655
    %v5657 = vpop.f32.mrb[0].mxu0
    %v5658 = vpop.f32.mrb[0].mxu0
    %v5659 = vadd.f32 %v5174, %v5658
    %v5660 = vpop.f32.mrb[0].mxu0
    %5661 = vmatprep.mubr.bf16.mxu0 0
    %5662 = vmatmul.mubr.bf16.gmra.mrb[0].mxu0 %v5419
    %v5663 = vpop.f32.mrb[0].mxu0
    %v5664 = vadd.f32 %v5174, %v5663
    %v5665 = vpop.f32.mrb[0].mxu0
    %v5666 = vpop.f32.mrb[0].mxu0
    %v5667 = vadd.f32 %v5174, %v5666
    %v5668 = vpop.f32.mrb[0].mxu0
    %5669 = vmatprep.mubr.bf16.mxu0 0
    %5670 = vmatmul.mubr.bf16.gmra.mrb[0].mxu0 %v5422
    %v5671 = vpop.f32.mrb[0].mxu0
    %v5672 = vadd.f32 %v5174, %v5671
    %v5673 = vpop.f32.mrb[0].mxu0
    %v5674 = vpop.f32.mrb[0].mxu0
    %v5675 = vadd.f32 %v5174, %v5674
    %v5676 = vpop.f32.mrb[0].mxu0
    %5677 = vmatprep.mubr.bf16.mxu0 0
    %5678 = vmatmul.mubr.bf16.gmra.mrb[0].mxu0 %v5425
    %v5679 = vpop.f32.mrb[0].mxu0
    %v5680 = vadd.f32 %v5174, %v5679
    %v5681 = vpop.f32.mrb[0].mxu0
    %v5682 = vpop.f32.mrb[0].mxu0
    %v5683 = vadd.f32 %v5174, %v5682
    %v5684 = vpop.f32.mrb[0].mxu0
    %5685 = vmatprep.mubr.bf16.mxu0 0
    %5686 = vmatmul.mubr.bf16.gmra.mrb[0].mxu0 %v5428
    %v5687 = vpop.f32.mrb[0].mxu0
    %v5688 = vadd.f32 %v5174, %v5687
    %v5689 = vpop.f32.mrb[0].mxu0
    %v5690 = vpop.f32.mrb[0].mxu0
    %v5691 = vadd.f32 %v5174, %v5690
    %v5692 = vpop.f32.mrb[0].mxu0
    %5693 = vmatprep.mubr.bf16.mxu0 0
    %5694 = vmatmul.mubr.bf16.gmra.mrb[0].mxu0 %v5431
    %v5695 = vpop.f32.mrb[0].mxu0
    %v5696 = vadd.f32 %v5174, %v5695
    %v5697 = vpop.f32.mrb[0].mxu0
    %v5698 = vpop.f32.mrb[0].mxu0
    %v5699 = vadd.f32 %v5174, %v5698
    %v5700 = vpop.f32.mrb[0].mxu0
    %5701 = vmatprep.mubr.bf16.mxu0 0
    %5702 = vmatmul.mubr.bf16.gmra.mrb[0].mxu0 %v5434
    %v5703 = vpop.f32.mrb[0].mxu0
    %v5704 = vadd.f32 %v5174, %v5703
    %v5705 = vpop.f32.mrb[0].mxu0
    %v5706 = vpop.f32.mrb[0].mxu0
    %v5707 = vadd.f32 %v5174, %v5706
    %v5708 = vpop.f32.mrb[0].mxu0
    %5709 = vmatprep.mubr.bf16.mxu0 0
    %5710 = vmatmul.mubr.bf16.gmra.mrb[0].mxu0 %v5437
    %v5711 = vpop.f32.mrb[0].mxu0
    %v5712 = vadd.f32 %v5174, %v5711
    %v5713 = vpop.f32.mrb[0].mxu0
    %v5714 = vpop.f32.mrb[0].mxu0
    %v5715 = vadd.f32 %v5174, %v5714
    %v5716 = vpop.f32.mrb[0].mxu0
    %5717 = vmatprep.mubr.bf16.mxu0 0
    %5718 = vmatmul.mubr.bf16.gmra.mrb[0].mxu0 %v5440
    %v5719 = vpop.f32.mrb[0].mxu0
    %v5720 = vadd.f32 %v5174, %v5719
    %v5721 = vpop.f32.mrb[0].mxu0
    %v5722 = vpop.f32.mrb[0].mxu0
    %v5723 = vadd.f32 %v5174, %v5722
    %v5724 = vpop.f32.mrb[0].mxu0
    %5725 = vmatprep.mubr.bf16.mxu0 0
    %5726 = vmatmul.mubr.bf16.gmra.mrb[0].mxu0 %v5443
    %v5727 = vpop.f32.mrb[0].mxu0
    %v5728 = vadd.f32 %v5174, %v5727
    %v5729 = vpop.f32.mrb[0].mxu0
    %v5730 = vpop.f32.mrb[0].mxu0
    %v5731 = vadd.f32 %v5174, %v5730
    %v5732 = vpop.f32.mrb[0].mxu0
    %5733 = vdwg.mxu0
    %v5734 = vmax.f32 %v5480, 0.0
    %v5735 = vmax.f32 %v5483, 0.0
    %v5736 = vmax.f32 %v5488, 0.0
    %v5737 = vmax.f32 %v5491, 0.0
    %v5738 = vmax.f32 %v5496, 0.0
    %v5739 = vmax.f32 %v5499, 0.0
    %v5740 = vmax.f32 %v5504, 0.0
    %v5741 = vmax.f32 %v5507, 0.0
    %v5742 = vmax.f32 %v5512, 0.0
    %v5743 = vmax.f32 %v5515, 0.0
    %v5744 = vmax.f32 %v5520, 0.0
    %v5745 = vmax.f32 %v5523, 0.0
    %v5746 = vmax.f32 %v5528, 0.0
    %v5747 = vmax.f32 %v5531, 0.0
    %v5748 = vmax.f32 %v5536, 0.0
    %v5749 = vmax.f32 %v5539, 0.0
    %v5750 = vmax.f32 %v5544, 0.0
    %v5751 = vmax.f32 %v5547, 0.0
    %v5752 = vmax.f32 %v5552, 0.0
    %v5753 = vmax.f32 %v5555, 0.0
    %v5754 = vmax.f32 %v5560, 0.0
    %v5755 = vmax.f32 %v5563, 0.0
    %v5756 = vmax.f32 %v5568, 0.0
    %v5757 = vmax.f32 %v5571, 0.0
    %v5758 = vmax.f32 %v5576, 0.0
    %v5759 = vmax.f32 %v5579, 0.0
    %v5760 = vmax.f32 %v5584, 0.0
    %v5761 = vmax.f32 %v5587, 0.0
    %v5762 = vmax.f32 %v5592, 0.0
    %v5763 = vmax.f32 %v5595, 0.0
    %v5764 = vmax.f32 %v5600, 0.0
    %v5765 = vmax.f32 %v5603, 0.0
    %v5766 = vmax.f32 %v5608, 0.0
    %v5767 = vmax.f32 %v5611, 0.0
    %v5768 = vmax.f32 %v5616, 0.0
    %v5769 = vmax.f32 %v5619, 0.0
    %v5770 = vmax.f32 %v5624, 0.0
    %v5771 = vmax.f32 %v5627, 0.0
    %v5772 = vmax.f32 %v5632, 0.0
    %v5773 = vmax.f32 %v5635, 0.0
    %v5774 = vmax.f32 %v5640, 0.0
    %v5775 = vmax.f32 %v5643, 0.0
    %v5776 = vmax.f32 %v5648, 0.0
    %v5777 = vmax.f32 %v5651, 0.0
    %v5778 = vmax.f32 %v5656, 0.0
    %v5779 = vmax.f32 %v5659, 0.0
    %v5780 = vmax.f32 %v5664, 0.0
    %v5781 = vmax.f32 %v5667, 0.0
    %v5782 = vmax.f32 %v5672, 0.0
    %v5783 = vmax.f32 %v5675, 0.0
    %v5784 = vmax.f32 %v5680, 0.0
    %v5785 = vmax.f32 %v5683, 0.0
    %v5786 = vmax.f32 %v5688, 0.0
    %v5787 = vmax.f32 %v5691, 0.0
    %v5788 = vmax.f32 %v5696, 0.0
    %v5789 = vmax.f32 %v5699, 0.0
    %v5790 = vmax.f32 %v5704, 0.0
    %v5791 = vmax.f32 %v5707, 0.0
    %v5792 = vmax.f32 %v5712, 0.0
    %v5793 = vmax.f32 %v5715, 0.0
    %v5794 = vmax.f32 %v5720, 0.0
    %v5795 = vmax.f32 %v5723, 0.0
    %v5796 = vmax.f32 %v5728, 0.0
    %v5797 = vmax.f32 %v5731, 0.0
    %v5798 = vpack.c.bf16 %v5735, %v5734
    %v5799 = vpack.c.bf16 %v5737, %v5736
    %v5800 = vpack.c.bf16 %v5739, %v5738
    %v5801 = vpack.c.bf16 %v5741, %v5740
    %v5802 = vpack.c.bf16 %v5743, %v5742
    %v5803 = vpack.c.bf16 %v5745, %v5744
    %v5804 = vpack.c.bf16 %v5747, %v5746
    %v5805 = vpack.c.bf16 %v5749, %v5748
    %v5806 = vpack.c.bf16 %v5751, %v5750
    %v5807 = vpack.c.bf16 %v5753, %v5752
    %v5808 = vpack.c.bf16 %v5755, %v5754
    %v5809 = vpack.c.bf16 %v5757, %v5756
    %v5810 = vpack.c.bf16 %v5759, %v5758
    %v5811 = vpack.c.bf16 %v5761, %v5760
    %v5812 = vpack.c.bf16 %v5763, %v5762
    %v5813 = vpack.c.bf16 %v5765, %v5764
    %v5814 = vpack.c.bf16 %v5767, %v5766
    %v5815 = vpack.c.bf16 %v5769, %v5768
    %v5816 = vpack.c.bf16 %v5771, %v5770
    %v5817 = vpack.c.bf16 %v5773, %v5772
    %v5818 = vpack.c.bf16 %v5775, %v5774
    %v5819 = vpack.c.bf16 %v5777, %v5776
    %v5820 = vpack.c.bf16 %v5779, %v5778
    %v5821 = vpack.c.bf16 %v5781, %v5780
    %v5822 = vpack.c.bf16 %v5783, %v5782
    %v5823 = vpack.c.bf16 %v5785, %v5784
    %v5824 = vpack.c.bf16 %v5787, %v5786
    %v5825 = vpack.c.bf16 %v5789, %v5788
    %v5826 = vpack.c.bf16 %v5791, %v5790
    %v5827 = vpack.c.bf16 %v5793, %v5792
    %v5828 = vpack.c.bf16 %v5795, %v5794
    %v5829 = vpack.c.bf16 %v5797, %v5796
    %5830 = vst.msk [vmem:[#allocation4 + $0x8] sm:$0xff] %vm3745, %v5798
    %5831 = vst.msk [vmem:[#allocation4 + $0x18] sm:$0xff] %vm3745, %v5799
    %5832 = vst.msk [vmem:[#allocation4 + $0x28] sm:$0xff] %vm3745, %v5800
    %5833 = vst.msk [vmem:[#allocation4 + $0x38] sm:$0xff] %vm3745, %v5801
    %5834 = vst.msk [vmem:[#allocation4 + $0x48] sm:$0xff] %vm3745, %v5802
    %5835 = vst.msk [vmem:[#allocation4 + $0x58] sm:$0xff] %vm3745, %v5803
    %5836 = vst.msk [vmem:[#allocation4 + $0x68] sm:$0xff] %vm3745, %v5804
    %5837 = vst.msk [vmem:[#allocation4 + $0x78] sm:$0xff] %vm3745, %v5805
    %5838 = vst.msk [vmem:[#allocation4 + $0x88] sm:$0xff] %vm3745, %v5806
    %5839 = vst.msk [vmem:[#allocation4 + $0x98] sm:$0xff] %vm3745, %v5807
    %5840 = vst.msk [vmem:[#allocation4 + $0xa8] sm:$0xff] %vm3745, %v5808
    %5841 = vst.msk [vmem:[#allocation4 + $0xb8] sm:$0xff] %vm3745, %v5809
    %5842 = vst.msk [vmem:[#allocation4 + $0xc8] sm:$0xff] %vm3745, %v5810
    %5843 = vst.msk [vmem:[#allocation4 + $0xd8] sm:$0xff] %vm3745, %v5811
    %5844 = vst.msk [vmem:[#allocation4 + $0xe8] sm:$0xff] %vm3745, %v5812
    %5845 = vst.msk [vmem:[#allocation4 + $0xf8] sm:$0xff] %vm3745, %v5813
    %5846 = vst.msk [vmem:[#allocation4 + $0x108] sm:$0xff] %vm3745, %v5814
    %5847 = vst.msk [vmem:[#allocation4 + $0x118] sm:$0xff] %vm3745, %v5815
    %5848 = vst.msk [vmem:[#allocation4 + $0x128] sm:$0xff] %vm3745, %v5816
    %5849 = vst.msk [vmem:[#allocation4 + $0x138] sm:$0xff] %vm3745, %v5817
    %5850 = vst.msk [vmem:[#allocation4 + $0x148] sm:$0xff] %vm3745, %v5818
    %5851 = vst.msk [vmem:[#allocation4 + $0x158] sm:$0xff] %vm3745, %v5819
    %5852 = vst.msk [vmem:[#allocation4 + $0x168] sm:$0xff] %vm3745, %v5820
    %5853 = vst.msk [vmem:[#allocation4 + $0x178] sm:$0xff] %vm3745, %v5821
    %5854 = vst.msk [vmem:[#allocation4 + $0x188] sm:$0xff] %vm3745, %v5822
    %5855 = vst.msk [vmem:[#allocation4 + $0x198] sm:$0xff] %vm3745, %v5823
    %5856 = vst.msk [vmem:[#allocation4 + $0x1a8] sm:$0xff] %vm3745, %v5824
    %5857 = vst.msk [vmem:[#allocation4 + $0x1b8] sm:$0xff] %vm3745, %v5825
    %5858 = vst.msk [vmem:[#allocation4 + $0x1c8] sm:$0xff] %vm3745, %v5826
    %5859 = vst.msk [vmem:[#allocation4 + $0x1d8] sm:$0xff] %vm3745, %v5827
    %5860 = vst.msk [vmem:[#allocation4 + $0x1e8] sm:$0xff] %vm3745, %v5828
    %5861 = vst.msk [vmem:[#allocation4 + $0x1f8] sm:$0xff] %vm3745, %v5829
    %v5862 = vld [vmem:[#allocation4] sm:$0xff]
    %v5863 = vld [vmem:[#allocation4 + $0x8] sm:$0xff]
    %v5864 = vld [vmem:[#allocation4 + $0x10] sm:$0xff]
    %v5865 = vld [vmem:[#allocation4 + $0x18] sm:$0xff]
    %v5866 = vld [vmem:[#allocation4 + $0x20] sm:$0xff]
    %v5867 = vld [vmem:[#allocation4 + $0x28] sm:$0xff]
    %v5868 = vld [vmem:[#allocation4 + $0x30] sm:$0xff]
    %v5869 = vld [vmem:[#allocation4 + $0x38] sm:$0xff]
    %v5870 = vld [vmem:[#allocation4 + $0x40] sm:$0xff]
    %v5871 = vld [vmem:[#allocation4 + $0x48] sm:$0xff]
    %v5872 = vld [vmem:[#allocation4 + $0x50] sm:$0xff]
    %v5873 = vld [vmem:[#allocation4 + $0x58] sm:$0xff]
    %v5874 = vld [vmem:[#allocation4 + $0x60] sm:$0xff]
    %v5875 = vld [vmem:[#allocation4 + $0x68] sm:$0xff]
    %v5876 = vld [vmem:[#allocation4 + $0x70] sm:$0xff]
    %v5877 = vld [vmem:[#allocation4 + $0x78] sm:$0xff]
    %v5878 = vld [vmem:[#allocation4 + $0x80] sm:$0xff]
    %v5879 = vld [vmem:[#allocation4 + $0x88] sm:$0xff]
    %v5880 = vld [vmem:[#allocation4 + $0x90] sm:$0xff]
    %v5881 = vld [vmem:[#allocation4 + $0x98] sm:$0xff]
    %v5882 = vld [vmem:[#allocation4 + $0xa0] sm:$0xff]
    %v5883 = vld [vmem:[#allocation4 + $0xa8] sm:$0xff]
    %v5884 = vld [vmem:[#allocation4 + $0xb0] sm:$0xff]
    %v5885 = vld [vmem:[#allocation4 + $0xb8] sm:$0xff]
    %v5886 = vld [vmem:[#allocation4 + $0xc0] sm:$0xff]
    %v5887 = vld [vmem:[#allocation4 + $0xc8] sm:$0xff]
    %v5888 = vld [vmem:[#allocation4 + $0xd0] sm:$0xff]
    %v5889 = vld [vmem:[#allocation4 + $0xd8] sm:$0xff]
    %v5890 = vld [vmem:[#allocation4 + $0xe0] sm:$0xff]
    %v5891 = vld [vmem:[#allocation4 + $0xe8] sm:$0xff]
    %v5892 = vld [vmem:[#allocation4 + $0xf0] sm:$0xff]
    %v5893 = vld [vmem:[#allocation4 + $0xf8] sm:$0xff]
    %v5894 = vld [vmem:[#allocation4 + $0x100] sm:$0xff]
    %v5895 = vld [vmem:[#allocation4 + $0x108] sm:$0xff]
    %v5896 = vld [vmem:[#allocation4 + $0x110] sm:$0xff]
    %v5897 = vld [vmem:[#allocation4 + $0x118] sm:$0xff]
    %v5898 = vld [vmem:[#allocation4 + $0x120] sm:$0xff]
    %v5899 = vld [vmem:[#allocation4 + $0x128] sm:$0xff]
    %v5900 = vld [vmem:[#allocation4 + $0x130] sm:$0xff]
    %v5901 = vld [vmem:[#allocation4 + $0x138] sm:$0xff]
    %v5902 = vld [vmem:[#allocation4 + $0x140] sm:$0xff]
    %v5903 = vld [vmem:[#allocation4 + $0x148] sm:$0xff]
    %v5904 = vld [vmem:[#allocation4 + $0x150] sm:$0xff]
    %v5905 = vld [vmem:[#allocation4 + $0x158] sm:$0xff]
    %v5906 = vld [vmem:[#allocation4 + $0x160] sm:$0xff]
    %v5907 = vld [vmem:[#allocation4 + $0x168] sm:$0xff]
    %v5908 = vld [vmem:[#allocation4 + $0x170] sm:$0xff]
    %v5909 = vld [vmem:[#allocation4 + $0x178] sm:$0xff]
    %v5910 = vld [vmem:[#allocation4 + $0x180] sm:$0xff]
    %v5911 = vld [vmem:[#allocation4 + $0x188] sm:$0xff]
    %v5912 = vld [vmem:[#allocation4 + $0x190] sm:$0xff]
    %v5913 = vld [vmem:[#allocation4 + $0x198] sm:$0xff]
    %v5914 = vld [vmem:[#allocation4 + $0x1a0] sm:$0xff]
    %v5915 = vld [vmem:[#allocation4 + $0x1a8] sm:$0xff]
    %v5916 = vld [vmem:[#allocation4 + $0x1b0] sm:$0xff]
    %v5917 = vld [vmem:[#allocation4 + $0x1b8] sm:$0xff]
    %v5918 = vld [vmem:[#allocation4 + $0x1c0] sm:$0xff]
    %v5919 = vld [vmem:[#allocation4 + $0x1c8] sm:$0xff]
    %v5920 = vld [vmem:[#allocation4 + $0x1d0] sm:$0xff]
    %v5921 = vld [vmem:[#allocation4 + $0x1d8] sm:$0xff]
    %v5922 = vld [vmem:[#allocation4 + $0x1e0] sm:$0xff]
    %v5923 = vld [vmem:[#allocation4 + $0x1e8] sm:$0xff]
    %v5924 = vld [vmem:[#allocation4 + $0x1f0] sm:$0xff]
    %v5925 = vld [vmem:[#allocation4 + $0x1f8] sm:$0xff]
    %v5926 = vld [vmem:[#allocation21] sm:$0xff]
    %v5927 = vld [vmem:[#allocation21 + $0x8] sm:$0xff]
    %v5928 = vld [vmem:[#allocation21 + $0x10] sm:$0xff]
    %v5929 = vld [vmem:[#allocation21 + $0x18] sm:$0xff]
    %v5930 = vld [vmem:[#allocation21 + $0x20] sm:$0xff]
    %v5931 = vld [vmem:[#allocation21 + $0x28] sm:$0xff]
    %v5932 = vld [vmem:[#allocation21 + $0x30] sm:$0xff]
    %v5933 = vld [vmem:[#allocation21 + $0x38] sm:$0xff]
    %v5934 = vld [vmem:[#allocation21 + $0x40] sm:$0xff]
    %v5935 = vld [vmem:[#allocation21 + $0x48] sm:$0xff]
    %v5936 = vld [vmem:[#allocation21 + $0x50] sm:$0xff]
    %v5937 = vld [vmem:[#allocation21 + $0x58] sm:$0xff]
    %v5938 = vld [vmem:[#allocation21 + $0x60] sm:$0xff]
    %v5939 = vld [vmem:[#allocation21 + $0x68] sm:$0xff]
    %v5940 = vld [vmem:[#allocation21 + $0x70] sm:$0xff]
    %v5941 = vld [vmem:[#allocation21 + $0x78] sm:$0xff]
    %v5942 = vld [vmem:[#allocation21 + $0x80] sm:$0xff]
    %v5943 = vld [vmem:[#allocation21 + $0x88] sm:$0xff]
    %v5944 = vld [vmem:[#allocation21 + $0x90] sm:$0xff]
    %v5945 = vld [vmem:[#allocation21 + $0x98] sm:$0xff]
    %v5946 = vld [vmem:[#allocation21 + $0xa0] sm:$0xff]
    %v5947 = vld [vmem:[#allocation21 + $0xa8] sm:$0xff]
    %v5948 = vld [vmem:[#allocation21 + $0xb0] sm:$0xff]
    %v5949 = vld [vmem:[#allocation21 + $0xb8] sm:$0xff]
    %v5950 = vld [vmem:[#allocation22] sm:$0x3]
    %v5952 = vlaneseq
    %v5953 = vshrl.u32 %v5952, 7
    %v5954 = vsub.s32 0, %v5953
    %v5955 = vrot.slane %v5950, %v5954
    %v5956 = vlaneseq
    %v5957 = vshrl.u32 %v5956, 7
    %v5958 = vsub.s32 1, %v5957
    %v5959 = vrot.slane %v5950, %v5958
    %v5986 = vunpack.c.l.b16 %v5926
    %v5987 = vunpack.c.h.b16 %v5926
    %v5988 = vunpack.c.l.b16 %v5927
    %v5989 = vunpack.c.h.b16 %v5927
    %v5990 = vunpack.c.l.b16 %v5928
    %v5991 = vunpack.c.h.b16 %v5928
    %v5992 = vunpack.c.l.b16 %v5929
    %v5993 = vunpack.c.h.b16 %v5929
    %v5994 = vunpack.c.l.b16 %v5930
    %v5995 = vunpack.c.h.b16 %v5930
    %v5996 = vunpack.c.l.b16 %v5931
    %v5997 = vunpack.c.h.b16 %v5931
    %v5998 = vunpack.c.l.b16 %v5932
    %v5999 = vunpack.c.h.b16 %v5932
    %v6000 = vunpack.c.l.b16 %v5933
    %v6001 = vunpack.c.h.b16 %v5933
    %v6002 = vunpack.c.l.b16 %v5934
    %v6003 = vunpack.c.h.b16 %v5934
    %v6004 = vunpack.c.l.b16 %v5935
    %v6005 = vunpack.c.h.b16 %v5935
    %v6006 = vunpack.c.l.b16 %v5936
    %v6007 = vunpack.c.h.b16 %v5936
    %v6008 = vunpack.c.l.b16 %v5937
    %v6009 = vunpack.c.h.b16 %v5937
    %v6010 = vunpack.c.l.b16 %v5938
    %v6011 = vunpack.c.h.b16 %v5938
    %v6012 = vunpack.c.l.b16 %v5939
    %v6013 = vunpack.c.h.b16 %v5939
    %v6014 = vunpack.c.l.b16 %v5940
    %v6015 = vunpack.c.h.b16 %v5940
    %v6016 = vunpack.c.l.b16 %v5941
    %v6017 = vunpack.c.h.b16 %v5941
    %v6018 = vunpack.c.l.b16 %v5942
    %v6019 = vunpack.c.h.b16 %v5942
    %v6020 = vunpack.c.l.b16 %v5943
    %v6021 = vunpack.c.h.b16 %v5943
    %v6022 = vunpack.c.l.b16 %v5944
    %v6023 = vunpack.c.h.b16 %v5944
    %v6024 = vunpack.c.l.b16 %v5945
    %v6025 = vunpack.c.h.b16 %v5945
    %v6026 = vunpack.c.l.b16 %v5946
    %v6027 = vunpack.c.h.b16 %v5946
    %v6028 = vunpack.c.l.b16 %v5947
    %v6029 = vunpack.c.h.b16 %v5947
    %v6030 = vunpack.c.l.b16 %v5948
    %v6031 = vunpack.c.h.b16 %v5948
    %v6032 = vunpack.c.l.b16 %v5949
    %v6033 = vunpack.c.h.b16 %v5949
    %v6034 = vpack.c.b16 %v5988, %v5986
    %v6035 = vpack.c.b16 %v5989, %v5987
    %v6036 = vpack.c.b16 %v5992, %v5990
    %v6037 = vpack.c.b16 %v5993, %v5991
    %v6038 = vpack.c.b16 %v5996, %v5994
    %v6039 = vpack.c.b16 %v5997, %v5995
    %v6040 = vpack.c.b16 %v6000, %v5998
    %v6041 = vpack.c.b16 %v6001, %v5999
    %v6042 = vpack.c.b16 %v6004, %v6002
    %v6043 = vpack.c.b16 %v6005, %v6003
    %v6044 = vpack.c.b16 %v6008, %v6006
    %v6045 = vpack.c.b16 %v6009, %v6007
    %v6046 = vpack.c.b16 %v6012, %v6010
    %v6047 = vpack.c.b16 %v6013, %v6011
    %v6048 = vpack.c.b16 %v6016, %v6014
    %v6049 = vpack.c.b16 %v6017, %v6015
    %v6050 = vpack.c.b16 %v6020, %v6018
    %v6051 = vpack.c.b16 %v6021, %v6019
    %v6052 = vpack.c.b16 %v6024, %v6022
    %v6053 = vpack.c.b16 %v6025, %v6023
    %v6054 = vpack.c.b16 %v6028, %v6026
    %v6055 = vpack.c.b16 %v6029, %v6027
    %v6056 = vpack.c.b16 %v6032, %v6030
    %v6057 = vpack.c.b16 %v6033, %v6031
    %v6083 = vsel %vm3745, %v5863, 0
    %v6086 = vsel %vm3745, %v5865, 0
    %v6089 = vsel %vm3745, %v5867, 0
    %v6092 = vsel %vm3745, %v5869, 0
    %v6095 = vsel %vm3745, %v5871, 0
    %v6098 = vsel %vm3745, %v5873, 0
    %v6101 = vsel %vm3745, %v5875, 0
    %v6104 = vsel %vm3745, %v5877, 0
    %v6107 = vsel %vm3745, %v5879, 0
    %v6110 = vsel %vm3745, %v5881, 0
    %v6113 = vsel %vm3745, %v5883, 0
    %v6116 = vsel %vm3745, %v5885, 0
    %v6119 = vsel %vm3745, %v5887, 0
    %v6122 = vsel %vm3745, %v5889, 0
    %v6125 = vsel %vm3745, %v5891, 0
    %v6128 = vsel %vm3745, %v5893, 0
    %v6131 = vsel %vm3745, %v5895, 0
    %v6134 = vsel %vm3745, %v5897, 0
    %v6137 = vsel %vm3745, %v5899, 0
    %v6140 = vsel %vm3745, %v5901, 0
    %v6143 = vsel %vm3745, %v5903, 0
    %v6146 = vsel %vm3745, %v5905, 0
    %v6149 = vsel %vm3745, %v5907, 0
    %v6152 = vsel %vm3745, %v5909, 0
    %v6155 = vsel %vm3745, %v5911, 0
    %v6158 = vsel %vm3745, %v5913, 0
    %v6161 = vsel %vm3745, %v5915, 0
    %v6164 = vsel %vm3745, %v5917, 0
    %v6167 = vsel %vm3745, %v5919, 0
    %v6170 = vsel %vm3745, %v5921, 0
    %v6173 = vsel %vm3745, %v5923, 0
    %v6176 = vsel %vm3745, %v5925, 0
    %6178 = vmatprep.subr.bf16.mxu0 %v6035
    %6179 = vmatpush1.bf16.msra.mxu0 %v6034
    %6180 = vmatprep.subr.bf16.mxu0 %v6037
    %6181 = vmatpush1.bf16.msra.mxu0 %v6036
    %6182 = vmatprep.subr.bf16.mxu0 %v6039
    %6183 = vmatpush1.bf16.msra.mxu0 %v6038
    %6184 = vmatprep.subr.bf16.mxu0 %v6041
    %6185 = vmatpush1.bf16.msra.mxu0 %v6040
    %6186 = vmatprep.subr.bf16.mxu0 %v6043
    %6187 = vmatpush1.bf16.msra.mxu0 %v6042
    %6188 = vmatprep.subr.bf16.mxu0 %v6045
    %6189 = vmatpush1.bf16.msra.mxu0 %v6044
    %6190 = vmatprep.subr.bf16.mxu0 %v6047
    %6191 = vmatpush1.bf16.msra.mxu0 %v6046
    %6192 = vmatprep.subr.bf16.mxu0 %v6049
    %6193 = vmatpush1.bf16.msra.mxu0 %v6048
    %6194 = vmatprep.subr.bf16.mxu0 %v6051
    %6195 = vmatpush1.bf16.msra.mxu0 %v6050
    %6196 = vmatprep.subr.bf16.mxu0 %v6053
    %6197 = vmatpush1.bf16.msra.mxu0 %v6052
    %6198 = vmatprep.subr.bf16.mxu0 %v6055
    %6199 = vmatpush1.bf16.msra.mxu0 %v6054
    %6200 = vmatprep.subr.bf16.mxu0 %v6057
    %6201 = vmatpush1.bf16.msra.mxu0 %v6056
    %6202 = vmatprep.subr.bf16.mxu0 0
    %6203 = vmatpush1.bf16.msra.mxu0 0
    %6204 = vmatprep.subr.bf16.mxu0 0
    %6205 = vmatpush1.bf16.msra.mxu0 0
    %6206 = vmatprep.subr.bf16.mxu0 0
    %6207 = vmatpush1.bf16.msra.mxu0 0
    %6208 = vmatprep.subr.bf16.mxu0 0
    %6209 = vmatpush1.bf16.msra.mxu0 0
    %6210 = vmatprep.mubr.bf16.mxu0 %v6083
    %6211 = vmatmul.mubr.bf16.gmra.mrb[0].mxu0 %v5862
    %v6212 = vpop.f32.mrb[0].mxu0
    %v6213 = vadd.f32 %v5955, %v6212
    %v6214 = vpop.f32.mrb[0].mxu0
    %v6215 = vadd.f32 %v5959, %v6214
    %v6216 = vpop.f32.mrb[0].mxu0
    %v6217 = vadd.f32 %v5955, %v6216
    %v6218 = vpop.f32.mrb[0].mxu0
    %v6219 = vadd.f32 %v5959, %v6218
    %6220 = vmatprep.mubr.bf16.mxu0 %v6086
    %6221 = vmatmul.mubr.bf16.gmra.mrb[0].mxu0 %v5864
    %v6222 = vpop.f32.mrb[0].mxu0
    %v6223 = vadd.f32 %v5955, %v6222
    %v6224 = vpop.f32.mrb[0].mxu0
    %v6225 = vadd.f32 %v5959, %v6224
    %v6226 = vpop.f32.mrb[0].mxu0
    %v6227 = vadd.f32 %v5955, %v6226
    %v6228 = vpop.f32.mrb[0].mxu0
    %v6229 = vadd.f32 %v5959, %v6228
    %6230 = vmatprep.mubr.bf16.mxu0 %v6089
    %6231 = vmatmul.mubr.bf16.gmra.mrb[0].mxu0 %v5866
    %v6232 = vpop.f32.mrb[0].mxu0
    %v6233 = vadd.f32 %v5955, %v6232
    %v6234 = vpop.f32.mrb[0].mxu0
    %v6235 = vadd.f32 %v5959, %v6234
    %v6236 = vpop.f32.mrb[0].mxu0
    %v6237 = vadd.f32 %v5955, %v6236
    %v6238 = vpop.f32.mrb[0].mxu0
    %v6239 = vadd.f32 %v5959, %v6238
    %6240 = vmatprep.mubr.bf16.mxu0 %v6092
    %6241 = vmatmul.mubr.bf16.gmra.mrb[0].mxu0 %v5868
    %v6242 = vpop.f32.mrb[0].mxu0
    %v6243 = vadd.f32 %v5955, %v6242
    %v6244 = vpop.f32.mrb[0].mxu0
    %v6245 = vadd.f32 %v5959, %v6244
    %v6246 = vpop.f32.mrb[0].mxu0
    %v6247 = vadd.f32 %v5955, %v6246
    %v6248 = vpop.f32.mrb[0].mxu0
    %v6249 = vadd.f32 %v5959, %v6248
    %6250 = vmatprep.mubr.bf16.mxu0 %v6095
    %6251 = vmatmul.mubr.bf16.gmra.mrb[0].mxu0 %v5870
    %v6252 = vpop.f32.mrb[0].mxu0
    %v6253 = vadd.f32 %v5955, %v6252
    %v6254 = vpop.f32.mrb[0].mxu0
    %v6255 = vadd.f32 %v5959, %v6254
    %v6256 = vpop.f32.mrb[0].mxu0
    %v6257 = vadd.f32 %v5955, %v6256
    %v6258 = vpop.f32.mrb[0].mxu0
    %v6259 = vadd.f32 %v5959, %v6258
    %6260 = vmatprep.mubr.bf16.mxu0 %v6098
    %6261 = vmatmul.mubr.bf16.gmra.mrb[0].mxu0 %v5872
    %v6262 = vpop.f32.mrb[0].mxu0
    %v6263 = vadd.f32 %v5955, %v6262
    %v6264 = vpop.f32.mrb[0].mxu0
    %v6265 = vadd.f32 %v5959, %v6264
    %v6266 = vpop.f32.mrb[0].mxu0
    %v6267 = vadd.f32 %v5955, %v6266
    %v6268 = vpop.f32.mrb[0].mxu0
    %v6269 = vadd.f32 %v5959, %v6268
    %6270 = vmatprep.mubr.bf16.mxu0 %v6101
    %6271 = vmatmul.mubr.bf16.gmra.mrb[0].mxu0 %v5874
    %v6272 = vpop.f32.mrb[0].mxu0
    %v6273 = vadd.f32 %v5955, %v6272
    %v6274 = vpop.f32.mrb[0].mxu0
    %v6275 = vadd.f32 %v5959, %v6274
    %v6276 = vpop.f32.mrb[0].mxu0
    %v6277 = vadd.f32 %v5955, %v6276
    %v6278 = vpop.f32.mrb[0].mxu0
    %v6279 = vadd.f32 %v5959, %v6278
    %6280 = vmatprep.mubr.bf16.mxu0 %v6104
    %6281 = vmatmul.mubr.bf16.gmra.mrb[0].mxu0 %v5876
    %v6282 = vpop.f32.mrb[0].mxu0
    %v6283 = vadd.f32 %v5955, %v6282
    %v6284 = vpop.f32.mrb[0].mxu0
    %v6285 = vadd.f32 %v5959, %v6284
    %v6286 = vpop.f32.mrb[0].mxu0
    %v6287 = vadd.f32 %v5955, %v6286
    %v6288 = vpop.f32.mrb[0].mxu0
    %v6289 = vadd.f32 %v5959, %v6288
    %6290 = vmatprep.mubr.bf16.mxu0 %v6107
    %6291 = vmatmul.mubr.bf16.gmra.mrb[0].mxu0 %v5878
    %v6292 = vpop.f32.mrb[0].mxu0
    %v6293 = vadd.f32 %v5955, %v6292
    %v6294 = vpop.f32.mrb[0].mxu0
    %v6295 = vadd.f32 %v5959, %v6294
    %v6296 = vpop.f32.mrb[0].mxu0
    %v6297 = vadd.f32 %v5955, %v6296
    %v6298 = vpop.f32.mrb[0].mxu0
    %v6299 = vadd.f32 %v5959, %v6298
    %6300 = vmatprep.mubr.bf16.mxu0 %v6110
    %6301 = vmatmul.mubr.bf16.gmra.mrb[0].mxu0 %v5880
    %v6302 = vpop.f32.mrb[0].mxu0
    %v6303 = vadd.f32 %v5955, %v6302
    %v6304 = vpop.f32.mrb[0].mxu0
    %v6305 = vadd.f32 %v5959, %v6304
    %v6306 = vpop.f32.mrb[0].mxu0
    %v6307 = vadd.f32 %v5955, %v6306
    %v6308 = vpop.f32.mrb[0].mxu0
    %v6309 = vadd.f32 %v5959, %v6308
    %6310 = vmatprep.mubr.bf16.mxu0 %v6113
    %6311 = vmatmul.mubr.bf16.gmra.mrb[0].mxu0 %v5882
    %v6312 = vpop.f32.mrb[0].mxu0
    %v6313 = vadd.f32 %v5955, %v6312
    %v6314 = vpop.f32.mrb[0].mxu0
    %v6315 = vadd.f32 %v5959, %v6314
    %v6316 = vpop.f32.mrb[0].mxu0
    %v6317 = vadd.f32 %v5955, %v6316
    %v6318 = vpop.f32.mrb[0].mxu0
    %v6319 = vadd.f32 %v5959, %v6318
    %6320 = vmatprep.mubr.bf16.mxu0 %v6116
    %6321 = vmatmul.mubr.bf16.gmra.mrb[0].mxu0 %v5884
    %v6322 = vpop.f32.mrb[0].mxu0
    %v6323 = vadd.f32 %v5955, %v6322
    %v6324 = vpop.f32.mrb[0].mxu0
    %v6325 = vadd.f32 %v5959, %v6324
    %v6326 = vpop.f32.mrb[0].mxu0
    %v6327 = vadd.f32 %v5955, %v6326
    %v6328 = vpop.f32.mrb[0].mxu0
    %v6329 = vadd.f32 %v5959, %v6328
    %6330 = vmatprep.mubr.bf16.mxu0 %v6119
    %6331 = vmatmul.mubr.bf16.gmra.mrb[0].mxu0 %v5886
    %v6332 = vpop.f32.mrb[0].mxu0
    %v6333 = vadd.f32 %v5955, %v6332
    %v6334 = vpop.f32.mrb[0].mxu0
    %v6335 = vadd.f32 %v5959, %v6334
    %v6336 = vpop.f32.mrb[0].mxu0
    %v6337 = vadd.f32 %v5955, %v6336
    %v6338 = vpop.f32.mrb[0].mxu0
    %v6339 = vadd.f32 %v5959, %v6338
    %6340 = vmatprep.mubr.bf16.mxu0 %v6122
    %6341 = vmatmul.mubr.bf16.gmra.mrb[0].mxu0 %v5888
    %v6342 = vpop.f32.mrb[0].mxu0
    %v6343 = vadd.f32 %v5955, %v6342
    %v6344 = vpop.f32.mrb[0].mxu0
    %v6345 = vadd.f32 %v5959, %v6344
    %v6346 = vpop.f32.mrb[0].mxu0
    %v6347 = vadd.f32 %v5955, %v6346
    %v6348 = vpop.f32.mrb[0].mxu0
    %v6349 = vadd.f32 %v5959, %v6348
    %6350 = vmatprep.mubr.bf16.mxu0 %v6125
    %6351 = vmatmul.mubr.bf16.gmra.mrb[0].mxu0 %v5890
    %v6352 = vpop.f32.mrb[0].mxu0
    %v6353 = vadd.f32 %v5955, %v6352
    %v6354 = vpop.f32.mrb[0].mxu0
    %v6355 = vadd.f32 %v5959, %v6354
    %v6356 = vpop.f32.mrb[0].mxu0
    %v6357 = vadd.f32 %v5955, %v6356
    %v6358 = vpop.f32.mrb[0].mxu0
    %v6359 = vadd.f32 %v5959, %v6358
    %6360 = vmatprep.mubr.bf16.mxu0 %v6128
    %6361 = vmatmul.mubr.bf16.gmra.mrb[0].mxu0 %v5892
    %v6362 = vpop.f32.mrb[0].mxu0
    %v6363 = vadd.f32 %v5955, %v6362
    %v6364 = vpop.f32.mrb[0].mxu0
    %v6365 = vadd.f32 %v5959, %v6364
    %v6366 = vpop.f32.mrb[0].mxu0
    %v6367 = vadd.f32 %v5955, %v6366
    %v6368 = vpop.f32.mrb[0].mxu0
    %v6369 = vadd.f32 %v5959, %v6368
    %6370 = vmatprep.mubr.bf16.mxu0 %v6131
    %6371 = vmatmul.mubr.bf16.gmra.mrb[0].mxu0 %v5894
    %v6372 = vpop.f32.mrb[0].mxu0
    %v6373 = vadd.f32 %v5955, %v6372
    %v6374 = vpop.f32.mrb[0].mxu0
    %v6375 = vadd.f32 %v5959, %v6374
    %v6376 = vpop.f32.mrb[0].mxu0
    %v6377 = vadd.f32 %v5955, %v6376
    %v6378 = vpop.f32.mrb[0].mxu0
    %v6379 = vadd.f32 %v5959, %v6378
    %6380 = vmatprep.mubr.bf16.mxu0 %v6134
    %6381 = vmatmul.mubr.bf16.gmra.mrb[0].mxu0 %v5896
    %v6382 = vpop.f32.mrb[0].mxu0
    %v6383 = vadd.f32 %v5955, %v6382
    %v6384 = vpop.f32.mrb[0].mxu0
    %v6385 = vadd.f32 %v5959, %v6384
    %v6386 = vpop.f32.mrb[0].mxu0
    %v6387 = vadd.f32 %v5955, %v6386
    %v6388 = vpop.f32.mrb[0].mxu0
    %v6389 = vadd.f32 %v5959, %v6388
    %6390 = vmatprep.mubr.bf16.mxu0 %v6137
    %6391 = vmatmul.mubr.bf16.gmra.mrb[0].mxu0 %v5898
    %v6392 = vpop.f32.mrb[0].mxu0
    %v6393 = vadd.f32 %v5955, %v6392
    %v6394 = vpop.f32.mrb[0].mxu0
    %v6395 = vadd.f32 %v5959, %v6394
    %v6396 = vpop.f32.mrb[0].mxu0
    %v6397 = vadd.f32 %v5955, %v6396
    %v6398 = vpop.f32.mrb[0].mxu0
    %v6399 = vadd.f32 %v5959, %v6398
    %6400 = vmatprep.mubr.bf16.mxu0 %v6140
    %6401 = vmatmul.mubr.bf16.gmra.mrb[0].mxu0 %v5900
    %v6402 = vpop.f32.mrb[0].mxu0
    %v6403 = vadd.f32 %v5955, %v6402
    %v6404 = vpop.f32.mrb[0].mxu0
    %v6405 = vadd.f32 %v5959, %v6404
    %v6406 = vpop.f32.mrb[0].mxu0
    %v6407 = vadd.f32 %v5955, %v6406
    %v6408 = vpop.f32.mrb[0].mxu0
    %v6409 = vadd.f32 %v5959, %v6408
    %6410 = vmatprep.mubr.bf16.mxu0 %v6143
    %6411 = vmatmul.mubr.bf16.gmra.mrb[0].mxu0 %v5902
    %v6412 = vpop.f32.mrb[0].mxu0
    %v6413 = vadd.f32 %v5955, %v6412
    %v6414 = vpop.f32.mrb[0].mxu0
    %v6415 = vadd.f32 %v5959, %v6414
    %v6416 = vpop.f32.mrb[0].mxu0
    %v6417 = vadd.f32 %v5955, %v6416
    %v6418 = vpop.f32.mrb[0].mxu0
    %v6419 = vadd.f32 %v5959, %v6418
    %6420 = vmatprep.mubr.bf16.mxu0 %v6146
    %6421 = vmatmul.mubr.bf16.gmra.mrb[0].mxu0 %v5904
    %v6422 = vpop.f32.mrb[0].mxu0
    %v6423 = vadd.f32 %v5955, %v6422
    %v6424 = vpop.f32.mrb[0].mxu0
    %v6425 = vadd.f32 %v5959, %v6424
    %v6426 = vpop.f32.mrb[0].mxu0
    %v6427 = vadd.f32 %v5955, %v6426
    %v6428 = vpop.f32.mrb[0].mxu0
    %v6429 = vadd.f32 %v5959, %v6428
    %6430 = vmatprep.mubr.bf16.mxu0 %v6149
    %6431 = vmatmul.mubr.bf16.gmra.mrb[0].mxu0 %v5906
    %v6432 = vpop.f32.mrb[0].mxu0
    %v6433 = vadd.f32 %v5955, %v6432
    %v6434 = vpop.f32.mrb[0].mxu0
    %v6435 = vadd.f32 %v5959, %v6434
    %v6436 = vpop.f32.mrb[0].mxu0
    %v6437 = vadd.f32 %v5955, %v6436
    %v6438 = vpop.f32.mrb[0].mxu0
    %v6439 = vadd.f32 %v5959, %v6438
    %6440 = vmatprep.mubr.bf16.mxu0 %v6152
    %6441 = vmatmul.mubr.bf16.gmra.mrb[0].mxu0 %v5908
    %v6442 = vpop.f32.mrb[0].mxu0
    %v6443 = vadd.f32 %v5955, %v6442
    %v6444 = vpop.f32.mrb[0].mxu0
    %v6445 = vadd.f32 %v5959, %v6444
    %v6446 = vpop.f32.mrb[0].mxu0
    %v6447 = vadd.f32 %v5955, %v6446
    %v6448 = vpop.f32.mrb[0].mxu0
    %v6449 = vadd.f32 %v5959, %v6448
    %6450 = vmatprep.mubr.bf16.mxu0 %v6155
    %6451 = vmatmul.mubr.bf16.gmra.mrb[0].mxu0 %v5910
    %v6452 = vpop.f32.mrb[0].mxu0
    %v6453 = vadd.f32 %v5955, %v6452
    %v6454 = vpop.f32.mrb[0].mxu0
    %v6455 = vadd.f32 %v5959, %v6454
    %v6456 = vpop.f32.mrb[0].mxu0
    %v6457 = vadd.f32 %v5955, %v6456
    %v6458 = vpop.f32.mrb[0].mxu0
    %v6459 = vadd.f32 %v5959, %v6458
    %6460 = vmatprep.mubr.bf16.mxu0 %v6158
    %6461 = vmatmul.mubr.bf16.gmra.mrb[0].mxu0 %v5912
    %v6462 = vpop.f32.mrb[0].mxu0
    %v6463 = vadd.f32 %v5955, %v6462
    %v6464 = vpop.f32.mrb[0].mxu0
    %v6465 = vadd.f32 %v5959, %v6464
    %v6466 = vpop.f32.mrb[0].mxu0
    %v6467 = vadd.f32 %v5955, %v6466
    %v6468 = vpop.f32.mrb[0].mxu0
    %v6469 = vadd.f32 %v5959, %v6468
    %6470 = vmatprep.mubr.bf16.mxu0 %v6161
    %6471 = vmatmul.mubr.bf16.gmra.mrb[0].mxu0 %v5914
    %v6472 = vpop.f32.mrb[0].mxu0
    %v6473 = vadd.f32 %v5955, %v6472
    %v6474 = vpop.f32.mrb[0].mxu0
    %v6475 = vadd.f32 %v5959, %v6474
    %v6476 = vpop.f32.mrb[0].mxu0
    %v6477 = vadd.f32 %v5955, %v6476
    %v6478 = vpop.f32.mrb[0].mxu0
    %v6479 = vadd.f32 %v5959, %v6478
    %6480 = vmatprep.mubr.bf16.mxu0 %v6164
    %6481 = vmatmul.mubr.bf16.gmra.mrb[0].mxu0 %v5916
    %v6482 = vpop.f32.mrb[0].mxu0
    %v6483 = vadd.f32 %v5955, %v6482
    %v6484 = vpop.f32.mrb[0].mxu0
    %v6485 = vadd.f32 %v5959, %v6484
    %v6486 = vpop.f32.mrb[0].mxu0
    %v6487 = vadd.f32 %v5955, %v6486
    %v6488 = vpop.f32.mrb[0].mxu0
    %v6489 = vadd.f32 %v5959, %v6488
    %6490 = vmatprep.mubr.bf16.mxu0 %v6167
    %6491 = vmatmul.mubr.bf16.gmra.mrb[0].mxu0 %v5918
    %v6492 = vpop.f32.mrb[0].mxu0
    %v6493 = vadd.f32 %v5955, %v6492
    %v6494 = vpop.f32.mrb[0].mxu0
    %v6495 = vadd.f32 %v5959, %v6494
    %v6496 = vpop.f32.mrb[0].mxu0
    %v6497 = vadd.f32 %v5955, %v6496
    %v6498 = vpop.f32.mrb[0].mxu0
    %v6499 = vadd.f32 %v5959, %v6498
    %6500 = vmatprep.mubr.bf16.mxu0 %v6170
    %6501 = vmatmul.mubr.bf16.gmra.mrb[0].mxu0 %v5920
    %v6502 = vpop.f32.mrb[0].mxu0
    %v6503 = vadd.f32 %v5955, %v6502
    %v6504 = vpop.f32.mrb[0].mxu0
    %v6505 = vadd.f32 %v5959, %v6504
    %v6506 = vpop.f32.mrb[0].mxu0
    %v6507 = vadd.f32 %v5955, %v6506
    %v6508 = vpop.f32.mrb[0].mxu0
    %v6509 = vadd.f32 %v5959, %v6508
    %6510 = vmatprep.mubr.bf16.mxu0 %v6173
    %6511 = vmatmul.mubr.bf16.gmra.mrb[0].mxu0 %v5922
    %v6512 = vpop.f32.mrb[0].mxu0
    %v6513 = vadd.f32 %v5955, %v6512
    %v6514 = vpop.f32.mrb[0].mxu0
    %v6515 = vadd.f32 %v5959, %v6514
    %v6516 = vpop.f32.mrb[0].mxu0
    %v6517 = vadd.f32 %v5955, %v6516
    %v6518 = vpop.f32.mrb[0].mxu0
    %v6519 = vadd.f32 %v5959, %v6518
    %6520 = vmatprep.mubr.bf16.mxu0 %v6176
    %6521 = vmatmul.mubr.bf16.gmra.mrb[0].mxu0 %v5924
    %v6522 = vpop.f32.mrb[0].mxu0
    %v6523 = vadd.f32 %v5955, %v6522
    %v6524 = vpop.f32.mrb[0].mxu0
    %v6525 = vadd.f32 %v5959, %v6524
    %v6526 = vpop.f32.mrb[0].mxu0
    %v6527 = vadd.f32 %v5955, %v6526
    %v6528 = vpop.f32.mrb[0].mxu0
    %v6529 = vadd.f32 %v5959, %v6528
    %6530 = vdwg.mxu0
    %v6531 = vmax.f32 %v6213, 0.0
    %v6532 = vmax.f32 %v6215, 0.0
    %v6533 = vmax.f32 %v6217, 0.0
    %v6534 = vmax.f32 %v6219, 0.0
    %v6535 = vmax.f32 %v6223, 0.0
    %v6536 = vmax.f32 %v6225, 0.0
    %v6537 = vmax.f32 %v6227, 0.0
    %v6538 = vmax.f32 %v6229, 0.0
    %v6539 = vmax.f32 %v6233, 0.0
    %v6540 = vmax.f32 %v6235, 0.0
    %v6541 = vmax.f32 %v6237, 0.0
    %v6542 = vmax.f32 %v6239, 0.0
    %v6543 = vmax.f32 %v6243, 0.0
    %v6544 = vmax.f32 %v6245, 0.0
    %v6545 = vmax.f32 %v6247, 0.0
    %v6546 = vmax.f32 %v6249, 0.0
    %v6547 = vmax.f32 %v6253, 0.0
    %v6548 = vmax.f32 %v6255, 0.0
    %v6549 = vmax.f32 %v6257, 0.0
    %v6550 = vmax.f32 %v6259, 0.0
    %v6551 = vmax.f32 %v6263, 0.0
    %v6552 = vmax.f32 %v6265, 0.0
    %v6553 = vmax.f32 %v6267, 0.0
    %v6554 = vmax.f32 %v6269, 0.0
    %v6555 = vmax.f32 %v6273, 0.0
    %v6556 = vmax.f32 %v6275, 0.0
    %v6557 = vmax.f32 %v6277, 0.0
    %v6558 = vmax.f32 %v6279, 0.0
    %v6559 = vmax.f32 %v6283, 0.0
    %v6560 = vmax.f32 %v6285, 0.0
    %v6561 = vmax.f32 %v6287, 0.0
    %v6562 = vmax.f32 %v6289, 0.0
    %v6563 = vmax.f32 %v6293, 0.0
    %v6564 = vmax.f32 %v6295, 0.0
    %v6565 = vmax.f32 %v6297, 0.0
    %v6566 = vmax.f32 %v6299, 0.0
    %v6567 = vmax.f32 %v6303, 0.0
    %v6568 = vmax.f32 %v6305, 0.0
    %v6569 = vmax.f32 %v6307, 0.0
    %v6570 = vmax.f32 %v6309, 0.0
    %v6571 = vmax.f32 %v6313, 0.0
    %v6572 = vmax.f32 %v6315, 0.0
    %v6573 = vmax.f32 %v6317, 0.0
    %v6574 = vmax.f32 %v6319, 0.0
    %v6575 = vmax.f32 %v6323, 0.0
    %v6576 = vmax.f32 %v6325, 0.0
    %v6577 = vmax.f32 %v6327, 0.0
    %v6578 = vmax.f32 %v6329, 0.0
    %v6579 = vmax.f32 %v6333, 0.0
    %v6580 = vmax.f32 %v6335, 0.0
    %v6581 = vmax.f32 %v6337, 0.0
    %v6582 = vmax.f32 %v6339, 0.0
    %v6583 = vmax.f32 %v6343, 0.0
    %v6584 = vmax.f32 %v6345, 0.0
    %v6585 = vmax.f32 %v6347, 0.0
    %v6586 = vmax.f32 %v6349, 0.0
    %v6587 = vmax.f32 %v6353, 0.0
    %v6588 = vmax.f32 %v6355, 0.0
    %v6589 = vmax.f32 %v6357, 0.0
    %v6590 = vmax.f32 %v6359, 0.0
    %v6591 = vmax.f32 %v6363, 0.0
    %v6592 = vmax.f32 %v6365, 0.0
    %v6593 = vmax.f32 %v6367, 0.0
    %v6594 = vmax.f32 %v6369, 0.0
    %v6595 = vmax.f32 %v6373, 0.0
    %v6596 = vmax.f32 %v6375, 0.0
    %v6597 = vmax.f32 %v6377, 0.0
    %v6598 = vmax.f32 %v6379, 0.0
    %v6599 = vmax.f32 %v6383, 0.0
    %v6600 = vmax.f32 %v6385, 0.0
    %v6601 = vmax.f32 %v6387, 0.0
    %v6602 = vmax.f32 %v6389, 0.0
    %v6603 = vmax.f32 %v6393, 0.0
    %v6604 = vmax.f32 %v6395, 0.0
    %v6605 = vmax.f32 %v6397, 0.0
    %v6606 = vmax.f32 %v6399, 0.0
    %v6607 = vmax.f32 %v6403, 0.0
    %v6608 = vmax.f32 %v6405, 0.0
    %v6609 = vmax.f32 %v6407, 0.0
    %v6610 = vmax.f32 %v6409, 0.0
    %v6611 = vmax.f32 %v6413, 0.0
    %v6612 = vmax.f32 %v6415, 0.0
    %v6613 = vmax.f32 %v6417, 0.0
    %v6614 = vmax.f32 %v6419, 0.0
    %v6615 = vmax.f32 %v6423, 0.0
    %v6616 = vmax.f32 %v6425, 0.0
    %v6617 = vmax.f32 %v6427, 0.0
    %v6618 = vmax.f32 %v6429, 0.0
    %v6619 = vmax.f32 %v6433, 0.0
    %v6620 = vmax.f32 %v6435, 0.0
    %v6621 = vmax.f32 %v6437, 0.0
    %v6622 = vmax.f32 %v6439, 0.0
    %v6623 = vmax.f32 %v6443, 0.0
    %v6624 = vmax.f32 %v6445, 0.0
    %v6625 = vmax.f32 %v6447, 0.0
    %v6626 = vmax.f32 %v6449, 0.0
    %v6627 = vmax.f32 %v6453, 0.0
    %v6628 = vmax.f32 %v6455, 0.0
    %v6629 = vmax.f32 %v6457, 0.0
    %v6630 = vmax.f32 %v6459, 0.0
    %v6631 = vmax.f32 %v6463, 0.0
    %v6632 = vmax.f32 %v6465, 0.0
    %v6633 = vmax.f32 %v6467, 0.0
    %v6634 = vmax.f32 %v6469, 0.0
    %v6635 = vmax.f32 %v6473, 0.0
    %v6636 = vmax.f32 %v6475, 0.0
    %v6637 = vmax.f32 %v6477, 0.0
    %v6638 = vmax.f32 %v6479, 0.0
    %v6639 = vmax.f32 %v6483, 0.0
    %v6640 = vmax.f32 %v6485, 0.0
    %v6641 = vmax.f32 %v6487, 0.0
    %v6642 = vmax.f32 %v6489, 0.0
    %v6643 = vmax.f32 %v6493, 0.0
    %v6644 = vmax.f32 %v6495, 0.0
    %v6645 = vmax.f32 %v6497, 0.0
    %v6646 = vmax.f32 %v6499, 0.0
    %v6647 = vmax.f32 %v6503, 0.0
    %v6648 = vmax.f32 %v6505, 0.0
    %v6649 = vmax.f32 %v6507, 0.0
    %v6650 = vmax.f32 %v6509, 0.0
    %v6651 = vmax.f32 %v6513, 0.0
    %v6652 = vmax.f32 %v6515, 0.0
    %v6653 = vmax.f32 %v6517, 0.0
    %v6654 = vmax.f32 %v6519, 0.0
    %v6655 = vmax.f32 %v6523, 0.0
    %v6656 = vmax.f32 %v6525, 0.0
    %v6657 = vmax.f32 %v6527, 0.0
    %v6658 = vmax.f32 %v6529, 0.0
    %v6659 = vpack.c.bf16 %v6533, %v6531
    %v6660 = vpack.c.bf16 %v6534, %v6532
    %v6661 = vpack.c.bf16 %v6537, %v6535
    %v6662 = vpack.c.bf16 %v6538, %v6536
    %v6663 = vpack.c.bf16 %v6541, %v6539
    %v6664 = vpack.c.bf16 %v6542, %v6540
    %v6665 = vpack.c.bf16 %v6545, %v6543
    %v6666 = vpack.c.bf16 %v6546, %v6544
    %v6667 = vpack.c.bf16 %v6549, %v6547
    %v6668 = vpack.c.bf16 %v6550, %v6548
    %v6669 = vpack.c.bf16 %v6553, %v6551
    %v6670 = vpack.c.bf16 %v6554, %v6552
    %v6671 = vpack.c.bf16 %v6557, %v6555
    %v6672 = vpack.c.bf16 %v6558, %v6556
    %v6673 = vpack.c.bf16 %v6561, %v6559
    %v6674 = vpack.c.bf16 %v6562, %v6560
    %v6675 = vpack.c.bf16 %v6565, %v6563
    %v6676 = vpack.c.bf16 %v6566, %v6564
    %v6677 = vpack.c.bf16 %v6569, %v6567
    %v6678 = vpack.c.bf16 %v6570, %v6568
    %v6679 = vpack.c.bf16 %v6573, %v6571
    %v6680 = vpack.c.bf16 %v6574, %v6572
    %v6681 = vpack.c.bf16 %v6577, %v6575
    %v6682 = vpack.c.bf16 %v6578, %v6576
    %v6683 = vpack.c.bf16 %v6581, %v6579
    %v6684 = vpack.c.bf16 %v6582, %v6580
    %v6685 = vpack.c.bf16 %v6585, %v6583
    %v6686 = vpack.c.bf16 %v6586, %v6584
    %v6687 = vpack.c.bf16 %v6589, %v6587
    %v6688 = vpack.c.bf16 %v6590, %v6588
    %v6689 = vpack.c.bf16 %v6593, %v6591
    %v6690 = vpack.c.bf16 %v6594, %v6592
    %v6691 = vpack.c.bf16 %v6597, %v6595
    %v6692 = vpack.c.bf16 %v6598, %v6596
    %v6693 = vpack.c.bf16 %v6601, %v6599
    %v6694 = vpack.c.bf16 %v6602, %v6600
    %v6695 = vpack.c.bf16 %v6605, %v6603
    %v6696 = vpack.c.bf16 %v6606, %v6604
    %v6697 = vpack.c.bf16 %v6609, %v6607
    %v6698 = vpack.c.bf16 %v6610, %v6608
    %v6699 = vpack.c.bf16 %v6613, %v6611
    %v6700 = vpack.c.bf16 %v6614, %v6612
    %v6701 = vpack.c.bf16 %v6617, %v6615
    %v6702 = vpack.c.bf16 %v6618, %v6616
    %v6703 = vpack.c.bf16 %v6621, %v6619
    %v6704 = vpack.c.bf16 %v6622, %v6620
    %v6705 = vpack.c.bf16 %v6625, %v6623
    %v6706 = vpack.c.bf16 %v6626, %v6624
    %v6707 = vpack.c.bf16 %v6629, %v6627
    %v6708 = vpack.c.bf16 %v6630, %v6628
    %v6709 = vpack.c.bf16 %v6633, %v6631
    %v6710 = vpack.c.bf16 %v6634, %v6632
    %v6711 = vpack.c.bf16 %v6637, %v6635
    %v6712 = vpack.c.bf16 %v6638, %v6636
    %v6713 = vpack.c.bf16 %v6641, %v6639
    %v6714 = vpack.c.bf16 %v6642, %v6640
    %v6715 = vpack.c.bf16 %v6645, %v6643
    %v6716 = vpack.c.bf16 %v6646, %v6644
    %v6717 = vpack.c.bf16 %v6649, %v6647
    %v6718 = vpack.c.bf16 %v6650, %v6648
    %v6719 = vpack.c.bf16 %v6653, %v6651
    %v6720 = vpack.c.bf16 %v6654, %v6652
    %v6721 = vpack.c.bf16 %v6657, %v6655
    %v6722 = vpack.c.bf16 %v6658, %v6656
    %v6723 = vld [vmem:[%s16] sm:$0xf]
    %v6724 = vld [vmem:[%s16 + $0x4] sm:$0xf]
    %v6725 = vld [vmem:[%s16 + $0x8] sm:$0xf]
    %v6726 = vld [vmem:[%s16 + $0xc] sm:$0xf]
    %v6727 = vld [vmem:[%s16 + $0x10] sm:$0xf]
    %v6728 = vld [vmem:[%s16 + $0x14] sm:$0xf]
    %v6729 = vld [vmem:[%s16 + $0x18] sm:$0xf]
    %v6730 = vld [vmem:[%s16 + $0x1c] sm:$0xf]
    %v6731 = vld [vmem:[%s16 + $0x20] sm:$0xf]
    %v6732 = vld [vmem:[%s16 + $0x24] sm:$0xf]
    %v6733 = vld [vmem:[%s16 + $0x28] sm:$0xf]
    %v6734 = vld [vmem:[%s16 + $0x2c] sm:$0xf]
    %v6735 = vld [vmem:[%s16 + $0x30] sm:$0xf]
    %v6736 = vld [vmem:[%s16 + $0x34] sm:$0xf]
    %v6737 = vld [vmem:[%s16 + $0x38] sm:$0xf]
    %v6738 = vld [vmem:[%s16 + $0x3c] sm:$0xf]
    %v6739 = vld [vmem:[%s16 + $0x40] sm:$0xf]
    %v6740 = vld [vmem:[%s16 + $0x44] sm:$0xf]
    %v6741 = vld [vmem:[%s16 + $0x48] sm:$0xf]
    %v6742 = vld [vmem:[%s16 + $0x4c] sm:$0xf]
    %v6743 = vld [vmem:[%s16 + $0x50] sm:$0xf]
    %v6744 = vld [vmem:[%s16 + $0x54] sm:$0xf]
    %v6745 = vld [vmem:[%s16 + $0x58] sm:$0xf]
    %v6746 = vld [vmem:[%s16 + $0x5c] sm:$0xf]
    %v6747 = vld [vmem:[%s16 + $0x60] sm:$0xf]
    %v6748 = vld [vmem:[%s16 + $0x64] sm:$0xf]
    %v6749 = vld [vmem:[%s16 + $0x68] sm:$0xf]
    %v6750 = vld [vmem:[%s16 + $0x6c] sm:$0xf]
    %v6751 = vld [vmem:[%s16 + $0x70] sm:$0xf]
    %v6752 = vld [vmem:[%s16 + $0x74] sm:$0xf]
    %v6753 = vld [vmem:[%s16 + $0x78] sm:$0xf]
    %v6754 = vld [vmem:[%s16 + $0x7c] sm:$0xf]
    %v6755 = vld [vmem:[#allocation24] sm:$0x1]
    %v6757 = vlaneseq
    %v6758 = vshrl.u32 %v6757, 7
    %v6759 = vsub.s32 0, %v6758
    %v6760 = vrot.slane %v6755, %v6759
    %v6794 = vunpack.c.l.b16 %v6723
    %v6795 = vunpack.c.l.b16 %v6724
    %v6796 = vunpack.c.l.b16 %v6725
    %v6797 = vunpack.c.l.b16 %v6726
    %v6798 = vunpack.c.l.b16 %v6727
    %v6799 = vunpack.c.l.b16 %v6728
    %v6800 = vunpack.c.l.b16 %v6729
    %v6801 = vunpack.c.l.b16 %v6730
    %v6802 = vunpack.c.l.b16 %v6731
    %v6803 = vunpack.c.l.b16 %v6732
    %v6804 = vunpack.c.l.b16 %v6733
    %v6805 = vunpack.c.l.b16 %v6734
    %v6806 = vunpack.c.l.b16 %v6735
    %v6807 = vunpack.c.l.b16 %v6736
    %v6808 = vunpack.c.l.b16 %v6737
    %v6809 = vunpack.c.l.b16 %v6738
    %v6810 = vunpack.c.l.b16 %v6739
    %v6811 = vunpack.c.l.b16 %v6740
    %v6812 = vunpack.c.l.b16 %v6741
    %v6813 = vunpack.c.l.b16 %v6742
    %v6814 = vunpack.c.l.b16 %v6743
    %v6815 = vunpack.c.l.b16 %v6744
    %v6816 = vunpack.c.l.b16 %v6745
    %v6817 = vunpack.c.l.b16 %v6746
    %v6818 = vunpack.c.l.b16 %v6747
    %v6819 = vunpack.c.l.b16 %v6748
    %v6820 = vunpack.c.l.b16 %v6749
    %v6821 = vunpack.c.l.b16 %v6750
    %v6822 = vunpack.c.l.b16 %v6751
    %v6823 = vunpack.c.l.b16 %v6752
    %v6824 = vunpack.c.l.b16 %v6753
    %v6825 = vunpack.c.l.b16 %v6754
    %v6826 = vpack.c.b16 %v6795, %v6794
    %v6827 = vpack.c.b16 %v6797, %v6796
    %v6828 = vpack.c.b16 %v6799, %v6798
    %v6829 = vpack.c.b16 %v6801, %v6800
    %v6830 = vpack.c.b16 %v6803, %v6802
    %v6831 = vpack.c.b16 %v6805, %v6804
    %v6832 = vpack.c.b16 %v6807, %v6806
    %v6833 = vpack.c.b16 %v6809, %v6808
    %v6834 = vpack.c.b16 %v6811, %v6810
    %v6835 = vpack.c.b16 %v6813, %v6812
    %v6836 = vpack.c.b16 %v6815, %v6814
    %v6837 = vpack.c.b16 %v6817, %v6816
    %v6838 = vpack.c.b16 %v6819, %v6818
    %v6839 = vpack.c.b16 %v6821, %v6820
    %v6840 = vpack.c.b16 %v6823, %v6822
    %v6841 = vpack.c.b16 %v6825, %v6824
    %6858 = vmatprep.subr.bf16.mxu0 0
    %6859 = vmatpush1.bf16.msra.mxu0 %v6826
    %6860 = vmatprep.subr.bf16.mxu0 0
    %6861 = vmatpush1.bf16.msra.mxu0 %v6827
    %6862 = vmatprep.subr.bf16.mxu0 0
    %6863 = vmatpush1.bf16.msra.mxu0 %v6828
    %6864 = vmatprep.subr.bf16.mxu0 0
    %6865 = vmatpush1.bf16.msra.mxu0 %v6829
    %6866 = vmatprep.subr.bf16.mxu0 0
    %6867 = vmatpush1.bf16.msra.mxu0 %v6830
    %6868 = vmatprep.subr.bf16.mxu0 0
    %6869 = vmatpush1.bf16.msra.mxu0 %v6831
    %6870 = vmatprep.subr.bf16.mxu0 0
    %6871 = vmatpush1.bf16.msra.mxu0 %v6832
    %6872 = vmatprep.subr.bf16.mxu0 0
    %6873 = vmatpush1.bf16.msra.mxu0 %v6833
    %6874 = vmatprep.subr.bf16.mxu0 0
    %6875 = vmatpush1.bf16.msra.mxu0 %v6834
    %6876 = vmatprep.subr.bf16.mxu0 0
    %6877 = vmatpush1.bf16.msra.mxu0 %v6835
    %6878 = vmatprep.subr.bf16.mxu0 0
    %6879 = vmatpush1.bf16.msra.mxu0 %v6836
    %6880 = vmatprep.subr.bf16.mxu0 0
    %6881 = vmatpush1.bf16.msra.mxu0 %v6837
    %6882 = vmatprep.subr.bf16.mxu0 0
    %6883 = vmatpush1.bf16.msra.mxu0 %v6838
    %6884 = vmatprep.subr.bf16.mxu0 0
    %6885 = vmatpush1.bf16.msra.mxu0 %v6839
    %6886 = vmatprep.subr.bf16.mxu0 0
    %6887 = vmatpush1.bf16.msra.mxu0 %v6840
    %6888 = vmatprep.subr.bf16.mxu0 0
    %6889 = vmatpush1.bf16.msra.mxu0 %v6841
    %6890 = vmatprep.mubr.bf16.mxu0 %v6660
    %6891 = vmatmul.mubr.bf16.gmra.mrb[0].mxu0 %v6659
    %v6892 = vpop.f32.mrb[0].mxu0
    %v6893 = vadd.f32 %v6760, %v6892
    %v6894 = vpop.f32.mrb[0].mxu0
    %v6895 = vpop.f32.mrb[0].mxu0
    %v6896 = vadd.f32 %v6760, %v6895
    %v6897 = vpop.f32.mrb[0].mxu0
    %6898 = vmatprep.mubr.bf16.mxu0 %v6662
    %6899 = vmatmul.mubr.bf16.gmra.mrb[0].mxu0 %v6661
    %v6900 = vpop.f32.mrb[0].mxu0
    %v6901 = vadd.f32 %v6760, %v6900
    %v6902 = vpop.f32.mrb[0].mxu0
    %v6903 = vpop.f32.mrb[0].mxu0
    %v6904 = vadd.f32 %v6760, %v6903
    %v6905 = vpop.f32.mrb[0].mxu0
    %6906 = vmatprep.mubr.bf16.mxu0 %v6664
    %6907 = vmatmul.mubr.bf16.gmra.mrb[0].mxu0 %v6663
    %v6908 = vpop.f32.mrb[0].mxu0
    %v6909 = vadd.f32 %v6760, %v6908
    %v6910 = vpop.f32.mrb[0].mxu0
    %v6911 = vpop.f32.mrb[0].mxu0
    %v6912 = vadd.f32 %v6760, %v6911
    %v6913 = vpop.f32.mrb[0].mxu0
    %6914 = vmatprep.mubr.bf16.mxu0 %v6666
    %6915 = vmatmul.mubr.bf16.gmra.mrb[0].mxu0 %v6665
    %v6916 = vpop.f32.mrb[0].mxu0
    %v6917 = vadd.f32 %v6760, %v6916
    %v6918 = vpop.f32.mrb[0].mxu0
    %v6919 = vpop.f32.mrb[0].mxu0
    %v6920 = vadd.f32 %v6760, %v6919
    %v6921 = vpop.f32.mrb[0].mxu0
    %6922 = vmatprep.mubr.bf16.mxu0 %v6668
    %6923 = vmatmul.mubr.bf16.gmra.mrb[0].mxu0 %v6667
    %v6924 = vpop.f32.mrb[0].mxu0
    %v6925 = vadd.f32 %v6760, %v6924
    %v6926 = vpop.f32.mrb[0].mxu0
    %v6927 = vpop.f32.mrb[0].mxu0
    %v6928 = vadd.f32 %v6760, %v6927
    %v6929 = vpop.f32.mrb[0].mxu0
    %6930 = vmatprep.mubr.bf16.mxu0 %v6670
    %6931 = vmatmul.mubr.bf16.gmra.mrb[0].mxu0 %v6669
    %v6932 = vpop.f32.mrb[0].mxu0
    %v6933 = vadd.f32 %v6760, %v6932
    %v6934 = vpop.f32.mrb[0].mxu0
    %v6935 = vpop.f32.mrb[0].mxu0
    %v6936 = vadd.f32 %v6760, %v6935
    %v6937 = vpop.f32.mrb[0].mxu0
    %6938 = vmatprep.mubr.bf16.mxu0 %v6672
    %6939 = vmatmul.mubr.bf16.gmra.mrb[0].mxu0 %v6671
    %v6940 = vpop.f32.mrb[0].mxu0
    %v6941 = vadd.f32 %v6760, %v6940
    %v6942 = vpop.f32.mrb[0].mxu0
    %v6943 = vpop.f32.mrb[0].mxu0
    %v6944 = vadd.f32 %v6760, %v6943
    %v6945 = vpop.f32.mrb[0].mxu0
    %6946 = vmatprep.mubr.bf16.mxu0 %v6674
    %6947 = vmatmul.mubr.bf16.gmra.mrb[0].mxu0 %v6673
    %v6948 = vpop.f32.mrb[0].mxu0
    %v6949 = vadd.f32 %v6760, %v6948
    %v6950 = vpop.f32.mrb[0].mxu0
    %v6951 = vpop.f32.mrb[0].mxu0
    %v6952 = vadd.f32 %v6760, %v6951
    %v6953 = vpop.f32.mrb[0].mxu0
    %6954 = vmatprep.mubr.bf16.mxu0 %v6676
    %6955 = vmatmul.mubr.bf16.gmra.mrb[0].mxu0 %v6675
    %v6956 = vpop.f32.mrb[0].mxu0
    %v6957 = vadd.f32 %v6760, %v6956
    %v6958 = vpop.f32.mrb[0].mxu0
    %v6959 = vpop.f32.mrb[0].mxu0
    %v6960 = vadd.f32 %v6760, %v6959
    %v6961 = vpop.f32.mrb[0].mxu0
    %6962 = vmatprep.mubr.bf16.mxu0 %v6678
    %6963 = vmatmul.mubr.bf16.gmra.mrb[0].mxu0 %v6677
    %v6964 = vpop.f32.mrb[0].mxu0
    %v6965 = vadd.f32 %v6760, %v6964
    %v6966 = vpop.f32.mrb[0].mxu0
    %v6967 = vpop.f32.mrb[0].mxu0
    %v6968 = vadd.f32 %v6760, %v6967
    %v6969 = vpop.f32.mrb[0].mxu0
    %6970 = vmatprep.mubr.bf16.mxu0 %v6680
    %6971 = vmatmul.mubr.bf16.gmra.mrb[0].mxu0 %v6679
    %v6972 = vpop.f32.mrb[0].mxu0
    %v6973 = vadd.f32 %v6760, %v6972
    %v6974 = vpop.f32.mrb[0].mxu0
    %v6975 = vpop.f32.mrb[0].mxu0
    %v6976 = vadd.f32 %v6760, %v6975
    %v6977 = vpop.f32.mrb[0].mxu0
    %6978 = vmatprep.mubr.bf16.mxu0 %v6682
    %6979 = vmatmul.mubr.bf16.gmra.mrb[0].mxu0 %v6681
    %v6980 = vpop.f32.mrb[0].mxu0
    %v6981 = vadd.f32 %v6760, %v6980
    %v6982 = vpop.f32.mrb[0].mxu0
    %v6983 = vpop.f32.mrb[0].mxu0
    %v6984 = vadd.f32 %v6760, %v6983
    %v6985 = vpop.f32.mrb[0].mxu0
    %6986 = vmatprep.mubr.bf16.mxu0 %v6684
    %6987 = vmatmul.mubr.bf16.gmra.mrb[0].mxu0 %v6683
    %v6988 = vpop.f32.mrb[0].mxu0
    %v6989 = vadd.f32 %v6760, %v6988
    %v6990 = vpop.f32.mrb[0].mxu0
    %v6991 = vpop.f32.mrb[0].mxu0
    %v6992 = vadd.f32 %v6760, %v6991
    %v6993 = vpop.f32.mrb[0].mxu0
    %6994 = vmatprep.mubr.bf16.mxu0 %v6686
    %6995 = vmatmul.mubr.bf16.gmra.mrb[0].mxu0 %v6685
    %v6996 = vpop.f32.mrb[0].mxu0
    %v6997 = vadd.f32 %v6760, %v6996
    %v6998 = vpop.f32.mrb[0].mxu0
    %v6999 = vpop.f32.mrb[0].mxu0
    %v7000 = vadd.f32 %v6760, %v6999
    %v7001 = vpop.f32.mrb[0].mxu0
    %7002 = vmatprep.mubr.bf16.mxu0 %v6688
    %7003 = vmatmul.mubr.bf16.gmra.mrb[0].mxu0 %v6687
    %v7004 = vpop.f32.mrb[0].mxu0
    %v7005 = vadd.f32 %v6760, %v7004
    %v7006 = vpop.f32.mrb[0].mxu0
    %v7007 = vpop.f32.mrb[0].mxu0
    %v7008 = vadd.f32 %v6760, %v7007
    %v7009 = vpop.f32.mrb[0].mxu0
    %7010 = vmatprep.mubr.bf16.mxu0 %v6690
    %7011 = vmatmul.mubr.bf16.gmra.mrb[0].mxu0 %v6689
    %v7012 = vpop.f32.mrb[0].mxu0
    %v7013 = vadd.f32 %v6760, %v7012
    %v7014 = vpop.f32.mrb[0].mxu0
    %v7015 = vpop.f32.mrb[0].mxu0
    %v7016 = vadd.f32 %v6760, %v7015
    %v7017 = vpop.f32.mrb[0].mxu0
    %7018 = vmatprep.mubr.bf16.mxu0 %v6692
    %7019 = vmatmul.mubr.bf16.gmra.mrb[0].mxu0 %v6691
    %v7020 = vpop.f32.mrb[0].mxu0
    %v7021 = vadd.f32 %v6760, %v7020
    %v7022 = vpop.f32.mrb[0].mxu0
    %v7023 = vpop.f32.mrb[0].mxu0
    %v7024 = vadd.f32 %v6760, %v7023
    %v7025 = vpop.f32.mrb[0].mxu0
    %7026 = vmatprep.mubr.bf16.mxu0 %v6694
    %7027 = vmatmul.mubr.bf16.gmra.mrb[0].mxu0 %v6693
    %v7028 = vpop.f32.mrb[0].mxu0
    %v7029 = vadd.f32 %v6760, %v7028
    %v7030 = vpop.f32.mrb[0].mxu0
    %v7031 = vpop.f32.mrb[0].mxu0
    %v7032 = vadd.f32 %v6760, %v7031
    %v7033 = vpop.f32.mrb[0].mxu0
    %7034 = vmatprep.mubr.bf16.mxu0 %v6696
    %7035 = vmatmul.mubr.bf16.gmra.mrb[0].mxu0 %v6695
    %v7036 = vpop.f32.mrb[0].mxu0
    %v7037 = vadd.f32 %v6760, %v7036
    %v7038 = vpop.f32.mrb[0].mxu0
    %v7039 = vpop.f32.mrb[0].mxu0
    %v7040 = vadd.f32 %v6760, %v7039
    %v7041 = vpop.f32.mrb[0].mxu0
    %7042 = vmatprep.mubr.bf16.mxu0 %v6698
    %7043 = vmatmul.mubr.bf16.gmra.mrb[0].mxu0 %v6697
    %v7044 = vpop.f32.mrb[0].mxu0
    %v7045 = vadd.f32 %v6760, %v7044
    %v7046 = vpop.f32.mrb[0].mxu0
    %v7047 = vpop.f32.mrb[0].mxu0
    %v7048 = vadd.f32 %v6760, %v7047
    %v7049 = vpop.f32.mrb[0].mxu0
    %7050 = vmatprep.mubr.bf16.mxu0 %v6700
    %7051 = vmatmul.mubr.bf16.gmra.mrb[0].mxu0 %v6699
    %v7052 = vpop.f32.mrb[0].mxu0
    %v7053 = vadd.f32 %v6760, %v7052
    %v7054 = vpop.f32.mrb[0].mxu0
    %v7055 = vpop.f32.mrb[0].mxu0
    %v7056 = vadd.f32 %v6760, %v7055
    %v7057 = vpop.f32.mrb[0].mxu0
    %7058 = vmatprep.mubr.bf16.mxu0 %v6702
    %7059 = vmatmul.mubr.bf16.gmra.mrb[0].mxu0 %v6701
    %v7060 = vpop.f32.mrb[0].mxu0
    %v7061 = vadd.f32 %v6760, %v7060
    %v7062 = vpop.f32.mrb[0].mxu0
    %v7063 = vpop.f32.mrb[0].mxu0
    %v7064 = vadd.f32 %v6760, %v7063
    %v7065 = vpop.f32.mrb[0].mxu0
    %7066 = vmatprep.mubr.bf16.mxu0 %v6704
    %7067 = vmatmul.mubr.bf16.gmra.mrb[0].mxu0 %v6703
    %v7068 = vpop.f32.mrb[0].mxu0
    %v7069 = vadd.f32 %v6760, %v7068
    %v7070 = vpop.f32.mrb[0].mxu0
    %v7071 = vpop.f32.mrb[0].mxu0
    %v7072 = vadd.f32 %v6760, %v7071
    %v7073 = vpop.f32.mrb[0].mxu0
    %7074 = vmatprep.mubr.bf16.mxu0 %v6706
    %7075 = vmatmul.mubr.bf16.gmra.mrb[0].mxu0 %v6705
    %v7076 = vpop.f32.mrb[0].mxu0
    %v7077 = vadd.f32 %v6760, %v7076
    %v7078 = vpop.f32.mrb[0].mxu0
    %v7079 = vpop.f32.mrb[0].mxu0
    %v7080 = vadd.f32 %v6760, %v7079
    %v7081 = vpop.f32.mrb[0].mxu0
    %7082 = vmatprep.mubr.bf16.mxu0 %v6708
    %7083 = vmatmul.mubr.bf16.gmra.mrb[0].mxu0 %v6707
    %v7084 = vpop.f32.mrb[0].mxu0
    %v7085 = vadd.f32 %v6760, %v7084
    %v7086 = vpop.f32.mrb[0].mxu0
    %v7087 = vpop.f32.mrb[0].mxu0
    %v7088 = vadd.f32 %v6760, %v7087
    %v7089 = vpop.f32.mrb[0].mxu0
    %7090 = vmatprep.mubr.bf16.mxu0 %v6710
    %7091 = vmatmul.mubr.bf16.gmra.mrb[0].mxu0 %v6709
    %v7092 = vpop.f32.mrb[0].mxu0
    %v7093 = vadd.f32 %v6760, %v7092
    %v7094 = vpop.f32.mrb[0].mxu0
    %v7095 = vpop.f32.mrb[0].mxu0
    %v7096 = vadd.f32 %v6760, %v7095
    %v7097 = vpop.f32.mrb[0].mxu0
    %7098 = vmatprep.mubr.bf16.mxu0 %v6712
    %7099 = vmatmul.mubr.bf16.gmra.mrb[0].mxu0 %v6711
    %v7100 = vpop.f32.mrb[0].mxu0
    %v7101 = vadd.f32 %v6760, %v7100
    %v7102 = vpop.f32.mrb[0].mxu0
    %v7103 = vpop.f32.mrb[0].mxu0
    %v7104 = vadd.f32 %v6760, %v7103
    %v7105 = vpop.f32.mrb[0].mxu0
    %7106 = vmatprep.mubr.bf16.mxu0 %v6714
    %7107 = vmatmul.mubr.bf16.gmra.mrb[0].mxu0 %v6713
    %v7108 = vpop.f32.mrb[0].mxu0
    %v7109 = vadd.f32 %v6760, %v7108
    %v7110 = vpop.f32.mrb[0].mxu0
    %v7111 = vpop.f32.mrb[0].mxu0
    %v7112 = vadd.f32 %v6760, %v7111
    %v7113 = vpop.f32.mrb[0].mxu0
    %7114 = vmatprep.mubr.bf16.mxu0 %v6716
    %7115 = vmatmul.mubr.bf16.gmra.mrb[0].mxu0 %v6715
    %v7116 = vpop.f32.mrb[0].mxu0
    %v7117 = vadd.f32 %v6760, %v7116
    %v7118 = vpop.f32.mrb[0].mxu0
    %v7119 = vpop.f32.mrb[0].mxu0
    %v7120 = vadd.f32 %v6760, %v7119
    %v7121 = vpop.f32.mrb[0].mxu0
    %7122 = vmatprep.mubr.bf16.mxu0 %v6718
    %7123 = vmatmul.mubr.bf16.gmra.mrb[0].mxu0 %v6717
    %v7124 = vpop.f32.mrb[0].mxu0
    %v7125 = vadd.f32 %v6760, %v7124
    %v7126 = vpop.f32.mrb[0].mxu0
    %v7127 = vpop.f32.mrb[0].mxu0
    %v7128 = vadd.f32 %v6760, %v7127
    %v7129 = vpop.f32.mrb[0].mxu0
    %7130 = vmatprep.mubr.bf16.mxu0 %v6720
    %7131 = vmatmul.mubr.bf16.gmra.mrb[0].mxu0 %v6719
    %v7132 = vpop.f32.mrb[0].mxu0
    %v7133 = vadd.f32 %v6760, %v7132
    %v7134 = vpop.f32.mrb[0].mxu0
    %v7135 = vpop.f32.mrb[0].mxu0
    %v7136 = vadd.f32 %v6760, %v7135
    %v7137 = vpop.f32.mrb[0].mxu0
    %7138 = vmatprep.mubr.bf16.mxu0 %v6722
    %7139 = vmatmul.mubr.bf16.gmra.mrb[0].mxu0 %v6721
    %v7140 = vpop.f32.mrb[0].mxu0
    %v7141 = vadd.f32 %v6760, %v7140
    %v7142 = vpop.f32.mrb[0].mxu0
    %v7143 = vpop.f32.mrb[0].mxu0
    %v7144 = vadd.f32 %v6760, %v7143
    %v7145 = vpop.f32.mrb[0].mxu0
    %7146 = vdwg.mxu0
    %v7147 = vmul.f32 %v6893, %v6893
    %v7148 = vmul.f32 %v6896, %v6896
    %v7149 = vmul.f32 %v6901, %v6901
    %v7150 = vmul.f32 %v6904, %v6904
    %v7151 = vmul.f32 %v6909, %v6909
    %v7152 = vmul.f32 %v6912, %v6912
    %v7153 = vmul.f32 %v6917, %v6917
    %v7154 = vmul.f32 %v6920, %v6920
    %v7155 = vmul.f32 %v6925, %v6925
    %v7156 = vmul.f32 %v6928, %v6928
    %v7157 = vmul.f32 %v6933, %v6933
    %v7158 = vmul.f32 %v6936, %v6936
    %v7159 = vmul.f32 %v6941, %v6941
    %v7160 = vmul.f32 %v6944, %v6944
    %v7161 = vmul.f32 %v6949, %v6949
    %v7162 = vmul.f32 %v6952, %v6952
    %v7163 = vmul.f32 %v6957, %v6957
    %v7164 = vmul.f32 %v6960, %v6960
    %v7165 = vmul.f32 %v6965, %v6965
    %v7166 = vmul.f32 %v6968, %v6968
    %v7167 = vmul.f32 %v6973, %v6973
    %v7168 = vmul.f32 %v6976, %v6976
    %v7169 = vmul.f32 %v6981, %v6981
    %v7170 = vmul.f32 %v6984, %v6984
    %v7171 = vmul.f32 %v6989, %v6989
    %v7172 = vmul.f32 %v6992, %v6992
    %v7173 = vmul.f32 %v6997, %v6997
    %v7174 = vmul.f32 %v7000, %v7000
    %v7175 = vmul.f32 %v7005, %v7005
    %v7176 = vmul.f32 %v7008, %v7008
    %v7177 = vmul.f32 %v7013, %v7013
    %v7178 = vmul.f32 %v7016, %v7016
    %v7179 = vmul.f32 %v7021, %v7021
    %v7180 = vmul.f32 %v7024, %v7024
    %v7181 = vmul.f32 %v7029, %v7029
    %v7182 = vmul.f32 %v7032, %v7032
    %v7183 = vmul.f32 %v7037, %v7037
    %v7184 = vmul.f32 %v7040, %v7040
    %v7185 = vmul.f32 %v7045, %v7045
    %v7186 = vmul.f32 %v7048, %v7048
    %v7187 = vmul.f32 %v7053, %v7053
    %v7188 = vmul.f32 %v7056, %v7056
    %v7189 = vmul.f32 %v7061, %v7061
    %v7190 = vmul.f32 %v7064, %v7064
    %v7191 = vmul.f32 %v7069, %v7069
    %v7192 = vmul.f32 %v7072, %v7072
    %v7193 = vmul.f32 %v7077, %v7077
    %v7194 = vmul.f32 %v7080, %v7080
    %v7195 = vmul.f32 %v7085, %v7085
    %v7196 = vmul.f32 %v7088, %v7088
    %v7197 = vmul.f32 %v7093, %v7093
    %v7198 = vmul.f32 %v7096, %v7096
    %v7199 = vmul.f32 %v7101, %v7101
    %v7200 = vmul.f32 %v7104, %v7104
    %v7201 = vmul.f32 %v7109, %v7109
    %v7202 = vmul.f32 %v7112, %v7112
    %v7203 = vmul.f32 %v7117, %v7117
    %v7204 = vmul.f32 %v7120, %v7120
    %v7205 = vmul.f32 %v7125, %v7125
    %v7206 = vmul.f32 %v7128, %v7128
    %v7207 = vmul.f32 %v7133, %v7133
    %v7208 = vmul.f32 %v7136, %v7136
    %v7209 = vmul.f32 %v7141, %v7141
    %v7210 = vmul.f32 %v7144, %v7144
    %v7211 = vld [vmem:[#allocation25] sm:$0xff]
    %v7212 = vld [vmem:[#allocation25 + $0x8] sm:$0xf]
    %vm7213 = vcmask 97280
    %v7215 = vsel %vm7213, %v7147, 0
    %v7218 = vsel %vm7213, %v7148, 0
    %v7221 = vsel %vm7213, %v7149, 0
    %v7224 = vsel %vm7213, %v7150, 0
    %v7227 = vsel %vm7213, %v7151, 0
    %v7230 = vsel %vm7213, %v7152, 0
    %v7233 = vsel %vm7213, %v7153, 0
    %v7236 = vsel %vm7213, %v7154, 0
    %v7239 = vsel %vm7213, %v7155, 0
    %v7242 = vsel %vm7213, %v7156, 0
    %v7245 = vsel %vm7213, %v7157, 0
    %v7248 = vsel %vm7213, %v7158, 0
    %v7251 = vsel %vm7213, %v7159, 0
    %v7254 = vsel %vm7213, %v7160, 0
    %v7257 = vsel %vm7213, %v7161, 0
    %v7260 = vsel %vm7213, %v7162, 0
    %v7263 = vsel %vm7213, %v7163, 0
    %v7266 = vsel %vm7213, %v7164, 0
    %v7269 = vsel %vm7213, %v7165, 0
    %v7272 = vsel %vm7213, %v7166, 0
    %v7275 = vsel %vm7213, %v7167, 0
    %v7278 = vsel %vm7213, %v7168, 0
    %v7281 = vsel %vm7213, %v7169, 0
    %v7284 = vsel %vm7213, %v7170, 0
    %v7287 = vsel %vm7213, %v7171, 0
    %v7290 = vsel %vm7213, %v7172, 0
    %v7293 = vsel %vm7213, %v7173, 0
    %v7296 = vsel %vm7213, %v7174, 0
    %v7299 = vsel %vm7213, %v7175, 0
    %v7302 = vsel %vm7213, %v7176, 0
    %v7305 = vsel %vm7213, %v7177, 0
    %v7308 = vsel %vm7213, %v7178, 0
    %v7311 = vsel %vm7213, %v7179, 0
    %v7314 = vsel %vm7213, %v7180, 0
    %v7317 = vsel %vm7213, %v7181, 0
    %v7320 = vsel %vm7213, %v7182, 0
    %v7323 = vsel %vm7213, %v7183, 0
    %v7326 = vsel %vm7213, %v7184, 0
    %v7329 = vsel %vm7213, %v7185, 0
    %v7332 = vsel %vm7213, %v7186, 0
    %v7335 = vsel %vm7213, %v7187, 0
    %v7338 = vsel %vm7213, %v7188, 0
    %v7341 = vsel %vm7213, %v7189, 0
    %v7344 = vsel %vm7213, %v7190, 0
    %v7347 = vsel %vm7213, %v7191, 0
    %v7350 = vsel %vm7213, %v7192, 0
    %v7353 = vsel %vm7213, %v7193, 0
    %v7356 = vsel %vm7213, %v7194, 0
    %v7359 = vsel %vm7213, %v7195, 0
    %v7362 = vsel %vm7213, %v7196, 0
    %v7365 = vsel %vm7213, %v7197, 0
    %v7368 = vsel %vm7213, %v7198, 0
    %v7371 = vsel %vm7213, %v7199, 0
    %v7374 = vsel %vm7213, %v7200, 0
    %v7377 = vsel %vm7213, %v7201, 0
    %v7380 = vsel %vm7213, %v7202, 0
    %v7383 = vsel %vm7213, %v7203, 0
    %v7386 = vsel %vm7213, %v7204, 0
    %v7389 = vsel %vm7213, %v7205, 0
    %v7392 = vsel %vm7213, %v7206, 0
    %v7395 = vsel %vm7213, %v7207, 0
    %v7398 = vsel %vm7213, %v7208, 0
    %v7401 = vsel %vm7213, %v7209, 0
    %v7404 = vsel %vm7213, %v7210, 0
    %vm7406 = vcmask 1043456
    %v7408 = vsel %vm7406, %v7212, 0
    %7410 = vmatprep.subr.mxu0 0.0
    %7411 = vmatpush1.msra.mxu0 %v7211
    %7412 = vmatprep.subr.mxu0 0.0
    %7413 = vmatpush1.msra.mxu0 %v7408
    %7414 = vmatprep.subr.mxu0 0.0
    %7415 = vmatpush1.msra.mxu0 0.0
    %7416 = vmatprep.subr.mxu0 0.0
    %7417 = vmatpush1.msra.mxu0 0.0
    %7418 = vmatprep.subr.mxu0 0.0
    %7419 = vmatpush1.msra.mxu0 0.0
    %7420 = vmatprep.subr.mxu0 0.0
    %7421 = vmatpush1.msra.mxu0 0.0
    %7422 = vmatprep.subr.mxu0 0.0
    %7423 = vmatpush1.msra.mxu0 0.0
    %7424 = vmatprep.subr.mxu0 0.0
    %7425 = vmatpush1.msra.mxu0 0.0
    %7426 = vmatprep.subr.mxu0 0.0
    %7427 = vmatpush1.msra.mxu0 0.0
    %7428 = vmatprep.subr.mxu0 0.0
    %7429 = vmatpush1.msra.mxu0 0.0
    %7430 = vmatprep.subr.mxu0 0.0
    %7431 = vmatpush1.msra.mxu0 0.0
    %7432 = vmatprep.subr.mxu0 0.0
    %7433 = vmatpush1.msra.mxu0 0.0
    %7434 = vmatprep.subr.mxu0 0.0
    %7435 = vmatpush1.msra.mxu0 0.0
    %7436 = vmatprep.subr.mxu0 0.0
    %7437 = vmatpush1.msra.mxu0 0.0
    %7438 = vmatprep.subr.mxu0 0.0
    %7439 = vmatpush1.msra.mxu0 0.0
    %7440 = vmatprep.subr.mxu0 0.0
    %7441 = vmatpush1.msra.mxu0 0.0
    %7442 = vmatprep.subr.mxu0 0.0
    %7443 = vmatpush1.msra.mxu0 0.0
    %7444 = vmatprep.subr.mxu0 0.0
    %7445 = vmatpush1.msra.mxu0 0.0
    %7446 = vmatprep.subr.mxu0 0.0
    %7447 = vmatpush1.msra.mxu0 0.0
    %7448 = vmatprep.subr.mxu0 0.0
    %7449 = vmatpush1.msra.mxu0 0.0
    %7450 = vmatprep.subr.mxu0 0.0
    %7451 = vmatpush1.msra.mxu0 0.0
    %7452 = vmatprep.subr.mxu0 0.0
    %7453 = vmatpush1.msra.mxu0 0.0
    %7454 = vmatprep.subr.mxu0 0.0
    %7455 = vmatpush1.msra.mxu0 0.0
    %7456 = vmatprep.subr.mxu0 0.0
    %7457 = vmatpush1.msra.mxu0 0.0
    %7458 = vmatprep.subr.mxu0 0.0
    %7459 = vmatpush1.msra.mxu0 0.0
    %7460 = vmatprep.subr.mxu0 0.0
    %7461 = vmatpush1.msra.mxu0 0.0
    %7462 = vmatprep.subr.mxu0 0.0
    %7463 = vmatpush1.msra.mxu0 0.0
    %7464 = vmatprep.subr.mxu0 0.0
    %7465 = vmatpush1.msra.mxu0 0.0
    %7466 = vmatprep.subr.mxu0 0.0
    %7467 = vmatpush1.msra.mxu0 0.0
    %7468 = vmatprep.subr.mxu0 0.0
    %7469 = vmatpush1.msra.mxu0 0.0
    %7470 = vmatprep.subr.mxu0 0.0
    %7471 = vmatpush1.msra.mxu0 0.0
    %7472 = vmatprep.subr.mxu0 0.0
    %7473 = vmatpush1.msra.mxu0 0.0
    %7474 = vmatprep.mubr.f32.mxu0 0.0
    %7475 = vmatmul.mubr.f32.gmra.mrb[0].mxu0 %v7215
    %v7476 = vpop.f32.mrb[0].mxu0
    %v7477 = vadd.f32 0.0, %v7476
    %v7478 = vpop.f32.mrb[0].mxu0
    %7479 = vmatprep.mubr.f32.mxu0 0.0
    %7480 = vmatmul.mubr.f32.gmra.mrb[0].mxu0 %v7218
    %v7481 = vpop.f32.mrb[0].mxu0
    %v7482 = vadd.f32 0.0, %v7481
    %v7483 = vpop.f32.mrb[0].mxu0
    %7484 = vmatprep.mubr.f32.mxu0 0.0
    %7485 = vmatmul.mubr.f32.gmra.mrb[0].mxu0 %v7221
    %v7486 = vpop.f32.mrb[0].mxu0
    %v7487 = vadd.f32 0.0, %v7486
    %v7488 = vpop.f32.mrb[0].mxu0
    %7489 = vmatprep.mubr.f32.mxu0 0.0
    %7490 = vmatmul.mubr.f32.gmra.mrb[0].mxu0 %v7224
    %v7491 = vpop.f32.mrb[0].mxu0
    %v7492 = vadd.f32 0.0, %v7491
    %v7493 = vpop.f32.mrb[0].mxu0
    %7494 = vmatprep.mubr.f32.mxu0 0.0
    %7495 = vmatmul.mubr.f32.gmra.mrb[0].mxu0 %v7227
    %v7496 = vpop.f32.mrb[0].mxu0
    %v7497 = vadd.f32 0.0, %v7496
    %v7498 = vpop.f32.mrb[0].mxu0
    %7499 = vmatprep.mubr.f32.mxu0 0.0
    %7500 = vmatmul.mubr.f32.gmra.mrb[0].mxu0 %v7230
    %v7501 = vpop.f32.mrb[0].mxu0
    %v7502 = vadd.f32 0.0, %v7501
    %v7503 = vpop.f32.mrb[0].mxu0
    %7504 = vmatprep.mubr.f32.mxu0 0.0
    %7505 = vmatmul.mubr.f32.gmra.mrb[0].mxu0 %v7233
    %v7506 = vpop.f32.mrb[0].mxu0
    %v7507 = vadd.f32 0.0, %v7506
    %v7508 = vpop.f32.mrb[0].mxu0
    %7509 = vmatprep.mubr.f32.mxu0 0.0
    %7510 = vmatmul.mubr.f32.gmra.mrb[0].mxu0 %v7236
    %v7511 = vpop.f32.mrb[0].mxu0
    %v7512 = vadd.f32 0.0, %v7511
    %v7513 = vpop.f32.mrb[0].mxu0
    %7514 = vmatprep.mubr.f32.mxu0 0.0
    %7515 = vmatmul.mubr.f32.gmra.mrb[0].mxu0 %v7239
    %v7516 = vpop.f32.mrb[0].mxu0
    %v7517 = vadd.f32 0.0, %v7516
    %v7518 = vpop.f32.mrb[0].mxu0
    %7519 = vmatprep.mubr.f32.mxu0 0.0
    %7520 = vmatmul.mubr.f32.gmra.mrb[0].mxu0 %v7242
    %v7521 = vpop.f32.mrb[0].mxu0
    %v7522 = vadd.f32 0.0, %v7521
    %v7523 = vpop.f32.mrb[0].mxu0
    %7524 = vmatprep.mubr.f32.mxu0 0.0
    %7525 = vmatmul.mubr.f32.gmra.mrb[0].mxu0 %v7245
    %v7526 = vpop.f32.mrb[0].mxu0
    %v7527 = vadd.f32 0.0, %v7526
    %v7528 = vpop.f32.mrb[0].mxu0
    %7529 = vmatprep.mubr.f32.mxu0 0.0
    %7530 = vmatmul.mubr.f32.gmra.mrb[0].mxu0 %v7248
    %v7531 = vpop.f32.mrb[0].mxu0
    %v7532 = vadd.f32 0.0, %v7531
    %v7533 = vpop.f32.mrb[0].mxu0
    %7534 = vmatprep.mubr.f32.mxu0 0.0
    %7535 = vmatmul.mubr.f32.gmra.mrb[0].mxu0 %v7251
    %v7536 = vpop.f32.mrb[0].mxu0
    %v7537 = vadd.f32 0.0, %v7536
    %v7538 = vpop.f32.mrb[0].mxu0
    %7539 = vmatprep.mubr.f32.mxu0 0.0
    %7540 = vmatmul.mubr.f32.gmra.mrb[0].mxu0 %v7254
    %v7541 = vpop.f32.mrb[0].mxu0
    %v7542 = vadd.f32 0.0, %v7541
    %v7543 = vpop.f32.mrb[0].mxu0
    %7544 = vmatprep.mubr.f32.mxu0 0.0
    %7545 = vmatmul.mubr.f32.gmra.mrb[0].mxu0 %v7257
    %v7546 = vpop.f32.mrb[0].mxu0
    %v7547 = vadd.f32 0.0, %v7546
    %v7548 = vpop.f32.mrb[0].mxu0
    %7549 = vmatprep.mubr.f32.mxu0 0.0
    %7550 = vmatmul.mubr.f32.gmra.mrb[0].mxu0 %v7260
    %v7551 = vpop.f32.mrb[0].mxu0
    %v7552 = vadd.f32 0.0, %v7551
    %v7553 = vpop.f32.mrb[0].mxu0
    %7554 = vmatprep.mubr.f32.mxu0 0.0
    %7555 = vmatmul.mubr.f32.gmra.mrb[0].mxu0 %v7263
    %v7556 = vpop.f32.mrb[0].mxu0
    %v7557 = vadd.f32 0.0, %v7556
    %v7558 = vpop.f32.mrb[0].mxu0
    %7559 = vmatprep.mubr.f32.mxu0 0.0
    %7560 = vmatmul.mubr.f32.gmra.mrb[0].mxu0 %v7266
    %v7561 = vpop.f32.mrb[0].mxu0
    %v7562 = vadd.f32 0.0, %v7561
    %v7563 = vpop.f32.mrb[0].mxu0
    %7564 = vmatprep.mubr.f32.mxu0 0.0
    %7565 = vmatmul.mubr.f32.gmra.mrb[0].mxu0 %v7269
    %v7566 = vpop.f32.mrb[0].mxu0
    %v7567 = vadd.f32 0.0, %v7566
    %v7568 = vpop.f32.mrb[0].mxu0
    %7569 = vmatprep.mubr.f32.mxu0 0.0
    %7570 = vmatmul.mubr.f32.gmra.mrb[0].mxu0 %v7272
    %v7571 = vpop.f32.mrb[0].mxu0
    %v7572 = vadd.f32 0.0, %v7571
    %v7573 = vpop.f32.mrb[0].mxu0
    %7574 = vmatprep.mubr.f32.mxu0 0.0
    %7575 = vmatmul.mubr.f32.gmra.mrb[0].mxu0 %v7275
    %v7576 = vpop.f32.mrb[0].mxu0
    %v7577 = vadd.f32 0.0, %v7576
    %v7578 = vpop.f32.mrb[0].mxu0
    %7579 = vmatprep.mubr.f32.mxu0 0.0
    %7580 = vmatmul.mubr.f32.gmra.mrb[0].mxu0 %v7278
    %v7581 = vpop.f32.mrb[0].mxu0
    %v7582 = vadd.f32 0.0, %v7581
    %v7583 = vpop.f32.mrb[0].mxu0
    %7584 = vmatprep.mubr.f32.mxu0 0.0
    %7585 = vmatmul.mubr.f32.gmra.mrb[0].mxu0 %v7281
    %v7586 = vpop.f32.mrb[0].mxu0
    %v7587 = vadd.f32 0.0, %v7586
    %v7588 = vpop.f32.mrb[0].mxu0
    %7589 = vmatprep.mubr.f32.mxu0 0.0
    %7590 = vmatmul.mubr.f32.gmra.mrb[0].mxu0 %v7284
    %v7591 = vpop.f32.mrb[0].mxu0
    %v7592 = vadd.f32 0.0, %v7591
    %v7593 = vpop.f32.mrb[0].mxu0
    %7594 = vmatprep.mubr.f32.mxu0 0.0
    %7595 = vmatmul.mubr.f32.gmra.mrb[0].mxu0 %v7287
    %v7596 = vpop.f32.mrb[0].mxu0
    %v7597 = vadd.f32 0.0, %v7596
    %v7598 = vpop.f32.mrb[0].mxu0
    %7599 = vmatprep.mubr.f32.mxu0 0.0
    %7600 = vmatmul.mubr.f32.gmra.mrb[0].mxu0 %v7290
    %v7601 = vpop.f32.mrb[0].mxu0
    %v7602 = vadd.f32 0.0, %v7601
    %v7603 = vpop.f32.mrb[0].mxu0
    %7604 = vmatprep.mubr.f32.mxu0 0.0
    %7605 = vmatmul.mubr.f32.gmra.mrb[0].mxu0 %v7293
    %v7606 = vpop.f32.mrb[0].mxu0
    %v7607 = vadd.f32 0.0, %v7606
    %v7608 = vpop.f32.mrb[0].mxu0
    %7609 = vmatprep.mubr.f32.mxu0 0.0
    %7610 = vmatmul.mubr.f32.gmra.mrb[0].mxu0 %v7296
    %v7611 = vpop.f32.mrb[0].mxu0
    %v7612 = vadd.f32 0.0, %v7611
    %v7613 = vpop.f32.mrb[0].mxu0
    %7614 = vmatprep.mubr.f32.mxu0 0.0
    %7615 = vmatmul.mubr.f32.gmra.mrb[0].mxu0 %v7299
    %v7616 = vpop.f32.mrb[0].mxu0
    %v7617 = vadd.f32 0.0, %v7616
    %v7618 = vpop.f32.mrb[0].mxu0
    %7619 = vmatprep.mubr.f32.mxu0 0.0
    %7620 = vmatmul.mubr.f32.gmra.mrb[0].mxu0 %v7302
    %v7621 = vpop.f32.mrb[0].mxu0
    %v7622 = vadd.f32 0.0, %v7621
    %v7623 = vpop.f32.mrb[0].mxu0
    %7624 = vmatprep.mubr.f32.mxu0 0.0
    %7625 = vmatmul.mubr.f32.gmra.mrb[0].mxu0 %v7305
    %v7626 = vpop.f32.mrb[0].mxu0
    %v7627 = vadd.f32 0.0, %v7626
    %v7628 = vpop.f32.mrb[0].mxu0
    %7629 = vmatprep.mubr.f32.mxu0 0.0
    %7630 = vmatmul.mubr.f32.gmra.mrb[0].mxu0 %v7308
    %v7631 = vpop.f32.mrb[0].mxu0
    %v7632 = vadd.f32 0.0, %v7631
    %v7633 = vpop.f32.mrb[0].mxu0
    %7634 = vmatprep.mubr.f32.mxu0 0.0
    %7635 = vmatmul.mubr.f32.gmra.mrb[0].mxu0 %v7311
    %v7636 = vpop.f32.mrb[0].mxu0
    %v7637 = vadd.f32 0.0, %v7636
    %v7638 = vpop.f32.mrb[0].mxu0
    %7639 = vmatprep.mubr.f32.mxu0 0.0
    %7640 = vmatmul.mubr.f32.gmra.mrb[0].mxu0 %v7314
    %v7641 = vpop.f32.mrb[0].mxu0
    %v7642 = vadd.f32 0.0, %v7641
    %v7643 = vpop.f32.mrb[0].mxu0
    %7644 = vmatprep.mubr.f32.mxu0 0.0
    %7645 = vmatmul.mubr.f32.gmra.mrb[0].mxu0 %v7317
    %v7646 = vpop.f32.mrb[0].mxu0
    %v7647 = vadd.f32 0.0, %v7646
    %v7648 = vpop.f32.mrb[0].mxu0
    %7649 = vmatprep.mubr.f32.mxu0 0.0
    %7650 = vmatmul.mubr.f32.gmra.mrb[0].mxu0 %v7320
    %v7651 = vpop.f32.mrb[0].mxu0
    %v7652 = vadd.f32 0.0, %v7651
    %v7653 = vpop.f32.mrb[0].mxu0
    %7654 = vmatprep.mubr.f32.mxu0 0.0
    %7655 = vmatmul.mubr.f32.gmra.mrb[0].mxu0 %v7323
    %v7656 = vpop.f32.mrb[0].mxu0
    %v7657 = vadd.f32 0.0, %v7656
    %v7658 = vpop.f32.mrb[0].mxu0
    %7659 = vmatprep.mubr.f32.mxu0 0.0
    %7660 = vmatmul.mubr.f32.gmra.mrb[0].mxu0 %v7326
    %v7661 = vpop.f32.mrb[0].mxu0
    %v7662 = vadd.f32 0.0, %v7661
    %v7663 = vpop.f32.mrb[0].mxu0
    %7664 = vmatprep.mubr.f32.mxu0 0.0
    %7665 = vmatmul.mubr.f32.gmra.mrb[0].mxu0 %v7329
    %v7666 = vpop.f32.mrb[0].mxu0
    %v7667 = vadd.f32 0.0, %v7666
    %v7668 = vpop.f32.mrb[0].mxu0
    %7669 = vmatprep.mubr.f32.mxu0 0.0
    %7670 = vmatmul.mubr.f32.gmra.mrb[0].mxu0 %v7332
    %v7671 = vpop.f32.mrb[0].mxu0
    %v7672 = vadd.f32 0.0, %v7671
    %v7673 = vpop.f32.mrb[0].mxu0
    %7674 = vmatprep.mubr.f32.mxu0 0.0
    %7675 = vmatmul.mubr.f32.gmra.mrb[0].mxu0 %v7335
    %v7676 = vpop.f32.mrb[0].mxu0
    %v7677 = vadd.f32 0.0, %v7676
    %v7678 = vpop.f32.mrb[0].mxu0
    %7679 = vmatprep.mubr.f32.mxu0 0.0
    %7680 = vmatmul.mubr.f32.gmra.mrb[0].mxu0 %v7338
    %v7681 = vpop.f32.mrb[0].mxu0
    %v7682 = vadd.f32 0.0, %v7681
    %v7683 = vpop.f32.mrb[0].mxu0
    %7684 = vmatprep.mubr.f32.mxu0 0.0
    %7685 = vmatmul.mubr.f32.gmra.mrb[0].mxu0 %v7341
    %v7686 = vpop.f32.mrb[0].mxu0
    %v7687 = vadd.f32 0.0, %v7686
    %v7688 = vpop.f32.mrb[0].mxu0
    %7689 = vmatprep.mubr.f32.mxu0 0.0
    %7690 = vmatmul.mubr.f32.gmra.mrb[0].mxu0 %v7344
    %v7691 = vpop.f32.mrb[0].mxu0
    %v7692 = vadd.f32 0.0, %v7691
    %v7693 = vpop.f32.mrb[0].mxu0
    %7694 = vmatprep.mubr.f32.mxu0 0.0
    %7695 = vmatmul.mubr.f32.gmra.mrb[0].mxu0 %v7347
    %v7696 = vpop.f32.mrb[0].mxu0
    %v7697 = vadd.f32 0.0, %v7696
    %v7698 = vpop.f32.mrb[0].mxu0
    %7699 = vmatprep.mubr.f32.mxu0 0.0
    %7700 = vmatmul.mubr.f32.gmra.mrb[0].mxu0 %v7350
    %v7701 = vpop.f32.mrb[0].mxu0
    %v7702 = vadd.f32 0.0, %v7701
    %v7703 = vpop.f32.mrb[0].mxu0
    %7704 = vmatprep.mubr.f32.mxu0 0.0
    %7705 = vmatmul.mubr.f32.gmra.mrb[0].mxu0 %v7353
    %v7706 = vpop.f32.mrb[0].mxu0
    %v7707 = vadd.f32 0.0, %v7706
    %v7708 = vpop.f32.mrb[0].mxu0
    %7709 = vmatprep.mubr.f32.mxu0 0.0
    %7710 = vmatmul.mubr.f32.gmra.mrb[0].mxu0 %v7356
    %v7711 = vpop.f32.mrb[0].mxu0
    %v7712 = vadd.f32 0.0, %v7711
    %v7713 = vpop.f32.mrb[0].mxu0
    %7714 = vmatprep.mubr.f32.mxu0 0.0
    %7715 = vmatmul.mubr.f32.gmra.mrb[0].mxu0 %v7359
    %v7716 = vpop.f32.mrb[0].mxu0
    %v7717 = vadd.f32 0.0, %v7716
    %v7718 = vpop.f32.mrb[0].mxu0
    %7719 = vmatprep.mubr.f32.mxu0 0.0
    %7720 = vmatmul.mubr.f32.gmra.mrb[0].mxu0 %v7362
    %v7721 = vpop.f32.mrb[0].mxu0
    %v7722 = vadd.f32 0.0, %v7721
    %v7723 = vpop.f32.mrb[0].mxu0
    %7724 = vmatprep.mubr.f32.mxu0 0.0
    %7725 = vmatmul.mubr.f32.gmra.mrb[0].mxu0 %v7365
    %v7726 = vpop.f32.mrb[0].mxu0
    %v7727 = vadd.f32 0.0, %v7726
    %v7728 = vpop.f32.mrb[0].mxu0
    %7729 = vmatprep.mubr.f32.mxu0 0.0
    %7730 = vmatmul.mubr.f32.gmra.mrb[0].mxu0 %v7368
    %v7731 = vpop.f32.mrb[0].mxu0
    %v7732 = vadd.f32 0.0, %v7731
    %v7733 = vpop.f32.mrb[0].mxu0
    %7734 = vmatprep.mubr.f32.mxu0 0.0
    %7735 = vmatmul.mubr.f32.gmra.mrb[0].mxu0 %v7371
    %v7736 = vpop.f32.mrb[0].mxu0
    %v7737 = vadd.f32 0.0, %v7736
    %v7738 = vpop.f32.mrb[0].mxu0
    %7739 = vmatprep.mubr.f32.mxu0 0.0
    %7740 = vmatmul.mubr.f32.gmra.mrb[0].mxu0 %v7374
    %v7741 = vpop.f32.mrb[0].mxu0
    %v7742 = vadd.f32 0.0, %v7741
    %v7743 = vpop.f32.mrb[0].mxu0
    %7744 = vmatprep.mubr.f32.mxu0 0.0
    %7745 = vmatmul.mubr.f32.gmra.mrb[0].mxu0 %v7377
    %v7746 = vpop.f32.mrb[0].mxu0
    %v7747 = vadd.f32 0.0, %v7746
    %v7748 = vpop.f32.mrb[0].mxu0
    %7749 = vmatprep.mubr.f32.mxu0 0.0
    %7750 = vmatmul.mubr.f32.gmra.mrb[0].mxu0 %v7380
    %v7751 = vpop.f32.mrb[0].mxu0
    %v7752 = vadd.f32 0.0, %v7751
    %v7753 = vpop.f32.mrb[0].mxu0
    %7754 = vmatprep.mubr.f32.mxu0 0.0
    %7755 = vmatmul.mubr.f32.gmra.mrb[0].mxu0 %v7383
    %v7756 = vpop.f32.mrb[0].mxu0
    %v7757 = vadd.f32 0.0, %v7756
    %v7758 = vpop.f32.mrb[0].mxu0
    %7759 = vmatprep.mubr.f32.mxu0 0.0
    %7760 = vmatmul.mubr.f32.gmra.mrb[0].mxu0 %v7386
    %v7761 = vpop.f32.mrb[0].mxu0
    %v7762 = vadd.f32 0.0, %v7761
    %v7763 = vpop.f32.mrb[0].mxu0
    %7764 = vmatprep.mubr.f32.mxu0 0.0
    %7765 = vmatmul.mubr.f32.gmra.mrb[0].mxu0 %v7389
    %v7766 = vpop.f32.mrb[0].mxu0
    %v7767 = vadd.f32 0.0, %v7766
    %v7768 = vpop.f32.mrb[0].mxu0
    %7769 = vmatprep.mubr.f32.mxu0 0.0
    %7770 = vmatmul.mubr.f32.gmra.mrb[0].mxu0 %v7392
    %v7771 = vpop.f32.mrb[0].mxu0
    %v7772 = vadd.f32 0.0, %v7771
    %v7773 = vpop.f32.mrb[0].mxu0
    %7774 = vmatprep.mubr.f32.mxu0 0.0
    %7775 = vmatmul.mubr.f32.gmra.mrb[0].mxu0 %v7395
    %v7776 = vpop.f32.mrb[0].mxu0
    %v7777 = vadd.f32 0.0, %v7776
    %v7778 = vpop.f32.mrb[0].mxu0
    %7779 = vmatprep.mubr.f32.mxu0 0.0
    %7780 = vmatmul.mubr.f32.gmra.mrb[0].mxu0 %v7398
    %v7781 = vpop.f32.mrb[0].mxu0
    %v7782 = vadd.f32 0.0, %v7781
    %v7783 = vpop.f32.mrb[0].mxu0
    %7784 = vmatprep.mubr.f32.mxu0 0.0
    %7785 = vmatmul.mubr.f32.gmra.mrb[0].mxu0 %v7401
    %v7786 = vpop.f32.mrb[0].mxu0
    %v7787 = vadd.f32 0.0, %v7786
    %v7788 = vpop.f32.mrb[0].mxu0
    %7789 = vmatprep.mubr.f32.mxu0 0.0
    %7790 = vmatmul.mubr.f32.gmra.mrb[0].mxu0 %v7404
    %v7791 = vpop.f32.mrb[0].mxu0
    %v7792 = vadd.f32 0.0, %v7791
    %v7793 = vpop.f32.mrb[0].mxu0
    %7794 = vdwg.mxu0
    %v7795 = vmax.f32 %v7477, 1e-24
    %v7796 = vmax.f32 %v7482, 1e-24
    %v7797 = vmax.f32 %v7487, 1e-24
    %v7798 = vmax.f32 %v7492, 1e-24
    %v7799 = vmax.f32 %v7497, 1e-24
    %v7800 = vmax.f32 %v7502, 1e-24
    %v7801 = vmax.f32 %v7507, 1e-24
    %v7802 = vmax.f32 %v7512, 1e-24
    %v7803 = vmax.f32 %v7517, 1e-24
    %v7804 = vmax.f32 %v7522, 1e-24
    %v7805 = vmax.f32 %v7527, 1e-24
    %v7806 = vmax.f32 %v7532, 1e-24
    %v7807 = vmax.f32 %v7537, 1e-24
    %v7808 = vmax.f32 %v7542, 1e-24
    %v7809 = vmax.f32 %v7547, 1e-24
    %v7810 = vmax.f32 %v7552, 1e-24
    %v7811 = vmax.f32 %v7557, 1e-24
    %v7812 = vmax.f32 %v7562, 1e-24
    %v7813 = vmax.f32 %v7567, 1e-24
    %v7814 = vmax.f32 %v7572, 1e-24
    %v7815 = vmax.f32 %v7577, 1e-24
    %v7816 = vmax.f32 %v7582, 1e-24
    %v7817 = vmax.f32 %v7587, 1e-24
    %v7818 = vmax.f32 %v7592, 1e-24
    %v7819 = vmax.f32 %v7597, 1e-24
    %v7820 = vmax.f32 %v7602, 1e-24
    %v7821 = vmax.f32 %v7607, 1e-24
    %v7822 = vmax.f32 %v7612, 1e-24
    %v7823 = vmax.f32 %v7617, 1e-24
    %v7824 = vmax.f32 %v7622, 1e-24
    %v7825 = vmax.f32 %v7627, 1e-24
    %v7826 = vmax.f32 %v7632, 1e-24
    %v7827 = vmax.f32 %v7637, 1e-24
    %v7828 = vmax.f32 %v7642, 1e-24
    %v7829 = vmax.f32 %v7647, 1e-24
    %v7830 = vmax.f32 %v7652, 1e-24
    %v7831 = vmax.f32 %v7657, 1e-24
    %v7832 = vmax.f32 %v7662, 1e-24
    %v7833 = vmax.f32 %v7667, 1e-24
    %v7834 = vmax.f32 %v7672, 1e-24
    %v7835 = vmax.f32 %v7677, 1e-24
    %v7836 = vmax.f32 %v7682, 1e-24
    %v7837 = vmax.f32 %v7687, 1e-24
    %v7838 = vmax.f32 %v7692, 1e-24
    %v7839 = vmax.f32 %v7697, 1e-24
    %v7840 = vmax.f32 %v7702, 1e-24
    %v7841 = vmax.f32 %v7707, 1e-24
    %v7842 = vmax.f32 %v7712, 1e-24
    %v7843 = vmax.f32 %v7717, 1e-24
    %v7844 = vmax.f32 %v7722, 1e-24
    %v7845 = vmax.f32 %v7727, 1e-24
    %v7846 = vmax.f32 %v7732, 1e-24
    %v7847 = vmax.f32 %v7737, 1e-24
    %v7848 = vmax.f32 %v7742, 1e-24
    %v7849 = vmax.f32 %v7747, 1e-24
    %v7850 = vmax.f32 %v7752, 1e-24
    %v7851 = vmax.f32 %v7757, 1e-24
    %v7852 = vmax.f32 %v7762, 1e-24
    %v7853 = vmax.f32 %v7767, 1e-24
    %v7854 = vmax.f32 %v7772, 1e-24
    %v7855 = vmax.f32 %v7777, 1e-24
    %v7856 = vmax.f32 %v7782, 1e-24
    %v7857 = vmax.f32 %v7787, 1e-24
    %v7858 = vmax.f32 %v7792, 1e-24
    %v7859 = vrsqrt.pop %v7795
    %v7860 = vrsqrt.pop %v7796
    %v7861 = vrsqrt.pop %v7797
    %v7862 = vrsqrt.pop %v7798
    %v7863 = vrsqrt.pop %v7799
    %v7864 = vrsqrt.pop %v7800
    %v7865 = vrsqrt.pop %v7801
    %v7866 = vrsqrt.pop %v7802
    %v7867 = vrsqrt.pop %v7803
    %v7868 = vrsqrt.pop %v7804
    %v7869 = vrsqrt.pop %v7805
    %v7870 = vrsqrt.pop %v7806
    %v7871 = vrsqrt.pop %v7807
    %v7872 = vrsqrt.pop %v7808
    %v7873 = vrsqrt.pop %v7809
    %v7874 = vrsqrt.pop %v7810
    %v7875 = vrsqrt.pop %v7811
    %v7876 = vrsqrt.pop %v7812
    %v7877 = vrsqrt.pop %v7813
    %v7878 = vrsqrt.pop %v7814
    %v7879 = vrsqrt.pop %v7815
    %v7880 = vrsqrt.pop %v7816
    %v7881 = vrsqrt.pop %v7817
    %v7882 = vrsqrt.pop %v7818
    %v7883 = vrsqrt.pop %v7819
    %v7884 = vrsqrt.pop %v7820
    %v7885 = vrsqrt.pop %v7821
    %v7886 = vrsqrt.pop %v7822
    %v7887 = vrsqrt.pop %v7823
    %v7888 = vrsqrt.pop %v7824
    %v7889 = vrsqrt.pop %v7825
    %v7890 = vrsqrt.pop %v7826
    %v7891 = vrsqrt.pop %v7827
    %v7892 = vrsqrt.pop %v7828
    %v7893 = vrsqrt.pop %v7829
    %v7894 = vrsqrt.pop %v7830
    %v7895 = vrsqrt.pop %v7831
    %v7896 = vrsqrt.pop %v7832
    %v7897 = vrsqrt.pop %v7833
    %v7898 = vrsqrt.pop %v7834
    %v7899 = vrsqrt.pop %v7835
    %v7900 = vrsqrt.pop %v7836
    %v7901 = vrsqrt.pop %v7837
    %v7902 = vrsqrt.pop %v7838
    %v7903 = vrsqrt.pop %v7839
    %v7904 = vrsqrt.pop %v7840
    %v7905 = vrsqrt.pop %v7841
    %v7906 = vrsqrt.pop %v7842
    %v7907 = vrsqrt.pop %v7843
    %v7908 = vrsqrt.pop %v7844
    %v7909 = vrsqrt.pop %v7845
    %v7910 = vrsqrt.pop %v7846
    %v7911 = vrsqrt.pop %v7847
    %v7912 = vrsqrt.pop %v7848
    %v7913 = vrsqrt.pop %v7849
    %v7914 = vrsqrt.pop %v7850
    %v7915 = vrsqrt.pop %v7851
    %v7916 = vrsqrt.pop %v7852
    %v7917 = vrsqrt.pop %v7853
    %v7918 = vrsqrt.pop %v7854
    %v7919 = vrsqrt.pop %v7855
    %v7920 = vrsqrt.pop %v7856
    %v7921 = vrsqrt.pop %v7857
    %v7922 = vrsqrt.pop %v7858
    %v7923 = vmul.f32 %v6893, %v7859
    %v7924 = vmul.f32 %v6896, %v7860
    %v7925 = vmul.f32 %v6901, %v7861
    %v7926 = vmul.f32 %v6904, %v7862
    %v7927 = vmul.f32 %v6909, %v7863
    %v7928 = vmul.f32 %v6912, %v7864
    %v7929 = vmul.f32 %v6917, %v7865
    %v7930 = vmul.f32 %v6920, %v7866
    %v7931 = vmul.f32 %v6925, %v7867
    %v7932 = vmul.f32 %v6928, %v7868
    %v7933 = vmul.f32 %v6933, %v7869
    %v7934 = vmul.f32 %v6936, %v7870
    %v7935 = vmul.f32 %v6941, %v7871
    %v7936 = vmul.f32 %v6944, %v7872
    %v7937 = vmul.f32 %v6949, %v7873
    %v7938 = vmul.f32 %v6952, %v7874
    %v7939 = vmul.f32 %v6957, %v7875
    %v7940 = vmul.f32 %v6960, %v7876
    %v7941 = vmul.f32 %v6965, %v7877
    %v7942 = vmul.f32 %v6968, %v7878
    %v7943 = vmul.f32 %v6973, %v7879
    %v7944 = vmul.f32 %v6976, %v7880
    %v7945 = vmul.f32 %v6981, %v7881
    %v7946 = vmul.f32 %v6984, %v7882
    %v7947 = vmul.f32 %v6989, %v7883
    %v7948 = vmul.f32 %v6992, %v7884
    %v7949 = vmul.f32 %v6997, %v7885
    %v7950 = vmul.f32 %v7000, %v7886
    %v7951 = vmul.f32 %v7005, %v7887
    %v7952 = vmul.f32 %v7008, %v7888
    %v7953 = vmul.f32 %v7013, %v7889
    %v7954 = vmul.f32 %v7016, %v7890
    %v7955 = vmul.f32 %v7021, %v7891
    %v7956 = vmul.f32 %v7024, %v7892
    %v7957 = vmul.f32 %v7029, %v7893
    %v7958 = vmul.f32 %v7032, %v7894
    %v7959 = vmul.f32 %v7037, %v7895
    %v7960 = vmul.f32 %v7040, %v7896
    %v7961 = vmul.f32 %v7045, %v7897
    %v7962 = vmul.f32 %v7048, %v7898
    %v7963 = vmul.f32 %v7053, %v7899
    %v7964 = vmul.f32 %v7056, %v7900
    %v7965 = vmul.f32 %v7061, %v7901
    %v7966 = vmul.f32 %v7064, %v7902
    %v7967 = vmul.f32 %v7069, %v7903
    %v7968 = vmul.f32 %v7072, %v7904
    %v7969 = vmul.f32 %v7077, %v7905
    %v7970 = vmul.f32 %v7080, %v7906
    %v7971 = vmul.f32 %v7085, %v7907
    %v7972 = vmul.f32 %v7088, %v7908
    %v7973 = vmul.f32 %v7093, %v7909
    %v7974 = vmul.f32 %v7096, %v7910
    %v7975 = vmul.f32 %v7101, %v7911
    %v7976 = vmul.f32 %v7104, %v7912
    %v7977 = vmul.f32 %v7109, %v7913
    %v7978 = vmul.f32 %v7112, %v7914
    %v7979 = vmul.f32 %v7117, %v7915
    %v7980 = vmul.f32 %v7120, %v7916
    %v7981 = vmul.f32 %v7125, %v7917
    %v7982 = vmul.f32 %v7128, %v7918
    %v7983 = vmul.f32 %v7133, %v7919
    %v7984 = vmul.f32 %v7136, %v7920
    %v7985 = vmul.f32 %v7141, %v7921
    %v7986 = vmul.f32 %v7144, %v7922
    %7987 = vst.msk [vmem:[%s19] sm:$0xff] %vm7213, %v7923
    %7988 = vst.msk [vmem:[%s19 + $0x8] sm:$0xff] %vm7213, %v7924
    %7989 = vst.msk [vmem:[%s19 + $0x10] sm:$0xff] %vm7213, %v7925
    %7990 = vst.msk [vmem:[%s19 + $0x18] sm:$0xff] %vm7213, %v7926
    %7991 = vst.msk [vmem:[%s19 + $0x20] sm:$0xff] %vm7213, %v7927
    %7992 = vst.msk [vmem:[%s19 + $0x28] sm:$0xff] %vm7213, %v7928
    %7993 = vst.msk [vmem:[%s19 + $0x30] sm:$0xff] %vm7213, %v7929
    %7994 = vst.msk [vmem:[%s19 + $0x38] sm:$0xff] %vm7213, %v7930
    %7995 = vst.msk [vmem:[%s19 + $0x40] sm:$0xff] %vm7213, %v7931
    %7996 = vst.msk [vmem:[%s19 + $0x48] sm:$0xff] %vm7213, %v7932
    %7997 = vst.msk [vmem:[%s19 + $0x50] sm:$0xff] %vm7213, %v7933
    %7998 = vst.msk [vmem:[%s19 + $0x58] sm:$0xff] %vm7213, %v7934
    %7999 = vst.msk [vmem:[%s19 + $0x60] sm:$0xff] %vm7213, %v7935
    %8000 = vst.msk [vmem:[%s19 + $0x68] sm:$0xff] %vm7213, %v7936
    %8001 = vst.msk [vmem:[%s19 + $0x70] sm:$0xff] %vm7213, %v7937
    %8002 = vst.msk [vmem:[%s19 + $0x78] sm:$0xff] %vm7213, %v7938
    %8003 = vst.msk [vmem:[%s19 + $0x80] sm:$0xff] %vm7213, %v7939
    %8004 = vst.msk [vmem:[%s19 + $0x88] sm:$0xff] %vm7213, %v7940
    %8005 = vst.msk [vmem:[%s19 + $0x90] sm:$0xff] %vm7213, %v7941
    %8006 = vst.msk [vmem:[%s19 + $0x98] sm:$0xff] %vm7213, %v7942
    %8007 = vst.msk [vmem:[%s19 + $0xa0] sm:$0xff] %vm7213, %v7943
    %8008 = vst.msk [vmem:[%s19 + $0xa8] sm:$0xff] %vm7213, %v7944
    %8009 = vst.msk [vmem:[%s19 + $0xb0] sm:$0xff] %vm7213, %v7945
    %8010 = vst.msk [vmem:[%s19 + $0xb8] sm:$0xff] %vm7213, %v7946
    %8011 = vst.msk [vmem:[%s19 + $0xc0] sm:$0xff] %vm7213, %v7947
    %8012 = vst.msk [vmem:[%s19 + $0xc8] sm:$0xff] %vm7213, %v7948
    %8013 = vst.msk [vmem:[%s19 + $0xd0] sm:$0xff] %vm7213, %v7949
    %8014 = vst.msk [vmem:[%s19 + $0xd8] sm:$0xff] %vm7213, %v7950
    %8015 = vst.msk [vmem:[%s19 + $0xe0] sm:$0xff] %vm7213, %v7951
    %8016 = vst.msk [vmem:[%s19 + $0xe8] sm:$0xff] %vm7213, %v7952
    %8017 = vst.msk [vmem:[%s19 + $0xf0] sm:$0xff] %vm7213, %v7953
    %8018 = vst.msk [vmem:[%s19 + $0xf8] sm:$0xff] %vm7213, %v7954
    %8019 = vst.msk [vmem:[%s19 + $0x100] sm:$0xff] %vm7213, %v7955
    %8020 = vst.msk [vmem:[%s19 + $0x108] sm:$0xff] %vm7213, %v7956
    %8021 = vst.msk [vmem:[%s19 + $0x110] sm:$0xff] %vm7213, %v7957
    %8022 = vst.msk [vmem:[%s19 + $0x118] sm:$0xff] %vm7213, %v7958
    %8023 = vst.msk [vmem:[%s19 + $0x120] sm:$0xff] %vm7213, %v7959
    %8024 = vst.msk [vmem:[%s19 + $0x128] sm:$0xff] %vm7213, %v7960
    %8025 = vst.msk [vmem:[%s19 + $0x130] sm:$0xff] %vm7213, %v7961
    %8026 = vst.msk [vmem:[%s19 + $0x138] sm:$0xff] %vm7213, %v7962
    %8027 = vst.msk [vmem:[%s19 + $0x140] sm:$0xff] %vm7213, %v7963
    %8028 = vst.msk [vmem:[%s19 + $0x148] sm:$0xff] %vm7213, %v7964
    %8029 = vst.msk [vmem:[%s19 + $0x150] sm:$0xff] %vm7213, %v7965
    %8030 = vst.msk [vmem:[%s19 + $0x158] sm:$0xff] %vm7213, %v7966
    %8031 = vst.msk [vmem:[%s19 + $0x160] sm:$0xff] %vm7213, %v7967
    %8032 = vst.msk [vmem:[%s19 + $0x168] sm:$0xff] %vm7213, %v7968
    %8033 = vst.msk [vmem:[%s19 + $0x170] sm:$0xff] %vm7213, %v7969
    %8034 = vst.msk [vmem:[%s19 + $0x178] sm:$0xff] %vm7213, %v7970
    %8035 = vst.msk [vmem:[%s19 + $0x180] sm:$0xff] %vm7213, %v7971
    %8036 = vst.msk [vmem:[%s19 + $0x188] sm:$0xff] %vm7213, %v7972
    %8037 = vst.msk [vmem:[%s19 + $0x190] sm:$0xff] %vm7213, %v7973
    %8038 = vst.msk [vmem:[%s19 + $0x198] sm:$0xff] %vm7213, %v7974
    %8039 = vst.msk [vmem:[%s19 + $0x1a0] sm:$0xff] %vm7213, %v7975
    %8040 = vst.msk [vmem:[%s19 + $0x1a8] sm:$0xff] %vm7213, %v7976
    %8041 = vst.msk [vmem:[%s19 + $0x1b0] sm:$0xff] %vm7213, %v7977
    %8042 = vst.msk [vmem:[%s19 + $0x1b8] sm:$0xff] %vm7213, %v7978
    %8043 = vst.msk [vmem:[%s19 + $0x1c0] sm:$0xff] %vm7213, %v7979
    %8044 = vst.msk [vmem:[%s19 + $0x1c8] sm:$0xff] %vm7213, %v7980
    %8045 = vst.msk [vmem:[%s19 + $0x1d0] sm:$0xff] %vm7213, %v7981
    %8046 = vst.msk [vmem:[%s19 + $0x1d8] sm:$0xff] %vm7213, %v7982
    %8047 = vst.msk [vmem:[%s19 + $0x1e0] sm:$0xff] %vm7213, %v7983
    %8048 = vst.msk [vmem:[%s19 + $0x1e8] sm:$0xff] %vm7213, %v7984
    %8049 = vst.msk [vmem:[%s19 + $0x1f0] sm:$0xff] %vm7213, %v7985
    %8050 = vst.msk [vmem:[%s19 + $0x1f8] sm:$0xff] %vm7213, %v7986
    // Predicated region
    $region134: #{decoder_forward.1} parent=1 // pred_check
      _
    $region135: #{decoder_forward.1} parent=1 // pred_check_branch
      %8052 = sbr.rel (0) target = $region137
    $region136: #{decoder_forward.1} parent=1 // pred_region
      _
    $region137: #{decoder_forward.1} parent=1 // pred_fallthru
      _
    // Predicated region
    $region138: #{decoder_forward.1} parent=1 // pred_check
      _
    $region139: #{decoder_forward.1} parent=1 // pred_check_branch
      %8054 = sbr.rel (0) target = $region141
    $region140: #{decoder_forward.1} parent=1 // pred_region
      _
    $region141: #{decoder_forward.1} parent=1 // pred_fallthru
      _
    %8055 = vsyncpa [#allocation6], 1
    %8056 = vsyncpa [#allocation8], 1
    %8057 = vsyncpa [#allocation11], 1
    %8058 = vsyncpa [#allocation14], 1
    %8059 = vsyncpa [#allocation17], 1
    %8060 = vsyncpa [#allocation20], 1
    %8061 = vsyncpa [#allocation23], 1
    %8062 = vsyncpa [#allocation26], 1

</llo_original>
